<compile_context>
chip_gen: v5e
topology: v5e:2x2
jax: 0.10.0
libtpu: 0.0.40
codegen_flags: <defaults>
</compile_context>

<pallas_src>
import functools
import math

import jax
import jax.numpy as jnp
from jax import lax
from jax.experimental import pallas as pl
from jax.experimental.pallas import tpu as pltpu

MIN_VALUE = 0.0
MAX_VALUE = 6.4


@functools.partial(jax.jit, static_argnames=("stride", "padding"))
def model_forward(x_nchw, w_t, bias, *, stride=2, padding=1):
    N, Cin, H, W = x_nchw.shape
    Cin_w, Cout, K, _ = w_t.shape
    assert Cin == Cin_w
    # The zero-fill max-pool halo trick below is only valid with clamp floor 0.
    assert MIN_VALUE == 0.0

    # ---- static geometry -----------------------------------------------------
    p = K - 1 - padding                              # halo of the dilated image (3)
    HD, WD = (H - 1) * stride + 1, (W - 1) * stride + 1
    HP, WP = HD + 2 * p, WD + 2 * p                  # 37 x 37 dilated+padded image
    HO, WO = HP - K + 1, WP - K + 1                  # 33 x 33 conv / pool output
    KKC = K * K * Cin                                # 75
    KKC1 = KKC + 1                                   # + ones row for the bias
    P = ((HO * WP + 127) // 128) * 128               # flat spatial extent 1221->1280
    max_off = (K - 1) * WP + (K - 1)                 # largest patch-row shift (152)
    L = ((max(HP * WP, max_off + P) + 127) // 128) * 128   # padded flat image len
    CB = 16 if Cout % 16 == 0 else Cout              # Cout channels per grid step

    # ---- cheap XLA glue: relu + zero-dilate + pad, planar & flattened --------
    xr = jnp.maximum(x_nchw, 0.0).astype(jnp.float32)
    xp = jnp.zeros((N, Cin, HP, WP), jnp.float32)
    xp = xp.at[:, :, p:p + HD:stride, p:p + WD:stride].set(xr)
    xflat = jnp.pad(xp.reshape(N, Cin, HP * WP),
                    ((0, 0), (0, 0), (0, L - HP * WP)))       # (N, Cin, L)

    # ---- weights: (Cin,Cout,K,K) -> flipped HWIO -> (Cout, K*K*Cin + 1) ------
    w_hwio = jnp.transpose(w_t[:, :, ::-1, ::-1], (2, 3, 0, 1)).astype(jnp.float32)
    w2t = jnp.concatenate(
        [w_hwio.reshape(KKC, Cout),
         bias.reshape(1, Cout).astype(jnp.float32)], axis=0).T        # (Cout, KKC1)

    # ---- 0/1 validity mask over the flat spatial axis ------------------------
    col = jnp.arange(P, dtype=jnp.int32)
    maskvec = (((col % WP) < WO) & (col < HO * WP)).astype(jnp.float32)[None, :]

    def kernel(xflat_ref, w_ref, mask_ref, o_ref, patches_ref):
        # Build the transposed im2col (+ ones row) once per image; the
        # sequential ("arbitrary") Cout-block axis reuses it from scratch.
        @pl.when(pl.program_id(1) == 0)
        def _build_patches():
            for kh in range(K):
                for kw in range(K):
                    r = (kh * K + kw) * Cin
                    off = kh * WP + kw
                    patches_ref[r:r + Cin, :] = xflat_ref[:, off:off + P]
            patches_ref[KKC:KKC1, :] = jnp.ones((1, P), jnp.float32)

        # One deep MXU matmul: conv-transpose (+ bias) for CB output channels.
        y = jnp.dot(w_ref[...], patches_ref[...],
                    preferred_element_type=jnp.float32)               # (CB, P)

        # Zero invalid flat columns (wrap columns ow>=WO and the tail).  A 0
        # value stands in for MaxPool's -inf padding thanks to clamp(min=0).
        m = mask_ref[...]                                             # (1, P)
        y = y * m

        # Separable 3x3 / stride-1 max pool on the flat axis:
        #   H direction = shift by +-WP, W direction = shift by +-1.
        zr = jnp.zeros((CB, WP), jnp.float32)
        yh = jnp.maximum(y, jnp.maximum(
            jnp.concatenate([y[:, WP:], zr], axis=1),                 # y[c + WP]
            jnp.concatenate([zr, y[:, :P - WP]], axis=1)))            # y[c - WP]
        yh = yh * m                                                   # kill seam cols
        zc = jnp.zeros((CB, 1), jnp.float32)
        yp = jnp.maximum(yh, jnp.maximum(
            jnp.concatenate([yh[:, 1:], zc], axis=1),                 # yh[c + 1]
            jnp.concatenate([zc, yh[:, :P - 1]], axis=1)))            # yh[c - 1]
        yp = jnp.clip(yp, MIN_VALUE, MAX_VALUE)

        # Repack the WP-strided flat rows into the NCHW output tile.
        for oh in range(HO):
            o_ref[:, oh, :] = yp[:, oh * WP:oh * WP + WO]

    return pl.pallas_call(
        kernel,
        out_shape=jax.ShapeDtypeStruct((N, Cout, HO, WO), jnp.float32),
        grid_spec=pltpu.PrefetchScalarGridSpec(
            num_scalar_prefetch=0,
            grid=(N, Cout // CB),
            in_specs=[
                pl.BlockSpec((None, Cin, L), lambda n, j: (n, 0, 0)),
                pl.BlockSpec((CB, KKC1), lambda n, j: (j, 0)),
                pl.BlockSpec((1, P), lambda n, j: (0, 0)),
            ],
            out_specs=pl.BlockSpec((None, CB, HO, WO), lambda n, j: (n, j, 0, 0)),
            scratch_shapes=[pltpu.VMEM((KKC1, P), jnp.float32)],
        ),
        compiler_params=pltpu.CompilerParams(
            dimension_semantics=("parallel", "arbitrary")),
    )(xflat, w2t, maskvec)


def reference_forward(x_nchw, w_t, bias, *, stride=2, padding=1):
    # Pure-JAX reference (XLA ops) for validation.
    Cin, Cout, K, _ = w_t.shape
    x = jnp.transpose(jnp.maximum(x_nchw, 0.0), (0, 2, 3, 1)).astype(jnp.float32)
    w_hwio = jnp.transpose(w_t[:, :, ::-1, ::-1], (2, 3, 0, 1)).astype(jnp.float32)
    p = K - 1 - padding
    y = lax.conv_general_dilated(
        x, w_hwio, window_strides=(1, 1), padding=[(p, p), (p, p)],
        lhs_dilation=(stride, stride),
        dimension_numbers=("NHWC", "HWIO", "NHWC"),
    ) + bias[None, None, None, :]
    pooled = lax.reduce_window(
        y, -jnp.inf, lax.max,
        window_dimensions=(1, 3, 3, 1), window_strides=(1, 1, 1, 1),
        padding=[(0, 0), (1, 1), (1, 1), (0, 0)])
    out = jnp.clip(pooled, MIN_VALUE, MAX_VALUE)
    return jnp.transpose(out, (0, 3, 1, 2))


if __name__ == "__main__":
    N, Cin, H, W = 2, 3, 16, 16
    Cout, K = 32, 5

    key = jax.random.PRNGKey(0)
    kx, kw, kb = jax.random.split(key, 3)

    # Deterministic "PyTorch-like" init: U(-1/sqrt(fan), 1/sqrt(fan)).
    bound = 1.0 / math.sqrt(Cin * K * K)
    w_t = jax.random.uniform(kw, (Cin, Cout, K, K), jnp.float32, -bound, bound)
    bias = jax.random.uniform(kb, (Cout,), jnp.float32, -bound, bound)
    x = jax.random.normal(kx, (N, Cin, H, W), jnp.float32)

    out = jax.block_until_ready(model_forward(x, w_t, bias))
    ref = jax.block_until_ready(reference_forward(x, w_t, bias))

    assert out.shape == (N, Cout, 2 * H + 1, 2 * W + 1), out.shape
    assert jnp.allclose(out, ref, atol=1e-4, rtol=1e-4), (
        float(jnp.max(jnp.abs(out - ref))))

    print("KERNEL_OK")
</pallas_src>

<mosaic_0001>
module attributes {stable_mosaic.version = 11 : i64} {
  func.func @kernel(%arg0: i32, %arg1: i32, %arg2: memref<1x3x1536xf32, #tpu.memory_space<vmem>>, %arg3: memref<16x76xf32, #tpu.memory_space<vmem>>, %arg4: memref<1x1280xf32, #tpu.memory_space<vmem>>, %arg5: memref<1x16x33x33xf32, #tpu.memory_space<vmem>>, %arg6: memref<76x1280xf32, #tpu.memory_space<vmem>>) attributes {dimension_semantics = [#tpu.dimension_semantics<parallel>, #tpu.dimension_semantics<arbitrary>], iteration_bounds = array<i64: 2, 2>, scalar_prefetch = 0 : i64, scratch_operands = 1 : i64, tpu.core_type = #tpu.core_type<tc>, window_params = [{transform_indices = @transform_0, window_bounds = array<i64: 1, 3, 1536>}, {transform_indices = @transform_1, window_bounds = array<i64: 16, 76>}, {pipeline_mode = #tpu.pipeline_mode<synchronous>, transform_indices = @transform_2, window_bounds = array<i64: 1, 1280>}, {transform_indices = @transform_3, window_bounds = array<i64: 1, 16, 33, 33>}]} {
    %c0_i32 = arith.constant 0 : i32
    %0 = arith.cmpi eq, %arg1, %c0_i32 : i32
    %1 = arith.extui %0 : i1 to i32
    %c0_i32_0 = arith.constant 0 : i32
    %2 = arith.cmpi ne, %1, %c0_i32_0 : i32
    scf.if %2 {
      %c0_110 = arith.constant 0 : index
      %c0_111 = arith.constant 0 : index
      %c0_112 = arith.constant 0 : index
      %161 = vector.load %arg2[%c0_110, %c0_111, %c0_112] : memref<1x3x1536xf32, #tpu.memory_space<vmem>>, vector<1x3x1280xf32>
      %162 = vector.shape_cast %161 : vector<1x3x1280xf32> to vector<3x1280xf32>
      %c0_113 = arith.constant 0 : index
      %c0_114 = arith.constant 0 : index
      %163 = vector.load %arg6[%c0_113, %c0_114] : memref<76x1280xf32, #tpu.memory_space<vmem>>, vector<3x1280xf32>
      tpu.vector_store %arg6[%c0_113, %c0_114], %162 {strides = array<i32>} : memref<76x1280xf32, #tpu.memory_space<vmem>>, vector<3x1280xf32>,
      %c0_115 = arith.constant 0 : index
      %c0_116 = arith.constant 0 : index
      %c1_117 = arith.constant 1 : index
      %164 = vector.load %arg2[%c0_115, %c0_116, %c1_117] : memref<1x3x1536xf32, #tpu.memory_space<vmem>>, vector<1x3x1280xf32>
      %165 = vector.shape_cast %164 : vector<1x3x1280xf32> to vector<3x1280xf32>
      %c3_118 = arith.constant 3 : index
      %c0_119 = arith.constant 0 : index
      %166 = vector.load %arg6[%c3_118, %c0_119] : memref<76x1280xf32, #tpu.memory_space<vmem>>, vector<3x1280xf32>
      tpu.vector_store %arg6[%c3_118, %c0_119], %165 {strides = array<i32>} : memref<76x1280xf32, #tpu.memory_space<vmem>>, vector<3x1280xf32>,
      %c0_120 = arith.constant 0 : index
      %c0_121 = arith.constant 0 : index
      %c2_122 = arith.constant 2 : index
      %167 = vector.load %arg2[%c0_120, %c0_121, %c2_122] : memref<1x3x1536xf32, #tpu.memory_space<vmem>>, vector<1x3x1280xf32>
      %168 = vector.shape_cast %167 : vector<1x3x1280xf32> to vector<3x1280xf32>
      %c6_123 = arith.constant 6 : index
      %c0_124 = arith.constant 0 : index
      %169 = vector.load %arg6[%c6_123, %c0_124] : memref<76x1280xf32, #tpu.memory_space<vmem>>, vector<3x1280xf32>
      tpu.vector_store %arg6[%c6_123, %c0_124], %168 {strides = array<i32>} : memref<76x1280xf32, #tpu.memory_space<vmem>>, vector<3x1280xf32>,
      %c0_125 = arith.constant 0 : index
      %c0_126 = arith.constant 0 : index
      %c3_127 = arith.constant 3 : index
      %170 = vector.load %arg2[%c0_125, %c0_126, %c3_127] : memref<1x3x1536xf32, #tpu.memory_space<vmem>>, vector<1x3x1280xf32>
      %171 = vector.shape_cast %170 : vector<1x3x1280xf32> to vector<3x1280xf32>
      %c9_128 = arith.constant 9 : index
      %c0_129 = arith.constant 0 : index
      %172 = vector.load %arg6[%c9_128, %c0_129] : memref<76x1280xf32, #tpu.memory_space<vmem>>, vector<3x1280xf32>
      tpu.vector_store %arg6[%c9_128, %c0_129], %171 {strides = array<i32>} : memref<76x1280xf32, #tpu.memory_space<vmem>>, vector<3x1280xf32>,
      %c0_130 = arith.constant 0 : index
      %c0_131 = arith.constant 0 : index
      %c4_132 = arith.constant 4 : index
      %173 = vector.load %arg2[%c0_130, %c0_131, %c4_132] : memref<1x3x1536xf32, #tpu.memory_space<vmem>>, vector<1x3x1280xf32>
      %174 = vector.shape_cast %173 : vector<1x3x1280xf32> to vector<3x1280xf32>
      %c12_133 = arith.constant 12 : index
      %c0_134 = arith.constant 0 : index
      %175 = vector.load %arg6[%c12_133, %c0_134] : memref<76x1280xf32, #tpu.memory_space<vmem>>, vector<3x1280xf32>
      tpu.vector_store %arg6[%c12_133, %c0_134], %174 {strides = array<i32>} : memref<76x1280xf32, #tpu.memory_space<vmem>>, vector<3x1280xf32>,
      %c0_135 = arith.constant 0 : index
      %c0_136 = arith.constant 0 : index
      %c37 = arith.constant 37 : index
      %176 = vector.load %arg2[%c0_135, %c0_136, %c37] : memref<1x3x1536xf32, #tpu.memory_space<vmem>>, vector<1x3x1280xf32>
      %177 = vector.shape_cast %176 : vector<1x3x1280xf32> to vector<3x1280xf32>
      %c15_137 = arith.constant 15 : index
      %c0_138 = arith.constant 0 : index
      %178 = vector.load %arg6[%c15_137, %c0_138] : memref<76x1280xf32, #tpu.memory_space<vmem>>, vector<3x1280xf32>
      tpu.vector_store %arg6[%c15_137, %c0_138], %177 {strides = array<i32>} : memref<76x1280xf32, #tpu.memory_space<vmem>>, vector<3x1280xf32>,
      %c0_139 = arith.constant 0 : index
      %c0_140 = arith.constant 0 : index
      %c38 = arith.constant 38 : index
      %179 = vector.load %arg2[%c0_139, %c0_140, %c38] : memref<1x3x1536xf32, #tpu.memory_space<vmem>>, vector<1x3x1280xf32>
      %180 = vector.shape_cast %179 : vector<1x3x1280xf32> to vector<3x1280xf32>
      %c18_141 = arith.constant 18 : index
      %c0_142 = arith.constant 0 : index
      %181 = vector.load %arg6[%c18_141, %c0_142] : memref<76x1280xf32, #tpu.memory_space<vmem>>, vector<3x1280xf32>
      tpu.vector_store %arg6[%c18_141, %c0_142], %180 {strides = array<i32>} : memref<76x1280xf32, #tpu.memory_space<vmem>>, vector<3x1280xf32>,
      %c0_143 = arith.constant 0 : index
      %c0_144 = arith.constant 0 : index
      %c39 = arith.constant 39 : index
      %182 = vector.load %arg2[%c0_143, %c0_144, %c39] : memref<1x3x1536xf32, #tpu.memory_space<vmem>>, vector<1x3x1280xf32>
      %183 = vector.shape_cast %182 : vector<1x3x1280xf32> to vector<3x1280xf32>
      %c21_145 = arith.constant 21 : index
      %c0_146 = arith.constant 0 : index
      %184 = vector.load %arg6[%c21_145, %c0_146] : memref<76x1280xf32, #tpu.memory_space<vmem>>, vector<3x1280xf32>
      tpu.vector_store %arg6[%c21_145, %c0_146], %183 {strides = array<i32>} : memref<76x1280xf32, #tpu.memory_space<vmem>>, vector<3x1280xf32>,
      %c0_147 = arith.constant 0 : index
      %c0_148 = arith.constant 0 : index
      %c40 = arith.constant 40 : index
      %185 = vector.load %arg2[%c0_147, %c0_148, %c40] : memref<1x3x1536xf32, #tpu.memory_space<vmem>>, vector<1x3x1280xf32>
      %186 = vector.shape_cast %185 : vector<1x3x1280xf32> to vector<3x1280xf32>
      %c24_149 = arith.constant 24 : index
      %c0_150 = arith.constant 0 : index
      %187 = vector.load %arg6[%c24_149, %c0_150] : memref<76x1280xf32, #tpu.memory_space<vmem>>, vector<3x1280xf32>
      tpu.vector_store %arg6[%c24_149, %c0_150], %186 {strides = array<i32>} : memref<76x1280xf32, #tpu.memory_space<vmem>>, vector<3x1280xf32>,
      %c0_151 = arith.constant 0 : index
      %c0_152 = arith.constant 0 : index
      %c41 = arith.constant 41 : index
      %188 = vector.load %arg2[%c0_151, %c0_152, %c41] : memref<1x3x1536xf32, #tpu.memory_space<vmem>>, vector<1x3x1280xf32>
      %189 = vector.shape_cast %188 : vector<1x3x1280xf32> to vector<3x1280xf32>
      %c27_153 = arith.constant 27 : index
      %c0_154 = arith.constant 0 : index
      %190 = vector.load %arg6[%c27_153, %c0_154] : memref<76x1280xf32, #tpu.memory_space<vmem>>, vector<3x1280xf32>
      tpu.vector_store %arg6[%c27_153, %c0_154], %189 {strides = array<i32>} : memref<76x1280xf32, #tpu.memory_space<vmem>>, vector<3x1280xf32>,
      %c0_155 = arith.constant 0 : index
      %c0_156 = arith.constant 0 : index
      %c74 = arith.constant 74 : index
      %191 = vector.load %arg2[%c0_155, %c0_156, %c74] : memref<1x3x1536xf32, #tpu.memory_space<vmem>>, vector<1x3x1280xf32>
      %192 = vector.shape_cast %191 : vector<1x3x1280xf32> to vector<3x1280xf32>
      %c30_157 = arith.constant 30 : index
      %c0_158 = arith.constant 0 : index
      %193 = vector.load %arg6[%c30_157, %c0_158] : memref<76x1280xf32, #tpu.memory_space<vmem>>, vector<3x1280xf32>
      tpu.vector_store %arg6[%c30_157, %c0_158], %192 {strides = array<i32>} : memref<76x1280xf32, #tpu.memory_space<vmem>>, vector<3x1280xf32>,
      %c0_159 = arith.constant 0 : index
      %c0_160 = arith.constant 0 : index
      %c75 = arith.constant 75 : index
      %194 = vector.load %arg2[%c0_159, %c0_160, %c75] : memref<1x3x1536xf32, #tpu.memory_space<vmem>>, vector<1x3x1280xf32>
      %195 = vector.shape_cast %194 : vector<1x3x1280xf32> to vector<3x1280xf32>
      %c33 = arith.constant 33 : index
      %c0_161 = arith.constant 0 : index
      %196 = vector.load %arg6[%c33, %c0_161] : memref<76x1280xf32, #tpu.memory_space<vmem>>, vector<3x1280xf32>
      tpu.vector_store %arg6[%c33, %c0_161], %195 {strides = array<i32>} : memref<76x1280xf32, #tpu.memory_space<vmem>>, vector<3x1280xf32>,
      %c0_162 = arith.constant 0 : index
      %c0_163 = arith.constant 0 : index
      %c76 = arith.constant 76 : index
      %197 = vector.load %arg2[%c0_162, %c0_163, %c76] : memref<1x3x1536xf32, #tpu.memory_space<vmem>>, vector<1x3x1280xf32>
      %198 = vector.shape_cast %197 : vector<1x3x1280xf32> to vector<3x1280xf32>
      %c36 = arith.constant 36 : index
      %c0_164 = arith.constant 0 : index
      %199 = vector.load %arg6[%c36, %c0_164] : memref<76x1280xf32, #tpu.memory_space<vmem>>, vector<3x1280xf32>
      tpu.vector_store %arg6[%c36, %c0_164], %198 {strides = array<i32>} : memref<76x1280xf32, #tpu.memory_space<vmem>>, vector<3x1280xf32>,
      %c0_165 = arith.constant 0 : index
      %c0_166 = arith.constant 0 : index
      %c77 = arith.constant 77 : index
      %200 = vector.load %arg2[%c0_165, %c0_166, %c77] : memref<1x3x1536xf32, #tpu.memory_space<vmem>>, vector<1x3x1280xf32>
      %201 = vector.shape_cast %200 : vector<1x3x1280xf32> to vector<3x1280xf32>
      %c39_167 = arith.constant 39 : index
      %c0_168 = arith.constant 0 : index
      %202 = vector.load %arg6[%c39_167, %c0_168] : memref<76x1280xf32, #tpu.memory_space<vmem>>, vector<3x1280xf32>
      tpu.vector_store %arg6[%c39_167, %c0_168], %201 {strides = array<i32>} : memref<76x1280xf32, #tpu.memory_space<vmem>>, vector<3x1280xf32>,
      %c0_169 = arith.constant 0 : index
      %c0_170 = arith.constant 0 : index
      %c78 = arith.constant 78 : index
      %203 = vector.load %arg2[%c0_169, %c0_170, %c78] : memref<1x3x1536xf32, #tpu.memory_space<vmem>>, vector<1x3x1280xf32>
      %204 = vector.shape_cast %203 : vector<1x3x1280xf32> to vector<3x1280xf32>
      %c42 = arith.constant 42 : index
      %c0_171 = arith.constant 0 : index
      %205 = vector.load %arg6[%c42, %c0_171] : memref<76x1280xf32, #tpu.memory_space<vmem>>, vector<3x1280xf32>
      tpu.vector_store %arg6[%c42, %c0_171], %204 {strides = array<i32>} : memref<76x1280xf32, #tpu.memory_space<vmem>>, vector<3x1280xf32>,
      %c0_172 = arith.constant 0 : index
      %c0_173 = arith.constant 0 : index
      %c111 = arith.constant 111 : index
      %206 = vector.load %arg2[%c0_172, %c0_173, %c111] : memref<1x3x1536xf32, #tpu.memory_space<vmem>>, vector<1x3x1280xf32>
      %207 = vector.shape_cast %206 : vector<1x3x1280xf32> to vector<3x1280xf32>
      %c45 = arith.constant 45 : index
      %c0_174 = arith.constant 0 : index
      %208 = vector.load %arg6[%c45, %c0_174] : memref<76x1280xf32, #tpu.memory_space<vmem>>, vector<3x1280xf32>
      tpu.vector_store %arg6[%c45, %c0_174], %207 {strides = array<i32>} : memref<76x1280xf32, #tpu.memory_space<vmem>>, vector<3x1280xf32>,
      %c0_175 = arith.constant 0 : index
      %c0_176 = arith.constant 0 : index
      %c112 = arith.constant 112 : index
      %209 = vector.load %arg2[%c0_175, %c0_176, %c112] : memref<1x3x1536xf32, #tpu.memory_space<vmem>>, vector<1x3x1280xf32>
      %210 = vector.shape_cast %209 : vector<1x3x1280xf32> to vector<3x1280xf32>
      %c48 = arith.constant 48 : index
      %c0_177 = arith.constant 0 : index
      %211 = vector.load %arg6[%c48, %c0_177] : memref<76x1280xf32, #tpu.memory_space<vmem>>, vector<3x1280xf32>
      tpu.vector_store %arg6[%c48, %c0_177], %210 {strides = array<i32>} : memref<76x1280xf32, #tpu.memory_space<vmem>>, vector<3x1280xf32>,
      %c0_178 = arith.constant 0 : index
      %c0_179 = arith.constant 0 : index
      %c113 = arith.constant 113 : index
      %212 = vector.load %arg2[%c0_178, %c0_179, %c113] : memref<1x3x1536xf32, #tpu.memory_space<vmem>>, vector<1x3x1280xf32>
      %213 = vector.shape_cast %212 : vector<1x3x1280xf32> to vector<3x1280xf32>
      %c51 = arith.constant 51 : index
      %c0_180 = arith.constant 0 : index
      %214 = vector.load %arg6[%c51, %c0_180] : memref<76x1280xf32, #tpu.memory_space<vmem>>, vector<3x1280xf32>
      tpu.vector_store %arg6[%c51, %c0_180], %213 {strides = array<i32>} : memref<76x1280xf32, #tpu.memory_space<vmem>>, vector<3x1280xf32>,
      %c0_181 = arith.constant 0 : index
      %c0_182 = arith.constant 0 : index
      %c114 = arith.constant 114 : index
      %215 = vector.load %arg2[%c0_181, %c0_182, %c114] : memref<1x3x1536xf32, #tpu.memory_space<vmem>>, vector<1x3x1280xf32>
      %216 = vector.shape_cast %215 : vector<1x3x1280xf32> to vector<3x1280xf32>
      %c54 = arith.constant 54 : index
      %c0_183 = arith.constant 0 : index
      %217 = vector.load %arg6[%c54, %c0_183] : memref<76x1280xf32, #tpu.memory_space<vmem>>, vector<3x1280xf32>
      tpu.vector_store %arg6[%c54, %c0_183], %216 {strides = array<i32>} : memref<76x1280xf32, #tpu.memory_space<vmem>>, vector<3x1280xf32>,
      %c0_184 = arith.constant 0 : index
      %c0_185 = arith.constant 0 : index
      %c115 = arith.constant 115 : index
      %218 = vector.load %arg2[%c0_184, %c0_185, %c115] : memref<1x3x1536xf32, #tpu.memory_space<vmem>>, vector<1x3x1280xf32>
      %219 = vector.shape_cast %218 : vector<1x3x1280xf32> to vector<3x1280xf32>
      %c57 = arith.constant 57 : index
      %c0_186 = arith.constant 0 : index
      %220 = vector.load %arg6[%c57, %c0_186] : memref<76x1280xf32, #tpu.memory_space<vmem>>, vector<3x1280xf32>
      tpu.vector_store %arg6[%c57, %c0_186], %219 {strides = array<i32>} : memref<76x1280xf32, #tpu.memory_space<vmem>>, vector<3x1280xf32>,
      %c0_187 = arith.constant 0 : index
      %c0_188 = arith.constant 0 : index
      %c148 = arith.constant 148 : index
      %221 = vector.load %arg2[%c0_187, %c0_188, %c148] : memref<1x3x1536xf32, #tpu.memory_space<vmem>>, vector<1x3x1280xf32>
      %222 = vector.shape_cast %221 : vector<1x3x1280xf32> to vector<3x1280xf32>
      %c60 = arith.constant 60 : index
      %c0_189 = arith.constant 0 : index
      %223 = vector.load %arg6[%c60, %c0_189] : memref<76x1280xf32, #tpu.memory_space<vmem>>, vector<3x1280xf32>
      tpu.vector_store %arg6[%c60, %c0_189], %222 {strides = array<i32>} : memref<76x1280xf32, #tpu.memory_space<vmem>>, vector<3x1280xf32>,
      %c0_190 = arith.constant 0 : index
      %c0_191 = arith.constant 0 : index
      %c149 = arith.constant 149 : index
      %224 = vector.load %arg2[%c0_190, %c0_191, %c149] : memref<1x3x1536xf32, #tpu.memory_space<vmem>>, vector<1x3x1280xf32>
      %225 = vector.shape_cast %224 : vector<1x3x1280xf32> to vector<3x1280xf32>
      %c63 = arith.constant 63 : index
      %c0_192 = arith.constant 0 : index
      %226 = vector.load %arg6[%c63, %c0_192] : memref<76x1280xf32, #tpu.memory_space<vmem>>, vector<3x1280xf32>
      tpu.vector_store %arg6[%c63, %c0_192], %225 {strides = array<i32>} : memref<76x1280xf32, #tpu.memory_space<vmem>>, vector<3x1280xf32>,
      %c0_193 = arith.constant 0 : index
      %c0_194 = arith.constant 0 : index
      %c150 = arith.constant 150 : index
      %227 = vector.load %arg2[%c0_193, %c0_194, %c150] : memref<1x3x1536xf32, #tpu.memory_space<vmem>>, vector<1x3x1280xf32>
      %228 = vector.shape_cast %227 : vector<1x3x1280xf32> to vector<3x1280xf32>
      %c66 = arith.constant 66 : index
      %c0_195 = arith.constant 0 : index
      %229 = vector.load %arg6[%c66, %c0_195] : memref<76x1280xf32, #tpu.memory_space<vmem>>, vector<3x1280xf32>
      tpu.vector_store %arg6[%c66, %c0_195], %228 {strides = array<i32>} : memref<76x1280xf32, #tpu.memory_space<vmem>>, vector<3x1280xf32>,
      %c0_196 = arith.constant 0 : index
      %c0_197 = arith.constant 0 : index
      %c151 = arith.constant 151 : index
      %230 = vector.load %arg2[%c0_196, %c0_197, %c151] : memref<1x3x1536xf32, #tpu.memory_space<vmem>>, vector<1x3x1280xf32>
      %231 = vector.shape_cast %230 : vector<1x3x1280xf32> to vector<3x1280xf32>
      %c69 = arith.constant 69 : index
      %c0_198 = arith.constant 0 : index
      %232 = vector.load %arg6[%c69, %c0_198] : memref<76x1280xf32, #tpu.memory_space<vmem>>, vector<3x1280xf32>
      tpu.vector_store %arg6[%c69, %c0_198], %231 {strides = array<i32>} : memref<76x1280xf32, #tpu.memory_space<vmem>>, vector<3x1280xf32>,
      %c0_199 = arith.constant 0 : index
      %c0_200 = arith.constant 0 : index
      %c152 = arith.constant 152 : index
      %233 = vector.load %arg2[%c0_199, %c0_200, %c152] : memref<1x3x1536xf32, #tpu.memory_space<vmem>>, vector<1x3x1280xf32>
      %234 = vector.shape_cast %233 : vector<1x3x1280xf32> to vector<3x1280xf32>
      %c72 = arith.constant 72 : index
      %c0_201 = arith.constant 0 : index
      %235 = vector.load %arg6[%c72, %c0_201] : memref<76x1280xf32, #tpu.memory_space<vmem>>, vector<3x1280xf32>
      tpu.vector_store %arg6[%c72, %c0_201], %234 {strides = array<i32>} : memref<76x1280xf32, #tpu.memory_space<vmem>>, vector<3x1280xf32>,
      %cst_202 = arith.constant 1.000000e+00 : f32
      %236 = vector.broadcast %cst_202 : f32 to vector<1x1280xf32>
      %c75_203 = arith.constant 75 : index
      %c0_204 = arith.constant 0 : index
      %237 = vector.load %arg6[%c75_203, %c0_204] : memref<76x1280xf32, #tpu.memory_space<vmem>>, vector<1x1280xf32>
      tpu.vector_store %arg6[%c75_203, %c0_204], %236 {strides = array<i32>} : memref<76x1280xf32, #tpu.memory_space<vmem>>, vector<1x1280xf32>,
    } else {
    }
    %c0 = arith.constant 0 : index
    %c0_1 = arith.constant 0 : index
    %3 = vector.load %arg3[%c0, %c0_1] : memref<16x76xf32, #tpu.memory_space<vmem>>, vector<16x76xf32>
    %c0_2 = arith.constant 0 : index
    %c0_3 = arith.constant 0 : index
    %4 = vector.load %arg6[%c0_2, %c0_3] : memref<76x1280xf32, #tpu.memory_space<vmem>>, vector<76x1280xf32>
    %cst = arith.constant dense<0.000000e+00> : vector<16x1280xf32>
    %5 = tpu.matmul %3, %4, %cst {dimension_numbers = #tpu.dot_dimension_numbers<[1], [0], [0], [1], [0, 0, 1, 1], [], []>} : vector<16x76xf32>, vector<76x1280xf32>, vector<16x1280xf32> -> vector<16x1280xf32>
    %c0_4 = arith.constant 0 : index
    %c0_5 = arith.constant 0 : index
    %6 = vector.load %arg4[%c0_4, %c0_5] : memref<1x1280xf32, #tpu.memory_space<vmem>>, vector<1x1280xf32>
    %7 = vector.broadcast %6 : vector<1x1280xf32> to vector<16x1280xf32>
    %8 = arith.mulf %5, %7 : vector<16x1280xf32>
    %cst_6 = arith.constant 0.000000e+00 : f32
    %9 = vector.broadcast %cst_6 : f32 to vector<16x37xf32>
    %10 = vector.extract_strided_slice %8 {offsets = [0, 37], sizes = [16, 1243], strides = [1, 1]} : vector<16x1280xf32> to vector<16x1243xf32>
    %11 = tpu.concatenate %10, %9 in 1 : vector<16x1243xf32>, vector<16x37xf32> -> vector<16x1280xf32>
    %12 = vector.extract_strided_slice %8 {offsets = [0, 0], sizes = [16, 1243], strides = [1, 1]} : vector<16x1280xf32> to vector<16x1243xf32>
    %13 = tpu.concatenate %9, %12 in 1 : vector<16x37xf32>, vector<16x1243xf32> -> vector<16x1280xf32>
    %14 = arith.maximumf %11, %13 : vector<16x1280xf32>
    %15 = arith.maximumf %8, %14 : vector<16x1280xf32>
    %16 = vector.broadcast %6 : vector<1x1280xf32> to vector<16x1280xf32>
    %17 = arith.mulf %15, %16 : vector<16x1280xf32>
    %cst_7 = arith.constant 0.000000e+00 : f32
    %18 = vector.broadcast %cst_7 : f32 to vector<16x1xf32>
    %19 = vector.extract_strided_slice %17 {offsets = [0, 1], sizes = [16, 1279], strides = [1, 1]} : vector<16x1280xf32> to vector<16x1279xf32>
    %20 = tpu.concatenate %19, %18 in 1 : vector<16x1279xf32>, vector<16x1xf32> -> vector<16x1280xf32>
    %21 = vector.extract_strided_slice %17 {offsets = [0, 0], sizes = [16, 1279], strides = [1, 1]} : vector<16x1280xf32> to vector<16x1279xf32>
    %22 = tpu.concatenate %18, %21 in 1 : vector<16x1xf32>, vector<16x1279xf32> -> vector<16x1280xf32>
    %23 = arith.maximumf %20, %22 : vector<16x1280xf32>
    %24 = arith.maximumf %17, %23 : vector<16x1280xf32>
    %cst_8 = arith.constant 0.000000e+00 : f32
    %cst_9 = arith.constant 6.400000e+00 : f32
    %25 = vector.broadcast %cst_8 : f32 to vector<16x1280xf32>
    %26 = arith.maximumf %25, %24 : vector<16x1280xf32>
    %27 = vector.broadcast %cst_9 : f32 to vector<16x1280xf32>
    %28 = arith.minimumf %27, %26 : vector<16x1280xf32>
    %29 = vector.extract_strided_slice %28 {offsets = [0, 0], sizes = [16, 33], strides = [1, 1]} : vector<16x1280xf32> to vector<16x33xf32>
    %c0_10 = arith.constant 0 : index
    %c0_11 = arith.constant 0 : index
    %c0_12 = arith.constant 0 : index
    %c0_13 = arith.constant 0 : index
    %30 = vector.load %arg5[%c0_10, %c0_11, %c0_12, %c0_13] : memref<1x16x33x33xf32, #tpu.memory_space<vmem>>, vector<1x16x1x33xf32>
    %31 = vector.shape_cast %30 : vector<1x16x1x33xf32> to vector<16x33xf32>
    %32 = vector.shape_cast %29 : vector<16x33xf32> to vector<1x16x1x33xf32>
    tpu.vector_store %arg5[%c0_10, %c0_11, %c0_12, %c0_13], %32 {strides = array<i32>} : memref<1x16x33x33xf32, #tpu.memory_space<vmem>>, vector<1x16x1x33xf32>,
    %33 = vector.extract_strided_slice %28 {offsets = [0, 37], sizes = [16, 33], strides = [1, 1]} : vector<16x1280xf32> to vector<16x33xf32>
    %c0_14 = arith.constant 0 : index
    %c0_15 = arith.constant 0 : index
    %c1 = arith.constant 1 : index
    %c0_16 = arith.constant 0 : index
    %34 = vector.load %arg5[%c0_14, %c0_15, %c1, %c0_16] : memref<1x16x33x33xf32, #tpu.memory_space<vmem>>, vector<1x16x1x33xf32>
    %35 = vector.shape_cast %34 : vector<1x16x1x33xf32> to vector<16x33xf32>
    %36 = vector.shape_cast %33 : vector<16x33xf32> to vector<1x16x1x33xf32>
    tpu.vector_store %arg5[%c0_14, %c0_15, %c1, %c0_16], %36 {strides = array<i32>} : memref<1x16x33x33xf32, #tpu.memory_space<vmem>>, vector<1x16x1x33xf32>,
    %37 = vector.extract_strided_slice %28 {offsets = [0, 74], sizes = [16, 33], strides = [1, 1]} : vector<16x1280xf32> to vector<16x33xf32>
    %c0_17 = arith.constant 0 : index
    %c0_18 = arith.constant 0 : index
    %c2 = arith.constant 2 : index
    %c0_19 = arith.constant 0 : index
    %38 = vector.load %arg5[%c0_17, %c0_18, %c2, %c0_19] : memref<1x16x33x33xf32, #tpu.memory_space<vmem>>, vector<1x16x1x33xf32>
    %39 = vector.shape_cast %38 : vector<1x16x1x33xf32> to vector<16x33xf32>
    %40 = vector.shape_cast %37 : vector<16x33xf32> to vector<1x16x1x33xf32>
    tpu.vector_store %arg5[%c0_17, %c0_18, %c2, %c0_19], %40 {strides = array<i32>} : memref<1x16x33x33xf32, #tpu.memory_space<vmem>>, vector<1x16x1x33xf32>,
    %41 = vector.extract_strided_slice %28 {offsets = [0, 111], sizes = [16, 33], strides = [1, 1]} : vector<16x1280xf32> to vector<16x33xf32>
    %c0_20 = arith.constant 0 : index
    %c0_21 = arith.constant 0 : index
    %c3 = arith.constant 3 : index
    %c0_22 = arith.constant 0 : index
    %42 = vector.load %arg5[%c0_20, %c0_21, %c3, %c0_22] : memref<1x16x33x33xf32, #tpu.memory_space<vmem>>, vector<1x16x1x33xf32>
    %43 = vector.shape_cast %42 : vector<1x16x1x33xf32> to vector<16x33xf32>
    %44 = vector.shape_cast %41 : vector<16x33xf32> to vector<1x16x1x33xf32>
    tpu.vector_store %arg5[%c0_20, %c0_21, %c3, %c0_22], %44 {strides = array<i32>} : memref<1x16x33x33xf32, #tpu.memory_space<vmem>>, vector<1x16x1x33xf32>,
    %45 = vector.extract_strided_slice %28 {offsets = [0, 148], sizes = [16, 33], strides = [1, 1]} : vector<16x1280xf32> to vector<16x33xf32>
    %c0_23 = arith.constant 0 : index
    %c0_24 = arith.constant 0 : index
    %c4 = arith.constant 4 : index
    %c0_25 = arith.constant 0 : index
    %46 = vector.load %arg5[%c0_23, %c0_24, %c4, %c0_25] : memref<1x16x33x33xf32, #tpu.memory_space<vmem>>, vector<1x16x1x33xf32>
    %47 = vector.shape_cast %46 : vector<1x16x1x33xf32> to vector<16x33xf32>
    %48 = vector.shape_cast %45 : vector<16x33xf32> to vector<1x16x1x33xf32>
    tpu.vector_store %arg5[%c0_23, %c0_24, %c4, %c0_25], %48 {strides = array<i32>} : memref<1x16x33x33xf32, #tpu.memory_space<vmem>>, vector<1x16x1x33xf32>,
    %49 = vector.extract_strided_slice %28 {offsets = [0, 185], sizes = [16, 33], strides = [1, 1]} : vector<16x1280xf32> to vector<16x33xf32>
    %c0_26 = arith.constant 0 : index
    %c0_27 = arith.constant 0 : index
    %c5 = arith.constant 5 : index
    %c0_28 = arith.constant 0 : index
    %50 = vector.load %arg5[%c0_26, %c0_27, %c5, %c0_28] : memref<1x16x33x33xf32, #tpu.memory_space<vmem>>, vector<1x16x1x33xf32>
    %51 = vector.shape_cast %50 : vector<1x16x1x33xf32> to vector<16x33xf32>
    %52 = vector.shape_cast %49 : vector<16x33xf32> to vector<1x16x1x33xf32>
    tpu.vector_store %arg5[%c0_26, %c0_27, %c5, %c0_28], %52 {strides = array<i32>} : memref<1x16x33x33xf32, #tpu.memory_space<vmem>>, vector<1x16x1x33xf32>,
    %53 = vector.extract_strided_slice %28 {offsets = [0, 222], sizes = [16, 33], strides = [1, 1]} : vector<16x1280xf32> to vector<16x33xf32>
    %c0_29 = arith.constant 0 : index
    %c0_30 = arith.constant 0 : index
    %c6 = arith.constant 6 : index
    %c0_31 = arith.constant 0 : index
    %54 = vector.load %arg5[%c0_29, %c0_30, %c6, %c0_31] : memref<1x16x33x33xf32, #tpu.memory_space<vmem>>, vector<1x16x1x33xf32>
    %55 = vector.shape_cast %54 : vector<1x16x1x33xf32> to vector<16x33xf32>
    %56 = vector.shape_cast %53 : vector<16x33xf32> to vector<1x16x1x33xf32>
    tpu.vector_store %arg5[%c0_29, %c0_30, %c6, %c0_31], %56 {strides = array<i32>} : memref<1x16x33x33xf32, #tpu.memory_space<vmem>>, vector<1x16x1x33xf32>,
    %57 = vector.extract_strided_slice %28 {offsets = [0, 259], sizes = [16, 33], strides = [1, 1]} : vector<16x1280xf32> to vector<16x33xf32>
    %c0_32 = arith.constant 0 : index
    %c0_33 = arith.constant 0 : index
    %c7 = arith.constant 7 : index
    %c0_34 = arith.constant 0 : index
    %58 = vector.load %arg5[%c0_32, %c0_33, %c7, %c0_34] : memref<1x16x33x33xf32, #tpu.memory_space<vmem>>, vector<1x16x1x33xf32>
    %59 = vector.shape_cast %58 : vector<1x16x1x33xf32> to vector<16x33xf32>
    %60 = vector.shape_cast %57 : vector<16x33xf32> to vector<1x16x1x33xf32>
    tpu.vector_store %arg5[%c0_32, %c0_33, %c7, %c0_34], %60 {strides = array<i32>} : memref<1x16x33x33xf32, #tpu.memory_space<vmem>>, vector<1x16x1x33xf32>,
    %61 = vector.extract_strided_slice %28 {offsets = [0, 296], sizes = [16, 33], strides = [1, 1]} : vector<16x1280xf32> to vector<16x33xf32>
    %c0_35 = arith.constant 0 : index
    %c0_36 = arith.constant 0 : index
    %c8 = arith.constant 8 : index
    %c0_37 = arith.constant 0 : index
    %62 = vector.load %arg5[%c0_35, %c0_36, %c8, %c0_37] : memref<1x16x33x33xf32, #tpu.memory_space<vmem>>, vector<1x16x1x33xf32>
    %63 = vector.shape_cast %62 : vector<1x16x1x33xf32> to vector<16x33xf32>
    %64 = vector.shape_cast %61 : vector<16x33xf32> to vector<1x16x1x33xf32>
    tpu.vector_store %arg5[%c0_35, %c0_36, %c8, %c0_37], %64 {strides = array<i32>} : memref<1x16x33x33xf32, #tpu.memory_space<vmem>>, vector<1x16x1x33xf32>,
    %65 = vector.extract_strided_slice %28 {offsets = [0, 333], sizes = [16, 33], strides = [1, 1]} : vector<16x1280xf32> to vector<16x33xf32>
    %c0_38 = arith.constant 0 : index
    %c0_39 = arith.constant 0 : index
    %c9 = arith.constant 9 : index
    %c0_40 = arith.constant 0 : index
    %66 = vector.load %arg5[%c0_38, %c0_39, %c9, %c0_40] : memref<1x16x33x33xf32, #tpu.memory_space<vmem>>, vector<1x16x1x33xf32>
    %67 = vector.shape_cast %66 : vector<1x16x1x33xf32> to vector<16x33xf32>
    %68 = vector.shape_cast %65 : vector<16x33xf32> to vector<1x16x1x33xf32>
    tpu.vector_store %arg5[%c0_38, %c0_39, %c9, %c0_40], %68 {strides = array<i32>} : memref<1x16x33x33xf32, #tpu.memory_space<vmem>>, vector<1x16x1x33xf32>,
    %69 = vector.extract_strided_slice %28 {offsets = [0, 370], sizes = [16, 33], strides = [1, 1]} : vector<16x1280xf32> to vector<16x33xf32>
    %c0_41 = arith.constant 0 : index
    %c0_42 = arith.constant 0 : index
    %c10 = arith.constant 10 : index
    %c0_43 = arith.constant 0 : index
    %70 = vector.load %arg5[%c0_41, %c0_42, %c10, %c0_43] : memref<1x16x33x33xf32, #tpu.memory_space<vmem>>, vector<1x16x1x33xf32>
    %71 = vector.shape_cast %70 : vector<1x16x1x33xf32> to vector<16x33xf32>
    %72 = vector.shape_cast %69 : vector<16x33xf32> to vector<1x16x1x33xf32>
    tpu.vector_store %arg5[%c0_41, %c0_42, %c10, %c0_43], %72 {strides = array<i32>} : memref<1x16x33x33xf32, #tpu.memory_space<vmem>>, vector<1x16x1x33xf32>,
    %73 = vector.extract_strided_slice %28 {offsets = [0, 407], sizes = [16, 33], strides = [1, 1]} : vector<16x1280xf32> to vector<16x33xf32>
    %c0_44 = arith.constant 0 : index
    %c0_45 = arith.constant 0 : index
    %c11 = arith.constant 11 : index
    %c0_46 = arith.constant 0 : index
    %74 = vector.load %arg5[%c0_44, %c0_45, %c11, %c0_46] : memref<1x16x33x33xf32, #tpu.memory_space<vmem>>, vector<1x16x1x33xf32>
    %75 = vector.shape_cast %74 : vector<1x16x1x33xf32> to vector<16x33xf32>
    %76 = vector.shape_cast %73 : vector<16x33xf32> to vector<1x16x1x33xf32>
    tpu.vector_store %arg5[%c0_44, %c0_45, %c11, %c0_46], %76 {strides = array<i32>} : memref<1x16x33x33xf32, #tpu.memory_space<vmem>>, vector<1x16x1x33xf32>,
    %77 = vector.extract_strided_slice %28 {offsets = [0, 444], sizes = [16, 33], strides = [1, 1]} : vector<16x1280xf32> to vector<16x33xf32>
    %c0_47 = arith.constant 0 : index
    %c0_48 = arith.constant 0 : index
    %c12 = arith.constant 12 : index
    %c0_49 = arith.constant 0 : index
    %78 = vector.load %arg5[%c0_47, %c0_48, %c12, %c0_49] : memref<1x16x33x33xf32, #tpu.memory_space<vmem>>, vector<1x16x1x33xf32>
    %79 = vector.shape_cast %78 : vector<1x16x1x33xf32> to vector<16x33xf32>
    %80 = vector.shape_cast %77 : vector<16x33xf32> to vector<1x16x1x33xf32>
    tpu.vector_store %arg5[%c0_47, %c0_48, %c12, %c0_49], %80 {strides = array<i32>} : memref<1x16x33x33xf32, #tpu.memory_space<vmem>>, vector<1x16x1x33xf32>,
    %81 = vector.extract_strided_slice %28 {offsets = [0, 481], sizes = [16, 33], strides = [1, 1]} : vector<16x1280xf32> to vector<16x33xf32>
    %c0_50 = arith.constant 0 : index
    %c0_51 = arith.constant 0 : index
    %c13 = arith.constant 13 : index
    %c0_52 = arith.constant 0 : index
    %82 = vector.load %arg5[%c0_50, %c0_51, %c13, %c0_52] : memref<1x16x33x33xf32, #tpu.memory_space<vmem>>, vector<1x16x1x33xf32>
    %83 = vector.shape_cast %82 : vector<1x16x1x33xf32> to vector<16x33xf32>
    %84 = vector.shape_cast %81 : vector<16x33xf32> to vector<1x16x1x33xf32>
    tpu.vector_store %arg5[%c0_50, %c0_51, %c13, %c0_52], %84 {strides = array<i32>} : memref<1x16x33x33xf32, #tpu.memory_space<vmem>>, vector<1x16x1x33xf32>,
    %85 = vector.extract_strided_slice %28 {offsets = [0, 518], sizes = [16, 33], strides = [1, 1]} : vector<16x1280xf32> to vector<16x33xf32>
    %c0_53 = arith.constant 0 : index
    %c0_54 = arith.constant 0 : index
    %c14 = arith.constant 14 : index
    %c0_55 = arith.constant 0 : index
    %86 = vector.load %arg5[%c0_53, %c0_54, %c14, %c0_55] : memref<1x16x33x33xf32, #tpu.memory_space<vmem>>, vector<1x16x1x33xf32>
    %87 = vector.shape_cast %86 : vector<1x16x1x33xf32> to vector<16x33xf32>
    %88 = vector.shape_cast %85 : vector<16x33xf32> to vector<1x16x1x33xf32>
    tpu.vector_store %arg5[%c0_53, %c0_54, %c14, %c0_55], %88 {strides = array<i32>} : memref<1x16x33x33xf32, #tpu.memory_space<vmem>>, vector<1x16x1x33xf32>,
    %89 = vector.extract_strided_slice %28 {offsets = [0, 555], sizes = [16, 33], strides = [1, 1]} : vector<16x1280xf32> to vector<16x33xf32>
    %c0_56 = arith.constant 0 : index
    %c0_57 = arith.constant 0 : index
    %c15 = arith.constant 15 : index
    %c0_58 = arith.constant 0 : index
    %90 = vector.load %arg5[%c0_56, %c0_57, %c15, %c0_58] : memref<1x16x33x33xf32, #tpu.memory_space<vmem>>, vector<1x16x1x33xf32>
    %91 = vector.shape_cast %90 : vector<1x16x1x33xf32> to vector<16x33xf32>
    %92 = vector.shape_cast %89 : vector<16x33xf32> to vector<1x16x1x33xf32>
    tpu.vector_store %arg5[%c0_56, %c0_57, %c15, %c0_58], %92 {strides = array<i32>} : memref<1x16x33x33xf32, #tpu.memory_space<vmem>>, vector<1x16x1x33xf32>,
    %93 = vector.extract_strided_slice %28 {offsets = [0, 592], sizes = [16, 33], strides = [1, 1]} : vector<16x1280xf32> to vector<16x33xf32>
    %c0_59 = arith.constant 0 : index
    %c0_60 = arith.constant 0 : index
    %c16 = arith.constant 16 : index
    %c0_61 = arith.constant 0 : index
    %94 = vector.load %arg5[%c0_59, %c0_60, %c16, %c0_61] : memref<1x16x33x33xf32, #tpu.memory_space<vmem>>, vector<1x16x1x33xf32>
    %95 = vector.shape_cast %94 : vector<1x16x1x33xf32> to vector<16x33xf32>
    %96 = vector.shape_cast %93 : vector<16x33xf32> to vector<1x16x1x33xf32>
    tpu.vector_store %arg5[%c0_59, %c0_60, %c16, %c0_61], %96 {strides = array<i32>} : memref<1x16x33x33xf32, #tpu.memory_space<vmem>>, vector<1x16x1x33xf32>,
    %97 = vector.extract_strided_slice %28 {offsets = [0, 629], sizes = [16, 33], strides = [1, 1]} : vector<16x1280xf32> to vector<16x33xf32>
    %c0_62 = arith.constant 0 : index
    %c0_63 = arith.constant 0 : index
    %c17 = arith.constant 17 : index
    %c0_64 = arith.constant 0 : index
    %98 = vector.load %arg5[%c0_62, %c0_63, %c17, %c0_64] : memref<1x16x33x33xf32, #tpu.memory_space<vmem>>, vector<1x16x1x33xf32>
    %99 = vector.shape_cast %98 : vector<1x16x1x33xf32> to vector<16x33xf32>
    %100 = vector.shape_cast %97 : vector<16x33xf32> to vector<1x16x1x33xf32>
    tpu.vector_store %arg5[%c0_62, %c0_63, %c17, %c0_64], %100 {strides = array<i32>} : memref<1x16x33x33xf32, #tpu.memory_space<vmem>>, vector<1x16x1x33xf32>,
    %101 = vector.extract_strided_slice %28 {offsets = [0, 666], sizes = [16, 33], strides = [1, 1]} : vector<16x1280xf32> to vector<16x33xf32>
    %c0_65 = arith.constant 0 : index
    %c0_66 = arith.constant 0 : index
    %c18 = arith.constant 18 : index
    %c0_67 = arith.constant 0 : index
    %102 = vector.load %arg5[%c0_65, %c0_66, %c18, %c0_67] : memref<1x16x33x33xf32, #tpu.memory_space<vmem>>, vector<1x16x1x33xf32>
    %103 = vector.shape_cast %102 : vector<1x16x1x33xf32> to vector<16x33xf32>
    %104 = vector.shape_cast %101 : vector<16x33xf32> to vector<1x16x1x33xf32>
    tpu.vector_store %arg5[%c0_65, %c0_66, %c18, %c0_67], %104 {strides = array<i32>} : memref<1x16x33x33xf32, #tpu.memory_space<vmem>>, vector<1x16x1x33xf32>,
    %105 = vector.extract_strided_slice %28 {offsets = [0, 703], sizes = [16, 33], strides = [1, 1]} : vector<16x1280xf32> to vector<16x33xf32>
    %c0_68 = arith.constant 0 : index
    %c0_69 = arith.constant 0 : index
    %c19 = arith.constant 19 : index
    %c0_70 = arith.constant 0 : index
    %106 = vector.load %arg5[%c0_68, %c0_69, %c19, %c0_70] : memref<1x16x33x33xf32, #tpu.memory_space<vmem>>, vector<1x16x1x33xf32>
    %107 = vector.shape_cast %106 : vector<1x16x1x33xf32> to vector<16x33xf32>
    %108 = vector.shape_cast %105 : vector<16x33xf32> to vector<1x16x1x33xf32>
    tpu.vector_store %arg5[%c0_68, %c0_69, %c19, %c0_70], %108 {strides = array<i32>} : memref<1x16x33x33xf32, #tpu.memory_space<vmem>>, vector<1x16x1x33xf32>,
    %109 = vector.extract_strided_slice %28 {offsets = [0, 740], sizes = [16, 33], strides = [1, 1]} : vector<16x1280xf32> to vector<16x33xf32>
    %c0_71 = arith.constant 0 : index
    %c0_72 = arith.constant 0 : index
    %c20 = arith.constant 20 : index
    %c0_73 = arith.constant 0 : index
    %110 = vector.load %arg5[%c0_71, %c0_72, %c20, %c0_73] : memref<1x16x33x33xf32, #tpu.memory_space<vmem>>, vector<1x16x1x33xf32>
    %111 = vector.shape_cast %110 : vector<1x16x1x33xf32> to vector<16x33xf32>
    %112 = vector.shape_cast %109 : vector<16x33xf32> to vector<1x16x1x33xf32>
    tpu.vector_store %arg5[%c0_71, %c0_72, %c20, %c0_73], %112 {strides = array<i32>} : memref<1x16x33x33xf32, #tpu.memory_space<vmem>>, vector<1x16x1x33xf32>,
    %113 = vector.extract_strided_slice %28 {offsets = [0, 777], sizes = [16, 33], strides = [1, 1]} : vector<16x1280xf32> to vector<16x33xf32>
    %c0_74 = arith.constant 0 : index
    %c0_75 = arith.constant 0 : index
    %c21 = arith.constant 21 : index
    %c0_76 = arith.constant 0 : index
    %114 = vector.load %arg5[%c0_74, %c0_75, %c21, %c0_76] : memref<1x16x33x33xf32, #tpu.memory_space<vmem>>, vector<1x16x1x33xf32>
    %115 = vector.shape_cast %114 : vector<1x16x1x33xf32> to vector<16x33xf32>
    %116 = vector.shape_cast %113 : vector<16x33xf32> to vector<1x16x1x33xf32>
    tpu.vector_store %arg5[%c0_74, %c0_75, %c21, %c0_76], %116 {strides = array<i32>} : memref<1x16x33x33xf32, #tpu.memory_space<vmem>>, vector<1x16x1x33xf32>,
    %117 = vector.extract_strided_slice %28 {offsets = [0, 814], sizes = [16, 33], strides = [1, 1]} : vector<16x1280xf32> to vector<16x33xf32>
    %c0_77 = arith.constant 0 : index
    %c0_78 = arith.constant 0 : index
    %c22 = arith.constant 22 : index
    %c0_79 = arith.constant 0 : index
    %118 = vector.load %arg5[%c0_77, %c0_78, %c22, %c0_79] : memref<1x16x33x33xf32, #tpu.memory_space<vmem>>, vector<1x16x1x33xf32>
    %119 = vector.shape_cast %118 : vector<1x16x1x33xf32> to vector<16x33xf32>
    %120 = vector.shape_cast %117 : vector<16x33xf32> to vector<1x16x1x33xf32>
    tpu.vector_store %arg5[%c0_77, %c0_78, %c22, %c0_79], %120 {strides = array<i32>} : memref<1x16x33x33xf32, #tpu.memory_space<vmem>>, vector<1x16x1x33xf32>,
    %121 = vector.extract_strided_slice %28 {offsets = [0, 851], sizes = [16, 33], strides = [1, 1]} : vector<16x1280xf32> to vector<16x33xf32>
    %c0_80 = arith.constant 0 : index
    %c0_81 = arith.constant 0 : index
    %c23 = arith.constant 23 : index
    %c0_82 = arith.constant 0 : index
    %122 = vector.load %arg5[%c0_80, %c0_81, %c23, %c0_82] : memref<1x16x33x33xf32, #tpu.memory_space<vmem>>, vector<1x16x1x33xf32>
    %123 = vector.shape_cast %122 : vector<1x16x1x33xf32> to vector<16x33xf32>
    %124 = vector.shape_cast %121 : vector<16x33xf32> to vector<1x16x1x33xf32>
    tpu.vector_store %arg5[%c0_80, %c0_81, %c23, %c0_82], %124 {strides = array<i32>} : memref<1x16x33x33xf32, #tpu.memory_space<vmem>>, vector<1x16x1x33xf32>,
    %125 = vector.extract_strided_slice %28 {offsets = [0, 888], sizes = [16, 33], strides = [1, 1]} : vector<16x1280xf32> to vector<16x33xf32>
    %c0_83 = arith.constant 0 : index
    %c0_84 = arith.constant 0 : index
    %c24 = arith.constant 24 : index
    %c0_85 = arith.constant 0 : index
    %126 = vector.load %arg5[%c0_83, %c0_84, %c24, %c0_85] : memref<1x16x33x33xf32, #tpu.memory_space<vmem>>, vector<1x16x1x33xf32>
    %127 = vector.shape_cast %126 : vector<1x16x1x33xf32> to vector<16x33xf32>
    %128 = vector.shape_cast %125 : vector<16x33xf32> to vector<1x16x1x33xf32>
    tpu.vector_store %arg5[%c0_83, %c0_84, %c24, %c0_85], %128 {strides = array<i32>} : memref<1x16x33x33xf32, #tpu.memory_space<vmem>>, vector<1x16x1x33xf32>,
    %129 = vector.extract_strided_slice %28 {offsets = [0, 925], sizes = [16, 33], strides = [1, 1]} : vector<16x1280xf32> to vector<16x33xf32>
    %c0_86 = arith.constant 0 : index
    %c0_87 = arith.constant 0 : index
    %c25 = arith.constant 25 : index
    %c0_88 = arith.constant 0 : index
    %130 = vector.load %arg5[%c0_86, %c0_87, %c25, %c0_88] : memref<1x16x33x33xf32, #tpu.memory_space<vmem>>, vector<1x16x1x33xf32>
    %131 = vector.shape_cast %130 : vector<1x16x1x33xf32> to vector<16x33xf32>
    %132 = vector.shape_cast %129 : vector<16x33xf32> to vector<1x16x1x33xf32>
    tpu.vector_store %arg5[%c0_86, %c0_87, %c25, %c0_88], %132 {strides = array<i32>} : memref<1x16x33x33xf32, #tpu.memory_space<vmem>>, vector<1x16x1x33xf32>,
    %133 = vector.extract_strided_slice %28 {offsets = [0, 962], sizes = [16, 33], strides = [1, 1]} : vector<16x1280xf32> to vector<16x33xf32>
    %c0_89 = arith.constant 0 : index
    %c0_90 = arith.constant 0 : index
    %c26 = arith.constant 26 : index
    %c0_91 = arith.constant 0 : index
    %134 = vector.load %arg5[%c0_89, %c0_90, %c26, %c0_91] : memref<1x16x33x33xf32, #tpu.memory_space<vmem>>, vector<1x16x1x33xf32>
    %135 = vector.shape_cast %134 : vector<1x16x1x33xf32> to vector<16x33xf32>
    %136 = vector.shape_cast %133 : vector<16x33xf32> to vector<1x16x1x33xf32>
    tpu.vector_store %arg5[%c0_89, %c0_90, %c26, %c0_91], %136 {strides = array<i32>} : memref<1x16x33x33xf32, #tpu.memory_space<vmem>>, vector<1x16x1x33xf32>,
    %137 = vector.extract_strided_slice %28 {offsets = [0, 999], sizes = [16, 33], strides = [1, 1]} : vector<16x1280xf32> to vector<16x33xf32>
    %c0_92 = arith.constant 0 : index
    %c0_93 = arith.constant 0 : index
    %c27 = arith.constant 27 : index
    %c0_94 = arith.constant 0 : index
    %138 = vector.load %arg5[%c0_92, %c0_93, %c27, %c0_94] : memref<1x16x33x33xf32, #tpu.memory_space<vmem>>, vector<1x16x1x33xf32>
    %139 = vector.shape_cast %138 : vector<1x16x1x33xf32> to vector<16x33xf32>
    %140 = vector.shape_cast %137 : vector<16x33xf32> to vector<1x16x1x33xf32>
    tpu.vector_store %arg5[%c0_92, %c0_93, %c27, %c0_94], %140 {strides = array<i32>} : memref<1x16x33x33xf32, #tpu.memory_space<vmem>>, vector<1x16x1x33xf32>,
    %141 = vector.extract_strided_slice %28 {offsets = [0, 1036], sizes = [16, 33], strides = [1, 1]} : vector<16x1280xf32> to vector<16x33xf32>
    %c0_95 = arith.constant 0 : index
    %c0_96 = arith.constant 0 : index
    %c28 = arith.constant 28 : index
    %c0_97 = arith.constant 0 : index
    %142 = vector.load %arg5[%c0_95, %c0_96, %c28, %c0_97] : memref<1x16x33x33xf32, #tpu.memory_space<vmem>>, vector<1x16x1x33xf32>
    %143 = vector.shape_cast %142 : vector<1x16x1x33xf32> to vector<16x33xf32>
    %144 = vector.shape_cast %141 : vector<16x33xf32> to vector<1x16x1x33xf32>
    tpu.vector_store %arg5[%c0_95, %c0_96, %c28, %c0_97], %144 {strides = array<i32>} : memref<1x16x33x33xf32, #tpu.memory_space<vmem>>, vector<1x16x1x33xf32>,
    %145 = vector.extract_strided_slice %28 {offsets = [0, 1073], sizes = [16, 33], strides = [1, 1]} : vector<16x1280xf32> to vector<16x33xf32>
    %c0_98 = arith.constant 0 : index
    %c0_99 = arith.constant 0 : index
    %c29 = arith.constant 29 : index
    %c0_100 = arith.constant 0 : index
    %146 = vector.load %arg5[%c0_98, %c0_99, %c29, %c0_100] : memref<1x16x33x33xf32, #tpu.memory_space<vmem>>, vector<1x16x1x33xf32>
    %147 = vector.shape_cast %146 : vector<1x16x1x33xf32> to vector<16x33xf32>
    %148 = vector.shape_cast %145 : vector<16x33xf32> to vector<1x16x1x33xf32>
    tpu.vector_store %arg5[%c0_98, %c0_99, %c29, %c0_100], %148 {strides = array<i32>} : memref<1x16x33x33xf32, #tpu.memory_space<vmem>>, vector<1x16x1x33xf32>,
    %149 = vector.extract_strided_slice %28 {offsets = [0, 1110], sizes = [16, 33], strides = [1, 1]} : vector<16x1280xf32> to vector<16x33xf32>
    %c0_101 = arith.constant 0 : index
    %c0_102 = arith.constant 0 : index
    %c30 = arith.constant 30 : index
    %c0_103 = arith.constant 0 : index
    %150 = vector.load %arg5[%c0_101, %c0_102, %c30, %c0_103] : memref<1x16x33x33xf32, #tpu.memory_space<vmem>>, vector<1x16x1x33xf32>
    %151 = vector.shape_cast %150 : vector<1x16x1x33xf32> to vector<16x33xf32>
    %152 = vector.shape_cast %149 : vector<16x33xf32> to vector<1x16x1x33xf32>
    tpu.vector_store %arg5[%c0_101, %c0_102, %c30, %c0_103], %152 {strides = array<i32>} : memref<1x16x33x33xf32, #tpu.memory_space<vmem>>, vector<1x16x1x33xf32>,
    %153 = vector.extract_strided_slice %28 {offsets = [0, 1147], sizes = [16, 33], strides = [1, 1]} : vector<16x1280xf32> to vector<16x33xf32>
    %c0_104 = arith.constant 0 : index
    %c0_105 = arith.constant 0 : index
    %c31 = arith.constant 31 : index
    %c0_106 = arith.constant 0 : index
    %154 = vector.load %arg5[%c0_104, %c0_105, %c31, %c0_106] : memref<1x16x33x33xf32, #tpu.memory_space<vmem>>, vector<1x16x1x33xf32>
    %155 = vector.shape_cast %154 : vector<1x16x1x33xf32> to vector<16x33xf32>
    %156 = vector.shape_cast %153 : vector<16x33xf32> to vector<1x16x1x33xf32>
    tpu.vector_store %arg5[%c0_104, %c0_105, %c31, %c0_106], %156 {strides = array<i32>} : memref<1x16x33x33xf32, #tpu.memory_space<vmem>>, vector<1x16x1x33xf32>,
    %157 = vector.extract_strided_slice %28 {offsets = [0, 1184], sizes = [16, 33], strides = [1, 1]} : vector<16x1280xf32> to vector<16x33xf32>
    %c0_107 = arith.constant 0 : index
    %c0_108 = arith.constant 0 : index
    %c32 = arith.constant 32 : index
    %c0_109 = arith.constant 0 : index
    %158 = vector.load %arg5[%c0_107, %c0_108, %c32, %c0_109] : memref<1x16x33x33xf32, #tpu.memory_space<vmem>>, vector<1x16x1x33xf32>
    %159 = vector.shape_cast %158 : vector<1x16x1x33xf32> to vector<16x33xf32>
    %160 = vector.shape_cast %157 : vector<16x33xf32> to vector<1x16x1x33xf32>
    tpu.vector_store %arg5[%c0_107, %c0_108, %c32, %c0_109], %160 {strides = array<i32>} : memref<1x16x33x33xf32, #tpu.memory_space<vmem>>, vector<1x16x1x33xf32>,
    return
  }
  func.func @transform_0(%arg0: i32, %arg1: i32) -> (i32, i32, i32) {
    %c0_i32 = arith.constant 0 : i32
    %c0_i32_0 = arith.constant 0 : i32
    %c0_i32_1 = arith.constant 0 : i32
    return %arg0, %c0_i32, %c0_i32_0 : i32, i32, i32
  }
  func.func @transform_1(%arg0: i32, %arg1: i32) -> (i32, i32) {
    %c0_i32 = arith.constant 0 : i32
    %c0_i32_0 = arith.constant 0 : i32
    return %arg1, %c0_i32 : i32, i32
  }
  func.func @transform_2(%arg0: i32, %arg1: i32) -> (i32, i32) {
    %c0_i32 = arith.constant 0 : i32
    %c0_i32_0 = arith.constant 0 : i32
    %c0_i32_1 = arith.constant 0 : i32
    return %c0_i32, %c0_i32_0 : i32, i32
  }
  func.func @transform_3(%arg0: i32, %arg1: i32) -> (i32, i32, i32, i32) {
    %c0_i32 = arith.constant 0 : i32
    %c0_i32_0 = arith.constant 0 : i32
    %c0_i32_1 = arith.constant 0 : i32
    return %arg0, %arg1, %c0_i32, %c0_i32_0 : i32, i32, i32, i32
  }
}

</mosaic_0001>

<llo_original>
// kernel: model_forward.1
$region0: #{model_forward.1}
  #allocation0 [shape = 'u32[]', space=smem, size = 0x4, offset = 0x4, fixed_abs, tag = 'smem constant byte address 0x4 - core index']
  #allocation1 [shape = 'u32[72,128]{1,0:T(1,128)}', space=vmem, size = 0x9000, scoped, tag = 'internal scratch']
  #allocation2 [shape = 'f32[76,1280]{1,0:T(8,128)}', space=vmem, size = 0x64000, scoped, tag = 'scratch operand']
  %s0 = inlined_call_operand.vmem [shape: f32[2,3,1536], index: 0, kind: input, shape index: {}]
  %s1 = inlined_call_operand.vmem [shape: f32[32,76], index: 1, kind: input, shape index: {}]
  %s2 = inlined_call_operand.vmem [shape: f32[1,1280], index: 2, kind: input, shape index: {}]
  %s3 = inlined_call_operand.vmem [shape: f32[2,32,33,33], index: 3, kind: output, shape index: {}]
  %s4 = sld [smem:[#allocation0]]
  $region49: #{model_forward.1} parent=0
    _
  %s6 = ssub.s32 1, %s4
  %s7 = scalar_select 0, %s6, %s4
  loop: start=0, step=1, limit=6
  $region2: #{model_forward.1} parent=0 // loop_pre_header
    _
  $region3: #{model_forward.1} parent=0 // loop_header
    %s9 = sphi 0, %s13
    %p10 = scmp.ge.s32.totalorder %s9, 6
    %s16 = sphi 0, %s28
    %s17 = sphi 0, %s24
    %s18 = sphi 0, %s16
    %s19 = sphi 0, %s17
    %s20 = sphi 0, %s18
    %s21 = sphi 0, %s19
    %s31 = sphi 0, %s33
    %s34 = sphi 0, %s31
    %s35 = sphi 0, %s34
    %s51 = sphi 0, %s35
    %s57 = sphi 0, %s59
    %s60 = sphi 0, %s57
    %s61 = sphi 0, %s60
    %s77 = sphi 0, %s61
    %s81 = sphi 0, %s81
    %s83 = sphi 0, %s81
    %s84 = sphi 0, %s83
    %s98 = sphi 0, %s84
    %s106 = sphi 0, %s108
    %s109 = sphi 0, %s106
    %s110 = sphi 0, %s109
    %s126 = sphi 0, %s110
  $region4: #{model_forward.1} parent=0 // loop_header_branch
    %12 = sbr.rel (%p10) target = $region8
  $region5: #{model_forward.1} parent=0 // loop_body
    %s14 = ssub.s32 %s9, 1
    %s15 = ssub.s32 %s9, 2
    %s22 = sadd.s32 1, %s17
    %p23 = scmp.ge.s32.totalorder %s22, 2
    %s24 = scalar_select %p23, 0, %s22
    %s25 = sadd.s32 1, %s16
    %s26 = scalar_select %p23, %s25, %s16
    %p27 = scmp.ge.s32.totalorder %s26, 2
    %s28 = scalar_select %p27, 0, %s26
    %s29 = ssub.s32 %s16, %s28
    %p30 = scmp.eq.s32.totalorder %s29, 0
    %s32 = sadd.s32 %s31, 1
    %s33 = scalar_select %p30, %s31, %s32
    %p36 = pneg %p30
    %p37 = scmp.eq.s32.totalorder %s9, 3
    %p38 = por %p36, %p37
    %p39 = scmp.ne.s32.totalorder %s31, %s34
    %p40 = scmp.eq.s32.totalorder %s9, 0
    %p41 = por %p39, %p40
    %p42 = scmp.ne.s32.totalorder %s31, %s34
    %p43 = scmp.eq.s32.totalorder %s14, 3
    %p44 = por %p42, %p43
    %p45 = scmp.ne.s32.totalorder %s34, %s35
    %p46 = scmp.eq.s32.totalorder %s14, 0
    %p47 = por %p45, %p46
    %p48 = scmp.ne.s32.totalorder %s34, %s35
    %p49 = scmp.eq.s32.totalorder %s15, 3
    %p50 = por %p48, %p49
    %p52 = scmp.ne.s32.totalorder %s35, %s51
    %p53 = scmp.eq.s32.totalorder %s15, 0
    %p54 = por %p52, %p53
    %s55 = ssub.s32 %s17, %s24
    %p56 = scmp.eq.s32.totalorder %s55, 0
    %s58 = sadd.s32 %s57, 1
    %s59 = scalar_select %p56, %s57, %s58
    %p62 = pneg %p56
    %p63 = scmp.eq.s32.totalorder %s9, 3
    %p64 = por %p62, %p63
    %p65 = scmp.ne.s32.totalorder %s57, %s60
    %p66 = scmp.eq.s32.totalorder %s9, 0
    %p67 = por %p65, %p66
    %p68 = scmp.ne.s32.totalorder %s57, %s60
    %p69 = scmp.eq.s32.totalorder %s14, 3
    %p70 = por %p68, %p69
    %p71 = scmp.ne.s32.totalorder %s60, %s61
    %p72 = scmp.eq.s32.totalorder %s14, 0
    %p73 = por %p71, %p72
    %p74 = scmp.ne.s32.totalorder %s60, %s61
    %p75 = scmp.eq.s32.totalorder %s15, 3
    %p76 = por %p74, %p75
    %p78 = scmp.ne.s32.totalorder %s61, %s77
    %p79 = scmp.eq.s32.totalorder %s15, 0
    %p80 = por %p78, %p79
    %s82 = sadd.s32 %s81, 1
    %p85 = scmp.eq.s32.totalorder %s9, 3
    %p86 = scmp.ne.s32.totalorder %s81, %s83
    %p87 = scmp.eq.s32.totalorder %s9, 0
    %p88 = por %p86, %p87
    %p89 = scmp.ne.s32.totalorder %s81, %s83
    %p90 = scmp.eq.s32.totalorder %s14, 3
    %p91 = por %p89, %p90
    %p92 = scmp.ne.s32.totalorder %s83, %s84
    %p93 = scmp.eq.s32.totalorder %s14, 0
    %p94 = por %p92, %p93
    %p95 = scmp.ne.s32.totalorder %s83, %s84
    %p96 = scmp.eq.s32.totalorder %s15, 3
    %p97 = por %p95, %p96
    %p99 = scmp.ne.s32.totalorder %s84, %s98
    %p100 = scmp.eq.s32.totalorder %s15, 0
    %p101 = por %p99, %p100
    %s102 = ssub.s32 %s16, %s28
    %s103 = ssub.s32 %s17, %s24
    %s104 = sor.u32 %s102, %s103
    %p105 = scmp.eq.s32.totalorder %s104, 0
    %s107 = sadd.s32 %s106, 1
    %s108 = scalar_select %p105, %s106, %s107
    %p111 = pneg %p105
    %p112 = scmp.eq.s32.totalorder %s9, 3
    %p113 = por %p111, %p112
    %p114 = scmp.ne.s32.totalorder %s106, %s109
    %p115 = scmp.eq.s32.totalorder %s9, 0
    %p116 = por %p114, %p115
    %p117 = scmp.ne.s32.totalorder %s106, %s109
    %p118 = scmp.eq.s32.totalorder %s14, 3
    %p119 = por %p117, %p118
    %p120 = scmp.ne.s32.totalorder %s109, %s110
    %p121 = scmp.eq.s32.totalorder %s14, 0
    %p122 = por %p120, %p121
    %p123 = scmp.ne.s32.totalorder %s109, %s110
    %p124 = scmp.eq.s32.totalorder %s15, 3
    %p125 = por %p123, %p124
    %p127 = scmp.ne.s32.totalorder %s110, %s126
    %p128 = scmp.eq.s32.totalorder %s15, 0
    %p129 = por %p127, %p128
    %p130 = scmp.le.s32.totalorder 1, %s9
    %p131 = scmp.lt.s32.totalorder %s9, 5
    %p132 = pnand %p130, %p131
    %p133 = pneg %p132
    // Predicated region
    $region9: #{model_forward.1} parent=5 // pred_check
      _
    $region10: #{model_forward.1} parent=5 // pred_check_branch
      %135 = sbr.rel (%p132) target = $region12
    $region11: #{model_forward.1} parent=5 // pred_region
      %s136 = ssub.s32 %s9, 1
      // Predicated region
      $region13: #{model_forward.1} parent=11 // pred_check
        %p137 = pneg %p94
      $region14: #{model_forward.1} parent=11 // pred_check_branch
        %139 = sbr.rel (%p137) target = $region16
      $region15: #{model_forward.1} parent=11 // pred_region
        _
      $region16: #{model_forward.1} parent=11 // pred_fallthru
        _
    $region12: #{model_forward.1} parent=5 // pred_fallthru
      _
    %p140 = scmp.lt.s32.totalorder %s9, 4
    // Predicated region
    $region17: #{model_forward.1} parent=5 // pred_check
      %p141 = pneg %p140
    $region18: #{model_forward.1} parent=5 // pred_check_branch
      %143 = sbr.rel (%p141) target = $region20
    $region19: #{model_forward.1} parent=5 // pred_region
      // Predicated region
      $region21: #{model_forward.1} parent=19 // pred_check
        %p144 = pneg %p41
      $region22: #{model_forward.1} parent=19 // pred_check_branch
        %146 = sbr.rel (%p144) target = $region24
      $region23: #{model_forward.1} parent=19 // pred_region
        %p147 = scmp.lt.s32.totalorder %s16, 1
        %s148 = scalar_select %p147, %s16, 1
        %s149 = smul.addr %s148, 12
        %s150 = smul.addr %s149, 4
        %s151 = scalar_lea.vmem %s0, %s150
      $region24: #{model_forward.1} parent=19 // pred_fallthru
        _
      // Predicated region
      $region25: #{model_forward.1} parent=19 // pred_check
        %p152 = pneg %p67
      $region26: #{model_forward.1} parent=19 // pred_check_branch
        %154 = sbr.rel (%p152) target = $region28
      $region27: #{model_forward.1} parent=19 // pred_region
        %s155 = smul.u32 2, %s17
        %p156 = scmp.lt.s32.totalorder %s155, 3
        %s157 = scalar_select %p156, %s155, 3
        %s158 = smul.addr %s157, 8
        %s159 = scalar_lea.vmem %s1, %s158
        %s160 = smul.u32 2, %s17
      $region28: #{model_forward.1} parent=19 // pred_fallthru
        _
    $region20: #{model_forward.1} parent=5 // pred_fallthru
      _
    %p161 = scmp.le.s32.totalorder 1, %s9
    %p162 = scmp.lt.s32.totalorder %s9, 5
    %p163 = pnand %p161, %p162
    %p164 = pneg %p163
    // Predicated region
    $region29: #{model_forward.1} parent=5 // pred_check
      _
    $region30: #{model_forward.1} parent=5 // pred_check_branch
      %166 = sbr.rel (%p163) target = $region32
    $region31: #{model_forward.1} parent=5 // pred_region
      %s167 = ssub.s32 %s9, 1
      %p168 = scmp.lt.s32.totalorder %s18, 1
      %s169 = scalar_select %p168, %s18, 1
      %s170 = smul.addr %s169, 12
      %s171 = smul.addr %s170, 4
      %s172 = scalar_lea.vmem %s0, %s171
      %p173 = pneg %p47
      %p174 = pneg %p44
      %s175 = smul.u32 2, %s19
      %p176 = scmp.lt.s32.totalorder %s175, 3
      %s177 = scalar_select %p176, %s175, 3
      %s178 = smul.addr %s177, 8
      %s179 = scalar_lea.vmem %s1, %s178
      %p180 = pneg %p73
      %p181 = pneg %p70
      %p182 = pneg %p94
      %p183 = pneg %p91
      %p184 = pneg %p122
      %p185 = pneg %p119
      %s186 = smul.u32 16, %s19
      %p187 = scmp.lt.s32.totalorder %s18, 1
      %s188 = scalar_select %p187, %s18, 1
      %p189 = scmp.lt.s32.totalorder %s186, 31
      %s190 = scalar_select %p189, %s186, 31
      %s191 = smul.addr %s190, 5
      %s192 = smul.addr %s188, 160
      %s193 = sadd.s32 %s191, %s192
      %s194 = smul.addr %s193, 8
      %s195 = scalar_lea.vmem %s3, %s194
      %p196 = scmp.lt.s32.totalorder %s18, 1
      %s197 = scalar_select %p196, %s18, 1
      %s198 = smul.addr %s197, 12
      %s199 = smul.addr %s198, 4
      %s200 = scalar_lea.vmem %s0, %s199
      %s201 = smul.u32 2, %s19
      %p202 = scmp.lt.s32.totalorder %s201, 3
      %s203 = scalar_select %p202, %s201, 3
      %s204 = smul.addr %s203, 8
      %s205 = scalar_lea.vmem %s1, %s204
      %s206 = smul.u32 2, %s19
      %s207 = smul.u32 16, %s19
      %p208 = scmp.lt.s32.totalorder %s18, 1
      %s209 = scalar_select %p208, %s18, 1
      %p210 = scmp.lt.s32.totalorder %s207, 31
      %s211 = scalar_select %p210, %s207, 31
      %s212 = smul.addr %s211, 5
      %s213 = smul.addr %s209, 160
      %s214 = sadd.s32 %s212, %s213
      %s215 = smul.addr %s214, 8
      %s216 = scalar_lea.vmem %s3, %s215
      %s217 = smul.u32 16, %s19
      %p218 = scmp.eq.s32.totalorder %s19, 0
      // Predicated region
      $region33: #{model_forward.1} parent=31 // pred_check
        %p219 = pneg %p218
      $region34: #{model_forward.1} parent=31 // pred_check_branch
        %221 = sbr.rel (%p219) target = $region36
      $region35: #{model_forward.1} parent=31 // pred_region
        %v222 = vld [vmem:[%s200] sm:$0x77]
        %v223 = vld [vmem:[%s200 + $0x8] sm:$0x77]
        %v224 = vld [vmem:[%s200 + $0x10] sm:$0x77]
        %v225 = vld [vmem:[%s200 + $0x18] sm:$0x77]
        %v226 = vld [vmem:[%s200 + $0x20] sm:$0x77]
        %232 = vst [vmem:[#allocation1] ss:$2 sm:$0xff] %v222
        %s233 = scalar_lea.vmem [#allocation1], 16
        %234 = vst [vmem:[%s233] ss:$2 sm:$0xff] %v223
        %s235 = scalar_lea.vmem [#allocation1], 32
        %236 = vst [vmem:[%s235] ss:$2 sm:$0xff] %v224
        %s237 = scalar_lea.vmem [#allocation1], 48
        %238 = vst [vmem:[%s237] ss:$2 sm:$0xff] %v225
        %v239 = vld.sshfl [vmem:[#allocation1] sm:$0xff pattern:$0x75316420]
        %v240 = vld.sshfl [vmem:[#allocation1 + $0x8] sm:$0xff pattern:$0x75316420]
        %v241 = vld.sshfl [vmem:[#allocation1 + $0x10] sm:$0xff pattern:$0x75316420]
        %v242 = vld.sshfl [vmem:[#allocation1 + $0x18] sm:$0xff pattern:$0x75316420]
        %v243 = vld.sshfl [vmem:[#allocation1 + $0x20] sm:$0xff pattern:$0x75316420]
        %v244 = vld.sshfl [vmem:[#allocation1 + $0x28] sm:$0xff pattern:$0x75316420]
        %v245 = vld.sshfl [vmem:[#allocation1 + $0x30] sm:$0xff pattern:$0x75316420]
        %v246 = vld.sshfl [vmem:[#allocation1 + $0x38] sm:$0xff pattern:$0x75316420]
        %247 = vst [vmem:[#allocation1] ss:$2 sm:$0xff] %v226
        %v248 = vld.sshfl [vmem:[#allocation1] sm:$0xff pattern:$0x75316420]
        %v249 = vld.sshfl [vmem:[#allocation1 + $0x8] sm:$0xff pattern:$0x75316420]
        %260 = vst [vmem:[#allocation2] sm:$0x7] %v239
        %261 = vst [vmem:[#allocation2 + $0x8] sm:$0x7] %v240
        %262 = vst [vmem:[#allocation2 + $0x10] sm:$0x7] %v241
        %263 = vst [vmem:[#allocation2 + $0x18] sm:$0x7] %v242
        %264 = vst [vmem:[#allocation2 + $0x20] sm:$0x7] %v243
        %265 = vst [vmem:[#allocation2 + $0x28] sm:$0x7] %v244
        %266 = vst [vmem:[#allocation2 + $0x30] sm:$0x7] %v245
        %267 = vst [vmem:[#allocation2 + $0x38] sm:$0x7] %v246
        %268 = vst [vmem:[#allocation2 + $0x40] sm:$0x7] %v248
        %269 = vst [vmem:[#allocation2 + $0x48] sm:$0x7] %v249
        %v270 = vld [vmem:[%s200] sm:$0x77]
        %v271 = vld [vmem:[%s200 + $0x8] sm:$0x77]
        %v272 = vld [vmem:[%s200 + $0x10] sm:$0x77]
        %v273 = vld [vmem:[%s200 + $0x18] sm:$0x77]
        %v274 = vld [vmem:[%s200 + $0x20] sm:$0x77]
        %v275 = vld [vmem:[%s200 + $0x28] sm:$0x7]
        %282 = vst [vmem:[#allocation1] ss:$2 sm:$0xff] %v270
        %s283 = scalar_lea.vmem [#allocation1], 16
        %284 = vst [vmem:[%s283] ss:$2 sm:$0xff] %v271
        %s285 = scalar_lea.vmem [#allocation1], 32
        %286 = vst [vmem:[%s285] ss:$2 sm:$0xff] %v272
        %s287 = scalar_lea.vmem [#allocation1], 48
        %288 = vst [vmem:[%s287] ss:$2 sm:$0xff] %v273
        %v289 = vld.sshfl [vmem:[#allocation1] sm:$0xff pattern:$0x75316420]
        %v290 = vld.sshfl [vmem:[#allocation1 + $0x8] sm:$0xff pattern:$0x75316420]
        %v291 = vld.sshfl [vmem:[#allocation1 + $0x10] sm:$0xff pattern:$0x75316420]
        %v292 = vld.sshfl [vmem:[#allocation1 + $0x18] sm:$0xff pattern:$0x75316420]
        %v293 = vld.sshfl [vmem:[#allocation1 + $0x20] sm:$0xff pattern:$0x75316420]
        %v294 = vld.sshfl [vmem:[#allocation1 + $0x28] sm:$0xff pattern:$0x75316420]
        %v295 = vld.sshfl [vmem:[#allocation1 + $0x30] sm:$0xff pattern:$0x75316420]
        %v296 = vld.sshfl [vmem:[#allocation1 + $0x38] sm:$0xff pattern:$0x75316420]
        %297 = vst [vmem:[#allocation1] ss:$2 sm:$0xff] %v274
        %298 = vst [vmem:[%s283] ss:$2 sm:$0xff] %v275
        %v299 = vld.sshfl [vmem:[#allocation1] sm:$0xff pattern:$0x75316420]
        %v300 = vld.sshfl [vmem:[#allocation1 + $0x8] sm:$0xff pattern:$0x75316420]
        %v301 = vld.sshfl [vmem:[#allocation1 + $0x10] sm:$0xff pattern:$0x75316420]
        %v302 = vrot.slane %v289, 5
        %v303 = vrot.slane %v290, 5
        %v304 = vrot.slane %v291, 5
        %v305 = vrot.slane %v292, 5
        %v306 = vrot.slane %v293, 5
        %v307 = vrot.slane %v294, 5
        %v308 = vrot.slane %v295, 5
        %v309 = vrot.slane %v296, 5
        %v310 = vrot.slane %v299, 5
        %v311 = vrot.slane %v300, 5
        %v312 = vrot.slane %v301, 5
        %313 = vrot.lane.b32.xlu0 %v302, 127
        %v314 = vpop.permute.xlu0 %313
        %315 = vrot.lane.b32.xlu0 %v303, 127
        %v316 = vpop.permute.xlu0 %315
        %317 = vrot.lane.b32.xlu0 %v304, 127
        %v318 = vpop.permute.xlu0 %317
        %319 = vrot.lane.b32.xlu0 %v305, 127
        %v320 = vpop.permute.xlu0 %319
        %321 = vrot.lane.b32.xlu0 %v306, 127
        %v322 = vpop.permute.xlu0 %321
        %323 = vrot.lane.b32.xlu0 %v307, 127
        %v324 = vpop.permute.xlu0 %323
        %325 = vrot.lane.b32.xlu0 %v308, 127
        %v326 = vpop.permute.xlu0 %325
        %327 = vrot.lane.b32.xlu0 %v309, 127
        %v328 = vpop.permute.xlu0 %327
        %329 = vrot.lane.b32.xlu0 %v310, 127
        %v330 = vpop.permute.xlu0 %329
        %331 = vrot.lane.b32.xlu0 %v311, 127
        %v332 = vpop.permute.xlu0 %331
        %333 = vrot.lane.b32.xlu0 %v312, 127
        %v334 = vpop.permute.xlu0 %333
        %vm335 = vcmask 1039360
        %v336 = vsel %vm335, %v314, %v316
        %v337 = vsel %vm335, %v316, %v318
        %v338 = vsel %vm335, %v318, %v320
        %v339 = vsel %vm335, %v320, %v322
        %v340 = vsel %vm335, %v322, %v324
        %v341 = vsel %vm335, %v324, %v326
        %v342 = vsel %vm335, %v326, %v328
        %v343 = vsel %vm335, %v328, %v330
        %v344 = vsel %vm335, %v330, %v332
        %v345 = vsel %vm335, %v332, %v334
        %356 = vst [vmem:[#allocation2] sm:$0x38] %v336
        %357 = vst [vmem:[#allocation2 + $0x8] sm:$0x38] %v337
        %358 = vst [vmem:[#allocation2 + $0x10] sm:$0x38] %v338
        %359 = vst [vmem:[#allocation2 + $0x18] sm:$0x38] %v339
        %360 = vst [vmem:[#allocation2 + $0x20] sm:$0x38] %v340
        %361 = vst [vmem:[#allocation2 + $0x28] sm:$0x38] %v341
        %362 = vst [vmem:[#allocation2 + $0x30] sm:$0x38] %v342
        %363 = vst [vmem:[#allocation2 + $0x38] sm:$0x38] %v343
        %364 = vst [vmem:[#allocation2 + $0x40] sm:$0x38] %v344
        %365 = vst [vmem:[#allocation2 + $0x48] sm:$0x38] %v345
        %v366 = vld [vmem:[%s200] sm:$0x77]
        %v367 = vld [vmem:[%s200 + $0x8] sm:$0x77]
        %v368 = vld [vmem:[%s200 + $0x10] sm:$0x77]
        %v369 = vld [vmem:[%s200 + $0x18] sm:$0x77]
        %v370 = vld [vmem:[%s200 + $0x20] sm:$0x77]
        %v371 = vld [vmem:[%s200 + $0x28] sm:$0x7]
        %378 = vst [vmem:[#allocation1] ss:$2 sm:$0xff] %v366
        %s379 = scalar_lea.vmem [#allocation1], 16
        %380 = vst [vmem:[%s379] ss:$2 sm:$0xff] %v367
        %s381 = scalar_lea.vmem [#allocation1], 32
        %382 = vst [vmem:[%s381] ss:$2 sm:$0xff] %v368
        %s383 = scalar_lea.vmem [#allocation1], 48
        %384 = vst [vmem:[%s383] ss:$2 sm:$0xff] %v369
        %v385 = vld.sshfl [vmem:[#allocation1] sm:$0xff pattern:$0x75316420]
        %v386 = vld.sshfl [vmem:[#allocation1 + $0x8] sm:$0xff pattern:$0x75316420]
        %v387 = vld.sshfl [vmem:[#allocation1 + $0x10] sm:$0xff pattern:$0x75316420]
        %v388 = vld.sshfl [vmem:[#allocation1 + $0x18] sm:$0xff pattern:$0x75316420]
        %v389 = vld.sshfl [vmem:[#allocation1 + $0x20] sm:$0xff pattern:$0x75316420]
        %v390 = vld.sshfl [vmem:[#allocation1 + $0x28] sm:$0xff pattern:$0x75316420]
        %v391 = vld.sshfl [vmem:[#allocation1 + $0x30] sm:$0xff pattern:$0x75316420]
        %v392 = vld.sshfl [vmem:[#allocation1 + $0x38] sm:$0xff pattern:$0x75316420]
        %393 = vst [vmem:[#allocation1] ss:$2 sm:$0xff] %v370
        %394 = vst [vmem:[%s379] ss:$2 sm:$0xff] %v371
        %v395 = vld.sshfl [vmem:[#allocation1] sm:$0xff pattern:$0x75316420]
        %v396 = vld.sshfl [vmem:[#allocation1 + $0x8] sm:$0xff pattern:$0x75316420]
        %v397 = vld.sshfl [vmem:[#allocation1 + $0x10] sm:$0xff pattern:$0x75316420]
        %v398 = vrot.slane %v385, 2
        %v399 = vrot.slane %v386, 2
        %v400 = vrot.slane %v387, 2
        %v401 = vrot.slane %v388, 2
        %v402 = vrot.slane %v389, 2
        %v403 = vrot.slane %v390, 2
        %v404 = vrot.slane %v391, 2
        %v405 = vrot.slane %v392, 2
        %v406 = vrot.slane %v395, 2
        %v407 = vrot.slane %v396, 2
        %v408 = vrot.slane %v397, 2
        %409 = vrot.lane.b32.xlu0 %v398, 126
        %v410 = vpop.permute.xlu0 %409
        %411 = vrot.lane.b32.xlu0 %v399, 126
        %v412 = vpop.permute.xlu0 %411
        %413 = vrot.lane.b32.xlu0 %v400, 126
        %v414 = vpop.permute.xlu0 %413
        %415 = vrot.lane.b32.xlu0 %v401, 126
        %v416 = vpop.permute.xlu0 %415
        %417 = vrot.lane.b32.xlu0 %v402, 126
        %v418 = vpop.permute.xlu0 %417
        %419 = vrot.lane.b32.xlu0 %v403, 126
        %v420 = vpop.permute.xlu0 %419
        %421 = vrot.lane.b32.xlu0 %v404, 126
        %v422 = vpop.permute.xlu0 %421
        %423 = vrot.lane.b32.xlu0 %v405, 126
        %v424 = vpop.permute.xlu0 %423
        %425 = vrot.lane.b32.xlu0 %v406, 126
        %v426 = vpop.permute.xlu0 %425
        %427 = vrot.lane.b32.xlu0 %v407, 126
        %v428 = vpop.permute.xlu0 %427
        %429 = vrot.lane.b32.xlu0 %v408, 126
        %v430 = vpop.permute.xlu0 %429
        %vm431 = vcmask 1031168
        %v432 = vsel %vm431, %v410, %v412
        %v433 = vsel %vm431, %v412, %v414
        %v434 = vsel %vm431, %v414, %v416
        %v435 = vsel %vm431, %v416, %v418
        %v436 = vsel %vm431, %v418, %v420
        %v437 = vsel %vm431, %v420, %v422
        %v438 = vsel %vm431, %v422, %v424
        %v439 = vsel %vm431, %v424, %v426
        %v440 = vsel %vm431, %v426, %v428
        %v441 = vsel %vm431, %v428, %v430
        %452 = vst [vmem:[#allocation2] sm:$0xc0] %v432
        %453 = vst [vmem:[#allocation2 + $0x8] sm:$0xc0] %v433
        %454 = vst [vmem:[#allocation2 + $0x10] sm:$0xc0] %v434
        %455 = vst [vmem:[#allocation2 + $0x18] sm:$0xc0] %v435
        %456 = vst [vmem:[#allocation2 + $0x20] sm:$0xc0] %v436
        %457 = vst [vmem:[#allocation2 + $0x28] sm:$0xc0] %v437
        %458 = vst [vmem:[#allocation2 + $0x30] sm:$0xc0] %v438
        %459 = vst [vmem:[#allocation2 + $0x38] sm:$0xc0] %v439
        %460 = vst [vmem:[#allocation2 + $0x40] sm:$0xc0] %v440
        %461 = vst [vmem:[#allocation2 + $0x48] sm:$0xc0] %v441
        %462 = vst [vmem:[#allocation2 + $0x50] sm:$0x1] %v432
        %463 = vst [vmem:[#allocation2 + $0x58] sm:$0x1] %v433
        %464 = vst [vmem:[#allocation2 + $0x60] sm:$0x1] %v434
        %465 = vst [vmem:[#allocation2 + $0x68] sm:$0x1] %v435
        %466 = vst [vmem:[#allocation2 + $0x70] sm:$0x1] %v436
        %467 = vst [vmem:[#allocation2 + $0x78] sm:$0x1] %v437
        %468 = vst [vmem:[#allocation2 + $0x80] sm:$0x1] %v438
        %469 = vst [vmem:[#allocation2 + $0x88] sm:$0x1] %v439
        %470 = vst [vmem:[#allocation2 + $0x90] sm:$0x1] %v440
        %471 = vst [vmem:[#allocation2 + $0x98] sm:$0x1] %v441
        %v472 = vld [vmem:[%s200] sm:$0x77]
        %v473 = vld [vmem:[%s200 + $0x8] sm:$0x77]
        %v474 = vld [vmem:[%s200 + $0x10] sm:$0x77]
        %v475 = vld [vmem:[%s200 + $0x18] sm:$0x77]
        %v476 = vld [vmem:[%s200 + $0x20] sm:$0x77]
        %v477 = vld [vmem:[%s200 + $0x28] sm:$0x7]
        %484 = vst [vmem:[#allocation1] ss:$2 sm:$0xff] %v472
        %s485 = scalar_lea.vmem [#allocation1], 16
        %486 = vst [vmem:[%s485] ss:$2 sm:$0xff] %v473
        %s487 = scalar_lea.vmem [#allocation1], 32
        %488 = vst [vmem:[%s487] ss:$2 sm:$0xff] %v474
        %s489 = scalar_lea.vmem [#allocation1], 48
        %490 = vst [vmem:[%s489] ss:$2 sm:$0xff] %v475
        %v491 = vld.sshfl [vmem:[#allocation1] sm:$0xff pattern:$0x75316420]
        %v492 = vld.sshfl [vmem:[#allocation1 + $0x8] sm:$0xff pattern:$0x75316420]
        %v493 = vld.sshfl [vmem:[#allocation1 + $0x10] sm:$0xff pattern:$0x75316420]
        %v494 = vld.sshfl [vmem:[#allocation1 + $0x18] sm:$0xff pattern:$0x75316420]
        %v495 = vld.sshfl [vmem:[#allocation1 + $0x20] sm:$0xff pattern:$0x75316420]
        %v496 = vld.sshfl [vmem:[#allocation1 + $0x28] sm:$0xff pattern:$0x75316420]
        %v497 = vld.sshfl [vmem:[#allocation1 + $0x30] sm:$0xff pattern:$0x75316420]
        %v498 = vld.sshfl [vmem:[#allocation1 + $0x38] sm:$0xff pattern:$0x75316420]
        %499 = vst [vmem:[#allocation1] ss:$2 sm:$0xff] %v476
        %500 = vst [vmem:[%s485] ss:$2 sm:$0xff] %v477
        %v501 = vld.sshfl [vmem:[#allocation1] sm:$0xff pattern:$0x75316420]
        %v502 = vld.sshfl [vmem:[#allocation1 + $0x8] sm:$0xff pattern:$0x75316420]
        %v503 = vld.sshfl [vmem:[#allocation1 + $0x10] sm:$0xff pattern:$0x75316420]
        %v504 = vrot.slane %v491, 7
        %v505 = vrot.slane %v492, 7
        %v506 = vrot.slane %v493, 7
        %v507 = vrot.slane %v494, 7
        %v508 = vrot.slane %v495, 7
        %v509 = vrot.slane %v496, 7
        %v510 = vrot.slane %v497, 7
        %v511 = vrot.slane %v498, 7
        %v512 = vrot.slane %v501, 7
        %v513 = vrot.slane %v502, 7
        %v514 = vrot.slane %v503, 7
        %515 = vrot.lane.b32.xlu0 %v504, 125
        %v516 = vpop.permute.xlu0 %515
        %517 = vrot.lane.b32.xlu0 %v505, 125
        %v518 = vpop.permute.xlu0 %517
        %519 = vrot.lane.b32.xlu0 %v506, 125
        %v520 = vpop.permute.xlu0 %519
        %521 = vrot.lane.b32.xlu0 %v507, 125
        %v522 = vpop.permute.xlu0 %521
        %523 = vrot.lane.b32.xlu0 %v508, 125
        %v524 = vpop.permute.xlu0 %523
        %525 = vrot.lane.b32.xlu0 %v509, 125
        %v526 = vpop.permute.xlu0 %525
        %527 = vrot.lane.b32.xlu0 %v510, 125
        %v528 = vpop.permute.xlu0 %527
        %529 = vrot.lane.b32.xlu0 %v511, 125
        %v530 = vpop.permute.xlu0 %529
        %531 = vrot.lane.b32.xlu0 %v512, 125
        %v532 = vpop.permute.xlu0 %531
        %533 = vrot.lane.b32.xlu0 %v513, 125
        %v534 = vpop.permute.xlu0 %533
        %535 = vrot.lane.b32.xlu0 %v514, 125
        %v536 = vpop.permute.xlu0 %535
        %vm537 = vcmask 1022976
        %v538 = vsel %vm537, %v516, %v518
        %v539 = vsel %vm537, %v518, %v520
        %v540 = vsel %vm537, %v520, %v522
        %v541 = vsel %vm537, %v522, %v524
        %v542 = vsel %vm537, %v524, %v526
        %v543 = vsel %vm537, %v526, %v528
        %v544 = vsel %vm537, %v528, %v530
        %v545 = vsel %vm537, %v530, %v532
        %v546 = vsel %vm537, %v532, %v534
        %v547 = vsel %vm537, %v534, %v536
        %558 = vst [vmem:[#allocation2 + $0x50] sm:$0xe] %v538
        %559 = vst [vmem:[#allocation2 + $0x58] sm:$0xe] %v539
        %560 = vst [vmem:[#allocation2 + $0x60] sm:$0xe] %v540
        %561 = vst [vmem:[#allocation2 + $0x68] sm:$0xe] %v541
        %562 = vst [vmem:[#allocation2 + $0x70] sm:$0xe] %v542
        %563 = vst [vmem:[#allocation2 + $0x78] sm:$0xe] %v543
        %564 = vst [vmem:[#allocation2 + $0x80] sm:$0xe] %v544
        %565 = vst [vmem:[#allocation2 + $0x88] sm:$0xe] %v545
        %566 = vst [vmem:[#allocation2 + $0x90] sm:$0xe] %v546
        %567 = vst [vmem:[#allocation2 + $0x98] sm:$0xe] %v547
        %v568 = vld [vmem:[%s200] sm:$0x77]
        %v569 = vld [vmem:[%s200 + $0x8] sm:$0x77]
        %v570 = vld [vmem:[%s200 + $0x10] sm:$0x77]
        %v571 = vld [vmem:[%s200 + $0x18] sm:$0x77]
        %v572 = vld [vmem:[%s200 + $0x20] sm:$0x77]
        %v573 = vld [vmem:[%s200 + $0x28] sm:$0x7]
        %s580 = scalar_lea.vmem [#allocation1], 1
        %581 = vst [vmem:[%s580] ss:$2 sm:$0xff] %v568
        %s582 = scalar_lea.vmem [#allocation1], 17
        %583 = vst [vmem:[%s582] ss:$2 sm:$0xff] %v569
        %s584 = scalar_lea.vmem [#allocation1], 33
        %585 = vst [vmem:[%s584] ss:$2 sm:$0xff] %v570
        %s586 = scalar_lea.vmem [#allocation1], 49
        %587 = vst [vmem:[%s586] ss:$2 sm:$0xff] %v571
        %v588 = vld.sshfl [vmem:[#allocation1] sm:$0xff pattern:$0x75316420]
        %v589 = vld.sshfl [vmem:[#allocation1 + $0x8] sm:$0xff pattern:$0x75316420]
        %v590 = vld.sshfl [vmem:[#allocation1 + $0x10] sm:$0xff pattern:$0x75316420]
        %v591 = vld.sshfl [vmem:[#allocation1 + $0x18] sm:$0xff pattern:$0x75316420]
        %v592 = vld.sshfl [vmem:[#allocation1 + $0x20] sm:$0xff pattern:$0x75316420]
        %v593 = vld.sshfl [vmem:[#allocation1 + $0x28] sm:$0xff pattern:$0x75316420]
        %v594 = vld.sshfl [vmem:[#allocation1 + $0x30] sm:$0xff pattern:$0x75316420]
        %v595 = vld.sshfl [vmem:[#allocation1 + $0x38] sm:$0xff pattern:$0x75316420]
        %596 = vst [vmem:[%s580] ss:$2 sm:$0xff] %v572
        %597 = vst [vmem:[%s582] ss:$2 sm:$0xff] %v573
        %v598 = vld.sshfl [vmem:[#allocation1] sm:$0xff pattern:$0x75316420]
        %v599 = vld.sshfl [vmem:[#allocation1 + $0x8] sm:$0xff pattern:$0x75316420]
        %v600 = vld.sshfl [vmem:[#allocation1 + $0x10] sm:$0xff pattern:$0x75316420]
        %601 = vrot.lane.b32.xlu0 %v588, 124
        %v602 = vpop.permute.xlu0 %601
        %603 = vrot.lane.b32.xlu0 %v589, 124
        %v604 = vpop.permute.xlu0 %603
        %605 = vrot.lane.b32.xlu0 %v590, 124
        %v606 = vpop.permute.xlu0 %605
        %607 = vrot.lane.b32.xlu0 %v591, 124
        %v608 = vpop.permute.xlu0 %607
        %609 = vrot.lane.b32.xlu0 %v592, 124
        %v610 = vpop.permute.xlu0 %609
        %611 = vrot.lane.b32.xlu0 %v593, 124
        %v612 = vpop.permute.xlu0 %611
        %613 = vrot.lane.b32.xlu0 %v594, 124
        %v614 = vpop.permute.xlu0 %613
        %615 = vrot.lane.b32.xlu0 %v595, 124
        %v616 = vpop.permute.xlu0 %615
        %617 = vrot.lane.b32.xlu0 %v598, 124
        %v618 = vpop.permute.xlu0 %617
        %619 = vrot.lane.b32.xlu0 %v599, 124
        %v620 = vpop.permute.xlu0 %619
        %621 = vrot.lane.b32.xlu0 %v600, 124
        %v622 = vpop.permute.xlu0 %621
        %vm623 = vcmask 1014784
        %v624 = vsel %vm623, %v602, %v604
        %v625 = vsel %vm623, %v604, %v606
        %v626 = vsel %vm623, %v606, %v608
        %v627 = vsel %vm623, %v608, %v610
        %v628 = vsel %vm623, %v610, %v612
        %v629 = vsel %vm623, %v612, %v614
        %v630 = vsel %vm623, %v614, %v616
        %v631 = vsel %vm623, %v616, %v618
        %v632 = vsel %vm623, %v618, %v620
        %v633 = vsel %vm623, %v620, %v622
        %644 = vst [vmem:[#allocation2 + $0x50] sm:$0x70] %v624
        %645 = vst [vmem:[#allocation2 + $0x58] sm:$0x70] %v625
        %646 = vst [vmem:[#allocation2 + $0x60] sm:$0x70] %v626
        %647 = vst [vmem:[#allocation2 + $0x68] sm:$0x70] %v627
        %648 = vst [vmem:[#allocation2 + $0x70] sm:$0x70] %v628
        %649 = vst [vmem:[#allocation2 + $0x78] sm:$0x70] %v629
        %650 = vst [vmem:[#allocation2 + $0x80] sm:$0x70] %v630
        %651 = vst [vmem:[#allocation2 + $0x88] sm:$0x70] %v631
        %652 = vst [vmem:[#allocation2 + $0x90] sm:$0x70] %v632
        %653 = vst [vmem:[#allocation2 + $0x98] sm:$0x70] %v633
        %v654 = vld [vmem:[%s200] sm:$0x77]
        %v655 = vld [vmem:[%s200 + $0x8] sm:$0x77]
        %v656 = vld [vmem:[%s200 + $0x10] sm:$0x77]
        %v657 = vld [vmem:[%s200 + $0x18] sm:$0x77]
        %v658 = vld [vmem:[%s200 + $0x20] sm:$0x77]
        %v659 = vld [vmem:[%s200 + $0x28] sm:$0x7]
        %666 = vst [vmem:[#allocation1] ss:$2 sm:$0xff] %v654
        %s667 = scalar_lea.vmem [#allocation1], 16
        %668 = vst [vmem:[%s667] ss:$2 sm:$0xff] %v655
        %s669 = scalar_lea.vmem [#allocation1], 32
        %670 = vst [vmem:[%s669] ss:$2 sm:$0xff] %v656
        %s671 = scalar_lea.vmem [#allocation1], 48
        %672 = vst [vmem:[%s671] ss:$2 sm:$0xff] %v657
        %v673 = vld.sshfl [vmem:[#allocation1] sm:$0xff pattern:$0x75316420]
        %v674 = vld.sshfl [vmem:[#allocation1 + $0x8] sm:$0xff pattern:$0x75316420]
        %v675 = vld.sshfl [vmem:[#allocation1 + $0x10] sm:$0xff pattern:$0x75316420]
        %v676 = vld.sshfl [vmem:[#allocation1 + $0x18] sm:$0xff pattern:$0x75316420]
        %v677 = vld.sshfl [vmem:[#allocation1 + $0x20] sm:$0xff pattern:$0x75316420]
        %v678 = vld.sshfl [vmem:[#allocation1 + $0x28] sm:$0xff pattern:$0x75316420]
        %v679 = vld.sshfl [vmem:[#allocation1 + $0x30] sm:$0xff pattern:$0x75316420]
        %v680 = vld.sshfl [vmem:[#allocation1 + $0x38] sm:$0xff pattern:$0x75316420]
        %681 = vst [vmem:[#allocation1] ss:$2 sm:$0xff] %v658
        %682 = vst [vmem:[%s667] ss:$2 sm:$0xff] %v659
        %v683 = vld.sshfl [vmem:[#allocation1] sm:$0xff pattern:$0x75316420]
        %v684 = vld.sshfl [vmem:[#allocation1 + $0x8] sm:$0xff pattern:$0x75316420]
        %v685 = vld.sshfl [vmem:[#allocation1 + $0x10] sm:$0xff pattern:$0x75316420]
        %v686 = vrot.slane %v673, 1
        %v687 = vrot.slane %v674, 1
        %v688 = vrot.slane %v675, 1
        %v689 = vrot.slane %v676, 1
        %v690 = vrot.slane %v677, 1
        %v691 = vrot.slane %v678, 1
        %v692 = vrot.slane %v679, 1
        %v693 = vrot.slane %v680, 1
        %v694 = vrot.slane %v683, 1
        %v695 = vrot.slane %v684, 1
        %v696 = vrot.slane %v685, 1
        %697 = vrot.lane.b32.xlu0 %v686, 91
        %v698 = vpop.permute.xlu0 %697
        %699 = vrot.lane.b32.xlu0 %v687, 91
        %v700 = vpop.permute.xlu0 %699
        %701 = vrot.lane.b32.xlu0 %v688, 91
        %v702 = vpop.permute.xlu0 %701
        %703 = vrot.lane.b32.xlu0 %v689, 91
        %v704 = vpop.permute.xlu0 %703
        %705 = vrot.lane.b32.xlu0 %v690, 91
        %v706 = vpop.permute.xlu0 %705
        %707 = vrot.lane.b32.xlu0 %v691, 91
        %v708 = vpop.permute.xlu0 %707
        %709 = vrot.lane.b32.xlu0 %v692, 91
        %v710 = vpop.permute.xlu0 %709
        %711 = vrot.lane.b32.xlu0 %v693, 91
        %v712 = vpop.permute.xlu0 %711
        %713 = vrot.lane.b32.xlu0 %v694, 91
        %v714 = vpop.permute.xlu0 %713
        %715 = vrot.lane.b32.xlu0 %v695, 91
        %v716 = vpop.permute.xlu0 %715
        %717 = vrot.lane.b32.xlu0 %v696, 91
        %v718 = vpop.permute.xlu0 %717
        %vm719 = vcmask 744448
        %v720 = vsel %vm719, %v698, %v700
        %v721 = vsel %vm719, %v700, %v702
        %v722 = vsel %vm719, %v702, %v704
        %v723 = vsel %vm719, %v704, %v706
        %v724 = vsel %vm719, %v706, %v708
        %v725 = vsel %vm719, %v708, %v710
        %v726 = vsel %vm719, %v710, %v712
        %v727 = vsel %vm719, %v712, %v714
        %v728 = vsel %vm719, %v714, %v716
        %v729 = vsel %vm719, %v716, %v718
        %740 = vst [vmem:[#allocation2 + $0x50] sm:$0x80] %v720
        %741 = vst [vmem:[#allocation2 + $0x58] sm:$0x80] %v721
        %742 = vst [vmem:[#allocation2 + $0x60] sm:$0x80] %v722
        %743 = vst [vmem:[#allocation2 + $0x68] sm:$0x80] %v723
        %744 = vst [vmem:[#allocation2 + $0x70] sm:$0x80] %v724
        %745 = vst [vmem:[#allocation2 + $0x78] sm:$0x80] %v725
        %746 = vst [vmem:[#allocation2 + $0x80] sm:$0x80] %v726
        %747 = vst [vmem:[#allocation2 + $0x88] sm:$0x80] %v727
        %748 = vst [vmem:[#allocation2 + $0x90] sm:$0x80] %v728
        %749 = vst [vmem:[#allocation2 + $0x98] sm:$0x80] %v729
        %750 = vst [vmem:[#allocation2 + $0xa0] sm:$0x3] %v720
        %751 = vst [vmem:[#allocation2 + $0xa8] sm:$0x3] %v721
        %752 = vst [vmem:[#allocation2 + $0xb0] sm:$0x3] %v722
        %753 = vst [vmem:[#allocation2 + $0xb8] sm:$0x3] %v723
        %754 = vst [vmem:[#allocation2 + $0xc0] sm:$0x3] %v724
        %755 = vst [vmem:[#allocation2 + $0xc8] sm:$0x3] %v725
        %756 = vst [vmem:[#allocation2 + $0xd0] sm:$0x3] %v726
        %757 = vst [vmem:[#allocation2 + $0xd8] sm:$0x3] %v727
        %758 = vst [vmem:[#allocation2 + $0xe0] sm:$0x3] %v728
        %759 = vst [vmem:[#allocation2 + $0xe8] sm:$0x3] %v729
        %v760 = vld [vmem:[%s200] sm:$0x77]
        %v761 = vld [vmem:[%s200 + $0x8] sm:$0x77]
        %v762 = vld [vmem:[%s200 + $0x10] sm:$0x77]
        %v763 = vld [vmem:[%s200 + $0x18] sm:$0x77]
        %v764 = vld [vmem:[%s200 + $0x20] sm:$0x77]
        %v765 = vld [vmem:[%s200 + $0x28] sm:$0x7]
        %772 = vst [vmem:[#allocation1] ss:$2 sm:$0xff] %v760
        %s773 = scalar_lea.vmem [#allocation1], 16
        %774 = vst [vmem:[%s773] ss:$2 sm:$0xff] %v761
        %s775 = scalar_lea.vmem [#allocation1], 32
        %776 = vst [vmem:[%s775] ss:$2 sm:$0xff] %v762
        %s777 = scalar_lea.vmem [#allocation1], 48
        %778 = vst [vmem:[%s777] ss:$2 sm:$0xff] %v763
        %v779 = vld.sshfl [vmem:[#allocation1] sm:$0xff pattern:$0x75316420]
        %v780 = vld.sshfl [vmem:[#allocation1 + $0x8] sm:$0xff pattern:$0x75316420]
        %v781 = vld.sshfl [vmem:[#allocation1 + $0x10] sm:$0xff pattern:$0x75316420]
        %v782 = vld.sshfl [vmem:[#allocation1 + $0x18] sm:$0xff pattern:$0x75316420]
        %v783 = vld.sshfl [vmem:[#allocation1 + $0x20] sm:$0xff pattern:$0x75316420]
        %v784 = vld.sshfl [vmem:[#allocation1 + $0x28] sm:$0xff pattern:$0x75316420]
        %v785 = vld.sshfl [vmem:[#allocation1 + $0x30] sm:$0xff pattern:$0x75316420]
        %v786 = vld.sshfl [vmem:[#allocation1 + $0x38] sm:$0xff pattern:$0x75316420]
        %787 = vst [vmem:[#allocation1] ss:$2 sm:$0xff] %v764
        %788 = vst [vmem:[%s773] ss:$2 sm:$0xff] %v765
        %v789 = vld.sshfl [vmem:[#allocation1] sm:$0xff pattern:$0x75316420]
        %v790 = vld.sshfl [vmem:[#allocation1 + $0x8] sm:$0xff pattern:$0x75316420]
        %v791 = vld.sshfl [vmem:[#allocation1 + $0x10] sm:$0xff pattern:$0x75316420]
        %v792 = vrot.slane %v779, 6
        %v793 = vrot.slane %v780, 6
        %v794 = vrot.slane %v781, 6
        %v795 = vrot.slane %v782, 6
        %v796 = vrot.slane %v783, 6
        %v797 = vrot.slane %v784, 6
        %v798 = vrot.slane %v785, 6
        %v799 = vrot.slane %v786, 6
        %v800 = vrot.slane %v789, 6
        %v801 = vrot.slane %v790, 6
        %v802 = vrot.slane %v791, 6
        %803 = vrot.lane.b32.xlu0 %v792, 90
        %v804 = vpop.permute.xlu0 %803
        %805 = vrot.lane.b32.xlu0 %v793, 90
        %v806 = vpop.permute.xlu0 %805
        %807 = vrot.lane.b32.xlu0 %v794, 90
        %v808 = vpop.permute.xlu0 %807
        %809 = vrot.lane.b32.xlu0 %v795, 90
        %v810 = vpop.permute.xlu0 %809
        %811 = vrot.lane.b32.xlu0 %v796, 90
        %v812 = vpop.permute.xlu0 %811
        %813 = vrot.lane.b32.xlu0 %v797, 90
        %v814 = vpop.permute.xlu0 %813
        %815 = vrot.lane.b32.xlu0 %v798, 90
        %v816 = vpop.permute.xlu0 %815
        %817 = vrot.lane.b32.xlu0 %v799, 90
        %v818 = vpop.permute.xlu0 %817
        %819 = vrot.lane.b32.xlu0 %v800, 90
        %v820 = vpop.permute.xlu0 %819
        %821 = vrot.lane.b32.xlu0 %v801, 90
        %v822 = vpop.permute.xlu0 %821
        %823 = vrot.lane.b32.xlu0 %v802, 90
        %v824 = vpop.permute.xlu0 %823
        %vm825 = vcmask 736256
        %v826 = vsel %vm825, %v804, %v806
        %v827 = vsel %vm825, %v806, %v808
        %v828 = vsel %vm825, %v808, %v810
        %v829 = vsel %vm825, %v810, %v812
        %v830 = vsel %vm825, %v812, %v814
        %v831 = vsel %vm825, %v814, %v816
        %v832 = vsel %vm825, %v816, %v818
        %v833 = vsel %vm825, %v818, %v820
        %v834 = vsel %vm825, %v820, %v822
        %v835 = vsel %vm825, %v822, %v824
        %846 = vst [vmem:[#allocation2 + $0xa0] sm:$0x1c] %v826
        %847 = vst [vmem:[#allocation2 + $0xa8] sm:$0x1c] %v827
        %848 = vst [vmem:[#allocation2 + $0xb0] sm:$0x1c] %v828
        %849 = vst [vmem:[#allocation2 + $0xb8] sm:$0x1c] %v829
        %850 = vst [vmem:[#allocation2 + $0xc0] sm:$0x1c] %v830
        %851 = vst [vmem:[#allocation2 + $0xc8] sm:$0x1c] %v831
        %852 = vst [vmem:[#allocation2 + $0xd0] sm:$0x1c] %v832
        %853 = vst [vmem:[#allocation2 + $0xd8] sm:$0x1c] %v833
        %854 = vst [vmem:[#allocation2 + $0xe0] sm:$0x1c] %v834
        %855 = vst [vmem:[#allocation2 + $0xe8] sm:$0x1c] %v835
        %v856 = vld [vmem:[%s200] sm:$0x77]
        %v857 = vld [vmem:[%s200 + $0x8] sm:$0x77]
        %v858 = vld [vmem:[%s200 + $0x10] sm:$0x77]
        %v859 = vld [vmem:[%s200 + $0x18] sm:$0x77]
        %v860 = vld [vmem:[%s200 + $0x20] sm:$0x77]
        %v861 = vld [vmem:[%s200 + $0x28] sm:$0x7]
        %868 = vst [vmem:[#allocation1] ss:$2 sm:$0xff] %v856
        %s869 = scalar_lea.vmem [#allocation1], 16
        %870 = vst [vmem:[%s869] ss:$2 sm:$0xff] %v857
        %s871 = scalar_lea.vmem [#allocation1], 32
        %872 = vst [vmem:[%s871] ss:$2 sm:$0xff] %v858
        %s873 = scalar_lea.vmem [#allocation1], 48
        %874 = vst [vmem:[%s873] ss:$2 sm:$0xff] %v859
        %v875 = vld.sshfl [vmem:[#allocation1] sm:$0xff pattern:$0x75316420]
        %v876 = vld.sshfl [vmem:[#allocation1 + $0x8] sm:$0xff pattern:$0x75316420]
        %v877 = vld.sshfl [vmem:[#allocation1 + $0x10] sm:$0xff pattern:$0x75316420]
        %v878 = vld.sshfl [vmem:[#allocation1 + $0x18] sm:$0xff pattern:$0x75316420]
        %v879 = vld.sshfl [vmem:[#allocation1 + $0x20] sm:$0xff pattern:$0x75316420]
        %v880 = vld.sshfl [vmem:[#allocation1 + $0x28] sm:$0xff pattern:$0x75316420]
        %v881 = vld.sshfl [vmem:[#allocation1 + $0x30] sm:$0xff pattern:$0x75316420]
        %v882 = vld.sshfl [vmem:[#allocation1 + $0x38] sm:$0xff pattern:$0x75316420]
        %883 = vst [vmem:[#allocation1] ss:$2 sm:$0xff] %v860
        %884 = vst [vmem:[%s869] ss:$2 sm:$0xff] %v861
        %v885 = vld.sshfl [vmem:[#allocation1] sm:$0xff pattern:$0x75316420]
        %v886 = vld.sshfl [vmem:[#allocation1 + $0x8] sm:$0xff pattern:$0x75316420]
        %v887 = vld.sshfl [vmem:[#allocation1 + $0x10] sm:$0xff pattern:$0x75316420]
        %v888 = vrot.slane %v875, 3
        %v889 = vrot.slane %v876, 3
        %v890 = vrot.slane %v877, 3
        %v891 = vrot.slane %v878, 3
        %v892 = vrot.slane %v879, 3
        %v893 = vrot.slane %v880, 3
        %v894 = vrot.slane %v881, 3
        %v895 = vrot.slane %v882, 3
        %v896 = vrot.slane %v885, 3
        %v897 = vrot.slane %v886, 3
        %v898 = vrot.slane %v887, 3
        %899 = vrot.lane.b32.xlu0 %v888, 89
        %v900 = vpop.permute.xlu0 %899
        %901 = vrot.lane.b32.xlu0 %v889, 89
        %v902 = vpop.permute.xlu0 %901
        %903 = vrot.lane.b32.xlu0 %v890, 89
        %v904 = vpop.permute.xlu0 %903
        %905 = vrot.lane.b32.xlu0 %v891, 89
        %v906 = vpop.permute.xlu0 %905
        %907 = vrot.lane.b32.xlu0 %v892, 89
        %v908 = vpop.permute.xlu0 %907
        %909 = vrot.lane.b32.xlu0 %v893, 89
        %v910 = vpop.permute.xlu0 %909
        %911 = vrot.lane.b32.xlu0 %v894, 89
        %v912 = vpop.permute.xlu0 %911
        %913 = vrot.lane.b32.xlu0 %v895, 89
        %v914 = vpop.permute.xlu0 %913
        %915 = vrot.lane.b32.xlu0 %v896, 89
        %v916 = vpop.permute.xlu0 %915
        %917 = vrot.lane.b32.xlu0 %v897, 89
        %v918 = vpop.permute.xlu0 %917
        %919 = vrot.lane.b32.xlu0 %v898, 89
        %v920 = vpop.permute.xlu0 %919
        %vm921 = vcmask 728064
        %v922 = vsel %vm921, %v900, %v902
        %v923 = vsel %vm921, %v902, %v904
        %v924 = vsel %vm921, %v904, %v906
        %v925 = vsel %vm921, %v906, %v908
        %v926 = vsel %vm921, %v908, %v910
        %v927 = vsel %vm921, %v910, %v912
        %v928 = vsel %vm921, %v912, %v914
        %v929 = vsel %vm921, %v914, %v916
        %v930 = vsel %vm921, %v916, %v918
        %v931 = vsel %vm921, %v918, %v920
        %942 = vst [vmem:[#allocation2 + $0xa0] sm:$0xe0] %v922
        %943 = vst [vmem:[#allocation2 + $0xa8] sm:$0xe0] %v923
        %944 = vst [vmem:[#allocation2 + $0xb0] sm:$0xe0] %v924
        %945 = vst [vmem:[#allocation2 + $0xb8] sm:$0xe0] %v925
        %946 = vst [vmem:[#allocation2 + $0xc0] sm:$0xe0] %v926
        %947 = vst [vmem:[#allocation2 + $0xc8] sm:$0xe0] %v927
        %948 = vst [vmem:[#allocation2 + $0xd0] sm:$0xe0] %v928
        %949 = vst [vmem:[#allocation2 + $0xd8] sm:$0xe0] %v929
        %950 = vst [vmem:[#allocation2 + $0xe0] sm:$0xe0] %v930
        %951 = vst [vmem:[#allocation2 + $0xe8] sm:$0xe0] %v931
        %v952 = vld [vmem:[%s200] sm:$0x77]
        %v953 = vld [vmem:[%s200 + $0x8] sm:$0x77]
        %v954 = vld [vmem:[%s200 + $0x10] sm:$0x77]
        %v955 = vld [vmem:[%s200 + $0x18] sm:$0x77]
        %v956 = vld [vmem:[%s200 + $0x20] sm:$0x77]
        %v957 = vld [vmem:[%s200 + $0x28] sm:$0x7]
        %964 = vst [vmem:[#allocation1] ss:$2 sm:$0xff] %v952
        %s965 = scalar_lea.vmem [#allocation1], 16
        %966 = vst [vmem:[%s965] ss:$2 sm:$0xff] %v953
        %s967 = scalar_lea.vmem [#allocation1], 32
        %968 = vst [vmem:[%s967] ss:$2 sm:$0xff] %v954
        %s969 = scalar_lea.vmem [#allocation1], 48
        %970 = vst [vmem:[%s969] ss:$2 sm:$0xff] %v955
        %v971 = vld.sshfl [vmem:[#allocation1] sm:$0xff pattern:$0x75316420]
        %v972 = vld.sshfl [vmem:[#allocation1 + $0x8] sm:$0xff pattern:$0x75316420]
        %v973 = vld.sshfl [vmem:[#allocation1 + $0x10] sm:$0xff pattern:$0x75316420]
        %v974 = vld.sshfl [vmem:[#allocation1 + $0x18] sm:$0xff pattern:$0x75316420]
        %v975 = vld.sshfl [vmem:[#allocation1 + $0x20] sm:$0xff pattern:$0x75316420]
        %v976 = vld.sshfl [vmem:[#allocation1 + $0x28] sm:$0xff pattern:$0x75316420]
        %v977 = vld.sshfl [vmem:[#allocation1 + $0x30] sm:$0xff pattern:$0x75316420]
        %v978 = vld.sshfl [vmem:[#allocation1 + $0x38] sm:$0xff pattern:$0x75316420]
        %979 = vst [vmem:[#allocation1] ss:$2 sm:$0xff] %v956
        %980 = vst [vmem:[%s965] ss:$2 sm:$0xff] %v957
        %v981 = vld.sshfl [vmem:[#allocation1] sm:$0xff pattern:$0x75316420]
        %v982 = vld.sshfl [vmem:[#allocation1 + $0x8] sm:$0xff pattern:$0x75316420]
        %v983 = vld.sshfl [vmem:[#allocation1 + $0x10] sm:$0xff pattern:$0x75316420]
        %984 = vrot.lane.b32.xlu0 %v971, 88
        %v985 = vpop.permute.xlu0 %984
        %986 = vrot.lane.b32.xlu0 %v972, 88
        %v987 = vpop.permute.xlu0 %986
        %988 = vrot.lane.b32.xlu0 %v973, 88
        %v989 = vpop.permute.xlu0 %988
        %990 = vrot.lane.b32.xlu0 %v974, 88
        %v991 = vpop.permute.xlu0 %990
        %992 = vrot.lane.b32.xlu0 %v975, 88
        %v993 = vpop.permute.xlu0 %992
        %994 = vrot.lane.b32.xlu0 %v976, 88
        %v995 = vpop.permute.xlu0 %994
        %996 = vrot.lane.b32.xlu0 %v977, 88
        %v997 = vpop.permute.xlu0 %996
        %998 = vrot.lane.b32.xlu0 %v978, 88
        %v999 = vpop.permute.xlu0 %998
        %1000 = vrot.lane.b32.xlu0 %v981, 88
        %v1001 = vpop.permute.xlu0 %1000
        %1002 = vrot.lane.b32.xlu0 %v982, 88
        %v1003 = vpop.permute.xlu0 %1002
        %1004 = vrot.lane.b32.xlu0 %v983, 88
        %v1005 = vpop.permute.xlu0 %1004
        %vm1006 = vcmask 719872
        %v1007 = vsel %vm1006, %v985, %v987
        %v1008 = vsel %vm1006, %v987, %v989
        %v1009 = vsel %vm1006, %v989, %v991
        %v1010 = vsel %vm1006, %v991, %v993
        %v1011 = vsel %vm1006, %v993, %v995
        %v1012 = vsel %vm1006, %v995, %v997
        %v1013 = vsel %vm1006, %v997, %v999
        %v1014 = vsel %vm1006, %v999, %v1001
        %v1015 = vsel %vm1006, %v1001, %v1003
        %v1016 = vsel %vm1006, %v1003, %v1005
        %1027 = vst [vmem:[#allocation2 + $0xf0] sm:$0x7] %v1007
        %1028 = vst [vmem:[#allocation2 + $0xf8] sm:$0x7] %v1008
        %1029 = vst [vmem:[#allocation2 + $0x100] sm:$0x7] %v1009
        %1030 = vst [vmem:[#allocation2 + $0x108] sm:$0x7] %v1010
        %1031 = vst [vmem:[#allocation2 + $0x110] sm:$0x7] %v1011
        %1032 = vst [vmem:[#allocation2 + $0x118] sm:$0x7] %v1012
        %1033 = vst [vmem:[#allocation2 + $0x120] sm:$0x7] %v1013
        %1034 = vst [vmem:[#allocation2 + $0x128] sm:$0x7] %v1014
        %1035 = vst [vmem:[#allocation2 + $0x130] sm:$0x7] %v1015
        %1036 = vst [vmem:[#allocation2 + $0x138] sm:$0x7] %v1016
        %v1037 = vld [vmem:[%s200] sm:$0x77]
        %v1038 = vld [vmem:[%s200 + $0x8] sm:$0x77]
        %v1039 = vld [vmem:[%s200 + $0x10] sm:$0x77]
        %v1040 = vld [vmem:[%s200 + $0x18] sm:$0x77]
        %v1041 = vld [vmem:[%s200 + $0x20] sm:$0x77]
        %v1042 = vld [vmem:[%s200 + $0x28] sm:$0x7]
        %1049 = vst [vmem:[#allocation1] ss:$2 sm:$0xff] %v1037
        %s1050 = scalar_lea.vmem [#allocation1], 16
        %1051 = vst [vmem:[%s1050] ss:$2 sm:$0xff] %v1038
        %s1052 = scalar_lea.vmem [#allocation1], 32
        %1053 = vst [vmem:[%s1052] ss:$2 sm:$0xff] %v1039
        %s1054 = scalar_lea.vmem [#allocation1], 48
        %1055 = vst [vmem:[%s1054] ss:$2 sm:$0xff] %v1040
        %v1056 = vld.sshfl [vmem:[#allocation1] sm:$0xff pattern:$0x75316420]
        %v1057 = vld.sshfl [vmem:[#allocation1 + $0x8] sm:$0xff pattern:$0x75316420]
        %v1058 = vld.sshfl [vmem:[#allocation1 + $0x10] sm:$0xff pattern:$0x75316420]
        %v1059 = vld.sshfl [vmem:[#allocation1 + $0x18] sm:$0xff pattern:$0x75316420]
        %v1060 = vld.sshfl [vmem:[#allocation1 + $0x20] sm:$0xff pattern:$0x75316420]
        %v1061 = vld.sshfl [vmem:[#allocation1 + $0x28] sm:$0xff pattern:$0x75316420]
        %v1062 = vld.sshfl [vmem:[#allocation1 + $0x30] sm:$0xff pattern:$0x75316420]
        %v1063 = vld.sshfl [vmem:[#allocation1 + $0x38] sm:$0xff pattern:$0x75316420]
        %1064 = vst [vmem:[#allocation1] ss:$2 sm:$0xff] %v1041
        %1065 = vst [vmem:[%s1050] ss:$2 sm:$0xff] %v1042
        %v1066 = vld.sshfl [vmem:[#allocation1] sm:$0xff pattern:$0x75316420]
        %v1067 = vld.sshfl [vmem:[#allocation1 + $0x8] sm:$0xff pattern:$0x75316420]
        %v1068 = vld.sshfl [vmem:[#allocation1 + $0x10] sm:$0xff pattern:$0x75316420]
        %v1069 = vrot.slane %v1056, 5
        %v1070 = vrot.slane %v1057, 5
        %v1071 = vrot.slane %v1058, 5
        %v1072 = vrot.slane %v1059, 5
        %v1073 = vrot.slane %v1060, 5
        %v1074 = vrot.slane %v1061, 5
        %v1075 = vrot.slane %v1062, 5
        %v1076 = vrot.slane %v1063, 5
        %v1077 = vrot.slane %v1066, 5
        %v1078 = vrot.slane %v1067, 5
        %v1079 = vrot.slane %v1068, 5
        %1080 = vrot.lane.b32.xlu0 %v1069, 87
        %v1081 = vpop.permute.xlu0 %1080
        %1082 = vrot.lane.b32.xlu0 %v1070, 87
        %v1083 = vpop.permute.xlu0 %1082
        %1084 = vrot.lane.b32.xlu0 %v1071, 87
        %v1085 = vpop.permute.xlu0 %1084
        %1086 = vrot.lane.b32.xlu0 %v1072, 87
        %v1087 = vpop.permute.xlu0 %1086
        %1088 = vrot.lane.b32.xlu0 %v1073, 87
        %v1089 = vpop.permute.xlu0 %1088
        %1090 = vrot.lane.b32.xlu0 %v1074, 87
        %v1091 = vpop.permute.xlu0 %1090
        %1092 = vrot.lane.b32.xlu0 %v1075, 87
        %v1093 = vpop.permute.xlu0 %1092
        %1094 = vrot.lane.b32.xlu0 %v1076, 87
        %v1095 = vpop.permute.xlu0 %1094
        %1096 = vrot.lane.b32.xlu0 %v1077, 87
        %v1097 = vpop.permute.xlu0 %1096
        %1098 = vrot.lane.b32.xlu0 %v1078, 87
        %v1099 = vpop.permute.xlu0 %1098
        %1100 = vrot.lane.b32.xlu0 %v1079, 87
        %v1101 = vpop.permute.xlu0 %1100
        %vm1102 = vcmask 711680
        %v1103 = vsel %vm1102, %v1081, %v1083
        %v1104 = vsel %vm1102, %v1083, %v1085
        %v1105 = vsel %vm1102, %v1085, %v1087
        %v1106 = vsel %vm1102, %v1087, %v1089
        %v1107 = vsel %vm1102, %v1089, %v1091
        %v1108 = vsel %vm1102, %v1091, %v1093
        %v1109 = vsel %vm1102, %v1093, %v1095
        %v1110 = vsel %vm1102, %v1095, %v1097
        %v1111 = vsel %vm1102, %v1097, %v1099
        %v1112 = vsel %vm1102, %v1099, %v1101
        %1123 = vst [vmem:[#allocation2 + $0xf0] sm:$0x38] %v1103
        %1124 = vst [vmem:[#allocation2 + $0xf8] sm:$0x38] %v1104
        %1125 = vst [vmem:[#allocation2 + $0x100] sm:$0x38] %v1105
        %1126 = vst [vmem:[#allocation2 + $0x108] sm:$0x38] %v1106
        %1127 = vst [vmem:[#allocation2 + $0x110] sm:$0x38] %v1107
        %1128 = vst [vmem:[#allocation2 + $0x118] sm:$0x38] %v1108
        %1129 = vst [vmem:[#allocation2 + $0x120] sm:$0x38] %v1109
        %1130 = vst [vmem:[#allocation2 + $0x128] sm:$0x38] %v1110
        %1131 = vst [vmem:[#allocation2 + $0x130] sm:$0x38] %v1111
        %1132 = vst [vmem:[#allocation2 + $0x138] sm:$0x38] %v1112
        %v1133 = vld [vmem:[%s200] sm:$0x77]
        %v1134 = vld [vmem:[%s200 + $0x8] sm:$0x77]
        %v1135 = vld [vmem:[%s200 + $0x10] sm:$0x77]
        %v1136 = vld [vmem:[%s200 + $0x18] sm:$0x77]
        %v1137 = vld [vmem:[%s200 + $0x20] sm:$0x77]
        %v1138 = vld [vmem:[%s200 + $0x28] sm:$0x7]
        %1145 = vst [vmem:[#allocation1] ss:$2 sm:$0xff] %v1133
        %s1146 = scalar_lea.vmem [#allocation1], 16
        %1147 = vst [vmem:[%s1146] ss:$2 sm:$0xff] %v1134
        %s1148 = scalar_lea.vmem [#allocation1], 32
        %1149 = vst [vmem:[%s1148] ss:$2 sm:$0xff] %v1135
        %s1150 = scalar_lea.vmem [#allocation1], 48
        %1151 = vst [vmem:[%s1150] ss:$2 sm:$0xff] %v1136
        %v1152 = vld.sshfl [vmem:[#allocation1] sm:$0xff pattern:$0x75316420]
        %v1153 = vld.sshfl [vmem:[#allocation1 + $0x8] sm:$0xff pattern:$0x75316420]
        %v1154 = vld.sshfl [vmem:[#allocation1 + $0x10] sm:$0xff pattern:$0x75316420]
        %v1155 = vld.sshfl [vmem:[#allocation1 + $0x18] sm:$0xff pattern:$0x75316420]
        %v1156 = vld.sshfl [vmem:[#allocation1 + $0x20] sm:$0xff pattern:$0x75316420]
        %v1157 = vld.sshfl [vmem:[#allocation1 + $0x28] sm:$0xff pattern:$0x75316420]
        %v1158 = vld.sshfl [vmem:[#allocation1 + $0x30] sm:$0xff pattern:$0x75316420]
        %v1159 = vld.sshfl [vmem:[#allocation1 + $0x38] sm:$0xff pattern:$0x75316420]
        %1160 = vst [vmem:[#allocation1] ss:$2 sm:$0xff] %v1137
        %1161 = vst [vmem:[%s1146] ss:$2 sm:$0xff] %v1138
        %v1162 = vld.sshfl [vmem:[#allocation1] sm:$0xff pattern:$0x75316420]
        %v1163 = vld.sshfl [vmem:[#allocation1 + $0x8] sm:$0xff pattern:$0x75316420]
        %v1164 = vld.sshfl [vmem:[#allocation1 + $0x10] sm:$0xff pattern:$0x75316420]
        %v1165 = vrot.slane %v1152, 2
        %v1166 = vrot.slane %v1153, 2
        %v1167 = vrot.slane %v1154, 2
        %v1168 = vrot.slane %v1155, 2
        %v1169 = vrot.slane %v1156, 2
        %v1170 = vrot.slane %v1157, 2
        %v1171 = vrot.slane %v1158, 2
        %v1172 = vrot.slane %v1159, 2
        %v1173 = vrot.slane %v1162, 2
        %v1174 = vrot.slane %v1163, 2
        %v1175 = vrot.slane %v1164, 2
        %1176 = vrot.lane.b32.xlu0 %v1165, 54
        %v1177 = vpop.permute.xlu0 %1176
        %1178 = vrot.lane.b32.xlu0 %v1166, 54
        %v1179 = vpop.permute.xlu0 %1178
        %1180 = vrot.lane.b32.xlu0 %v1167, 54
        %v1181 = vpop.permute.xlu0 %1180
        %1182 = vrot.lane.b32.xlu0 %v1168, 54
        %v1183 = vpop.permute.xlu0 %1182
        %1184 = vrot.lane.b32.xlu0 %v1169, 54
        %v1185 = vpop.permute.xlu0 %1184
        %1186 = vrot.lane.b32.xlu0 %v1170, 54
        %v1187 = vpop.permute.xlu0 %1186
        %1188 = vrot.lane.b32.xlu0 %v1171, 54
        %v1189 = vpop.permute.xlu0 %1188
        %1190 = vrot.lane.b32.xlu0 %v1172, 54
        %v1191 = vpop.permute.xlu0 %1190
        %1192 = vrot.lane.b32.xlu0 %v1173, 54
        %v1193 = vpop.permute.xlu0 %1192
        %1194 = vrot.lane.b32.xlu0 %v1174, 54
        %v1195 = vpop.permute.xlu0 %1194
        %1196 = vrot.lane.b32.xlu0 %v1175, 54
        %v1197 = vpop.permute.xlu0 %1196
        %vm1198 = vcmask 441344
        %v1199 = vsel %vm1198, %v1177, %v1179
        %v1200 = vsel %vm1198, %v1179, %v1181
        %v1201 = vsel %vm1198, %v1181, %v1183
        %v1202 = vsel %vm1198, %v1183, %v1185
        %v1203 = vsel %vm1198, %v1185, %v1187
        %v1204 = vsel %vm1198, %v1187, %v1189
        %v1205 = vsel %vm1198, %v1189, %v1191
        %v1206 = vsel %vm1198, %v1191, %v1193
        %v1207 = vsel %vm1198, %v1193, %v1195
        %v1208 = vsel %vm1198, %v1195, %v1197
        %1219 = vst [vmem:[#allocation2 + $0xf0] sm:$0xc0] %v1199
        %1220 = vst [vmem:[#allocation2 + $0xf8] sm:$0xc0] %v1200
        %1221 = vst [vmem:[#allocation2 + $0x100] sm:$0xc0] %v1201
        %1222 = vst [vmem:[#allocation2 + $0x108] sm:$0xc0] %v1202
        %1223 = vst [vmem:[#allocation2 + $0x110] sm:$0xc0] %v1203
        %1224 = vst [vmem:[#allocation2 + $0x118] sm:$0xc0] %v1204
        %1225 = vst [vmem:[#allocation2 + $0x120] sm:$0xc0] %v1205
        %1226 = vst [vmem:[#allocation2 + $0x128] sm:$0xc0] %v1206
        %1227 = vst [vmem:[#allocation2 + $0x130] sm:$0xc0] %v1207
        %1228 = vst [vmem:[#allocation2 + $0x138] sm:$0xc0] %v1208
        %1229 = vst [vmem:[#allocation2 + $0x140] sm:$0x1] %v1199
        %1230 = vst [vmem:[#allocation2 + $0x148] sm:$0x1] %v1200
        %1231 = vst [vmem:[#allocation2 + $0x150] sm:$0x1] %v1201
        %1232 = vst [vmem:[#allocation2 + $0x158] sm:$0x1] %v1202
        %1233 = vst [vmem:[#allocation2 + $0x160] sm:$0x1] %v1203
        %1234 = vst [vmem:[#allocation2 + $0x168] sm:$0x1] %v1204
        %1235 = vst [vmem:[#allocation2 + $0x170] sm:$0x1] %v1205
        %1236 = vst [vmem:[#allocation2 + $0x178] sm:$0x1] %v1206
        %1237 = vst [vmem:[#allocation2 + $0x180] sm:$0x1] %v1207
        %1238 = vst [vmem:[#allocation2 + $0x188] sm:$0x1] %v1208
        %v1239 = vld [vmem:[%s200] sm:$0x77]
        %v1240 = vld [vmem:[%s200 + $0x8] sm:$0x77]
        %v1241 = vld [vmem:[%s200 + $0x10] sm:$0x77]
        %v1242 = vld [vmem:[%s200 + $0x18] sm:$0x77]
        %v1243 = vld [vmem:[%s200 + $0x20] sm:$0x77]
        %v1244 = vld [vmem:[%s200 + $0x28] sm:$0x7]
        %1251 = vst [vmem:[#allocation1] ss:$2 sm:$0xff] %v1239
        %s1252 = scalar_lea.vmem [#allocation1], 16
        %1253 = vst [vmem:[%s1252] ss:$2 sm:$0xff] %v1240
        %s1254 = scalar_lea.vmem [#allocation1], 32
        %1255 = vst [vmem:[%s1254] ss:$2 sm:$0xff] %v1241
        %s1256 = scalar_lea.vmem [#allocation1], 48
        %1257 = vst [vmem:[%s1256] ss:$2 sm:$0xff] %v1242
        %v1258 = vld.sshfl [vmem:[#allocation1] sm:$0xff pattern:$0x75316420]
        %v1259 = vld.sshfl [vmem:[#allocation1 + $0x8] sm:$0xff pattern:$0x75316420]
        %v1260 = vld.sshfl [vmem:[#allocation1 + $0x10] sm:$0xff pattern:$0x75316420]
        %v1261 = vld.sshfl [vmem:[#allocation1 + $0x18] sm:$0xff pattern:$0x75316420]
        %v1262 = vld.sshfl [vmem:[#allocation1 + $0x20] sm:$0xff pattern:$0x75316420]
        %v1263 = vld.sshfl [vmem:[#allocation1 + $0x28] sm:$0xff pattern:$0x75316420]
        %v1264 = vld.sshfl [vmem:[#allocation1 + $0x30] sm:$0xff pattern:$0x75316420]
        %v1265 = vld.sshfl [vmem:[#allocation1 + $0x38] sm:$0xff pattern:$0x75316420]
        %1266 = vst [vmem:[#allocation1] ss:$2 sm:$0xff] %v1243
        %1267 = vst [vmem:[%s1252] ss:$2 sm:$0xff] %v1244
        %v1268 = vld.sshfl [vmem:[#allocation1] sm:$0xff pattern:$0x75316420]
        %v1269 = vld.sshfl [vmem:[#allocation1 + $0x8] sm:$0xff pattern:$0x75316420]
        %v1270 = vld.sshfl [vmem:[#allocation1 + $0x10] sm:$0xff pattern:$0x75316420]
        %v1271 = vrot.slane %v1258, 7
        %v1272 = vrot.slane %v1259, 7
        %v1273 = vrot.slane %v1260, 7
        %v1274 = vrot.slane %v1261, 7
        %v1275 = vrot.slane %v1262, 7
        %v1276 = vrot.slane %v1263, 7
        %v1277 = vrot.slane %v1264, 7
        %v1278 = vrot.slane %v1265, 7
        %v1279 = vrot.slane %v1268, 7
        %v1280 = vrot.slane %v1269, 7
        %v1281 = vrot.slane %v1270, 7
        %1282 = vrot.lane.b32.xlu0 %v1271, 53
        %v1283 = vpop.permute.xlu0 %1282
        %1284 = vrot.lane.b32.xlu0 %v1272, 53
        %v1285 = vpop.permute.xlu0 %1284
        %1286 = vrot.lane.b32.xlu0 %v1273, 53
        %v1287 = vpop.permute.xlu0 %1286
        %1288 = vrot.lane.b32.xlu0 %v1274, 53
        %v1289 = vpop.permute.xlu0 %1288
        %1290 = vrot.lane.b32.xlu0 %v1275, 53
        %v1291 = vpop.permute.xlu0 %1290
        %1292 = vrot.lane.b32.xlu0 %v1276, 53
        %v1293 = vpop.permute.xlu0 %1292
        %1294 = vrot.lane.b32.xlu0 %v1277, 53
        %v1295 = vpop.permute.xlu0 %1294
        %1296 = vrot.lane.b32.xlu0 %v1278, 53
        %v1297 = vpop.permute.xlu0 %1296
        %1298 = vrot.lane.b32.xlu0 %v1279, 53
        %v1299 = vpop.permute.xlu0 %1298
        %1300 = vrot.lane.b32.xlu0 %v1280, 53
        %v1301 = vpop.permute.xlu0 %1300
        %1302 = vrot.lane.b32.xlu0 %v1281, 53
        %v1303 = vpop.permute.xlu0 %1302
        %vm1304 = vcmask 433152
        %v1305 = vsel %vm1304, %v1283, %v1285
        %v1306 = vsel %vm1304, %v1285, %v1287
        %v1307 = vsel %vm1304, %v1287, %v1289
        %v1308 = vsel %vm1304, %v1289, %v1291
        %v1309 = vsel %vm1304, %v1291, %v1293
        %v1310 = vsel %vm1304, %v1293, %v1295
        %v1311 = vsel %vm1304, %v1295, %v1297
        %v1312 = vsel %vm1304, %v1297, %v1299
        %v1313 = vsel %vm1304, %v1299, %v1301
        %v1314 = vsel %vm1304, %v1301, %v1303
        %1325 = vst [vmem:[#allocation2 + $0x140] sm:$0xe] %v1305
        %1326 = vst [vmem:[#allocation2 + $0x148] sm:$0xe] %v1306
        %1327 = vst [vmem:[#allocation2 + $0x150] sm:$0xe] %v1307
        %1328 = vst [vmem:[#allocation2 + $0x158] sm:$0xe] %v1308
        %1329 = vst [vmem:[#allocation2 + $0x160] sm:$0xe] %v1309
        %1330 = vst [vmem:[#allocation2 + $0x168] sm:$0xe] %v1310
        %1331 = vst [vmem:[#allocation2 + $0x170] sm:$0xe] %v1311
        %1332 = vst [vmem:[#allocation2 + $0x178] sm:$0xe] %v1312
        %1333 = vst [vmem:[#allocation2 + $0x180] sm:$0xe] %v1313
        %1334 = vst [vmem:[#allocation2 + $0x188] sm:$0xe] %v1314
        %v1335 = vld [vmem:[%s200] sm:$0x77]
        %v1336 = vld [vmem:[%s200 + $0x8] sm:$0x77]
        %v1337 = vld [vmem:[%s200 + $0x10] sm:$0x77]
        %v1338 = vld [vmem:[%s200 + $0x18] sm:$0x77]
        %v1339 = vld [vmem:[%s200 + $0x20] sm:$0x77]
        %v1340 = vld [vmem:[%s200 + $0x28] sm:$0x7]
        %s1347 = scalar_lea.vmem [#allocation1], 1
        %1348 = vst [vmem:[%s1347] ss:$2 sm:$0xff] %v1335
        %s1349 = scalar_lea.vmem [#allocation1], 17
        %1350 = vst [vmem:[%s1349] ss:$2 sm:$0xff] %v1336
        %s1351 = scalar_lea.vmem [#allocation1], 33
        %1352 = vst [vmem:[%s1351] ss:$2 sm:$0xff] %v1337
        %s1353 = scalar_lea.vmem [#allocation1], 49
        %1354 = vst [vmem:[%s1353] ss:$2 sm:$0xff] %v1338
        %v1355 = vld.sshfl [vmem:[#allocation1] sm:$0xff pattern:$0x75316420]
        %v1356 = vld.sshfl [vmem:[#allocation1 + $0x8] sm:$0xff pattern:$0x75316420]
        %v1357 = vld.sshfl [vmem:[#allocation1 + $0x10] sm:$0xff pattern:$0x75316420]
        %v1358 = vld.sshfl [vmem:[#allocation1 + $0x18] sm:$0xff pattern:$0x75316420]
        %v1359 = vld.sshfl [vmem:[#allocation1 + $0x20] sm:$0xff pattern:$0x75316420]
        %v1360 = vld.sshfl [vmem:[#allocation1 + $0x28] sm:$0xff pattern:$0x75316420]
        %v1361 = vld.sshfl [vmem:[#allocation1 + $0x30] sm:$0xff pattern:$0x75316420]
        %v1362 = vld.sshfl [vmem:[#allocation1 + $0x38] sm:$0xff pattern:$0x75316420]
        %1363 = vst [vmem:[%s1347] ss:$2 sm:$0xff] %v1339
        %1364 = vst [vmem:[%s1349] ss:$2 sm:$0xff] %v1340
        %v1365 = vld.sshfl [vmem:[#allocation1] sm:$0xff pattern:$0x75316420]
        %v1366 = vld.sshfl [vmem:[#allocation1 + $0x8] sm:$0xff pattern:$0x75316420]
        %v1367 = vld.sshfl [vmem:[#allocation1 + $0x10] sm:$0xff pattern:$0x75316420]
        %1368 = vrot.lane.b32.xlu0 %v1355, 52
        %v1369 = vpop.permute.xlu0 %1368
        %1370 = vrot.lane.b32.xlu0 %v1356, 52
        %v1371 = vpop.permute.xlu0 %1370
        %1372 = vrot.lane.b32.xlu0 %v1357, 52
        %v1373 = vpop.permute.xlu0 %1372
        %1374 = vrot.lane.b32.xlu0 %v1358, 52
        %v1375 = vpop.permute.xlu0 %1374
        %1376 = vrot.lane.b32.xlu0 %v1359, 52
        %v1377 = vpop.permute.xlu0 %1376
        %1378 = vrot.lane.b32.xlu0 %v1360, 52
        %v1379 = vpop.permute.xlu0 %1378
        %1380 = vrot.lane.b32.xlu0 %v1361, 52
        %v1381 = vpop.permute.xlu0 %1380
        %1382 = vrot.lane.b32.xlu0 %v1362, 52
        %v1383 = vpop.permute.xlu0 %1382
        %1384 = vrot.lane.b32.xlu0 %v1365, 52
        %v1385 = vpop.permute.xlu0 %1384
        %1386 = vrot.lane.b32.xlu0 %v1366, 52
        %v1387 = vpop.permute.xlu0 %1386
        %1388 = vrot.lane.b32.xlu0 %v1367, 52
        %v1389 = vpop.permute.xlu0 %1388
        %vm1390 = vcmask 424960
        %v1391 = vsel %vm1390, %v1369, %v1371
        %v1392 = vsel %vm1390, %v1371, %v1373
        %v1393 = vsel %vm1390, %v1373, %v1375
        %v1394 = vsel %vm1390, %v1375, %v1377
        %v1395 = vsel %vm1390, %v1377, %v1379
        %v1396 = vsel %vm1390, %v1379, %v1381
        %v1397 = vsel %vm1390, %v1381, %v1383
        %v1398 = vsel %vm1390, %v1383, %v1385
        %v1399 = vsel %vm1390, %v1385, %v1387
        %v1400 = vsel %vm1390, %v1387, %v1389
        %1411 = vst [vmem:[#allocation2 + $0x140] sm:$0x70] %v1391
        %1412 = vst [vmem:[#allocation2 + $0x148] sm:$0x70] %v1392
        %1413 = vst [vmem:[#allocation2 + $0x150] sm:$0x70] %v1393
        %1414 = vst [vmem:[#allocation2 + $0x158] sm:$0x70] %v1394
        %1415 = vst [vmem:[#allocation2 + $0x160] sm:$0x70] %v1395
        %1416 = vst [vmem:[#allocation2 + $0x168] sm:$0x70] %v1396
        %1417 = vst [vmem:[#allocation2 + $0x170] sm:$0x70] %v1397
        %1418 = vst [vmem:[#allocation2 + $0x178] sm:$0x70] %v1398
        %1419 = vst [vmem:[#allocation2 + $0x180] sm:$0x70] %v1399
        %1420 = vst [vmem:[#allocation2 + $0x188] sm:$0x70] %v1400
        %v1421 = vld [vmem:[%s200] sm:$0x77]
        %v1422 = vld [vmem:[%s200 + $0x8] sm:$0x77]
        %v1423 = vld [vmem:[%s200 + $0x10] sm:$0x77]
        %v1424 = vld [vmem:[%s200 + $0x18] sm:$0x77]
        %v1425 = vld [vmem:[%s200 + $0x20] sm:$0x77]
        %v1426 = vld [vmem:[%s200 + $0x28] sm:$0x7]
        %1433 = vst [vmem:[#allocation1] ss:$2 sm:$0xff] %v1421
        %s1434 = scalar_lea.vmem [#allocation1], 16
        %1435 = vst [vmem:[%s1434] ss:$2 sm:$0xff] %v1422
        %s1436 = scalar_lea.vmem [#allocation1], 32
        %1437 = vst [vmem:[%s1436] ss:$2 sm:$0xff] %v1423
        %s1438 = scalar_lea.vmem [#allocation1], 48
        %1439 = vst [vmem:[%s1438] ss:$2 sm:$0xff] %v1424
        %v1440 = vld.sshfl [vmem:[#allocation1] sm:$0xff pattern:$0x75316420]
        %v1441 = vld.sshfl [vmem:[#allocation1 + $0x8] sm:$0xff pattern:$0x75316420]
        %v1442 = vld.sshfl [vmem:[#allocation1 + $0x10] sm:$0xff pattern:$0x75316420]
        %v1443 = vld.sshfl [vmem:[#allocation1 + $0x18] sm:$0xff pattern:$0x75316420]
        %v1444 = vld.sshfl [vmem:[#allocation1 + $0x20] sm:$0xff pattern:$0x75316420]
        %v1445 = vld.sshfl [vmem:[#allocation1 + $0x28] sm:$0xff pattern:$0x75316420]
        %v1446 = vld.sshfl [vmem:[#allocation1 + $0x30] sm:$0xff pattern:$0x75316420]
        %v1447 = vld.sshfl [vmem:[#allocation1 + $0x38] sm:$0xff pattern:$0x75316420]
        %1448 = vst [vmem:[#allocation1] ss:$2 sm:$0xff] %v1425
        %1449 = vst [vmem:[%s1434] ss:$2 sm:$0xff] %v1426
        %v1450 = vld.sshfl [vmem:[#allocation1] sm:$0xff pattern:$0x75316420]
        %v1451 = vld.sshfl [vmem:[#allocation1 + $0x8] sm:$0xff pattern:$0x75316420]
        %v1452 = vld.sshfl [vmem:[#allocation1 + $0x10] sm:$0xff pattern:$0x75316420]
        %v1453 = vrot.slane %v1440, 1
        %v1454 = vrot.slane %v1441, 1
        %v1455 = vrot.slane %v1442, 1
        %v1456 = vrot.slane %v1443, 1
        %v1457 = vrot.slane %v1444, 1
        %v1458 = vrot.slane %v1445, 1
        %v1459 = vrot.slane %v1446, 1
        %v1460 = vrot.slane %v1447, 1
        %v1461 = vrot.slane %v1450, 1
        %v1462 = vrot.slane %v1451, 1
        %v1463 = vrot.slane %v1452, 1
        %1464 = vrot.lane.b32.xlu0 %v1453, 51
        %v1465 = vpop.permute.xlu0 %1464
        %1466 = vrot.lane.b32.xlu0 %v1454, 51
        %v1467 = vpop.permute.xlu0 %1466
        %1468 = vrot.lane.b32.xlu0 %v1455, 51
        %v1469 = vpop.permute.xlu0 %1468
        %1470 = vrot.lane.b32.xlu0 %v1456, 51
        %v1471 = vpop.permute.xlu0 %1470
        %1472 = vrot.lane.b32.xlu0 %v1457, 51
        %v1473 = vpop.permute.xlu0 %1472
        %1474 = vrot.lane.b32.xlu0 %v1458, 51
        %v1475 = vpop.permute.xlu0 %1474
        %1476 = vrot.lane.b32.xlu0 %v1459, 51
        %v1477 = vpop.permute.xlu0 %1476
        %1478 = vrot.lane.b32.xlu0 %v1460, 51
        %v1479 = vpop.permute.xlu0 %1478
        %1480 = vrot.lane.b32.xlu0 %v1461, 51
        %v1481 = vpop.permute.xlu0 %1480
        %1482 = vrot.lane.b32.xlu0 %v1462, 51
        %v1483 = vpop.permute.xlu0 %1482
        %1484 = vrot.lane.b32.xlu0 %v1463, 51
        %v1485 = vpop.permute.xlu0 %1484
        %vm1486 = vcmask 416768
        %v1487 = vsel %vm1486, %v1465, %v1467
        %v1488 = vsel %vm1486, %v1467, %v1469
        %v1489 = vsel %vm1486, %v1469, %v1471
        %v1490 = vsel %vm1486, %v1471, %v1473
        %v1491 = vsel %vm1486, %v1473, %v1475
        %v1492 = vsel %vm1486, %v1475, %v1477
        %v1493 = vsel %vm1486, %v1477, %v1479
        %v1494 = vsel %vm1486, %v1479, %v1481
        %v1495 = vsel %vm1486, %v1481, %v1483
        %v1496 = vsel %vm1486, %v1483, %v1485
        %1507 = vst [vmem:[#allocation2 + $0x140] sm:$0x80] %v1487
        %1508 = vst [vmem:[#allocation2 + $0x148] sm:$0x80] %v1488
        %1509 = vst [vmem:[#allocation2 + $0x150] sm:$0x80] %v1489
        %1510 = vst [vmem:[#allocation2 + $0x158] sm:$0x80] %v1490
        %1511 = vst [vmem:[#allocation2 + $0x160] sm:$0x80] %v1491
        %1512 = vst [vmem:[#allocation2 + $0x168] sm:$0x80] %v1492
        %1513 = vst [vmem:[#allocation2 + $0x170] sm:$0x80] %v1493
        %1514 = vst [vmem:[#allocation2 + $0x178] sm:$0x80] %v1494
        %1515 = vst [vmem:[#allocation2 + $0x180] sm:$0x80] %v1495
        %1516 = vst [vmem:[#allocation2 + $0x188] sm:$0x80] %v1496
        %1517 = vst [vmem:[#allocation2 + $0x190] sm:$0x3] %v1487
        %1518 = vst [vmem:[#allocation2 + $0x198] sm:$0x3] %v1488
        %1519 = vst [vmem:[#allocation2 + $0x1a0] sm:$0x3] %v1489
        %1520 = vst [vmem:[#allocation2 + $0x1a8] sm:$0x3] %v1490
        %1521 = vst [vmem:[#allocation2 + $0x1b0] sm:$0x3] %v1491
        %1522 = vst [vmem:[#allocation2 + $0x1b8] sm:$0x3] %v1492
        %1523 = vst [vmem:[#allocation2 + $0x1c0] sm:$0x3] %v1493
        %1524 = vst [vmem:[#allocation2 + $0x1c8] sm:$0x3] %v1494
        %1525 = vst [vmem:[#allocation2 + $0x1d0] sm:$0x3] %v1495
        %1526 = vst [vmem:[#allocation2 + $0x1d8] sm:$0x3] %v1496
        %v1527 = vld [vmem:[%s200] sm:$0x77]
        %v1528 = vld [vmem:[%s200 + $0x8] sm:$0x77]
        %v1529 = vld [vmem:[%s200 + $0x10] sm:$0x77]
        %v1530 = vld [vmem:[%s200 + $0x18] sm:$0x77]
        %v1531 = vld [vmem:[%s200 + $0x20] sm:$0x77]
        %v1532 = vld [vmem:[%s200 + $0x28] sm:$0x7]
        %1539 = vst [vmem:[#allocation1] ss:$2 sm:$0xff] %v1527
        %s1540 = scalar_lea.vmem [#allocation1], 16
        %1541 = vst [vmem:[%s1540] ss:$2 sm:$0xff] %v1528
        %s1542 = scalar_lea.vmem [#allocation1], 32
        %1543 = vst [vmem:[%s1542] ss:$2 sm:$0xff] %v1529
        %s1544 = scalar_lea.vmem [#allocation1], 48
        %1545 = vst [vmem:[%s1544] ss:$2 sm:$0xff] %v1530
        %v1546 = vld.sshfl [vmem:[#allocation1] sm:$0xff pattern:$0x75316420]
        %v1547 = vld.sshfl [vmem:[#allocation1 + $0x8] sm:$0xff pattern:$0x75316420]
        %v1548 = vld.sshfl [vmem:[#allocation1 + $0x10] sm:$0xff pattern:$0x75316420]
        %v1549 = vld.sshfl [vmem:[#allocation1 + $0x18] sm:$0xff pattern:$0x75316420]
        %v1550 = vld.sshfl [vmem:[#allocation1 + $0x20] sm:$0xff pattern:$0x75316420]
        %v1551 = vld.sshfl [vmem:[#allocation1 + $0x28] sm:$0xff pattern:$0x75316420]
        %v1552 = vld.sshfl [vmem:[#allocation1 + $0x30] sm:$0xff pattern:$0x75316420]
        %v1553 = vld.sshfl [vmem:[#allocation1 + $0x38] sm:$0xff pattern:$0x75316420]
        %1554 = vst [vmem:[#allocation1] ss:$2 sm:$0xff] %v1531
        %1555 = vst [vmem:[%s1540] ss:$2 sm:$0xff] %v1532
        %v1556 = vld.sshfl [vmem:[#allocation1] sm:$0xff pattern:$0x75316420]
        %v1557 = vld.sshfl [vmem:[#allocation1 + $0x8] sm:$0xff pattern:$0x75316420]
        %v1558 = vld.sshfl [vmem:[#allocation1 + $0x10] sm:$0xff pattern:$0x75316420]
        %v1559 = vrot.slane %v1546, 6
        %v1560 = vrot.slane %v1547, 6
        %v1561 = vrot.slane %v1548, 6
        %v1562 = vrot.slane %v1549, 6
        %v1563 = vrot.slane %v1550, 6
        %v1564 = vrot.slane %v1551, 6
        %v1565 = vrot.slane %v1552, 6
        %v1566 = vrot.slane %v1553, 6
        %v1567 = vrot.slane %v1556, 6
        %v1568 = vrot.slane %v1557, 6
        %v1569 = vrot.slane %v1558, 6
        %1570 = vrot.lane.b32.xlu0 %v1559, 50
        %v1571 = vpop.permute.xlu0 %1570
        %1572 = vrot.lane.b32.xlu0 %v1560, 50
        %v1573 = vpop.permute.xlu0 %1572
        %1574 = vrot.lane.b32.xlu0 %v1561, 50
        %v1575 = vpop.permute.xlu0 %1574
        %1576 = vrot.lane.b32.xlu0 %v1562, 50
        %v1577 = vpop.permute.xlu0 %1576
        %1578 = vrot.lane.b32.xlu0 %v1563, 50
        %v1579 = vpop.permute.xlu0 %1578
        %1580 = vrot.lane.b32.xlu0 %v1564, 50
        %v1581 = vpop.permute.xlu0 %1580
        %1582 = vrot.lane.b32.xlu0 %v1565, 50
        %v1583 = vpop.permute.xlu0 %1582
        %1584 = vrot.lane.b32.xlu0 %v1566, 50
        %v1585 = vpop.permute.xlu0 %1584
        %1586 = vrot.lane.b32.xlu0 %v1567, 50
        %v1587 = vpop.permute.xlu0 %1586
        %1588 = vrot.lane.b32.xlu0 %v1568, 50
        %v1589 = vpop.permute.xlu0 %1588
        %1590 = vrot.lane.b32.xlu0 %v1569, 50
        %v1591 = vpop.permute.xlu0 %1590
        %vm1592 = vcmask 408576
        %v1593 = vsel %vm1592, %v1571, %v1573
        %v1594 = vsel %vm1592, %v1573, %v1575
        %v1595 = vsel %vm1592, %v1575, %v1577
        %v1596 = vsel %vm1592, %v1577, %v1579
        %v1597 = vsel %vm1592, %v1579, %v1581
        %v1598 = vsel %vm1592, %v1581, %v1583
        %v1599 = vsel %vm1592, %v1583, %v1585
        %v1600 = vsel %vm1592, %v1585, %v1587
        %v1601 = vsel %vm1592, %v1587, %v1589
        %v1602 = vsel %vm1592, %v1589, %v1591
        %1613 = vst [vmem:[#allocation2 + $0x190] sm:$0x1c] %v1593
        %1614 = vst [vmem:[#allocation2 + $0x198] sm:$0x1c] %v1594
        %1615 = vst [vmem:[#allocation2 + $0x1a0] sm:$0x1c] %v1595
        %1616 = vst [vmem:[#allocation2 + $0x1a8] sm:$0x1c] %v1596
        %1617 = vst [vmem:[#allocation2 + $0x1b0] sm:$0x1c] %v1597
        %1618 = vst [vmem:[#allocation2 + $0x1b8] sm:$0x1c] %v1598
        %1619 = vst [vmem:[#allocation2 + $0x1c0] sm:$0x1c] %v1599
        %1620 = vst [vmem:[#allocation2 + $0x1c8] sm:$0x1c] %v1600
        %1621 = vst [vmem:[#allocation2 + $0x1d0] sm:$0x1c] %v1601
        %1622 = vst [vmem:[#allocation2 + $0x1d8] sm:$0x1c] %v1602
        %v1623 = vld [vmem:[%s200] sm:$0x77]
        %v1624 = vld [vmem:[%s200 + $0x8] sm:$0x77]
        %v1625 = vld [vmem:[%s200 + $0x10] sm:$0x77]
        %v1626 = vld [vmem:[%s200 + $0x18] sm:$0x77]
        %v1627 = vld [vmem:[%s200 + $0x20] sm:$0x77]
        %v1628 = vld [vmem:[%s200 + $0x28] sm:$0x7]
        %1635 = vst [vmem:[#allocation1] ss:$2 sm:$0xff] %v1623
        %s1636 = scalar_lea.vmem [#allocation1], 16
        %1637 = vst [vmem:[%s1636] ss:$2 sm:$0xff] %v1624
        %s1638 = scalar_lea.vmem [#allocation1], 32
        %1639 = vst [vmem:[%s1638] ss:$2 sm:$0xff] %v1625
        %s1640 = scalar_lea.vmem [#allocation1], 48
        %1641 = vst [vmem:[%s1640] ss:$2 sm:$0xff] %v1626
        %v1642 = vld.sshfl [vmem:[#allocation1] sm:$0xff pattern:$0x75316420]
        %v1643 = vld.sshfl [vmem:[#allocation1 + $0x8] sm:$0xff pattern:$0x75316420]
        %v1644 = vld.sshfl [vmem:[#allocation1 + $0x10] sm:$0xff pattern:$0x75316420]
        %v1645 = vld.sshfl [vmem:[#allocation1 + $0x18] sm:$0xff pattern:$0x75316420]
        %v1646 = vld.sshfl [vmem:[#allocation1 + $0x20] sm:$0xff pattern:$0x75316420]
        %v1647 = vld.sshfl [vmem:[#allocation1 + $0x28] sm:$0xff pattern:$0x75316420]
        %v1648 = vld.sshfl [vmem:[#allocation1 + $0x30] sm:$0xff pattern:$0x75316420]
        %v1649 = vld.sshfl [vmem:[#allocation1 + $0x38] sm:$0xff pattern:$0x75316420]
        %1650 = vst [vmem:[#allocation1] ss:$2 sm:$0xff] %v1627
        %1651 = vst [vmem:[%s1636] ss:$2 sm:$0xff] %v1628
        %v1652 = vld.sshfl [vmem:[#allocation1] sm:$0xff pattern:$0x75316420]
        %v1653 = vld.sshfl [vmem:[#allocation1 + $0x8] sm:$0xff pattern:$0x75316420]
        %v1654 = vld.sshfl [vmem:[#allocation1 + $0x10] sm:$0xff pattern:$0x75316420]
        %v1655 = vrot.slane %v1642, 3
        %v1656 = vrot.slane %v1643, 3
        %v1657 = vrot.slane %v1644, 3
        %v1658 = vrot.slane %v1645, 3
        %v1659 = vrot.slane %v1646, 3
        %v1660 = vrot.slane %v1647, 3
        %v1661 = vrot.slane %v1648, 3
        %v1662 = vrot.slane %v1649, 3
        %v1663 = vrot.slane %v1652, 3
        %v1664 = vrot.slane %v1653, 3
        %v1665 = vrot.slane %v1654, 3
        %1666 = vrot.lane.b32.xlu0 %v1655, 17
        %v1667 = vpop.permute.xlu0 %1666
        %1668 = vrot.lane.b32.xlu0 %v1656, 17
        %v1669 = vpop.permute.xlu0 %1668
        %1670 = vrot.lane.b32.xlu0 %v1657, 17
        %v1671 = vpop.permute.xlu0 %1670
        %1672 = vrot.lane.b32.xlu0 %v1658, 17
        %v1673 = vpop.permute.xlu0 %1672
        %1674 = vrot.lane.b32.xlu0 %v1659, 17
        %v1675 = vpop.permute.xlu0 %1674
        %1676 = vrot.lane.b32.xlu0 %v1660, 17
        %v1677 = vpop.permute.xlu0 %1676
        %1678 = vrot.lane.b32.xlu0 %v1661, 17
        %v1679 = vpop.permute.xlu0 %1678
        %1680 = vrot.lane.b32.xlu0 %v1662, 17
        %v1681 = vpop.permute.xlu0 %1680
        %1682 = vrot.lane.b32.xlu0 %v1663, 17
        %v1683 = vpop.permute.xlu0 %1682
        %1684 = vrot.lane.b32.xlu0 %v1664, 17
        %v1685 = vpop.permute.xlu0 %1684
        %1686 = vrot.lane.b32.xlu0 %v1665, 17
        %v1687 = vpop.permute.xlu0 %1686
        %vm1688 = vcmask 138240
        %v1689 = vsel %vm1688, %v1667, %v1669
        %v1690 = vsel %vm1688, %v1669, %v1671
        %v1691 = vsel %vm1688, %v1671, %v1673
        %v1692 = vsel %vm1688, %v1673, %v1675
        %v1693 = vsel %vm1688, %v1675, %v1677
        %v1694 = vsel %vm1688, %v1677, %v1679
        %v1695 = vsel %vm1688, %v1679, %v1681
        %v1696 = vsel %vm1688, %v1681, %v1683
        %v1697 = vsel %vm1688, %v1683, %v1685
        %v1698 = vsel %vm1688, %v1685, %v1687
        %1709 = vst [vmem:[#allocation2 + $0x190] sm:$0xe0] %v1689
        %1710 = vst [vmem:[#allocation2 + $0x198] sm:$0xe0] %v1690
        %1711 = vst [vmem:[#allocation2 + $0x1a0] sm:$0xe0] %v1691
        %1712 = vst [vmem:[#allocation2 + $0x1a8] sm:$0xe0] %v1692
        %1713 = vst [vmem:[#allocation2 + $0x1b0] sm:$0xe0] %v1693
        %1714 = vst [vmem:[#allocation2 + $0x1b8] sm:$0xe0] %v1694
        %1715 = vst [vmem:[#allocation2 + $0x1c0] sm:$0xe0] %v1695
        %1716 = vst [vmem:[#allocation2 + $0x1c8] sm:$0xe0] %v1696
        %1717 = vst [vmem:[#allocation2 + $0x1d0] sm:$0xe0] %v1697
        %1718 = vst [vmem:[#allocation2 + $0x1d8] sm:$0xe0] %v1698
        %v1719 = vld [vmem:[%s200] sm:$0x77]
        %v1720 = vld [vmem:[%s200 + $0x8] sm:$0x77]
        %v1721 = vld [vmem:[%s200 + $0x10] sm:$0x77]
        %v1722 = vld [vmem:[%s200 + $0x18] sm:$0x77]
        %v1723 = vld [vmem:[%s200 + $0x20] sm:$0x77]
        %v1724 = vld [vmem:[%s200 + $0x28] sm:$0x7]
        %1731 = vst [vmem:[#allocation1] ss:$2 sm:$0xff] %v1719
        %s1732 = scalar_lea.vmem [#allocation1], 16
        %1733 = vst [vmem:[%s1732] ss:$2 sm:$0xff] %v1720
        %s1734 = scalar_lea.vmem [#allocation1], 32
        %1735 = vst [vmem:[%s1734] ss:$2 sm:$0xff] %v1721
        %s1736 = scalar_lea.vmem [#allocation1], 48
        %1737 = vst [vmem:[%s1736] ss:$2 sm:$0xff] %v1722
        %v1738 = vld.sshfl [vmem:[#allocation1] sm:$0xff pattern:$0x75316420]
        %v1739 = vld.sshfl [vmem:[#allocation1 + $0x8] sm:$0xff pattern:$0x75316420]
        %v1740 = vld.sshfl [vmem:[#allocation1 + $0x10] sm:$0xff pattern:$0x75316420]
        %v1741 = vld.sshfl [vmem:[#allocation1 + $0x18] sm:$0xff pattern:$0x75316420]
        %v1742 = vld.sshfl [vmem:[#allocation1 + $0x20] sm:$0xff pattern:$0x75316420]
        %v1743 = vld.sshfl [vmem:[#allocation1 + $0x28] sm:$0xff pattern:$0x75316420]
        %v1744 = vld.sshfl [vmem:[#allocation1 + $0x30] sm:$0xff pattern:$0x75316420]
        %v1745 = vld.sshfl [vmem:[#allocation1 + $0x38] sm:$0xff pattern:$0x75316420]
        %1746 = vst [vmem:[#allocation1] ss:$2 sm:$0xff] %v1723
        %1747 = vst [vmem:[%s1732] ss:$2 sm:$0xff] %v1724
        %v1748 = vld.sshfl [vmem:[#allocation1] sm:$0xff pattern:$0x75316420]
        %v1749 = vld.sshfl [vmem:[#allocation1 + $0x8] sm:$0xff pattern:$0x75316420]
        %v1750 = vld.sshfl [vmem:[#allocation1 + $0x10] sm:$0xff pattern:$0x75316420]
        %1751 = vrot.lane.b32.xlu0 %v1738, 16
        %v1752 = vpop.permute.xlu0 %1751
        %1753 = vrot.lane.b32.xlu0 %v1739, 16
        %v1754 = vpop.permute.xlu0 %1753
        %1755 = vrot.lane.b32.xlu0 %v1740, 16
        %v1756 = vpop.permute.xlu0 %1755
        %1757 = vrot.lane.b32.xlu0 %v1741, 16
        %v1758 = vpop.permute.xlu0 %1757
        %1759 = vrot.lane.b32.xlu0 %v1742, 16
        %v1760 = vpop.permute.xlu0 %1759
        %1761 = vrot.lane.b32.xlu0 %v1743, 16
        %v1762 = vpop.permute.xlu0 %1761
        %1763 = vrot.lane.b32.xlu0 %v1744, 16
        %v1764 = vpop.permute.xlu0 %1763
        %1765 = vrot.lane.b32.xlu0 %v1745, 16
        %v1766 = vpop.permute.xlu0 %1765
        %1767 = vrot.lane.b32.xlu0 %v1748, 16
        %v1768 = vpop.permute.xlu0 %1767
        %1769 = vrot.lane.b32.xlu0 %v1749, 16
        %v1770 = vpop.permute.xlu0 %1769
        %1771 = vrot.lane.b32.xlu0 %v1750, 16
        %v1772 = vpop.permute.xlu0 %1771
        %vm1773 = vcmask 130048
        %v1774 = vsel %vm1773, %v1752, %v1754
        %v1775 = vsel %vm1773, %v1754, %v1756
        %v1776 = vsel %vm1773, %v1756, %v1758
        %v1777 = vsel %vm1773, %v1758, %v1760
        %v1778 = vsel %vm1773, %v1760, %v1762
        %v1779 = vsel %vm1773, %v1762, %v1764
        %v1780 = vsel %vm1773, %v1764, %v1766
        %v1781 = vsel %vm1773, %v1766, %v1768
        %v1782 = vsel %vm1773, %v1768, %v1770
        %v1783 = vsel %vm1773, %v1770, %v1772
        %1794 = vst [vmem:[#allocation2 + $0x1e0] sm:$0x7] %v1774
        %1795 = vst [vmem:[#allocation2 + $0x1e8] sm:$0x7] %v1775
        %1796 = vst [vmem:[#allocation2 + $0x1f0] sm:$0x7] %v1776
        %1797 = vst [vmem:[#allocation2 + $0x1f8] sm:$0x7] %v1777
        %1798 = vst [vmem:[#allocation2 + $0x200] sm:$0x7] %v1778
        %1799 = vst [vmem:[#allocation2 + $0x208] sm:$0x7] %v1779
        %1800 = vst [vmem:[#allocation2 + $0x210] sm:$0x7] %v1780
        %1801 = vst [vmem:[#allocation2 + $0x218] sm:$0x7] %v1781
        %1802 = vst [vmem:[#allocation2 + $0x220] sm:$0x7] %v1782
        %1803 = vst [vmem:[#allocation2 + $0x228] sm:$0x7] %v1783
        %v1804 = vld [vmem:[%s200] sm:$0x77]
        %v1805 = vld [vmem:[%s200 + $0x8] sm:$0x77]
        %v1806 = vld [vmem:[%s200 + $0x10] sm:$0x77]
        %v1807 = vld [vmem:[%s200 + $0x18] sm:$0x77]
        %v1808 = vld [vmem:[%s200 + $0x20] sm:$0x77]
        %v1809 = vld [vmem:[%s200 + $0x28] sm:$0x7]
        %1816 = vst [vmem:[#allocation1] ss:$2 sm:$0xff] %v1804
        %s1817 = scalar_lea.vmem [#allocation1], 16
        %1818 = vst [vmem:[%s1817] ss:$2 sm:$0xff] %v1805
        %s1819 = scalar_lea.vmem [#allocation1], 32
        %1820 = vst [vmem:[%s1819] ss:$2 sm:$0xff] %v1806
        %s1821 = scalar_lea.vmem [#allocation1], 48
        %1822 = vst [vmem:[%s1821] ss:$2 sm:$0xff] %v1807
        %v1823 = vld.sshfl [vmem:[#allocation1] sm:$0xff pattern:$0x75316420]
        %v1824 = vld.sshfl [vmem:[#allocation1 + $0x8] sm:$0xff pattern:$0x75316420]
        %v1825 = vld.sshfl [vmem:[#allocation1 + $0x10] sm:$0xff pattern:$0x75316420]
        %v1826 = vld.sshfl [vmem:[#allocation1 + $0x18] sm:$0xff pattern:$0x75316420]
        %v1827 = vld.sshfl [vmem:[#allocation1 + $0x20] sm:$0xff pattern:$0x75316420]
        %v1828 = vld.sshfl [vmem:[#allocation1 + $0x28] sm:$0xff pattern:$0x75316420]
        %v1829 = vld.sshfl [vmem:[#allocation1 + $0x30] sm:$0xff pattern:$0x75316420]
        %v1830 = vld.sshfl [vmem:[#allocation1 + $0x38] sm:$0xff pattern:$0x75316420]
        %1831 = vst [vmem:[#allocation1] ss:$2 sm:$0xff] %v1808
        %1832 = vst [vmem:[%s1817] ss:$2 sm:$0xff] %v1809
        %v1833 = vld.sshfl [vmem:[#allocation1] sm:$0xff pattern:$0x75316420]
        %v1834 = vld.sshfl [vmem:[#allocation1 + $0x8] sm:$0xff pattern:$0x75316420]
        %v1835 = vld.sshfl [vmem:[#allocation1 + $0x10] sm:$0xff pattern:$0x75316420]
        %v1836 = vrot.slane %v1823, 5
        %v1837 = vrot.slane %v1824, 5
        %v1838 = vrot.slane %v1825, 5
        %v1839 = vrot.slane %v1826, 5
        %v1840 = vrot.slane %v1827, 5
        %v1841 = vrot.slane %v1828, 5
        %v1842 = vrot.slane %v1829, 5
        %v1843 = vrot.slane %v1830, 5
        %v1844 = vrot.slane %v1833, 5
        %v1845 = vrot.slane %v1834, 5
        %v1846 = vrot.slane %v1835, 5
        %1847 = vrot.lane.b32.xlu0 %v1836, 15
        %v1848 = vpop.permute.xlu0 %1847
        %1849 = vrot.lane.b32.xlu0 %v1837, 15
        %v1850 = vpop.permute.xlu0 %1849
        %1851 = vrot.lane.b32.xlu0 %v1838, 15
        %v1852 = vpop.permute.xlu0 %1851
        %1853 = vrot.lane.b32.xlu0 %v1839, 15
        %v1854 = vpop.permute.xlu0 %1853
        %1855 = vrot.lane.b32.xlu0 %v1840, 15
        %v1856 = vpop.permute.xlu0 %1855
        %1857 = vrot.lane.b32.xlu0 %v1841, 15
        %v1858 = vpop.permute.xlu0 %1857
        %1859 = vrot.lane.b32.xlu0 %v1842, 15
        %v1860 = vpop.permute.xlu0 %1859
        %1861 = vrot.lane.b32.xlu0 %v1843, 15
        %v1862 = vpop.permute.xlu0 %1861
        %1863 = vrot.lane.b32.xlu0 %v1844, 15
        %v1864 = vpop.permute.xlu0 %1863
        %1865 = vrot.lane.b32.xlu0 %v1845, 15
        %v1866 = vpop.permute.xlu0 %1865
        %1867 = vrot.lane.b32.xlu0 %v1846, 15
        %v1868 = vpop.permute.xlu0 %1867
        %vm1869 = vcmask 121856
        %v1870 = vsel %vm1869, %v1848, %v1850
        %v1871 = vsel %vm1869, %v1850, %v1852
        %v1872 = vsel %vm1869, %v1852, %v1854
        %v1873 = vsel %vm1869, %v1854, %v1856
        %v1874 = vsel %vm1869, %v1856, %v1858
        %v1875 = vsel %vm1869, %v1858, %v1860
        %v1876 = vsel %vm1869, %v1860, %v1862
        %v1877 = vsel %vm1869, %v1862, %v1864
        %v1878 = vsel %vm1869, %v1864, %v1866
        %v1879 = vsel %vm1869, %v1866, %v1868
        %1890 = vst [vmem:[#allocation2 + $0x1e0] sm:$0x38] %v1870
        %1891 = vst [vmem:[#allocation2 + $0x1e8] sm:$0x38] %v1871
        %1892 = vst [vmem:[#allocation2 + $0x1f0] sm:$0x38] %v1872
        %1893 = vst [vmem:[#allocation2 + $0x1f8] sm:$0x38] %v1873
        %1894 = vst [vmem:[#allocation2 + $0x200] sm:$0x38] %v1874
        %1895 = vst [vmem:[#allocation2 + $0x208] sm:$0x38] %v1875
        %1896 = vst [vmem:[#allocation2 + $0x210] sm:$0x38] %v1876
        %1897 = vst [vmem:[#allocation2 + $0x218] sm:$0x38] %v1877
        %1898 = vst [vmem:[#allocation2 + $0x220] sm:$0x38] %v1878
        %1899 = vst [vmem:[#allocation2 + $0x228] sm:$0x38] %v1879
        %v1900 = vld [vmem:[%s200] sm:$0x77]
        %v1901 = vld [vmem:[%s200 + $0x8] sm:$0x77]
        %v1902 = vld [vmem:[%s200 + $0x10] sm:$0x77]
        %v1903 = vld [vmem:[%s200 + $0x18] sm:$0x77]
        %v1904 = vld [vmem:[%s200 + $0x20] sm:$0x77]
        %v1905 = vld [vmem:[%s200 + $0x28] sm:$0x7]
        %1912 = vst [vmem:[#allocation1] ss:$2 sm:$0xff] %v1900
        %s1913 = scalar_lea.vmem [#allocation1], 16
        %1914 = vst [vmem:[%s1913] ss:$2 sm:$0xff] %v1901
        %s1915 = scalar_lea.vmem [#allocation1], 32
        %1916 = vst [vmem:[%s1915] ss:$2 sm:$0xff] %v1902
        %s1917 = scalar_lea.vmem [#allocation1], 48
        %1918 = vst [vmem:[%s1917] ss:$2 sm:$0xff] %v1903
        %v1919 = vld.sshfl [vmem:[#allocation1] sm:$0xff pattern:$0x75316420]
        %v1920 = vld.sshfl [vmem:[#allocation1 + $0x8] sm:$0xff pattern:$0x75316420]
        %v1921 = vld.sshfl [vmem:[#allocation1 + $0x10] sm:$0xff pattern:$0x75316420]
        %v1922 = vld.sshfl [vmem:[#allocation1 + $0x18] sm:$0xff pattern:$0x75316420]
        %v1923 = vld.sshfl [vmem:[#allocation1 + $0x20] sm:$0xff pattern:$0x75316420]
        %v1924 = vld.sshfl [vmem:[#allocation1 + $0x28] sm:$0xff pattern:$0x75316420]
        %v1925 = vld.sshfl [vmem:[#allocation1 + $0x30] sm:$0xff pattern:$0x75316420]
        %v1926 = vld.sshfl [vmem:[#allocation1 + $0x38] sm:$0xff pattern:$0x75316420]
        %1927 = vst [vmem:[#allocation1] ss:$2 sm:$0xff] %v1904
        %1928 = vst [vmem:[%s1913] ss:$2 sm:$0xff] %v1905
        %v1929 = vld.sshfl [vmem:[#allocation1] sm:$0xff pattern:$0x75316420]
        %v1930 = vld.sshfl [vmem:[#allocation1 + $0x8] sm:$0xff pattern:$0x75316420]
        %v1931 = vld.sshfl [vmem:[#allocation1 + $0x10] sm:$0xff pattern:$0x75316420]
        %v1932 = vrot.slane %v1919, 2
        %v1933 = vrot.slane %v1920, 2
        %v1934 = vrot.slane %v1921, 2
        %v1935 = vrot.slane %v1922, 2
        %v1936 = vrot.slane %v1923, 2
        %v1937 = vrot.slane %v1924, 2
        %v1938 = vrot.slane %v1925, 2
        %v1939 = vrot.slane %v1926, 2
        %v1940 = vrot.slane %v1929, 2
        %v1941 = vrot.slane %v1930, 2
        %v1942 = vrot.slane %v1931, 2
        %1943 = vrot.lane.b32.xlu0 %v1932, 14
        %v1944 = vpop.permute.xlu0 %1943
        %1945 = vrot.lane.b32.xlu0 %v1933, 14
        %v1946 = vpop.permute.xlu0 %1945
        %1947 = vrot.lane.b32.xlu0 %v1934, 14
        %v1948 = vpop.permute.xlu0 %1947
        %1949 = vrot.lane.b32.xlu0 %v1935, 14
        %v1950 = vpop.permute.xlu0 %1949
        %1951 = vrot.lane.b32.xlu0 %v1936, 14
        %v1952 = vpop.permute.xlu0 %1951
        %1953 = vrot.lane.b32.xlu0 %v1937, 14
        %v1954 = vpop.permute.xlu0 %1953
        %1955 = vrot.lane.b32.xlu0 %v1938, 14
        %v1956 = vpop.permute.xlu0 %1955
        %1957 = vrot.lane.b32.xlu0 %v1939, 14
        %v1958 = vpop.permute.xlu0 %1957
        %1959 = vrot.lane.b32.xlu0 %v1940, 14
        %v1960 = vpop.permute.xlu0 %1959
        %1961 = vrot.lane.b32.xlu0 %v1941, 14
        %v1962 = vpop.permute.xlu0 %1961
        %1963 = vrot.lane.b32.xlu0 %v1942, 14
        %v1964 = vpop.permute.xlu0 %1963
        %vm1965 = vcmask 113664
        %v1966 = vsel %vm1965, %v1944, %v1946
        %v1967 = vsel %vm1965, %v1946, %v1948
        %v1968 = vsel %vm1965, %v1948, %v1950
        %v1969 = vsel %vm1965, %v1950, %v1952
        %v1970 = vsel %vm1965, %v1952, %v1954
        %v1971 = vsel %vm1965, %v1954, %v1956
        %v1972 = vsel %vm1965, %v1956, %v1958
        %v1973 = vsel %vm1965, %v1958, %v1960
        %v1974 = vsel %vm1965, %v1960, %v1962
        %v1975 = vsel %vm1965, %v1962, %v1964
        %1986 = vst [vmem:[#allocation2 + $0x1e0] sm:$0xc0] %v1966
        %1987 = vst [vmem:[#allocation2 + $0x1e8] sm:$0xc0] %v1967
        %1988 = vst [vmem:[#allocation2 + $0x1f0] sm:$0xc0] %v1968
        %1989 = vst [vmem:[#allocation2 + $0x1f8] sm:$0xc0] %v1969
        %1990 = vst [vmem:[#allocation2 + $0x200] sm:$0xc0] %v1970
        %1991 = vst [vmem:[#allocation2 + $0x208] sm:$0xc0] %v1971
        %1992 = vst [vmem:[#allocation2 + $0x210] sm:$0xc0] %v1972
        %1993 = vst [vmem:[#allocation2 + $0x218] sm:$0xc0] %v1973
        %1994 = vst [vmem:[#allocation2 + $0x220] sm:$0xc0] %v1974
        %1995 = vst [vmem:[#allocation2 + $0x228] sm:$0xc0] %v1975
        %1996 = vst [vmem:[#allocation2 + $0x230] sm:$0x1] %v1966
        %1997 = vst [vmem:[#allocation2 + $0x238] sm:$0x1] %v1967
        %1998 = vst [vmem:[#allocation2 + $0x240] sm:$0x1] %v1968
        %1999 = vst [vmem:[#allocation2 + $0x248] sm:$0x1] %v1969
        %2000 = vst [vmem:[#allocation2 + $0x250] sm:$0x1] %v1970
        %2001 = vst [vmem:[#allocation2 + $0x258] sm:$0x1] %v1971
        %2002 = vst [vmem:[#allocation2 + $0x260] sm:$0x1] %v1972
        %2003 = vst [vmem:[#allocation2 + $0x268] sm:$0x1] %v1973
        %2004 = vst [vmem:[#allocation2 + $0x270] sm:$0x1] %v1974
        %2005 = vst [vmem:[#allocation2 + $0x278] sm:$0x1] %v1975
        %v2006 = vld [vmem:[%s200] sm:$0x77]
        %v2007 = vld [vmem:[%s200 + $0x8] sm:$0x77]
        %v2008 = vld [vmem:[%s200 + $0x10] sm:$0x77]
        %v2009 = vld [vmem:[%s200 + $0x18] sm:$0x77]
        %v2010 = vld [vmem:[%s200 + $0x20] sm:$0x77]
        %v2011 = vld [vmem:[%s200 + $0x28] sm:$0x7]
        %2018 = vst [vmem:[#allocation1] ss:$2 sm:$0xff] %v2006
        %s2019 = scalar_lea.vmem [#allocation1], 16
        %2020 = vst [vmem:[%s2019] ss:$2 sm:$0xff] %v2007
        %s2021 = scalar_lea.vmem [#allocation1], 32
        %2022 = vst [vmem:[%s2021] ss:$2 sm:$0xff] %v2008
        %s2023 = scalar_lea.vmem [#allocation1], 48
        %2024 = vst [vmem:[%s2023] ss:$2 sm:$0xff] %v2009
        %v2025 = vld.sshfl [vmem:[#allocation1] sm:$0xff pattern:$0x75316420]
        %v2026 = vld.sshfl [vmem:[#allocation1 + $0x8] sm:$0xff pattern:$0x75316420]
        %v2027 = vld.sshfl [vmem:[#allocation1 + $0x10] sm:$0xff pattern:$0x75316420]
        %v2028 = vld.sshfl [vmem:[#allocation1 + $0x18] sm:$0xff pattern:$0x75316420]
        %v2029 = vld.sshfl [vmem:[#allocation1 + $0x20] sm:$0xff pattern:$0x75316420]
        %v2030 = vld.sshfl [vmem:[#allocation1 + $0x28] sm:$0xff pattern:$0x75316420]
        %v2031 = vld.sshfl [vmem:[#allocation1 + $0x30] sm:$0xff pattern:$0x75316420]
        %v2032 = vld.sshfl [vmem:[#allocation1 + $0x38] sm:$0xff pattern:$0x75316420]
        %2033 = vst [vmem:[#allocation1] ss:$2 sm:$0xff] %v2010
        %2034 = vst [vmem:[%s2019] ss:$2 sm:$0xff] %v2011
        %v2035 = vld.sshfl [vmem:[#allocation1] sm:$0xff pattern:$0x75316420]
        %v2036 = vld.sshfl [vmem:[#allocation1 + $0x8] sm:$0xff pattern:$0x75316420]
        %v2037 = vld.sshfl [vmem:[#allocation1 + $0x10] sm:$0xff pattern:$0x75316420]
        %v2038 = vrot.slane %v2025, 7
        %v2039 = vrot.slane %v2026, 7
        %v2040 = vrot.slane %v2027, 7
        %v2041 = vrot.slane %v2028, 7
        %v2042 = vrot.slane %v2029, 7
        %v2043 = vrot.slane %v2030, 7
        %v2044 = vrot.slane %v2031, 7
        %v2045 = vrot.slane %v2032, 7
        %v2046 = vrot.slane %v2035, 7
        %v2047 = vrot.slane %v2036, 7
        %v2048 = vrot.slane %v2037, 7
        %2049 = vrot.lane.b32.xlu0 %v2038, 13
        %v2050 = vpop.permute.xlu0 %2049
        %2051 = vrot.lane.b32.xlu0 %v2039, 13
        %v2052 = vpop.permute.xlu0 %2051
        %2053 = vrot.lane.b32.xlu0 %v2040, 13
        %v2054 = vpop.permute.xlu0 %2053
        %2055 = vrot.lane.b32.xlu0 %v2041, 13
        %v2056 = vpop.permute.xlu0 %2055
        %2057 = vrot.lane.b32.xlu0 %v2042, 13
        %v2058 = vpop.permute.xlu0 %2057
        %2059 = vrot.lane.b32.xlu0 %v2043, 13
        %v2060 = vpop.permute.xlu0 %2059
        %2061 = vrot.lane.b32.xlu0 %v2044, 13
        %v2062 = vpop.permute.xlu0 %2061
        %2063 = vrot.lane.b32.xlu0 %v2045, 13
        %v2064 = vpop.permute.xlu0 %2063
        %2065 = vrot.lane.b32.xlu0 %v2046, 13
        %v2066 = vpop.permute.xlu0 %2065
        %2067 = vrot.lane.b32.xlu0 %v2047, 13
        %v2068 = vpop.permute.xlu0 %2067
        %2069 = vrot.lane.b32.xlu0 %v2048, 13
        %v2070 = vpop.permute.xlu0 %2069
        %vm2071 = vcmask 105472
        %v2072 = vsel %vm2071, %v2050, %v2052
        %v2073 = vsel %vm2071, %v2052, %v2054
        %v2074 = vsel %vm2071, %v2054, %v2056
        %v2075 = vsel %vm2071, %v2056, %v2058
        %v2076 = vsel %vm2071, %v2058, %v2060
        %v2077 = vsel %vm2071, %v2060, %v2062
        %v2078 = vsel %vm2071, %v2062, %v2064
        %v2079 = vsel %vm2071, %v2064, %v2066
        %v2080 = vsel %vm2071, %v2066, %v2068
        %v2081 = vsel %vm2071, %v2068, %v2070
        %2092 = vst [vmem:[#allocation2 + $0x230] sm:$0xe] %v2072
        %2093 = vst [vmem:[#allocation2 + $0x238] sm:$0xe] %v2073
        %2094 = vst [vmem:[#allocation2 + $0x240] sm:$0xe] %v2074
        %2095 = vst [vmem:[#allocation2 + $0x248] sm:$0xe] %v2075
        %2096 = vst [vmem:[#allocation2 + $0x250] sm:$0xe] %v2076
        %2097 = vst [vmem:[#allocation2 + $0x258] sm:$0xe] %v2077
        %2098 = vst [vmem:[#allocation2 + $0x260] sm:$0xe] %v2078
        %2099 = vst [vmem:[#allocation2 + $0x268] sm:$0xe] %v2079
        %2100 = vst [vmem:[#allocation2 + $0x270] sm:$0xe] %v2080
        %2101 = vst [vmem:[#allocation2 + $0x278] sm:$0xe] %v2081
        %v2102 = vld [vmem:[%s200 + $0x4] sm:$0x77]
        %v2103 = vld [vmem:[%s200 + $0xc] sm:$0x77]
        %v2104 = vld [vmem:[%s200 + $0x14] sm:$0x77]
        %v2105 = vld [vmem:[%s200 + $0x1c] sm:$0x77]
        %v2106 = vld [vmem:[%s200 + $0x24] sm:$0x77]
        %v2107 = vld [vmem:[%s200 + $0x2c] sm:$0x7]
        %s2114 = scalar_lea.vmem [#allocation1], 1
        %2115 = vst [vmem:[%s2114] ss:$2 sm:$0xff] %v2102
        %s2116 = scalar_lea.vmem [#allocation1], 17
        %2117 = vst [vmem:[%s2116] ss:$2 sm:$0xff] %v2103
        %s2118 = scalar_lea.vmem [#allocation1], 33
        %2119 = vst [vmem:[%s2118] ss:$2 sm:$0xff] %v2104
        %s2120 = scalar_lea.vmem [#allocation1], 49
        %2121 = vst [vmem:[%s2120] ss:$2 sm:$0xff] %v2105
        %v2122 = vld.sshfl [vmem:[#allocation1] sm:$0xff pattern:$0x75316420]
        %v2123 = vld.sshfl [vmem:[#allocation1 + $0x8] sm:$0xff pattern:$0x75316420]
        %v2124 = vld.sshfl [vmem:[#allocation1 + $0x10] sm:$0xff pattern:$0x75316420]
        %v2125 = vld.sshfl [vmem:[#allocation1 + $0x18] sm:$0xff pattern:$0x75316420]
        %v2126 = vld.sshfl [vmem:[#allocation1 + $0x20] sm:$0xff pattern:$0x75316420]
        %v2127 = vld.sshfl [vmem:[#allocation1 + $0x28] sm:$0xff pattern:$0x75316420]
        %v2128 = vld.sshfl [vmem:[#allocation1 + $0x30] sm:$0xff pattern:$0x75316420]
        %v2129 = vld.sshfl [vmem:[#allocation1 + $0x38] sm:$0xff pattern:$0x75316420]
        %2130 = vst [vmem:[%s2114] ss:$2 sm:$0xff] %v2106
        %2131 = vst [vmem:[%s2116] ss:$2 sm:$0xff] %v2107
        %v2132 = vld.sshfl [vmem:[#allocation1] sm:$0xff pattern:$0x75316420]
        %v2133 = vld.sshfl [vmem:[#allocation1 + $0x8] sm:$0xff pattern:$0x75316420]
        %v2134 = vld.sshfl [vmem:[#allocation1 + $0x10] sm:$0xff pattern:$0x75316420]
        %2135 = vrot.lane.b32.xlu0 %v2122, 108
        %v2136 = vpop.permute.xlu0 %2135
        %2137 = vrot.lane.b32.xlu0 %v2123, 108
        %v2138 = vpop.permute.xlu0 %2137
        %2139 = vrot.lane.b32.xlu0 %v2124, 108
        %v2140 = vpop.permute.xlu0 %2139
        %2141 = vrot.lane.b32.xlu0 %v2125, 108
        %v2142 = vpop.permute.xlu0 %2141
        %2143 = vrot.lane.b32.xlu0 %v2126, 108
        %v2144 = vpop.permute.xlu0 %2143
        %2145 = vrot.lane.b32.xlu0 %v2127, 108
        %v2146 = vpop.permute.xlu0 %2145
        %2147 = vrot.lane.b32.xlu0 %v2128, 108
        %v2148 = vpop.permute.xlu0 %2147
        %2149 = vrot.lane.b32.xlu0 %v2129, 108
        %v2150 = vpop.permute.xlu0 %2149
        %2151 = vrot.lane.b32.xlu0 %v2132, 108
        %v2152 = vpop.permute.xlu0 %2151
        %2153 = vrot.lane.b32.xlu0 %v2133, 108
        %v2154 = vpop.permute.xlu0 %2153
        %2155 = vrot.lane.b32.xlu0 %v2134, 108
        %v2156 = vpop.permute.xlu0 %2155
        %vm2157 = vcmask 883712
        %v2158 = vsel %vm2157, %v2136, %v2138
        %v2159 = vsel %vm2157, %v2138, %v2140
        %v2160 = vsel %vm2157, %v2140, %v2142
        %v2161 = vsel %vm2157, %v2142, %v2144
        %v2162 = vsel %vm2157, %v2144, %v2146
        %v2163 = vsel %vm2157, %v2146, %v2148
        %v2164 = vsel %vm2157, %v2148, %v2150
        %v2165 = vsel %vm2157, %v2150, %v2152
        %v2166 = vsel %vm2157, %v2152, %v2154
        %v2167 = vsel %vm2157, %v2154, %v2156
        %2178 = vst [vmem:[#allocation2 + $0x230] sm:$0x70] %v2158
        %2179 = vst [vmem:[#allocation2 + $0x238] sm:$0x70] %v2159
        %2180 = vst [vmem:[#allocation2 + $0x240] sm:$0x70] %v2160
        %2181 = vst [vmem:[#allocation2 + $0x248] sm:$0x70] %v2161
        %2182 = vst [vmem:[#allocation2 + $0x250] sm:$0x70] %v2162
        %2183 = vst [vmem:[#allocation2 + $0x258] sm:$0x70] %v2163
        %2184 = vst [vmem:[#allocation2 + $0x260] sm:$0x70] %v2164
        %2185 = vst [vmem:[#allocation2 + $0x268] sm:$0x70] %v2165
        %2186 = vst [vmem:[#allocation2 + $0x270] sm:$0x70] %v2166
        %2187 = vst [vmem:[#allocation2 + $0x278] sm:$0x70] %v2167
        %v2188 = vld [vmem:[%s200 + $0x4] sm:$0x77]
        %v2189 = vld [vmem:[%s200 + $0xc] sm:$0x77]
        %v2190 = vld [vmem:[%s200 + $0x14] sm:$0x77]
        %v2191 = vld [vmem:[%s200 + $0x1c] sm:$0x77]
        %v2192 = vld [vmem:[%s200 + $0x24] sm:$0x77]
        %v2193 = vld [vmem:[%s200 + $0x2c] sm:$0x7]
        %2200 = vst [vmem:[#allocation1] ss:$2 sm:$0xff] %v2188
        %s2201 = scalar_lea.vmem [#allocation1], 16
        %2202 = vst [vmem:[%s2201] ss:$2 sm:$0xff] %v2189
        %s2203 = scalar_lea.vmem [#allocation1], 32
        %2204 = vst [vmem:[%s2203] ss:$2 sm:$0xff] %v2190
        %s2205 = scalar_lea.vmem [#allocation1], 48
        %2206 = vst [vmem:[%s2205] ss:$2 sm:$0xff] %v2191
        %v2207 = vld.sshfl [vmem:[#allocation1] sm:$0xff pattern:$0x75316420]
        %v2208 = vld.sshfl [vmem:[#allocation1 + $0x8] sm:$0xff pattern:$0x75316420]
        %v2209 = vld.sshfl [vmem:[#allocation1 + $0x10] sm:$0xff pattern:$0x75316420]
        %v2210 = vld.sshfl [vmem:[#allocation1 + $0x18] sm:$0xff pattern:$0x75316420]
        %v2211 = vld.sshfl [vmem:[#allocation1 + $0x20] sm:$0xff pattern:$0x75316420]
        %v2212 = vld.sshfl [vmem:[#allocation1 + $0x28] sm:$0xff pattern:$0x75316420]
        %v2213 = vld.sshfl [vmem:[#allocation1 + $0x30] sm:$0xff pattern:$0x75316420]
        %v2214 = vld.sshfl [vmem:[#allocation1 + $0x38] sm:$0xff pattern:$0x75316420]
        %2215 = vst [vmem:[#allocation1] ss:$2 sm:$0xff] %v2192
        %2216 = vst [vmem:[%s2201] ss:$2 sm:$0xff] %v2193
        %v2217 = vld.sshfl [vmem:[#allocation1] sm:$0xff pattern:$0x75316420]
        %v2218 = vld.sshfl [vmem:[#allocation1 + $0x8] sm:$0xff pattern:$0x75316420]
        %v2219 = vld.sshfl [vmem:[#allocation1 + $0x10] sm:$0xff pattern:$0x75316420]
        %v2220 = vrot.slane %v2207, 1
        %v2221 = vrot.slane %v2208, 1
        %v2222 = vrot.slane %v2209, 1
        %v2223 = vrot.slane %v2210, 1
        %v2224 = vrot.slane %v2211, 1
        %v2225 = vrot.slane %v2212, 1
        %v2226 = vrot.slane %v2213, 1
        %v2227 = vrot.slane %v2214, 1
        %v2228 = vrot.slane %v2217, 1
        %v2229 = vrot.slane %v2218, 1
        %v2230 = vrot.slane %v2219, 1
        %2231 = vrot.lane.b32.xlu0 %v2220, 107
        %v2232 = vpop.permute.xlu0 %2231
        %2233 = vrot.lane.b32.xlu0 %v2221, 107
        %v2234 = vpop.permute.xlu0 %2233
        %2235 = vrot.lane.b32.xlu0 %v2222, 107
        %v2236 = vpop.permute.xlu0 %2235
        %2237 = vrot.lane.b32.xlu0 %v2223, 107
        %v2238 = vpop.permute.xlu0 %2237
        %2239 = vrot.lane.b32.xlu0 %v2224, 107
        %v2240 = vpop.permute.xlu0 %2239
        %2241 = vrot.lane.b32.xlu0 %v2225, 107
        %v2242 = vpop.permute.xlu0 %2241
        %2243 = vrot.lane.b32.xlu0 %v2226, 107
        %v2244 = vpop.permute.xlu0 %2243
        %2245 = vrot.lane.b32.xlu0 %v2227, 107
        %v2246 = vpop.permute.xlu0 %2245
        %2247 = vrot.lane.b32.xlu0 %v2228, 107
        %v2248 = vpop.permute.xlu0 %2247
        %2249 = vrot.lane.b32.xlu0 %v2229, 107
        %v2250 = vpop.permute.xlu0 %2249
        %2251 = vrot.lane.b32.xlu0 %v2230, 107
        %v2252 = vpop.permute.xlu0 %2251
        %vm2253 = vcmask 875520
        %v2254 = vsel %vm2253, %v2232, %v2234
        %v2255 = vsel %vm2253, %v2234, %v2236
        %v2256 = vsel %vm2253, %v2236, %v2238
        %v2257 = vsel %vm2253, %v2238, %v2240
        %v2258 = vsel %vm2253, %v2240, %v2242
        %v2259 = vsel %vm2253, %v2242, %v2244
        %v2260 = vsel %vm2253, %v2244, %v2246
        %v2261 = vsel %vm2253, %v2246, %v2248
        %v2262 = vsel %vm2253, %v2248, %v2250
        %v2263 = vsel %vm2253, %v2250, %v2252
        %2274 = vst [vmem:[#allocation2 + $0x230] sm:$0x80] %v2254
        %2275 = vst [vmem:[#allocation2 + $0x238] sm:$0x80] %v2255
        %2276 = vst [vmem:[#allocation2 + $0x240] sm:$0x80] %v2256
        %2277 = vst [vmem:[#allocation2 + $0x248] sm:$0x80] %v2257
        %2278 = vst [vmem:[#allocation2 + $0x250] sm:$0x80] %v2258
        %2279 = vst [vmem:[#allocation2 + $0x258] sm:$0x80] %v2259
        %2280 = vst [vmem:[#allocation2 + $0x260] sm:$0x80] %v2260
        %2281 = vst [vmem:[#allocation2 + $0x268] sm:$0x80] %v2261
        %2282 = vst [vmem:[#allocation2 + $0x270] sm:$0x80] %v2262
        %2283 = vst [vmem:[#allocation2 + $0x278] sm:$0x80] %v2263
        %2284 = vst [vmem:[#allocation2 + $0x280] sm:$0x3] %v2254
        %2285 = vst [vmem:[#allocation2 + $0x288] sm:$0x3] %v2255
        %2286 = vst [vmem:[#allocation2 + $0x290] sm:$0x3] %v2256
        %2287 = vst [vmem:[#allocation2 + $0x298] sm:$0x3] %v2257
        %2288 = vst [vmem:[#allocation2 + $0x2a0] sm:$0x3] %v2258
        %2289 = vst [vmem:[#allocation2 + $0x2a8] sm:$0x3] %v2259
        %2290 = vst [vmem:[#allocation2 + $0x2b0] sm:$0x3] %v2260
        %2291 = vst [vmem:[#allocation2 + $0x2b8] sm:$0x3] %v2261
        %2292 = vst [vmem:[#allocation2 + $0x2c0] sm:$0x3] %v2262
        %2293 = vst [vmem:[#allocation2 + $0x2c8] sm:$0x3] %v2263
        %v2294 = vld [vmem:[%s200 + $0x4] sm:$0x77]
        %v2295 = vld [vmem:[%s200 + $0xc] sm:$0x77]
        %v2296 = vld [vmem:[%s200 + $0x14] sm:$0x77]
        %v2297 = vld [vmem:[%s200 + $0x1c] sm:$0x77]
        %v2298 = vld [vmem:[%s200 + $0x24] sm:$0x77]
        %v2299 = vld [vmem:[%s200 + $0x2c] sm:$0x7]
        %2306 = vst [vmem:[#allocation1] ss:$2 sm:$0xff] %v2294
        %s2307 = scalar_lea.vmem [#allocation1], 16
        %2308 = vst [vmem:[%s2307] ss:$2 sm:$0xff] %v2295
        %s2309 = scalar_lea.vmem [#allocation1], 32
        %2310 = vst [vmem:[%s2309] ss:$2 sm:$0xff] %v2296
        %s2311 = scalar_lea.vmem [#allocation1], 48
        %2312 = vst [vmem:[%s2311] ss:$2 sm:$0xff] %v2297
        %v2313 = vld.sshfl [vmem:[#allocation1] sm:$0xff pattern:$0x75316420]
        %v2314 = vld.sshfl [vmem:[#allocation1 + $0x8] sm:$0xff pattern:$0x75316420]
        %v2315 = vld.sshfl [vmem:[#allocation1 + $0x10] sm:$0xff pattern:$0x75316420]
        %v2316 = vld.sshfl [vmem:[#allocation1 + $0x18] sm:$0xff pattern:$0x75316420]
        %v2317 = vld.sshfl [vmem:[#allocation1 + $0x20] sm:$0xff pattern:$0x75316420]
        %v2318 = vld.sshfl [vmem:[#allocation1 + $0x28] sm:$0xff pattern:$0x75316420]
        %v2319 = vld.sshfl [vmem:[#allocation1 + $0x30] sm:$0xff pattern:$0x75316420]
        %v2320 = vld.sshfl [vmem:[#allocation1 + $0x38] sm:$0xff pattern:$0x75316420]
        %2321 = vst [vmem:[#allocation1] ss:$2 sm:$0xff] %v2298
        %2322 = vst [vmem:[%s2307] ss:$2 sm:$0xff] %v2299
        %v2323 = vld.sshfl [vmem:[#allocation1] sm:$0xff pattern:$0x75316420]
        %v2324 = vld.sshfl [vmem:[#allocation1 + $0x8] sm:$0xff pattern:$0x75316420]
        %v2325 = vld.sshfl [vmem:[#allocation1 + $0x10] sm:$0xff pattern:$0x75316420]
        %v2326 = vrot.slane %v2313, 6
        %v2327 = vrot.slane %v2314, 6
        %v2328 = vrot.slane %v2315, 6
        %v2329 = vrot.slane %v2316, 6
        %v2330 = vrot.slane %v2317, 6
        %v2331 = vrot.slane %v2318, 6
        %v2332 = vrot.slane %v2319, 6
        %v2333 = vrot.slane %v2320, 6
        %v2334 = vrot.slane %v2323, 6
        %v2335 = vrot.slane %v2324, 6
        %v2336 = vrot.slane %v2325, 6
        %2337 = vrot.lane.b32.xlu0 %v2326, 106
        %v2338 = vpop.permute.xlu0 %2337
        %2339 = vrot.lane.b32.xlu0 %v2327, 106
        %v2340 = vpop.permute.xlu0 %2339
        %2341 = vrot.lane.b32.xlu0 %v2328, 106
        %v2342 = vpop.permute.xlu0 %2341
        %2343 = vrot.lane.b32.xlu0 %v2329, 106
        %v2344 = vpop.permute.xlu0 %2343
        %2345 = vrot.lane.b32.xlu0 %v2330, 106
        %v2346 = vpop.permute.xlu0 %2345
        %2347 = vrot.lane.b32.xlu0 %v2331, 106
        %v2348 = vpop.permute.xlu0 %2347
        %2349 = vrot.lane.b32.xlu0 %v2332, 106
        %v2350 = vpop.permute.xlu0 %2349
        %2351 = vrot.lane.b32.xlu0 %v2333, 106
        %v2352 = vpop.permute.xlu0 %2351
        %2353 = vrot.lane.b32.xlu0 %v2334, 106
        %v2354 = vpop.permute.xlu0 %2353
        %2355 = vrot.lane.b32.xlu0 %v2335, 106
        %v2356 = vpop.permute.xlu0 %2355
        %2357 = vrot.lane.b32.xlu0 %v2336, 106
        %v2358 = vpop.permute.xlu0 %2357
        %vm2359 = vcmask 867328
        %v2360 = vsel %vm2359, %v2338, %v2340
        %v2361 = vsel %vm2359, %v2340, %v2342
        %v2362 = vsel %vm2359, %v2342, %v2344
        %v2363 = vsel %vm2359, %v2344, %v2346
        %v2364 = vsel %vm2359, %v2346, %v2348
        %v2365 = vsel %vm2359, %v2348, %v2350
        %v2366 = vsel %vm2359, %v2350, %v2352
        %v2367 = vsel %vm2359, %v2352, %v2354
        %v2368 = vsel %vm2359, %v2354, %v2356
        %v2369 = vsel %vm2359, %v2356, %v2358
        %2380 = vst [vmem:[#allocation2 + $0x280] sm:$0x1c] %v2360
        %2381 = vst [vmem:[#allocation2 + $0x288] sm:$0x1c] %v2361
        %2382 = vst [vmem:[#allocation2 + $0x290] sm:$0x1c] %v2362
        %2383 = vst [vmem:[#allocation2 + $0x298] sm:$0x1c] %v2363
        %2384 = vst [vmem:[#allocation2 + $0x2a0] sm:$0x1c] %v2364
        %2385 = vst [vmem:[#allocation2 + $0x2a8] sm:$0x1c] %v2365
        %2386 = vst [vmem:[#allocation2 + $0x2b0] sm:$0x1c] %v2366
        %2387 = vst [vmem:[#allocation2 + $0x2b8] sm:$0x1c] %v2367
        %2388 = vst [vmem:[#allocation2 + $0x2c0] sm:$0x1c] %v2368
        %2389 = vst [vmem:[#allocation2 + $0x2c8] sm:$0x1c] %v2369
        %v2390 = vld [vmem:[%s200 + $0x4] sm:$0x77]
        %v2391 = vld [vmem:[%s200 + $0xc] sm:$0x77]
        %v2392 = vld [vmem:[%s200 + $0x14] sm:$0x77]
        %v2393 = vld [vmem:[%s200 + $0x1c] sm:$0x77]
        %v2394 = vld [vmem:[%s200 + $0x24] sm:$0x77]
        %v2395 = vld [vmem:[%s200 + $0x2c] sm:$0x7]
        %2402 = vst [vmem:[#allocation1] ss:$2 sm:$0xff] %v2390
        %s2403 = scalar_lea.vmem [#allocation1], 16
        %2404 = vst [vmem:[%s2403] ss:$2 sm:$0xff] %v2391
        %s2405 = scalar_lea.vmem [#allocation1], 32
        %2406 = vst [vmem:[%s2405] ss:$2 sm:$0xff] %v2392
        %s2407 = scalar_lea.vmem [#allocation1], 48
        %2408 = vst [vmem:[%s2407] ss:$2 sm:$0xff] %v2393
        %v2409 = vld.sshfl [vmem:[#allocation1] sm:$0xff pattern:$0x75316420]
        %v2410 = vld.sshfl [vmem:[#allocation1 + $0x8] sm:$0xff pattern:$0x75316420]
        %v2411 = vld.sshfl [vmem:[#allocation1 + $0x10] sm:$0xff pattern:$0x75316420]
        %v2412 = vld.sshfl [vmem:[#allocation1 + $0x18] sm:$0xff pattern:$0x75316420]
        %v2413 = vld.sshfl [vmem:[#allocation1 + $0x20] sm:$0xff pattern:$0x75316420]
        %v2414 = vld.sshfl [vmem:[#allocation1 + $0x28] sm:$0xff pattern:$0x75316420]
        %v2415 = vld.sshfl [vmem:[#allocation1 + $0x30] sm:$0xff pattern:$0x75316420]
        %v2416 = vld.sshfl [vmem:[#allocation1 + $0x38] sm:$0xff pattern:$0x75316420]
        %2417 = vst [vmem:[#allocation1] ss:$2 sm:$0xff] %v2394
        %2418 = vst [vmem:[%s2403] ss:$2 sm:$0xff] %v2395
        %v2419 = vld.sshfl [vmem:[#allocation1] sm:$0xff pattern:$0x75316420]
        %v2420 = vld.sshfl [vmem:[#allocation1 + $0x8] sm:$0xff pattern:$0x75316420]
        %v2421 = vld.sshfl [vmem:[#allocation1 + $0x10] sm:$0xff pattern:$0x75316420]
        %v2422 = vrot.slane %v2409, 3
        %v2423 = vrot.slane %v2410, 3
        %v2424 = vrot.slane %v2411, 3
        %v2425 = vrot.slane %v2412, 3
        %v2426 = vrot.slane %v2413, 3
        %v2427 = vrot.slane %v2414, 3
        %v2428 = vrot.slane %v2415, 3
        %v2429 = vrot.slane %v2416, 3
        %v2430 = vrot.slane %v2419, 3
        %v2431 = vrot.slane %v2420, 3
        %v2432 = vrot.slane %v2421, 3
        %2433 = vrot.lane.b32.xlu0 %v2422, 105
        %v2434 = vpop.permute.xlu0 %2433
        %2435 = vrot.lane.b32.xlu0 %v2423, 105
        %v2436 = vpop.permute.xlu0 %2435
        %2437 = vrot.lane.b32.xlu0 %v2424, 105
        %v2438 = vpop.permute.xlu0 %2437
        %2439 = vrot.lane.b32.xlu0 %v2425, 105
        %v2440 = vpop.permute.xlu0 %2439
        %2441 = vrot.lane.b32.xlu0 %v2426, 105
        %v2442 = vpop.permute.xlu0 %2441
        %2443 = vrot.lane.b32.xlu0 %v2427, 105
        %v2444 = vpop.permute.xlu0 %2443
        %2445 = vrot.lane.b32.xlu0 %v2428, 105
        %v2446 = vpop.permute.xlu0 %2445
        %2447 = vrot.lane.b32.xlu0 %v2429, 105
        %v2448 = vpop.permute.xlu0 %2447
        %2449 = vrot.lane.b32.xlu0 %v2430, 105
        %v2450 = vpop.permute.xlu0 %2449
        %2451 = vrot.lane.b32.xlu0 %v2431, 105
        %v2452 = vpop.permute.xlu0 %2451
        %2453 = vrot.lane.b32.xlu0 %v2432, 105
        %v2454 = vpop.permute.xlu0 %2453
        %vm2455 = vcmask 859136
        %v2456 = vsel %vm2455, %v2434, %v2436
        %v2457 = vsel %vm2455, %v2436, %v2438
        %v2458 = vsel %vm2455, %v2438, %v2440
        %v2459 = vsel %vm2455, %v2440, %v2442
        %v2460 = vsel %vm2455, %v2442, %v2444
        %v2461 = vsel %vm2455, %v2444, %v2446
        %v2462 = vsel %vm2455, %v2446, %v2448
        %v2463 = vsel %vm2455, %v2448, %v2450
        %v2464 = vsel %vm2455, %v2450, %v2452
        %v2465 = vsel %vm2455, %v2452, %v2454
        %2476 = vst [vmem:[#allocation2 + $0x280] sm:$0xe0] %v2456
        %2477 = vst [vmem:[#allocation2 + $0x288] sm:$0xe0] %v2457
        %2478 = vst [vmem:[#allocation2 + $0x290] sm:$0xe0] %v2458
        %2479 = vst [vmem:[#allocation2 + $0x298] sm:$0xe0] %v2459
        %2480 = vst [vmem:[#allocation2 + $0x2a0] sm:$0xe0] %v2460
        %2481 = vst [vmem:[#allocation2 + $0x2a8] sm:$0xe0] %v2461
        %2482 = vst [vmem:[#allocation2 + $0x2b0] sm:$0xe0] %v2462
        %2483 = vst [vmem:[#allocation2 + $0x2b8] sm:$0xe0] %v2463
        %2484 = vst [vmem:[#allocation2 + $0x2c0] sm:$0xe0] %v2464
        %2485 = vst [vmem:[#allocation2 + $0x2c8] sm:$0xe0] %v2465
        %v2486 = vld [vmem:[%s200 + $0x4] sm:$0x77]
        %v2487 = vld [vmem:[%s200 + $0xc] sm:$0x77]
        %v2488 = vld [vmem:[%s200 + $0x14] sm:$0x77]
        %v2489 = vld [vmem:[%s200 + $0x1c] sm:$0x77]
        %v2490 = vld [vmem:[%s200 + $0x24] sm:$0x77]
        %v2491 = vld [vmem:[%s200 + $0x2c] sm:$0x7]
        %2498 = vst [vmem:[#allocation1] ss:$2 sm:$0xff] %v2486
        %s2499 = scalar_lea.vmem [#allocation1], 16
        %2500 = vst [vmem:[%s2499] ss:$2 sm:$0xff] %v2487
        %s2501 = scalar_lea.vmem [#allocation1], 32
        %2502 = vst [vmem:[%s2501] ss:$2 sm:$0xff] %v2488
        %s2503 = scalar_lea.vmem [#allocation1], 48
        %2504 = vst [vmem:[%s2503] ss:$2 sm:$0xff] %v2489
        %v2505 = vld.sshfl [vmem:[#allocation1] sm:$0xff pattern:$0x75316420]
        %v2506 = vld.sshfl [vmem:[#allocation1 + $0x8] sm:$0xff pattern:$0x75316420]
        %v2507 = vld.sshfl [vmem:[#allocation1 + $0x10] sm:$0xff pattern:$0x75316420]
        %v2508 = vld.sshfl [vmem:[#allocation1 + $0x18] sm:$0xff pattern:$0x75316420]
        %v2509 = vld.sshfl [vmem:[#allocation1 + $0x20] sm:$0xff pattern:$0x75316420]
        %v2510 = vld.sshfl [vmem:[#allocation1 + $0x28] sm:$0xff pattern:$0x75316420]
        %v2511 = vld.sshfl [vmem:[#allocation1 + $0x30] sm:$0xff pattern:$0x75316420]
        %v2512 = vld.sshfl [vmem:[#allocation1 + $0x38] sm:$0xff pattern:$0x75316420]
        %2513 = vst [vmem:[#allocation1] ss:$2 sm:$0xff] %v2490
        %2514 = vst [vmem:[%s2499] ss:$2 sm:$0xff] %v2491
        %v2515 = vld.sshfl [vmem:[#allocation1] sm:$0xff pattern:$0x75316420]
        %v2516 = vld.sshfl [vmem:[#allocation1 + $0x8] sm:$0xff pattern:$0x75316420]
        %v2517 = vld.sshfl [vmem:[#allocation1 + $0x10] sm:$0xff pattern:$0x75316420]
        %2518 = vrot.lane.b32.xlu0 %v2505, 104
        %v2519 = vpop.permute.xlu0 %2518
        %2520 = vrot.lane.b32.xlu0 %v2506, 104
        %v2521 = vpop.permute.xlu0 %2520
        %2522 = vrot.lane.b32.xlu0 %v2507, 104
        %v2523 = vpop.permute.xlu0 %2522
        %2524 = vrot.lane.b32.xlu0 %v2508, 104
        %v2525 = vpop.permute.xlu0 %2524
        %2526 = vrot.lane.b32.xlu0 %v2509, 104
        %v2527 = vpop.permute.xlu0 %2526
        %2528 = vrot.lane.b32.xlu0 %v2510, 104
        %v2529 = vpop.permute.xlu0 %2528
        %2530 = vrot.lane.b32.xlu0 %v2511, 104
        %v2531 = vpop.permute.xlu0 %2530
        %2532 = vrot.lane.b32.xlu0 %v2512, 104
        %v2533 = vpop.permute.xlu0 %2532
        %2534 = vrot.lane.b32.xlu0 %v2515, 104
        %v2535 = vpop.permute.xlu0 %2534
        %2536 = vrot.lane.b32.xlu0 %v2516, 104
        %v2537 = vpop.permute.xlu0 %2536
        %2538 = vrot.lane.b32.xlu0 %v2517, 104
        %v2539 = vpop.permute.xlu0 %2538
        %vm2540 = vcmask 850944
        %v2541 = vsel %vm2540, %v2519, %v2521
        %v2542 = vsel %vm2540, %v2521, %v2523
        %v2543 = vsel %vm2540, %v2523, %v2525
        %v2544 = vsel %vm2540, %v2525, %v2527
        %v2545 = vsel %vm2540, %v2527, %v2529
        %v2546 = vsel %vm2540, %v2529, %v2531
        %v2547 = vsel %vm2540, %v2531, %v2533
        %v2548 = vsel %vm2540, %v2533, %v2535
        %v2549 = vsel %vm2540, %v2535, %v2537
        %v2550 = vsel %vm2540, %v2537, %v2539
        %2561 = vst [vmem:[#allocation2 + $0x2d0] sm:$0x7] %v2541
        %2562 = vst [vmem:[#allocation2 + $0x2d8] sm:$0x7] %v2542
        %2563 = vst [vmem:[#allocation2 + $0x2e0] sm:$0x7] %v2543
        %2564 = vst [vmem:[#allocation2 + $0x2e8] sm:$0x7] %v2544
        %2565 = vst [vmem:[#allocation2 + $0x2f0] sm:$0x7] %v2545
        %2566 = vst [vmem:[#allocation2 + $0x2f8] sm:$0x7] %v2546
        %2567 = vst [vmem:[#allocation2 + $0x300] sm:$0x7] %v2547
        %2568 = vst [vmem:[#allocation2 + $0x308] sm:$0x7] %v2548
        %2569 = vst [vmem:[#allocation2 + $0x310] sm:$0x7] %v2549
        %2570 = vst [vmem:[#allocation2 + $0x318] sm:$0x7] %v2550
        %s2571 = scalar_lea.vmem [#allocation2], 723
        %2572 = vst [vmem:[%s2571] ss:$8 sm:$0xf] 1.0
        %2573 = vst [vmem:[%s2571] ss:$8 sm:$0xf0] 1.0
        %v2574 = vlaneseq
        %vm2575 = vcmp.ge.s32.totalorder %v2574, 0
        %vm2576 = vcmp.lt.s32.totalorder %v2574, 256
        %vm2577 = vmand %vm2575, %vm2576
        %s2578 = scalar_lea.vmem [#allocation2], 787
        %2579 = vst.msk [vmem:[%s2578] ss:$8 sm:$0x3] %vm2577, 1.0
        %2580 = vst.msk [vmem:[%s2578] ss:$8 sm:$0x0] %vm2577, 1.0
      $region36: #{model_forward.1} parent=31 // pred_fallthru
        _
      %v2581 = vld [vmem:[%s205] sm:$0xff]
      %v2582 = vld [vmem:[%s205 + $0x8] sm:$0xff]
      %v2583 = vld [vmem:[#allocation2] sm:$0xff]
      %v2584 = vld [vmem:[#allocation2 + $0x8] sm:$0xff]
      %v2585 = vld [vmem:[#allocation2 + $0x10] sm:$0xff]
      %v2586 = vld [vmem:[#allocation2 + $0x18] sm:$0xff]
      %v2587 = vld [vmem:[#allocation2 + $0x20] sm:$0xff]
      %v2588 = vld [vmem:[#allocation2 + $0x28] sm:$0xff]
      %v2589 = vld [vmem:[#allocation2 + $0x30] sm:$0xff]
      %v2590 = vld [vmem:[#allocation2 + $0x38] sm:$0xff]
      %v2591 = vld [vmem:[#allocation2 + $0x40] sm:$0xff]
      %v2592 = vld [vmem:[#allocation2 + $0x48] sm:$0xff]
      %v2593 = vld [vmem:[#allocation2 + $0x50] sm:$0xff]
      %v2594 = vld [vmem:[#allocation2 + $0x58] sm:$0xff]
      %v2595 = vld [vmem:[#allocation2 + $0x60] sm:$0xff]
      %v2596 = vld [vmem:[#allocation2 + $0x68] sm:$0xff]
      %v2597 = vld [vmem:[#allocation2 + $0x70] sm:$0xff]
      %v2598 = vld [vmem:[#allocation2 + $0x78] sm:$0xff]
      %v2599 = vld [vmem:[#allocation2 + $0x80] sm:$0xff]
      %v2600 = vld [vmem:[#allocation2 + $0x88] sm:$0xff]
      %v2601 = vld [vmem:[#allocation2 + $0x90] sm:$0xff]
      %v2602 = vld [vmem:[#allocation2 + $0x98] sm:$0xff]
      %v2603 = vld [vmem:[#allocation2 + $0xa0] sm:$0xff]
      %v2604 = vld [vmem:[#allocation2 + $0xa8] sm:$0xff]
      %v2605 = vld [vmem:[#allocation2 + $0xb0] sm:$0xff]
      %v2606 = vld [vmem:[#allocation2 + $0xb8] sm:$0xff]
      %v2607 = vld [vmem:[#allocation2 + $0xc0] sm:$0xff]
      %v2608 = vld [vmem:[#allocation2 + $0xc8] sm:$0xff]
      %v2609 = vld [vmem:[#allocation2 + $0xd0] sm:$0xff]
      %v2610 = vld [vmem:[#allocation2 + $0xd8] sm:$0xff]
      %v2611 = vld [vmem:[#allocation2 + $0xe0] sm:$0xff]
      %v2612 = vld [vmem:[#allocation2 + $0xe8] sm:$0xff]
      %v2613 = vld [vmem:[#allocation2 + $0xf0] sm:$0xff]
      %v2614 = vld [vmem:[#allocation2 + $0xf8] sm:$0xff]
      %v2615 = vld [vmem:[#allocation2 + $0x100] sm:$0xff]
      %v2616 = vld [vmem:[#allocation2 + $0x108] sm:$0xff]
      %v2617 = vld [vmem:[#allocation2 + $0x110] sm:$0xff]
      %v2618 = vld [vmem:[#allocation2 + $0x118] sm:$0xff]
      %v2619 = vld [vmem:[#allocation2 + $0x120] sm:$0xff]
      %v2620 = vld [vmem:[#allocation2 + $0x128] sm:$0xff]
      %v2621 = vld [vmem:[#allocation2 + $0x130] sm:$0xff]
      %v2622 = vld [vmem:[#allocation2 + $0x138] sm:$0xff]
      %v2623 = vld [vmem:[#allocation2 + $0x140] sm:$0xff]
      %v2624 = vld [vmem:[#allocation2 + $0x148] sm:$0xff]
      %v2625 = vld [vmem:[#allocation2 + $0x150] sm:$0xff]
      %v2626 = vld [vmem:[#allocation2 + $0x158] sm:$0xff]
      %v2627 = vld [vmem:[#allocation2 + $0x160] sm:$0xff]
      %v2628 = vld [vmem:[#allocation2 + $0x168] sm:$0xff]
      %v2629 = vld [vmem:[#allocation2 + $0x170] sm:$0xff]
      %v2630 = vld [vmem:[#allocation2 + $0x178] sm:$0xff]
      %v2631 = vld [vmem:[#allocation2 + $0x180] sm:$0xff]
      %v2632 = vld [vmem:[#allocation2 + $0x188] sm:$0xff]
      %v2633 = vld [vmem:[#allocation2 + $0x190] sm:$0xff]
      %v2634 = vld [vmem:[#allocation2 + $0x198] sm:$0xff]
      %v2635 = vld [vmem:[#allocation2 + $0x1a0] sm:$0xff]
      %v2636 = vld [vmem:[#allocation2 + $0x1a8] sm:$0xff]
      %v2637 = vld [vmem:[#allocation2 + $0x1b0] sm:$0xff]
      %v2638 = vld [vmem:[#allocation2 + $0x1b8] sm:$0xff]
      %v2639 = vld [vmem:[#allocation2 + $0x1c0] sm:$0xff]
      %v2640 = vld [vmem:[#allocation2 + $0x1c8] sm:$0xff]
      %v2641 = vld [vmem:[#allocation2 + $0x1d0] sm:$0xff]
      %v2642 = vld [vmem:[#allocation2 + $0x1d8] sm:$0xff]
      %v2643 = vld [vmem:[#allocation2 + $0x1e0] sm:$0xff]
      %v2644 = vld [vmem:[#allocation2 + $0x1e8] sm:$0xff]
      %v2645 = vld [vmem:[#allocation2 + $0x1f0] sm:$0xff]
      %v2646 = vld [vmem:[#allocation2 + $0x1f8] sm:$0xff]
      %v2647 = vld [vmem:[#allocation2 + $0x200] sm:$0xff]
      %v2648 = vld [vmem:[#allocation2 + $0x208] sm:$0xff]
      %v2649 = vld [vmem:[#allocation2 + $0x210] sm:$0xff]
      %v2650 = vld [vmem:[#allocation2 + $0x218] sm:$0xff]
      %v2651 = vld [vmem:[#allocation2 + $0x220] sm:$0xff]
      %v2652 = vld [vmem:[#allocation2 + $0x228] sm:$0xff]
      %v2653 = vld [vmem:[#allocation2 + $0x230] sm:$0xff]
      %v2654 = vld [vmem:[#allocation2 + $0x238] sm:$0xff]
      %v2655 = vld [vmem:[#allocation2 + $0x240] sm:$0xff]
      %v2656 = vld [vmem:[#allocation2 + $0x248] sm:$0xff]
      %v2657 = vld [vmem:[#allocation2 + $0x250] sm:$0xff]
      %v2658 = vld [vmem:[#allocation2 + $0x258] sm:$0xff]
      %v2659 = vld [vmem:[#allocation2 + $0x260] sm:$0xff]
      %v2660 = vld [vmem:[#allocation2 + $0x268] sm:$0xff]
      %v2661 = vld [vmem:[#allocation2 + $0x270] sm:$0xff]
      %v2662 = vld [vmem:[#allocation2 + $0x278] sm:$0xff]
      %v2663 = vld [vmem:[#allocation2 + $0x280] sm:$0xff]
      %v2664 = vld [vmem:[#allocation2 + $0x288] sm:$0xff]
      %v2665 = vld [vmem:[#allocation2 + $0x290] sm:$0xff]
      %v2666 = vld [vmem:[#allocation2 + $0x298] sm:$0xff]
      %v2667 = vld [vmem:[#allocation2 + $0x2a0] sm:$0xff]
      %v2668 = vld [vmem:[#allocation2 + $0x2a8] sm:$0xff]
      %v2669 = vld [vmem:[#allocation2 + $0x2b0] sm:$0xff]
      %v2670 = vld [vmem:[#allocation2 + $0x2b8] sm:$0xff]
      %v2671 = vld [vmem:[#allocation2 + $0x2c0] sm:$0xff]
      %v2672 = vld [vmem:[#allocation2 + $0x2c8] sm:$0xff]
      %v2673 = vld [vmem:[#allocation2 + $0x2d0] sm:$0xf]
      %v2674 = vld [vmem:[#allocation2 + $0x2d8] sm:$0xf]
      %v2675 = vld [vmem:[#allocation2 + $0x2e0] sm:$0xf]
      %v2676 = vld [vmem:[#allocation2 + $0x2e8] sm:$0xf]
      %v2677 = vld [vmem:[#allocation2 + $0x2f0] sm:$0xf]
      %v2678 = vld [vmem:[#allocation2 + $0x2f8] sm:$0xf]
      %v2679 = vld [vmem:[#allocation2 + $0x300] sm:$0xf]
      %v2680 = vld [vmem:[#allocation2 + $0x308] sm:$0xf]
      %v2681 = vld [vmem:[#allocation2 + $0x310] sm:$0xf]
      %v2682 = vld [vmem:[#allocation2 + $0x318] sm:$0xf]
      %vm2683 = vcmask 621568
      %v2685 = vsel %vm2683, %v2581, 0
      %v2688 = vsel %vm2683, %v2582, 0
      %vm2690 = vcmask 1043456
      %v2692 = vsel %vm2690, %v2673, 0
      %v2695 = vsel %vm2690, %v2674, 0
      %v2698 = vsel %vm2690, %v2675, 0
      %v2701 = vsel %vm2690, %v2676, 0
      %v2704 = vsel %vm2690, %v2677, 0
      %v2707 = vsel %vm2690, %v2678, 0
      %v2710 = vsel %vm2690, %v2679, 0
      %v2713 = vsel %vm2690, %v2680, 0
      %v2716 = vsel %vm2690, %v2681, 0
      %v2719 = vsel %vm2690, %v2682, 0
      %2721 = vmatpush.msra.mxu0 0.0
      %2722 = vmatpush.msra.mxu0 0.0
      %2723 = vmatpush.msra.mxu0 0.0
      %2724 = vmatpush.msra.mxu0 0.0
      %2725 = vmatpush.msra.mxu0 0.0
      %2726 = vmatpush.msra.mxu0 0.0
      %2727 = vmatpush.msra.mxu0 %v2692
      %2728 = vmatpush.msra.mxu0 %v2663
      %2729 = vmatpush.msra.mxu0 %v2653
      %2730 = vmatpush.msra.mxu0 %v2643
      %2731 = vmatpush.msra.mxu0 %v2633
      %2732 = vmatpush.msra.mxu0 %v2623
      %2733 = vmatpush.msra.mxu0 %v2613
      %2734 = vmatpush.msra.mxu0 %v2603
      %2735 = vmatpush.msra.mxu0 %v2593
      %2736 = vmatpush.msra.mxu0 %v2583
      %2737 = vmatmul.f32.gmra.mxu0 %v2685
      %v2738 = vpop.f32.mrf.mxu0
      %v2739 = vadd.f32 0.0, %v2738
      %2740 = vmatmul.f32.gmra.mxu0 %v2688
      %v2741 = vpop.f32.mrf.mxu0
      %v2742 = vadd.f32 0.0, %v2741
      %2743 = vdwg.mxu0
      %2744 = vmatpush.msra.mxu0 0.0
      %2745 = vmatpush.msra.mxu0 0.0
      %2746 = vmatpush.msra.mxu0 0.0
      %2747 = vmatpush.msra.mxu0 0.0
      %2748 = vmatpush.msra.mxu0 0.0
      %2749 = vmatpush.msra.mxu0 0.0
      %2750 = vmatpush.msra.mxu0 %v2695
      %2751 = vmatpush.msra.mxu0 %v2664
      %2752 = vmatpush.msra.mxu0 %v2654
      %2753 = vmatpush.msra.mxu0 %v2644
      %2754 = vmatpush.msra.mxu0 %v2634
      %2755 = vmatpush.msra.mxu0 %v2624
      %2756 = vmatpush.msra.mxu0 %v2614
      %2757 = vmatpush.msra.mxu0 %v2604
      %2758 = vmatpush.msra.mxu0 %v2594
      %2759 = vmatpush.msra.mxu0 %v2584
      %2760 = vmatmul.f32.gmra.mxu0 %v2685
      %v2761 = vpop.f32.mrf.mxu0
      %v2762 = vadd.f32 0.0, %v2761
      %2763 = vmatmul.f32.gmra.mxu0 %v2688
      %v2764 = vpop.f32.mrf.mxu0
      %v2765 = vadd.f32 0.0, %v2764
      %2766 = vdwg.mxu0
      %2767 = vmatpush.msra.mxu0 0.0
      %2768 = vmatpush.msra.mxu0 0.0
      %2769 = vmatpush.msra.mxu0 0.0
      %2770 = vmatpush.msra.mxu0 0.0
      %2771 = vmatpush.msra.mxu0 0.0
      %2772 = vmatpush.msra.mxu0 0.0
      %2773 = vmatpush.msra.mxu0 %v2698
      %2774 = vmatpush.msra.mxu0 %v2665
      %2775 = vmatpush.msra.mxu0 %v2655
      %2776 = vmatpush.msra.mxu0 %v2645
      %2777 = vmatpush.msra.mxu0 %v2635
      %2778 = vmatpush.msra.mxu0 %v2625
      %2779 = vmatpush.msra.mxu0 %v2615
      %2780 = vmatpush.msra.mxu0 %v2605
      %2781 = vmatpush.msra.mxu0 %v2595
      %2782 = vmatpush.msra.mxu0 %v2585
      %2783 = vmatmul.f32.gmra.mxu0 %v2685
      %v2784 = vpop.f32.mrf.mxu0
      %v2785 = vadd.f32 0.0, %v2784
      %2786 = vmatmul.f32.gmra.mxu0 %v2688
      %v2787 = vpop.f32.mrf.mxu0
      %v2788 = vadd.f32 0.0, %v2787
      %2789 = vdwg.mxu0
      %2790 = vmatpush.msra.mxu0 0.0
      %2791 = vmatpush.msra.mxu0 0.0
      %2792 = vmatpush.msra.mxu0 0.0
      %2793 = vmatpush.msra.mxu0 0.0
      %2794 = vmatpush.msra.mxu0 0.0
      %2795 = vmatpush.msra.mxu0 0.0
      %2796 = vmatpush.msra.mxu0 %v2701
      %2797 = vmatpush.msra.mxu0 %v2666
      %2798 = vmatpush.msra.mxu0 %v2656
      %2799 = vmatpush.msra.mxu0 %v2646
      %2800 = vmatpush.msra.mxu0 %v2636
      %2801 = vmatpush.msra.mxu0 %v2626
      %2802 = vmatpush.msra.mxu0 %v2616
      %2803 = vmatpush.msra.mxu0 %v2606
      %2804 = vmatpush.msra.mxu0 %v2596
      %2805 = vmatpush.msra.mxu0 %v2586
      %2806 = vmatmul.f32.gmra.mxu0 %v2685
      %v2807 = vpop.f32.mrf.mxu0
      %v2808 = vadd.f32 0.0, %v2807
      %2809 = vmatmul.f32.gmra.mxu0 %v2688
      %v2810 = vpop.f32.mrf.mxu0
      %v2811 = vadd.f32 0.0, %v2810
      %2812 = vdwg.mxu0
      %2813 = vmatpush.msra.mxu0 0.0
      %2814 = vmatpush.msra.mxu0 0.0
      %2815 = vmatpush.msra.mxu0 0.0
      %2816 = vmatpush.msra.mxu0 0.0
      %2817 = vmatpush.msra.mxu0 0.0
      %2818 = vmatpush.msra.mxu0 0.0
      %2819 = vmatpush.msra.mxu0 %v2704
      %2820 = vmatpush.msra.mxu0 %v2667
      %2821 = vmatpush.msra.mxu0 %v2657
      %2822 = vmatpush.msra.mxu0 %v2647
      %2823 = vmatpush.msra.mxu0 %v2637
      %2824 = vmatpush.msra.mxu0 %v2627
      %2825 = vmatpush.msra.mxu0 %v2617
      %2826 = vmatpush.msra.mxu0 %v2607
      %2827 = vmatpush.msra.mxu0 %v2597
      %2828 = vmatpush.msra.mxu0 %v2587
      %2829 = vmatmul.f32.gmra.mxu0 %v2685
      %v2830 = vpop.f32.mrf.mxu0
      %v2831 = vadd.f32 0.0, %v2830
      %2832 = vmatmul.f32.gmra.mxu0 %v2688
      %v2833 = vpop.f32.mrf.mxu0
      %v2834 = vadd.f32 0.0, %v2833
      %2835 = vdwg.mxu0
      %2836 = vmatpush.msra.mxu0 0.0
      %2837 = vmatpush.msra.mxu0 0.0
      %2838 = vmatpush.msra.mxu0 0.0
      %2839 = vmatpush.msra.mxu0 0.0
      %2840 = vmatpush.msra.mxu0 0.0
      %2841 = vmatpush.msra.mxu0 0.0
      %2842 = vmatpush.msra.mxu0 %v2707
      %2843 = vmatpush.msra.mxu0 %v2668
      %2844 = vmatpush.msra.mxu0 %v2658
      %2845 = vmatpush.msra.mxu0 %v2648
      %2846 = vmatpush.msra.mxu0 %v2638
      %2847 = vmatpush.msra.mxu0 %v2628
      %2848 = vmatpush.msra.mxu0 %v2618
      %2849 = vmatpush.msra.mxu0 %v2608
      %2850 = vmatpush.msra.mxu0 %v2598
      %2851 = vmatpush.msra.mxu0 %v2588
      %2852 = vmatmul.f32.gmra.mxu0 %v2685
      %v2853 = vpop.f32.mrf.mxu0
      %v2854 = vadd.f32 0.0, %v2853
      %2855 = vmatmul.f32.gmra.mxu0 %v2688
      %v2856 = vpop.f32.mrf.mxu0
      %v2857 = vadd.f32 0.0, %v2856
      %2858 = vdwg.mxu0
      %2859 = vmatpush.msra.mxu0 0.0
      %2860 = vmatpush.msra.mxu0 0.0
      %2861 = vmatpush.msra.mxu0 0.0
      %2862 = vmatpush.msra.mxu0 0.0
      %2863 = vmatpush.msra.mxu0 0.0
      %2864 = vmatpush.msra.mxu0 0.0
      %2865 = vmatpush.msra.mxu0 %v2710
      %2866 = vmatpush.msra.mxu0 %v2669
      %2867 = vmatpush.msra.mxu0 %v2659
      %2868 = vmatpush.msra.mxu0 %v2649
      %2869 = vmatpush.msra.mxu0 %v2639
      %2870 = vmatpush.msra.mxu0 %v2629
      %2871 = vmatpush.msra.mxu0 %v2619
      %2872 = vmatpush.msra.mxu0 %v2609
      %2873 = vmatpush.msra.mxu0 %v2599
      %2874 = vmatpush.msra.mxu0 %v2589
      %2875 = vmatmul.f32.gmra.mxu0 %v2685
      %v2876 = vpop.f32.mrf.mxu0
      %v2877 = vadd.f32 0.0, %v2876
      %2878 = vmatmul.f32.gmra.mxu0 %v2688
      %v2879 = vpop.f32.mrf.mxu0
      %v2880 = vadd.f32 0.0, %v2879
      %2881 = vdwg.mxu0
      %2882 = vmatpush.msra.mxu0 0.0
      %2883 = vmatpush.msra.mxu0 0.0
      %2884 = vmatpush.msra.mxu0 0.0
      %2885 = vmatpush.msra.mxu0 0.0
      %2886 = vmatpush.msra.mxu0 0.0
      %2887 = vmatpush.msra.mxu0 0.0
      %2888 = vmatpush.msra.mxu0 %v2713
      %2889 = vmatpush.msra.mxu0 %v2670
      %2890 = vmatpush.msra.mxu0 %v2660
      %2891 = vmatpush.msra.mxu0 %v2650
      %2892 = vmatpush.msra.mxu0 %v2640
      %2893 = vmatpush.msra.mxu0 %v2630
      %2894 = vmatpush.msra.mxu0 %v2620
      %2895 = vmatpush.msra.mxu0 %v2610
      %2896 = vmatpush.msra.mxu0 %v2600
      %2897 = vmatpush.msra.mxu0 %v2590
      %2898 = vmatmul.f32.gmra.mxu0 %v2685
      %v2899 = vpop.f32.mrf.mxu0
      %v2900 = vadd.f32 0.0, %v2899
      %2901 = vmatmul.f32.gmra.mxu0 %v2688
      %v2902 = vpop.f32.mrf.mxu0
      %v2903 = vadd.f32 0.0, %v2902
      %2904 = vdwg.mxu0
      %2905 = vmatpush.msra.mxu0 0.0
      %2906 = vmatpush.msra.mxu0 0.0
      %2907 = vmatpush.msra.mxu0 0.0
      %2908 = vmatpush.msra.mxu0 0.0
      %2909 = vmatpush.msra.mxu0 0.0
      %2910 = vmatpush.msra.mxu0 0.0
      %2911 = vmatpush.msra.mxu0 %v2716
      %2912 = vmatpush.msra.mxu0 %v2671
      %2913 = vmatpush.msra.mxu0 %v2661
      %2914 = vmatpush.msra.mxu0 %v2651
      %2915 = vmatpush.msra.mxu0 %v2641
      %2916 = vmatpush.msra.mxu0 %v2631
      %2917 = vmatpush.msra.mxu0 %v2621
      %2918 = vmatpush.msra.mxu0 %v2611
      %2919 = vmatpush.msra.mxu0 %v2601
      %2920 = vmatpush.msra.mxu0 %v2591
      %2921 = vmatmul.f32.gmra.mxu0 %v2685
      %v2922 = vpop.f32.mrf.mxu0
      %v2923 = vadd.f32 0.0, %v2922
      %2924 = vmatmul.f32.gmra.mxu0 %v2688
      %v2925 = vpop.f32.mrf.mxu0
      %v2926 = vadd.f32 0.0, %v2925
      %2927 = vdwg.mxu0
      %2928 = vmatpush.msra.mxu0 0.0
      %2929 = vmatpush.msra.mxu0 0.0
      %2930 = vmatpush.msra.mxu0 0.0
      %2931 = vmatpush.msra.mxu0 0.0
      %2932 = vmatpush.msra.mxu0 0.0
      %2933 = vmatpush.msra.mxu0 0.0
      %2934 = vmatpush.msra.mxu0 %v2719
      %2935 = vmatpush.msra.mxu0 %v2672
      %2936 = vmatpush.msra.mxu0 %v2662
      %2937 = vmatpush.msra.mxu0 %v2652
      %2938 = vmatpush.msra.mxu0 %v2642
      %2939 = vmatpush.msra.mxu0 %v2632
      %2940 = vmatpush.msra.mxu0 %v2622
      %2941 = vmatpush.msra.mxu0 %v2612
      %2942 = vmatpush.msra.mxu0 %v2602
      %2943 = vmatpush.msra.mxu0 %v2592
      %2944 = vmatmul.f32.gmra.mxu0 %v2685
      %v2945 = vpop.f32.mrf.mxu0
      %v2946 = vadd.f32 0.0, %v2945
      %2947 = vmatmul.f32.gmra.mxu0 %v2688
      %v2948 = vpop.f32.mrf.mxu0
      %v2949 = vadd.f32 0.0, %v2948
      %2950 = vdwg.mxu0
      %v2951 = vld [vmem:[%s2] sm:$0xff]
      %v2952 = vld [vmem:[%s2 + $0x8] sm:$0x3]
      %v2955 = vperm.slane %v2951, 0
      %v2956 = vperm.slane %v2951, 1
      %v2957 = vperm.slane %v2951, 2
      %v2958 = vperm.slane %v2951, 3
      %v2959 = vperm.slane %v2951, 4
      %v2960 = vperm.slane %v2951, 5
      %v2961 = vperm.slane %v2951, 6
      %v2962 = vperm.slane %v2951, 7
      %v2963 = vperm.slane %v2952, 0
      %v2964 = vperm.slane %v2952, 1
      %v2975 = vmul.f32 %v2739, %v2955
      %v2976 = vmul.f32 %v2762, %v2956
      %v2977 = vmul.f32 %v2785, %v2957
      %v2978 = vmul.f32 %v2808, %v2958
      %v2979 = vmul.f32 %v2831, %v2959
      %v2980 = vmul.f32 %v2854, %v2960
      %v2981 = vmul.f32 %v2877, %v2961
      %v2982 = vmul.f32 %v2900, %v2962
      %v2983 = vmul.f32 %v2923, %v2963
      %v2984 = vmul.f32 %v2946, %v2964
      %v2985 = vmul.f32 %v2742, %v2955
      %v2986 = vmul.f32 %v2765, %v2956
      %v2987 = vmul.f32 %v2788, %v2957
      %v2988 = vmul.f32 %v2811, %v2958
      %v2989 = vmul.f32 %v2834, %v2959
      %v2990 = vmul.f32 %v2857, %v2960
      %v2991 = vmul.f32 %v2880, %v2961
      %v2992 = vmul.f32 %v2903, %v2962
      %v2993 = vmul.f32 %v2926, %v2963
      %v2994 = vmul.f32 %v2949, %v2964
      %3015 = vrot.lane.b32.xlu0 %v2975, 91
      %v3016 = vpop.permute.xlu0 %3015
      %3017 = vrot.lane.b32.xlu0 %v2976, 91
      %v3018 = vpop.permute.xlu0 %3017
      %3019 = vrot.lane.b32.xlu0 %v2977, 91
      %v3020 = vpop.permute.xlu0 %3019
      %3021 = vrot.lane.b32.xlu0 %v2978, 91
      %v3022 = vpop.permute.xlu0 %3021
      %3023 = vrot.lane.b32.xlu0 %v2979, 91
      %v3024 = vpop.permute.xlu0 %3023
      %3025 = vrot.lane.b32.xlu0 %v2980, 91
      %v3026 = vpop.permute.xlu0 %3025
      %3027 = vrot.lane.b32.xlu0 %v2981, 91
      %v3028 = vpop.permute.xlu0 %3027
      %3029 = vrot.lane.b32.xlu0 %v2982, 91
      %v3030 = vpop.permute.xlu0 %3029
      %3031 = vrot.lane.b32.xlu0 %v2983, 91
      %v3032 = vpop.permute.xlu0 %3031
      %3033 = vrot.lane.b32.xlu0 %v2984, 91
      %v3034 = vpop.permute.xlu0 %3033
      %3035 = vrot.lane.b32.xlu0 %v2985, 91
      %v3036 = vpop.permute.xlu0 %3035
      %3037 = vrot.lane.b32.xlu0 %v2986, 91
      %v3038 = vpop.permute.xlu0 %3037
      %3039 = vrot.lane.b32.xlu0 %v2987, 91
      %v3040 = vpop.permute.xlu0 %3039
      %3041 = vrot.lane.b32.xlu0 %v2988, 91
      %v3042 = vpop.permute.xlu0 %3041
      %3043 = vrot.lane.b32.xlu0 %v2989, 91
      %v3044 = vpop.permute.xlu0 %3043
      %3045 = vrot.lane.b32.xlu0 %v2990, 91
      %v3046 = vpop.permute.xlu0 %3045
      %3047 = vrot.lane.b32.xlu0 %v2991, 91
      %v3048 = vpop.permute.xlu0 %3047
      %3049 = vrot.lane.b32.xlu0 %v2992, 91
      %v3050 = vpop.permute.xlu0 %3049
      %3051 = vrot.lane.b32.xlu0 %v2993, 91
      %v3052 = vpop.permute.xlu0 %3051
      %3053 = vrot.lane.b32.xlu0 %v2994, 91
      %v3054 = vpop.permute.xlu0 %3053
      %vm3055 = vcmask 744448
      %v3056 = vsel %vm3055, %v3016, %v3018
      %v3057 = vsel %vm3055, %v3018, %v3020
      %v3058 = vsel %vm3055, %v3020, %v3022
      %v3059 = vsel %vm3055, %v3022, %v3024
      %v3060 = vsel %vm3055, %v3024, %v3026
      %v3061 = vsel %vm3055, %v3026, %v3028
      %v3062 = vsel %vm3055, %v3028, %v3030
      %v3063 = vsel %vm3055, %v3030, %v3032
      %v3064 = vsel %vm3055, %v3032, %v3034
      %v3065 = vsel %vm3055, %v3036, %v3038
      %v3066 = vsel %vm3055, %v3038, %v3040
      %v3067 = vsel %vm3055, %v3040, %v3042
      %v3068 = vsel %vm3055, %v3042, %v3044
      %v3069 = vsel %vm3055, %v3044, %v3046
      %v3070 = vsel %vm3055, %v3046, %v3048
      %v3071 = vsel %vm3055, %v3048, %v3050
      %v3072 = vsel %vm3055, %v3050, %v3052
      %v3073 = vsel %vm3055, %v3052, %v3054
      %v3094 = vsel %vm3055, %v3034, 0.0
      %v3095 = vsel %vm3055, %v3054, 0.0
      %3096 = vrot.lane.b32.xlu0 %v2975, 37
      %v3097 = vpop.permute.xlu0 %3096
      %3098 = vrot.lane.b32.xlu0 %v2976, 37
      %v3099 = vpop.permute.xlu0 %3098
      %3100 = vrot.lane.b32.xlu0 %v2977, 37
      %v3101 = vpop.permute.xlu0 %3100
      %3102 = vrot.lane.b32.xlu0 %v2978, 37
      %v3103 = vpop.permute.xlu0 %3102
      %3104 = vrot.lane.b32.xlu0 %v2979, 37
      %v3105 = vpop.permute.xlu0 %3104
      %3106 = vrot.lane.b32.xlu0 %v2980, 37
      %v3107 = vpop.permute.xlu0 %3106
      %3108 = vrot.lane.b32.xlu0 %v2981, 37
      %v3109 = vpop.permute.xlu0 %3108
      %3110 = vrot.lane.b32.xlu0 %v2982, 37
      %v3111 = vpop.permute.xlu0 %3110
      %3112 = vrot.lane.b32.xlu0 %v2983, 37
      %v3113 = vpop.permute.xlu0 %3112
      %3114 = vrot.lane.b32.xlu0 %v2984, 37
      %v3115 = vpop.permute.xlu0 %3114
      %3116 = vrot.lane.b32.xlu0 %v2985, 37
      %v3117 = vpop.permute.xlu0 %3116
      %3118 = vrot.lane.b32.xlu0 %v2986, 37
      %v3119 = vpop.permute.xlu0 %3118
      %3120 = vrot.lane.b32.xlu0 %v2987, 37
      %v3121 = vpop.permute.xlu0 %3120
      %3122 = vrot.lane.b32.xlu0 %v2988, 37
      %v3123 = vpop.permute.xlu0 %3122
      %3124 = vrot.lane.b32.xlu0 %v2989, 37
      %v3125 = vpop.permute.xlu0 %3124
      %3126 = vrot.lane.b32.xlu0 %v2990, 37
      %v3127 = vpop.permute.xlu0 %3126
      %3128 = vrot.lane.b32.xlu0 %v2991, 37
      %v3129 = vpop.permute.xlu0 %3128
      %3130 = vrot.lane.b32.xlu0 %v2992, 37
      %v3131 = vpop.permute.xlu0 %3130
      %3132 = vrot.lane.b32.xlu0 %v2993, 37
      %v3133 = vpop.permute.xlu0 %3132
      %3134 = vrot.lane.b32.xlu0 %v2994, 37
      %v3135 = vpop.permute.xlu0 %3134
      %vm3136 = vcmask 302080
      %v3137 = vsel %vm3136, %v3097, %v3099
      %v3138 = vsel %vm3136, %v3099, %v3101
      %v3139 = vsel %vm3136, %v3101, %v3103
      %v3140 = vsel %vm3136, %v3103, %v3105
      %v3141 = vsel %vm3136, %v3105, %v3107
      %v3142 = vsel %vm3136, %v3107, %v3109
      %v3143 = vsel %vm3136, %v3109, %v3111
      %v3144 = vsel %vm3136, %v3111, %v3113
      %v3145 = vsel %vm3136, %v3113, %v3115
      %v3146 = vsel %vm3136, %v3117, %v3119
      %v3147 = vsel %vm3136, %v3119, %v3121
      %v3148 = vsel %vm3136, %v3121, %v3123
      %v3149 = vsel %vm3136, %v3123, %v3125
      %v3150 = vsel %vm3136, %v3125, %v3127
      %v3151 = vsel %vm3136, %v3127, %v3129
      %v3152 = vsel %vm3136, %v3129, %v3131
      %v3153 = vsel %vm3136, %v3131, %v3133
      %v3154 = vsel %vm3136, %v3133, %v3135
      %v3175 = vsel %vm3136, 0.0, %v3097
      %v3176 = vsel %vm3136, 0.0, %v3117
      %v3177 = vmax.f32 %v3056, %v3175
      %v3178 = vmax.f32 %v3057, %v3137
      %v3179 = vmax.f32 %v3058, %v3138
      %v3180 = vmax.f32 %v3059, %v3139
      %v3181 = vmax.f32 %v3060, %v3140
      %v3182 = vmax.f32 %v3061, %v3141
      %v3183 = vmax.f32 %v3062, %v3142
      %v3184 = vmax.f32 %v3063, %v3143
      %v3185 = vmax.f32 %v3064, %v3144
      %v3186 = vmax.f32 %v3094, %v3145
      %v3187 = vmax.f32 %v3065, %v3176
      %v3188 = vmax.f32 %v3066, %v3146
      %v3189 = vmax.f32 %v3067, %v3147
      %v3190 = vmax.f32 %v3068, %v3148
      %v3191 = vmax.f32 %v3069, %v3149
      %v3192 = vmax.f32 %v3070, %v3150
      %v3193 = vmax.f32 %v3071, %v3151
      %v3194 = vmax.f32 %v3072, %v3152
      %v3195 = vmax.f32 %v3073, %v3153
      %v3196 = vmax.f32 %v3095, %v3154
      %v3197 = vmax.f32 %v2975, %v3177
      %v3198 = vmax.f32 %v2976, %v3178
      %v3199 = vmax.f32 %v2977, %v3179
      %v3200 = vmax.f32 %v2978, %v3180
      %v3201 = vmax.f32 %v2979, %v3181
      %v3202 = vmax.f32 %v2980, %v3182
      %v3203 = vmax.f32 %v2981, %v3183
      %v3204 = vmax.f32 %v2982, %v3184
      %v3205 = vmax.f32 %v2983, %v3185
      %v3206 = vmax.f32 %v2984, %v3186
      %v3207 = vmax.f32 %v2985, %v3187
      %v3208 = vmax.f32 %v2986, %v3188
      %v3209 = vmax.f32 %v2987, %v3189
      %v3210 = vmax.f32 %v2988, %v3190
      %v3211 = vmax.f32 %v2989, %v3191
      %v3212 = vmax.f32 %v2990, %v3192
      %v3213 = vmax.f32 %v2991, %v3193
      %v3214 = vmax.f32 %v2992, %v3194
      %v3215 = vmax.f32 %v2993, %v3195
      %v3216 = vmax.f32 %v2994, %v3196
      %v3217 = vmul.f32 %v3197, %v2955
      %v3218 = vmul.f32 %v3198, %v2956
      %v3219 = vmul.f32 %v3199, %v2957
      %v3220 = vmul.f32 %v3200, %v2958
      %v3221 = vmul.f32 %v3201, %v2959
      %v3222 = vmul.f32 %v3202, %v2960
      %v3223 = vmul.f32 %v3203, %v2961
      %v3224 = vmul.f32 %v3204, %v2962
      %v3225 = vmul.f32 %v3205, %v2963
      %v3226 = vmul.f32 %v3206, %v2964
      %v3227 = vmul.f32 %v3207, %v2955
      %v3228 = vmul.f32 %v3208, %v2956
      %v3229 = vmul.f32 %v3209, %v2957
      %v3230 = vmul.f32 %v3210, %v2958
      %v3231 = vmul.f32 %v3211, %v2959
      %v3232 = vmul.f32 %v3212, %v2960
      %v3233 = vmul.f32 %v3213, %v2961
      %v3234 = vmul.f32 %v3214, %v2962
      %v3235 = vmul.f32 %v3215, %v2963
      %v3236 = vmul.f32 %v3216, %v2964
      %3257 = vrot.lane.b32.xlu0 %v3217, 127
      %v3258 = vpop.permute.xlu0 %3257
      %3259 = vrot.lane.b32.xlu0 %v3218, 127
      %v3260 = vpop.permute.xlu0 %3259
      %3261 = vrot.lane.b32.xlu0 %v3219, 127
      %v3262 = vpop.permute.xlu0 %3261
      %3263 = vrot.lane.b32.xlu0 %v3220, 127
      %v3264 = vpop.permute.xlu0 %3263
      %3265 = vrot.lane.b32.xlu0 %v3221, 127
      %v3266 = vpop.permute.xlu0 %3265
      %3267 = vrot.lane.b32.xlu0 %v3222, 127
      %v3268 = vpop.permute.xlu0 %3267
      %3269 = vrot.lane.b32.xlu0 %v3223, 127
      %v3270 = vpop.permute.xlu0 %3269
      %3271 = vrot.lane.b32.xlu0 %v3224, 127
      %v3272 = vpop.permute.xlu0 %3271
      %3273 = vrot.lane.b32.xlu0 %v3225, 127
      %v3274 = vpop.permute.xlu0 %3273
      %3275 = vrot.lane.b32.xlu0 %v3226, 127
      %v3276 = vpop.permute.xlu0 %3275
      %3277 = vrot.lane.b32.xlu0 %v3227, 127
      %v3278 = vpop.permute.xlu0 %3277
      %3279 = vrot.lane.b32.xlu0 %v3228, 127
      %v3280 = vpop.permute.xlu0 %3279
      %3281 = vrot.lane.b32.xlu0 %v3229, 127
      %v3282 = vpop.permute.xlu0 %3281
      %3283 = vrot.lane.b32.xlu0 %v3230, 127
      %v3284 = vpop.permute.xlu0 %3283
      %3285 = vrot.lane.b32.xlu0 %v3231, 127
      %v3286 = vpop.permute.xlu0 %3285
      %3287 = vrot.lane.b32.xlu0 %v3232, 127
      %v3288 = vpop.permute.xlu0 %3287
      %3289 = vrot.lane.b32.xlu0 %v3233, 127
      %v3290 = vpop.permute.xlu0 %3289
      %3291 = vrot.lane.b32.xlu0 %v3234, 127
      %v3292 = vpop.permute.xlu0 %3291
      %3293 = vrot.lane.b32.xlu0 %v3235, 127
      %v3294 = vpop.permute.xlu0 %3293
      %3295 = vrot.lane.b32.xlu0 %v3236, 127
      %v3296 = vpop.permute.xlu0 %3295
      %vm3297 = vcmask 1039360
      %v3298 = vsel %vm3297, %v3258, %v3260
      %v3299 = vsel %vm3297, %v3260, %v3262
      %v3300 = vsel %vm3297, %v3262, %v3264
      %v3301 = vsel %vm3297, %v3264, %v3266
      %v3302 = vsel %vm3297, %v3266, %v3268
      %v3303 = vsel %vm3297, %v3268, %v3270
      %v3304 = vsel %vm3297, %v3270, %v3272
      %v3305 = vsel %vm3297, %v3272, %v3274
      %v3306 = vsel %vm3297, %v3274, %v3276
      %v3307 = vsel %vm3297, %v3278, %v3280
      %v3308 = vsel %vm3297, %v3280, %v3282
      %v3309 = vsel %vm3297, %v3282, %v3284
      %v3310 = vsel %vm3297, %v3284, %v3286
      %v3311 = vsel %vm3297, %v3286, %v3288
      %v3312 = vsel %vm3297, %v3288, %v3290
      %v3313 = vsel %vm3297, %v3290, %v3292
      %v3314 = vsel %vm3297, %v3292, %v3294
      %v3315 = vsel %vm3297, %v3294, %v3296
      %v3336 = vsel %vm3297, %v3276, 0.0
      %v3337 = vsel %vm3297, %v3296, 0.0
      %3338 = vrot.lane.b32.xlu0 %v3217, 1
      %v3339 = vpop.permute.xlu0 %3338
      %3340 = vrot.lane.b32.xlu0 %v3218, 1
      %v3341 = vpop.permute.xlu0 %3340
      %3342 = vrot.lane.b32.xlu0 %v3219, 1
      %v3343 = vpop.permute.xlu0 %3342
      %3344 = vrot.lane.b32.xlu0 %v3220, 1
      %v3345 = vpop.permute.xlu0 %3344
      %3346 = vrot.lane.b32.xlu0 %v3221, 1
      %v3347 = vpop.permute.xlu0 %3346
      %3348 = vrot.lane.b32.xlu0 %v3222, 1
      %v3349 = vpop.permute.xlu0 %3348
      %3350 = vrot.lane.b32.xlu0 %v3223, 1
      %v3351 = vpop.permute.xlu0 %3350
      %3352 = vrot.lane.b32.xlu0 %v3224, 1
      %v3353 = vpop.permute.xlu0 %3352
      %3354 = vrot.lane.b32.xlu0 %v3225, 1
      %v3355 = vpop.permute.xlu0 %3354
      %3356 = vrot.lane.b32.xlu0 %v3226, 1
      %v3357 = vpop.permute.xlu0 %3356
      %3358 = vrot.lane.b32.xlu0 %v3227, 1
      %v3359 = vpop.permute.xlu0 %3358
      %3360 = vrot.lane.b32.xlu0 %v3228, 1
      %v3361 = vpop.permute.xlu0 %3360
      %3362 = vrot.lane.b32.xlu0 %v3229, 1
      %v3363 = vpop.permute.xlu0 %3362
      %3364 = vrot.lane.b32.xlu0 %v3230, 1
      %v3365 = vpop.permute.xlu0 %3364
      %3366 = vrot.lane.b32.xlu0 %v3231, 1
      %v3367 = vpop.permute.xlu0 %3366
      %3368 = vrot.lane.b32.xlu0 %v3232, 1
      %v3369 = vpop.permute.xlu0 %3368
      %3370 = vrot.lane.b32.xlu0 %v3233, 1
      %v3371 = vpop.permute.xlu0 %3370
      %3372 = vrot.lane.b32.xlu0 %v3234, 1
      %v3373 = vpop.permute.xlu0 %3372
      %3374 = vrot.lane.b32.xlu0 %v3235, 1
      %v3375 = vpop.permute.xlu0 %3374
      %3376 = vrot.lane.b32.xlu0 %v3236, 1
      %v3377 = vpop.permute.xlu0 %3376
      %vm3378 = vcmask 7168
      %v3379 = vsel %vm3378, %v3339, %v3341
      %v3380 = vsel %vm3378, %v3341, %v3343
      %v3381 = vsel %vm3378, %v3343, %v3345
      %v3382 = vsel %vm3378, %v3345, %v3347
      %v3383 = vsel %vm3378, %v3347, %v3349
      %v3384 = vsel %vm3378, %v3349, %v3351
      %v3385 = vsel %vm3378, %v3351, %v3353
      %v3386 = vsel %vm3378, %v3353, %v3355
      %v3387 = vsel %vm3378, %v3355, %v3357
      %v3388 = vsel %vm3378, %v3359, %v3361
      %v3389 = vsel %vm3378, %v3361, %v3363
      %v3390 = vsel %vm3378, %v3363, %v3365
      %v3391 = vsel %vm3378, %v3365, %v3367
      %v3392 = vsel %vm3378, %v3367, %v3369
      %v3393 = vsel %vm3378, %v3369, %v3371
      %v3394 = vsel %vm3378, %v3371, %v3373
      %v3395 = vsel %vm3378, %v3373, %v3375
      %v3396 = vsel %vm3378, %v3375, %v3377
      %v3417 = vsel %vm3378, 0.0, %v3339
      %v3418 = vsel %vm3378, 0.0, %v3359
      %v3419 = vmax.f32 %v3298, %v3417
      %v3420 = vmax.f32 %v3299, %v3379
      %v3421 = vmax.f32 %v3300, %v3380
      %v3422 = vmax.f32 %v3301, %v3381
      %v3423 = vmax.f32 %v3302, %v3382
      %v3424 = vmax.f32 %v3303, %v3383
      %v3425 = vmax.f32 %v3304, %v3384
      %v3426 = vmax.f32 %v3305, %v3385
      %v3427 = vmax.f32 %v3306, %v3386
      %v3428 = vmax.f32 %v3336, %v3387
      %v3429 = vmax.f32 %v3307, %v3418
      %v3430 = vmax.f32 %v3308, %v3388
      %v3431 = vmax.f32 %v3309, %v3389
      %v3432 = vmax.f32 %v3310, %v3390
      %v3433 = vmax.f32 %v3311, %v3391
      %v3434 = vmax.f32 %v3312, %v3392
      %v3435 = vmax.f32 %v3313, %v3393
      %v3436 = vmax.f32 %v3314, %v3394
      %v3437 = vmax.f32 %v3315, %v3395
      %v3438 = vmax.f32 %v3337, %v3396
      %v3439 = vmax.f32 %v3217, %v3419
      %v3440 = vmax.f32 %v3218, %v3420
      %v3441 = vmax.f32 %v3219, %v3421
      %v3442 = vmax.f32 %v3220, %v3422
      %v3443 = vmax.f32 %v3221, %v3423
      %v3444 = vmax.f32 %v3222, %v3424
      %v3445 = vmax.f32 %v3223, %v3425
      %v3446 = vmax.f32 %v3224, %v3426
      %v3447 = vmax.f32 %v3225, %v3427
      %v3448 = vmax.f32 %v3226, %v3428
      %v3449 = vmax.f32 %v3227, %v3429
      %v3450 = vmax.f32 %v3228, %v3430
      %v3451 = vmax.f32 %v3229, %v3431
      %v3452 = vmax.f32 %v3230, %v3432
      %v3453 = vmax.f32 %v3231, %v3433
      %v3454 = vmax.f32 %v3232, %v3434
      %v3455 = vmax.f32 %v3233, %v3435
      %v3456 = vmax.f32 %v3234, %v3436
      %v3457 = vmax.f32 %v3235, %v3437
      %v3458 = vmax.f32 %v3236, %v3438
      %v3459 = vmax.f32 %v3439, 0.0
      %v3460 = vmax.f32 %v3440, 0.0
      %v3461 = vmax.f32 %v3441, 0.0
      %v3462 = vmax.f32 %v3442, 0.0
      %v3463 = vmax.f32 %v3443, 0.0
      %v3464 = vmax.f32 %v3444, 0.0
      %v3465 = vmax.f32 %v3445, 0.0
      %v3466 = vmax.f32 %v3446, 0.0
      %v3467 = vmax.f32 %v3447, 0.0
      %v3468 = vmax.f32 %v3448, 0.0
      %v3469 = vmax.f32 %v3449, 0.0
      %v3470 = vmax.f32 %v3450, 0.0
      %v3471 = vmax.f32 %v3451, 0.0
      %v3472 = vmax.f32 %v3452, 0.0
      %v3473 = vmax.f32 %v3453, 0.0
      %v3474 = vmax.f32 %v3454, 0.0
      %v3475 = vmax.f32 %v3455, 0.0
      %v3476 = vmax.f32 %v3456, 0.0
      %v3477 = vmax.f32 %v3457, 0.0
      %v3478 = vmax.f32 %v3458, 0.0
      %v3479 = vmin.f32 %v3459, 6.4
      %v3480 = vmin.f32 %v3460, 6.4
      %v3481 = vmin.f32 %v3461, 6.4
      %v3482 = vmin.f32 %v3462, 6.4
      %v3483 = vmin.f32 %v3463, 6.4
      %v3484 = vmin.f32 %v3464, 6.4
      %v3485 = vmin.f32 %v3465, 6.4
      %v3486 = vmin.f32 %v3466, 6.4
      %v3487 = vmin.f32 %v3467, 6.4
      %v3488 = vmin.f32 %v3468, 6.4
      %v3489 = vmin.f32 %v3469, 6.4
      %v3490 = vmin.f32 %v3470, 6.4
      %v3491 = vmin.f32 %v3471, 6.4
      %v3492 = vmin.f32 %v3472, 6.4
      %v3493 = vmin.f32 %v3473, 6.4
      %v3494 = vmin.f32 %v3474, 6.4
      %v3495 = vmin.f32 %v3475, 6.4
      %v3496 = vmin.f32 %v3476, 6.4
      %v3497 = vmin.f32 %v3477, 6.4
      %v3498 = vmin.f32 %v3478, 6.4
      %v3501 = vrot.slane %v3479, 1
      %v3502 = vrot.slane %v3479, 2
      %v3503 = vrot.slane %v3479, 3
      %v3504 = vrot.slane %v3479, 4
      %v3505 = vrot.slane %v3479, 5
      %v3506 = vrot.slane %v3479, 6
      %v3507 = vrot.slane %v3479, 7
      %v3508 = vrot.slane %v3489, 1
      %v3509 = vrot.slane %v3489, 2
      %v3510 = vrot.slane %v3489, 3
      %v3511 = vrot.slane %v3489, 4
      %v3512 = vrot.slane %v3489, 5
      %v3513 = vrot.slane %v3489, 6
      %v3514 = vrot.slane %v3489, 7
      %vm3529 = vcmask 262144
      %3530 = vst.msk [vmem:[%s216] sm:$0x1] %vm3529, %v3479
      %3531 = vst.msk [vmem:[%s216 + $0x28] sm:$0x1] %vm3529, %v3501
      %3532 = vst.msk [vmem:[%s216 + $0x50] sm:$0x1] %vm3529, %v3502
      %3533 = vst.msk [vmem:[%s216 + $0x78] sm:$0x1] %vm3529, %v3503
      %3534 = vst.msk [vmem:[%s216 + $0xa0] sm:$0x1] %vm3529, %v3504
      %3535 = vst.msk [vmem:[%s216 + $0xc8] sm:$0x1] %vm3529, %v3505
      %3536 = vst.msk [vmem:[%s216 + $0xf0] sm:$0x1] %vm3529, %v3506
      %3537 = vst.msk [vmem:[%s216 + $0x118] sm:$0x1] %vm3529, %v3507
      %3538 = vst.msk [vmem:[%s216 + $0x140] sm:$0x1] %vm3529, %v3489
      %3539 = vst.msk [vmem:[%s216 + $0x168] sm:$0x1] %vm3529, %v3508
      %3540 = vst.msk [vmem:[%s216 + $0x190] sm:$0x1] %vm3529, %v3509
      %3541 = vst.msk [vmem:[%s216 + $0x1b8] sm:$0x1] %vm3529, %v3510
      %3542 = vst.msk [vmem:[%s216 + $0x1e0] sm:$0x1] %vm3529, %v3511
      %3543 = vst.msk [vmem:[%s216 + $0x208] sm:$0x1] %vm3529, %v3512
      %3544 = vst.msk [vmem:[%s216 + $0x230] sm:$0x1] %vm3529, %v3513
      %3545 = vst.msk [vmem:[%s216 + $0x258] sm:$0x1] %vm3529, %v3514
      %v3546 = vperm.slane %v3479, 0
      %v3547 = vperm.slane %v3501, 0
      %v3548 = vperm.slane %v3502, 0
      %v3549 = vperm.slane %v3503, 0
      %v3550 = vperm.slane %v3504, 0
      %v3551 = vperm.slane %v3505, 0
      %v3552 = vperm.slane %v3506, 0
      %v3553 = vperm.slane %v3507, 0
      %v3554 = vperm.slane %v3489, 0
      %v3555 = vperm.slane %v3508, 0
      %v3556 = vperm.slane %v3509, 0
      %v3557 = vperm.slane %v3510, 0
      %v3558 = vperm.slane %v3511, 0
      %v3559 = vperm.slane %v3512, 0
      %v3560 = vperm.slane %v3513, 0
      %v3561 = vperm.slane %v3514, 0
      %3562 = vrot.lane.b32.xlu0 %v3546, 91
      %v3563 = vpop.permute.xlu0 %3562
      %3564 = vrot.lane.b32.xlu0 %v3547, 91
      %v3565 = vpop.permute.xlu0 %3564
      %3566 = vrot.lane.b32.xlu0 %v3548, 91
      %v3567 = vpop.permute.xlu0 %3566
      %3568 = vrot.lane.b32.xlu0 %v3549, 91
      %v3569 = vpop.permute.xlu0 %3568
      %3570 = vrot.lane.b32.xlu0 %v3550, 91
      %v3571 = vpop.permute.xlu0 %3570
      %3572 = vrot.lane.b32.xlu0 %v3551, 91
      %v3573 = vpop.permute.xlu0 %3572
      %3574 = vrot.lane.b32.xlu0 %v3552, 91
      %v3575 = vpop.permute.xlu0 %3574
      %3576 = vrot.lane.b32.xlu0 %v3553, 91
      %v3577 = vpop.permute.xlu0 %3576
      %3578 = vrot.lane.b32.xlu0 %v3554, 91
      %v3579 = vpop.permute.xlu0 %3578
      %3580 = vrot.lane.b32.xlu0 %v3555, 91
      %v3581 = vpop.permute.xlu0 %3580
      %3582 = vrot.lane.b32.xlu0 %v3556, 91
      %v3583 = vpop.permute.xlu0 %3582
      %3584 = vrot.lane.b32.xlu0 %v3557, 91
      %v3585 = vpop.permute.xlu0 %3584
      %3586 = vrot.lane.b32.xlu0 %v3558, 91
      %v3587 = vpop.permute.xlu0 %3586
      %3588 = vrot.lane.b32.xlu0 %v3559, 91
      %v3589 = vpop.permute.xlu0 %3588
      %3590 = vrot.lane.b32.xlu0 %v3560, 91
      %v3591 = vpop.permute.xlu0 %3590
      %3592 = vrot.lane.b32.xlu0 %v3561, 91
      %v3593 = vpop.permute.xlu0 %3592
      %3610 = vst.msk [vmem:[%s216 + $0x1] sm:$0x1] %vm3529, %v3563
      %3611 = vst.msk [vmem:[%s216 + $0x29] sm:$0x1] %vm3529, %v3565
      %3612 = vst.msk [vmem:[%s216 + $0x51] sm:$0x1] %vm3529, %v3567
      %3613 = vst.msk [vmem:[%s216 + $0x79] sm:$0x1] %vm3529, %v3569
      %3614 = vst.msk [vmem:[%s216 + $0xa1] sm:$0x1] %vm3529, %v3571
      %3615 = vst.msk [vmem:[%s216 + $0xc9] sm:$0x1] %vm3529, %v3573
      %3616 = vst.msk [vmem:[%s216 + $0xf1] sm:$0x1] %vm3529, %v3575
      %3617 = vst.msk [vmem:[%s216 + $0x119] sm:$0x1] %vm3529, %v3577
      %3618 = vst.msk [vmem:[%s216 + $0x141] sm:$0x1] %vm3529, %v3579
      %3619 = vst.msk [vmem:[%s216 + $0x169] sm:$0x1] %vm3529, %v3581
      %3620 = vst.msk [vmem:[%s216 + $0x191] sm:$0x1] %vm3529, %v3583
      %3621 = vst.msk [vmem:[%s216 + $0x1b9] sm:$0x1] %vm3529, %v3585
      %3622 = vst.msk [vmem:[%s216 + $0x1e1] sm:$0x1] %vm3529, %v3587
      %3623 = vst.msk [vmem:[%s216 + $0x209] sm:$0x1] %vm3529, %v3589
      %3624 = vst.msk [vmem:[%s216 + $0x231] sm:$0x1] %vm3529, %v3591
      %3625 = vst.msk [vmem:[%s216 + $0x259] sm:$0x1] %vm3529, %v3593
      %3626 = vrot.lane.b32.xlu0 %v3546, 54
      %v3627 = vpop.permute.xlu0 %3626
      %3628 = vrot.lane.b32.xlu0 %v3547, 54
      %v3629 = vpop.permute.xlu0 %3628
      %3630 = vrot.lane.b32.xlu0 %v3548, 54
      %v3631 = vpop.permute.xlu0 %3630
      %3632 = vrot.lane.b32.xlu0 %v3549, 54
      %v3633 = vpop.permute.xlu0 %3632
      %3634 = vrot.lane.b32.xlu0 %v3550, 54
      %v3635 = vpop.permute.xlu0 %3634
      %3636 = vrot.lane.b32.xlu0 %v3551, 54
      %v3637 = vpop.permute.xlu0 %3636
      %3638 = vrot.lane.b32.xlu0 %v3552, 54
      %v3639 = vpop.permute.xlu0 %3638
      %3640 = vrot.lane.b32.xlu0 %v3553, 54
      %v3641 = vpop.permute.xlu0 %3640
      %3642 = vrot.lane.b32.xlu0 %v3554, 54
      %v3643 = vpop.permute.xlu0 %3642
      %3644 = vrot.lane.b32.xlu0 %v3555, 54
      %v3645 = vpop.permute.xlu0 %3644
      %3646 = vrot.lane.b32.xlu0 %v3556, 54
      %v3647 = vpop.permute.xlu0 %3646
      %3648 = vrot.lane.b32.xlu0 %v3557, 54
      %v3649 = vpop.permute.xlu0 %3648
      %3650 = vrot.lane.b32.xlu0 %v3558, 54
      %v3651 = vpop.permute.xlu0 %3650
      %3652 = vrot.lane.b32.xlu0 %v3559, 54
      %v3653 = vpop.permute.xlu0 %3652
      %3654 = vrot.lane.b32.xlu0 %v3560, 54
      %v3655 = vpop.permute.xlu0 %3654
      %3656 = vrot.lane.b32.xlu0 %v3561, 54
      %v3657 = vpop.permute.xlu0 %3656
      %3674 = vst.msk [vmem:[%s216 + $0x2] sm:$0x1] %vm3529, %v3627
      %3675 = vst.msk [vmem:[%s216 + $0x2a] sm:$0x1] %vm3529, %v3629
      %3676 = vst.msk [vmem:[%s216 + $0x52] sm:$0x1] %vm3529, %v3631
      %3677 = vst.msk [vmem:[%s216 + $0x7a] sm:$0x1] %vm3529, %v3633
      %3678 = vst.msk [vmem:[%s216 + $0xa2] sm:$0x1] %vm3529, %v3635
      %3679 = vst.msk [vmem:[%s216 + $0xca] sm:$0x1] %vm3529, %v3637
      %3680 = vst.msk [vmem:[%s216 + $0xf2] sm:$0x1] %vm3529, %v3639
      %3681 = vst.msk [vmem:[%s216 + $0x11a] sm:$0x1] %vm3529, %v3641
      %3682 = vst.msk [vmem:[%s216 + $0x142] sm:$0x1] %vm3529, %v3643
      %3683 = vst.msk [vmem:[%s216 + $0x16a] sm:$0x1] %vm3529, %v3645
      %3684 = vst.msk [vmem:[%s216 + $0x192] sm:$0x1] %vm3529, %v3647
      %3685 = vst.msk [vmem:[%s216 + $0x1ba] sm:$0x1] %vm3529, %v3649
      %3686 = vst.msk [vmem:[%s216 + $0x1e2] sm:$0x1] %vm3529, %v3651
      %3687 = vst.msk [vmem:[%s216 + $0x20a] sm:$0x1] %vm3529, %v3653
      %3688 = vst.msk [vmem:[%s216 + $0x232] sm:$0x1] %vm3529, %v3655
      %3689 = vst.msk [vmem:[%s216 + $0x25a] sm:$0x1] %vm3529, %v3657
      %v3692 = vrot.slane %v3480, 7
      %v3693 = vrot.slane %v3490, 7
      %vm3694 = vcmask 1040384
      %v3695 = vsel %vm3694, %v3479, %v3692
      %vm3696 = vcmask 1041409
      %v3697 = vsel %vm3696, %v3479, %v3692
      %v3698 = vrot.slane %v3697, 1
      %vm3699 = vcmask 1042434
      %v3700 = vsel %vm3699, %v3479, %v3692
      %v3701 = vrot.slane %v3700, 2
      %vm3702 = vcmask 1043459
      %v3703 = vsel %vm3702, %v3479, %v3692
      %v3704 = vrot.slane %v3703, 3
      %vm3705 = vcmask 1044484
      %v3706 = vsel %vm3705, %v3479, %v3692
      %v3707 = vrot.slane %v3706, 4
      %vm3708 = vcmask 1045509
      %v3709 = vsel %vm3708, %v3479, %v3692
      %v3710 = vrot.slane %v3709, 5
      %vm3711 = vcmask 1046534
      %v3712 = vsel %vm3711, %v3479, %v3692
      %v3713 = vrot.slane %v3712, 6
      %vm3714 = vcmask 1046528
      %v3715 = vsel %vm3714, %v3692, %v3479
      %v3716 = vrot.slane %v3715, 7
      %v3717 = vsel %vm3694, %v3489, %v3693
      %v3718 = vsel %vm3696, %v3489, %v3693
      %v3719 = vrot.slane %v3718, 1
      %v3720 = vsel %vm3699, %v3489, %v3693
      %v3721 = vrot.slane %v3720, 2
      %v3722 = vsel %vm3702, %v3489, %v3693
      %v3723 = vrot.slane %v3722, 3
      %v3724 = vsel %vm3705, %v3489, %v3693
      %v3725 = vrot.slane %v3724, 4
      %v3726 = vsel %vm3708, %v3489, %v3693
      %v3727 = vrot.slane %v3726, 5
      %v3728 = vsel %vm3711, %v3489, %v3693
      %v3729 = vrot.slane %v3728, 6
      %v3730 = vsel %vm3714, %v3693, %v3489
      %v3731 = vrot.slane %v3730, 7
      %v3732 = vperm.slane %v3695, 0
      %v3733 = vperm.slane %v3695, 1
      %v3734 = vperm.slane %v3698, 0
      %v3735 = vperm.slane %v3698, 1
      %v3736 = vperm.slane %v3701, 0
      %v3737 = vperm.slane %v3701, 1
      %v3738 = vperm.slane %v3704, 0
      %v3739 = vperm.slane %v3704, 1
      %v3740 = vperm.slane %v3707, 0
      %v3741 = vperm.slane %v3707, 1
      %v3742 = vperm.slane %v3710, 0
      %v3743 = vperm.slane %v3710, 1
      %v3744 = vperm.slane %v3713, 0
      %v3745 = vperm.slane %v3713, 1
      %v3746 = vperm.slane %v3716, 0
      %v3747 = vperm.slane %v3716, 1
      %v3748 = vperm.slane %v3717, 0
      %v3749 = vperm.slane %v3717, 1
      %v3750 = vperm.slane %v3719, 0
      %v3751 = vperm.slane %v3719, 1
      %v3752 = vperm.slane %v3721, 0
      %v3753 = vperm.slane %v3721, 1
      %v3754 = vperm.slane %v3723, 0
      %v3755 = vperm.slane %v3723, 1
      %v3756 = vperm.slane %v3725, 0
      %v3757 = vperm.slane %v3725, 1
      %v3758 = vperm.slane %v3727, 0
      %v3759 = vperm.slane %v3727, 1
      %v3760 = vperm.slane %v3729, 0
      %v3761 = vperm.slane %v3729, 1
      %v3762 = vperm.slane %v3731, 0
      %v3763 = vperm.slane %v3731, 1
      %3764 = vrot.lane.b32.xlu0 %v3732, 17
      %v3765 = vpop.permute.xlu0 %3764
      %3766 = vrot.lane.b32.xlu0 %v3733, 17
      %v3767 = vpop.permute.xlu0 %3766
      %3768 = vrot.lane.b32.xlu0 %v3734, 17
      %v3769 = vpop.permute.xlu0 %3768
      %3770 = vrot.lane.b32.xlu0 %v3735, 17
      %v3771 = vpop.permute.xlu0 %3770
      %3772 = vrot.lane.b32.xlu0 %v3736, 17
      %v3773 = vpop.permute.xlu0 %3772
      %3774 = vrot.lane.b32.xlu0 %v3737, 17
      %v3775 = vpop.permute.xlu0 %3774
      %3776 = vrot.lane.b32.xlu0 %v3738, 17
      %v3777 = vpop.permute.xlu0 %3776
      %3778 = vrot.lane.b32.xlu0 %v3739, 17
      %v3779 = vpop.permute.xlu0 %3778
      %3780 = vrot.lane.b32.xlu0 %v3740, 17
      %v3781 = vpop.permute.xlu0 %3780
      %3782 = vrot.lane.b32.xlu0 %v3741, 17
      %v3783 = vpop.permute.xlu0 %3782
      %3784 = vrot.lane.b32.xlu0 %v3742, 17
      %v3785 = vpop.permute.xlu0 %3784
      %3786 = vrot.lane.b32.xlu0 %v3743, 17
      %v3787 = vpop.permute.xlu0 %3786
      %3788 = vrot.lane.b32.xlu0 %v3744, 17
      %v3789 = vpop.permute.xlu0 %3788
      %3790 = vrot.lane.b32.xlu0 %v3745, 17
      %v3791 = vpop.permute.xlu0 %3790
      %3792 = vrot.lane.b32.xlu0 %v3746, 17
      %v3793 = vpop.permute.xlu0 %3792
      %3794 = vrot.lane.b32.xlu0 %v3747, 17
      %v3795 = vpop.permute.xlu0 %3794
      %3796 = vrot.lane.b32.xlu0 %v3748, 17
      %v3797 = vpop.permute.xlu0 %3796
      %3798 = vrot.lane.b32.xlu0 %v3749, 17
      %v3799 = vpop.permute.xlu0 %3798
      %3800 = vrot.lane.b32.xlu0 %v3750, 17
      %v3801 = vpop.permute.xlu0 %3800
      %3802 = vrot.lane.b32.xlu0 %v3751, 17
      %v3803 = vpop.permute.xlu0 %3802
      %3804 = vrot.lane.b32.xlu0 %v3752, 17
      %v3805 = vpop.permute.xlu0 %3804
      %3806 = vrot.lane.b32.xlu0 %v3753, 17
      %v3807 = vpop.permute.xlu0 %3806
      %3808 = vrot.lane.b32.xlu0 %v3754, 17
      %v3809 = vpop.permute.xlu0 %3808
      %3810 = vrot.lane.b32.xlu0 %v3755, 17
      %v3811 = vpop.permute.xlu0 %3810
      %3812 = vrot.lane.b32.xlu0 %v3756, 17
      %v3813 = vpop.permute.xlu0 %3812
      %3814 = vrot.lane.b32.xlu0 %v3757, 17
      %v3815 = vpop.permute.xlu0 %3814
      %3816 = vrot.lane.b32.xlu0 %v3758, 17
      %v3817 = vpop.permute.xlu0 %3816
      %3818 = vrot.lane.b32.xlu0 %v3759, 17
      %v3819 = vpop.permute.xlu0 %3818
      %3820 = vrot.lane.b32.xlu0 %v3760, 17
      %v3821 = vpop.permute.xlu0 %3820
      %3822 = vrot.lane.b32.xlu0 %v3761, 17
      %v3823 = vpop.permute.xlu0 %3822
      %3824 = vrot.lane.b32.xlu0 %v3762, 17
      %v3825 = vpop.permute.xlu0 %3824
      %3826 = vrot.lane.b32.xlu0 %v3763, 17
      %v3827 = vpop.permute.xlu0 %3826
      %vm3828 = vcmask 138240
      %v3829 = vsel %vm3828, %v3765, %v3767
      %v3830 = vsel %vm3828, %v3769, %v3771
      %v3831 = vsel %vm3828, %v3773, %v3775
      %v3832 = vsel %vm3828, %v3777, %v3779
      %v3833 = vsel %vm3828, %v3781, %v3783
      %v3834 = vsel %vm3828, %v3785, %v3787
      %v3835 = vsel %vm3828, %v3789, %v3791
      %v3836 = vsel %vm3828, %v3793, %v3795
      %v3837 = vsel %vm3828, %v3797, %v3799
      %v3838 = vsel %vm3828, %v3801, %v3803
      %v3839 = vsel %vm3828, %v3805, %v3807
      %v3840 = vsel %vm3828, %v3809, %v3811
      %v3841 = vsel %vm3828, %v3813, %v3815
      %v3842 = vsel %vm3828, %v3817, %v3819
      %v3843 = vsel %vm3828, %v3821, %v3823
      %v3844 = vsel %vm3828, %v3825, %v3827
      %3861 = vst.msk [vmem:[%s216 + $0x3] sm:$0x1] %vm3529, %v3829
      %3862 = vst.msk [vmem:[%s216 + $0x2b] sm:$0x1] %vm3529, %v3830
      %3863 = vst.msk [vmem:[%s216 + $0x53] sm:$0x1] %vm3529, %v3831
      %3864 = vst.msk [vmem:[%s216 + $0x7b] sm:$0x1] %vm3529, %v3832
      %3865 = vst.msk [vmem:[%s216 + $0xa3] sm:$0x1] %vm3529, %v3833
      %3866 = vst.msk [vmem:[%s216 + $0xcb] sm:$0x1] %vm3529, %v3834
      %3867 = vst.msk [vmem:[%s216 + $0xf3] sm:$0x1] %vm3529, %v3835
      %3868 = vst.msk [vmem:[%s216 + $0x11b] sm:$0x1] %vm3529, %v3836
      %3869 = vst.msk [vmem:[%s216 + $0x143] sm:$0x1] %vm3529, %v3837
      %3870 = vst.msk [vmem:[%s216 + $0x16b] sm:$0x1] %vm3529, %v3838
      %3871 = vst.msk [vmem:[%s216 + $0x193] sm:$0x1] %vm3529, %v3839
      %3872 = vst.msk [vmem:[%s216 + $0x1bb] sm:$0x1] %vm3529, %v3840
      %3873 = vst.msk [vmem:[%s216 + $0x1e3] sm:$0x1] %vm3529, %v3841
      %3874 = vst.msk [vmem:[%s216 + $0x20b] sm:$0x1] %vm3529, %v3842
      %3875 = vst.msk [vmem:[%s216 + $0x233] sm:$0x1] %vm3529, %v3843
      %3876 = vst.msk [vmem:[%s216 + $0x25b] sm:$0x1] %vm3529, %v3844
      %v3877 = vrot.slane %v3480, 1
      %v3878 = vrot.slane %v3480, 2
      %v3879 = vrot.slane %v3480, 3
      %v3880 = vrot.slane %v3480, 4
      %v3881 = vrot.slane %v3480, 5
      %v3882 = vrot.slane %v3480, 6
      %v3883 = vrot.slane %v3490, 1
      %v3884 = vrot.slane %v3490, 2
      %v3885 = vrot.slane %v3490, 3
      %v3886 = vrot.slane %v3490, 4
      %v3887 = vrot.slane %v3490, 5
      %v3888 = vrot.slane %v3490, 6
      %v3889 = vperm.slane %v3480, 0
      %v3890 = vperm.slane %v3877, 0
      %v3891 = vperm.slane %v3878, 0
      %v3892 = vperm.slane %v3879, 0
      %v3893 = vperm.slane %v3880, 0
      %v3894 = vperm.slane %v3881, 0
      %v3895 = vperm.slane %v3882, 0
      %v3896 = vperm.slane %v3692, 0
      %v3897 = vperm.slane %v3490, 0
      %v3898 = vperm.slane %v3883, 0
      %v3899 = vperm.slane %v3884, 0
      %v3900 = vperm.slane %v3885, 0
      %v3901 = vperm.slane %v3886, 0
      %v3902 = vperm.slane %v3887, 0
      %v3903 = vperm.slane %v3888, 0
      %v3904 = vperm.slane %v3693, 0
      %3905 = vrot.lane.b32.xlu0 %v3889, 108
      %v3906 = vpop.permute.xlu0 %3905
      %3907 = vrot.lane.b32.xlu0 %v3890, 108
      %v3908 = vpop.permute.xlu0 %3907
      %3909 = vrot.lane.b32.xlu0 %v3891, 108
      %v3910 = vpop.permute.xlu0 %3909
      %3911 = vrot.lane.b32.xlu0 %v3892, 108
      %v3912 = vpop.permute.xlu0 %3911
      %3913 = vrot.lane.b32.xlu0 %v3893, 108
      %v3914 = vpop.permute.xlu0 %3913
      %3915 = vrot.lane.b32.xlu0 %v3894, 108
      %v3916 = vpop.permute.xlu0 %3915
      %3917 = vrot.lane.b32.xlu0 %v3895, 108
      %v3918 = vpop.permute.xlu0 %3917
      %3919 = vrot.lane.b32.xlu0 %v3896, 108
      %v3920 = vpop.permute.xlu0 %3919
      %3921 = vrot.lane.b32.xlu0 %v3897, 108
      %v3922 = vpop.permute.xlu0 %3921
      %3923 = vrot.lane.b32.xlu0 %v3898, 108
      %v3924 = vpop.permute.xlu0 %3923
      %3925 = vrot.lane.b32.xlu0 %v3899, 108
      %v3926 = vpop.permute.xlu0 %3925
      %3927 = vrot.lane.b32.xlu0 %v3900, 108
      %v3928 = vpop.permute.xlu0 %3927
      %3929 = vrot.lane.b32.xlu0 %v3901, 108
      %v3930 = vpop.permute.xlu0 %3929
      %3931 = vrot.lane.b32.xlu0 %v3902, 108
      %v3932 = vpop.permute.xlu0 %3931
      %3933 = vrot.lane.b32.xlu0 %v3903, 108
      %v3934 = vpop.permute.xlu0 %3933
      %3935 = vrot.lane.b32.xlu0 %v3904, 108
      %v3936 = vpop.permute.xlu0 %3935
      %3953 = vst.msk [vmem:[%s216 + $0x4] sm:$0x1] %vm3529, %v3906
      %3954 = vst.msk [vmem:[%s216 + $0x2c] sm:$0x1] %vm3529, %v3908
      %3955 = vst.msk [vmem:[%s216 + $0x54] sm:$0x1] %vm3529, %v3910
      %3956 = vst.msk [vmem:[%s216 + $0x7c] sm:$0x1] %vm3529, %v3912
      %3957 = vst.msk [vmem:[%s216 + $0xa4] sm:$0x1] %vm3529, %v3914
      %3958 = vst.msk [vmem:[%s216 + $0xcc] sm:$0x1] %vm3529, %v3916
      %3959 = vst.msk [vmem:[%s216 + $0xf4] sm:$0x1] %vm3529, %v3918
      %3960 = vst.msk [vmem:[%s216 + $0x11c] sm:$0x1] %vm3529, %v3920
      %3961 = vst.msk [vmem:[%s216 + $0x144] sm:$0x1] %vm3529, %v3922
      %3962 = vst.msk [vmem:[%s216 + $0x16c] sm:$0x1] %vm3529, %v3924
      %3963 = vst.msk [vmem:[%s216 + $0x194] sm:$0x1] %vm3529, %v3926
      %3964 = vst.msk [vmem:[%s216 + $0x1bc] sm:$0x1] %vm3529, %v3928
      %3965 = vst.msk [vmem:[%s216 + $0x1e4] sm:$0x1] %vm3529, %v3930
      %3966 = vst.msk [vmem:[%s216 + $0x20c] sm:$0x1] %vm3529, %v3932
      %3967 = vst.msk [vmem:[%s216 + $0x234] sm:$0x1] %vm3529, %v3934
      %3968 = vst.msk [vmem:[%s216 + $0x25c] sm:$0x1] %vm3529, %v3936
      %3969 = vrot.lane.b32.xlu0 %v3889, 71
      %v3970 = vpop.permute.xlu0 %3969
      %3971 = vrot.lane.b32.xlu0 %v3890, 71
      %v3972 = vpop.permute.xlu0 %3971
      %3973 = vrot.lane.b32.xlu0 %v3891, 71
      %v3974 = vpop.permute.xlu0 %3973
      %3975 = vrot.lane.b32.xlu0 %v3892, 71
      %v3976 = vpop.permute.xlu0 %3975
      %3977 = vrot.lane.b32.xlu0 %v3893, 71
      %v3978 = vpop.permute.xlu0 %3977
      %3979 = vrot.lane.b32.xlu0 %v3894, 71
      %v3980 = vpop.permute.xlu0 %3979
      %3981 = vrot.lane.b32.xlu0 %v3895, 71
      %v3982 = vpop.permute.xlu0 %3981
      %3983 = vrot.lane.b32.xlu0 %v3896, 71
      %v3984 = vpop.permute.xlu0 %3983
      %3985 = vrot.lane.b32.xlu0 %v3897, 71
      %v3986 = vpop.permute.xlu0 %3985
      %3987 = vrot.lane.b32.xlu0 %v3898, 71
      %v3988 = vpop.permute.xlu0 %3987
      %3989 = vrot.lane.b32.xlu0 %v3899, 71
      %v3990 = vpop.permute.xlu0 %3989
      %3991 = vrot.lane.b32.xlu0 %v3900, 71
      %v3992 = vpop.permute.xlu0 %3991
      %3993 = vrot.lane.b32.xlu0 %v3901, 71
      %v3994 = vpop.permute.xlu0 %3993
      %3995 = vrot.lane.b32.xlu0 %v3902, 71
      %v3996 = vpop.permute.xlu0 %3995
      %3997 = vrot.lane.b32.xlu0 %v3903, 71
      %v3998 = vpop.permute.xlu0 %3997
      %3999 = vrot.lane.b32.xlu0 %v3904, 71
      %v4000 = vpop.permute.xlu0 %3999
      %4017 = vst.msk [vmem:[%s216 + $0x5] sm:$0x1] %vm3529, %v3970
      %4018 = vst.msk [vmem:[%s216 + $0x2d] sm:$0x1] %vm3529, %v3972
      %4019 = vst.msk [vmem:[%s216 + $0x55] sm:$0x1] %vm3529, %v3974
      %4020 = vst.msk [vmem:[%s216 + $0x7d] sm:$0x1] %vm3529, %v3976
      %4021 = vst.msk [vmem:[%s216 + $0xa5] sm:$0x1] %vm3529, %v3978
      %4022 = vst.msk [vmem:[%s216 + $0xcd] sm:$0x1] %vm3529, %v3980
      %4023 = vst.msk [vmem:[%s216 + $0xf5] sm:$0x1] %vm3529, %v3982
      %4024 = vst.msk [vmem:[%s216 + $0x11d] sm:$0x1] %vm3529, %v3984
      %4025 = vst.msk [vmem:[%s216 + $0x145] sm:$0x1] %vm3529, %v3986
      %4026 = vst.msk [vmem:[%s216 + $0x16d] sm:$0x1] %vm3529, %v3988
      %4027 = vst.msk [vmem:[%s216 + $0x195] sm:$0x1] %vm3529, %v3990
      %4028 = vst.msk [vmem:[%s216 + $0x1bd] sm:$0x1] %vm3529, %v3992
      %4029 = vst.msk [vmem:[%s216 + $0x1e5] sm:$0x1] %vm3529, %v3994
      %4030 = vst.msk [vmem:[%s216 + $0x20d] sm:$0x1] %vm3529, %v3996
      %4031 = vst.msk [vmem:[%s216 + $0x235] sm:$0x1] %vm3529, %v3998
      %4032 = vst.msk [vmem:[%s216 + $0x25d] sm:$0x1] %vm3529, %v4000
      %4033 = vrot.lane.b32.xlu0 %v3889, 34
      %v4034 = vpop.permute.xlu0 %4033
      %4035 = vrot.lane.b32.xlu0 %v3890, 34
      %v4036 = vpop.permute.xlu0 %4035
      %4037 = vrot.lane.b32.xlu0 %v3891, 34
      %v4038 = vpop.permute.xlu0 %4037
      %4039 = vrot.lane.b32.xlu0 %v3892, 34
      %v4040 = vpop.permute.xlu0 %4039
      %4041 = vrot.lane.b32.xlu0 %v3893, 34
      %v4042 = vpop.permute.xlu0 %4041
      %4043 = vrot.lane.b32.xlu0 %v3894, 34
      %v4044 = vpop.permute.xlu0 %4043
      %4045 = vrot.lane.b32.xlu0 %v3895, 34
      %v4046 = vpop.permute.xlu0 %4045
      %4047 = vrot.lane.b32.xlu0 %v3896, 34
      %v4048 = vpop.permute.xlu0 %4047
      %4049 = vrot.lane.b32.xlu0 %v3897, 34
      %v4050 = vpop.permute.xlu0 %4049
      %4051 = vrot.lane.b32.xlu0 %v3898, 34
      %v4052 = vpop.permute.xlu0 %4051
      %4053 = vrot.lane.b32.xlu0 %v3899, 34
      %v4054 = vpop.permute.xlu0 %4053
      %4055 = vrot.lane.b32.xlu0 %v3900, 34
      %v4056 = vpop.permute.xlu0 %4055
      %4057 = vrot.lane.b32.xlu0 %v3901, 34
      %v4058 = vpop.permute.xlu0 %4057
      %4059 = vrot.lane.b32.xlu0 %v3902, 34
      %v4060 = vpop.permute.xlu0 %4059
      %4061 = vrot.lane.b32.xlu0 %v3903, 34
      %v4062 = vpop.permute.xlu0 %4061
      %4063 = vrot.lane.b32.xlu0 %v3904, 34
      %v4064 = vpop.permute.xlu0 %4063
      %4081 = vst.msk [vmem:[%s216 + $0x6] sm:$0x1] %vm3529, %v4034
      %4082 = vst.msk [vmem:[%s216 + $0x2e] sm:$0x1] %vm3529, %v4036
      %4083 = vst.msk [vmem:[%s216 + $0x56] sm:$0x1] %vm3529, %v4038
      %4084 = vst.msk [vmem:[%s216 + $0x7e] sm:$0x1] %vm3529, %v4040
      %4085 = vst.msk [vmem:[%s216 + $0xa6] sm:$0x1] %vm3529, %v4042
      %4086 = vst.msk [vmem:[%s216 + $0xce] sm:$0x1] %vm3529, %v4044
      %4087 = vst.msk [vmem:[%s216 + $0xf6] sm:$0x1] %vm3529, %v4046
      %4088 = vst.msk [vmem:[%s216 + $0x11e] sm:$0x1] %vm3529, %v4048
      %4089 = vst.msk [vmem:[%s216 + $0x146] sm:$0x1] %vm3529, %v4050
      %4090 = vst.msk [vmem:[%s216 + $0x16e] sm:$0x1] %vm3529, %v4052
      %4091 = vst.msk [vmem:[%s216 + $0x196] sm:$0x1] %vm3529, %v4054
      %4092 = vst.msk [vmem:[%s216 + $0x1be] sm:$0x1] %vm3529, %v4056
      %4093 = vst.msk [vmem:[%s216 + $0x1e6] sm:$0x1] %vm3529, %v4058
      %4094 = vst.msk [vmem:[%s216 + $0x20e] sm:$0x1] %vm3529, %v4060
      %4095 = vst.msk [vmem:[%s216 + $0x236] sm:$0x1] %vm3529, %v4062
      %4096 = vst.msk [vmem:[%s216 + $0x25e] sm:$0x1] %vm3529, %v4064
      %v4099 = vrot.slane %v3481, 1
      %v4100 = vrot.slane %v3481, 2
      %v4101 = vrot.slane %v3481, 3
      %v4102 = vrot.slane %v3481, 4
      %v4103 = vrot.slane %v3481, 5
      %v4104 = vrot.slane %v3481, 6
      %v4105 = vrot.slane %v3481, 7
      %v4106 = vrot.slane %v3491, 1
      %v4107 = vrot.slane %v3491, 2
      %v4108 = vrot.slane %v3491, 3
      %v4109 = vrot.slane %v3491, 4
      %v4110 = vrot.slane %v3491, 5
      %v4111 = vrot.slane %v3491, 6
      %v4112 = vrot.slane %v3491, 7
      %v4113 = vperm.slane %v3481, 0
      %v4114 = vperm.slane %v4099, 0
      %v4115 = vperm.slane %v4100, 0
      %v4116 = vperm.slane %v4101, 0
      %v4117 = vperm.slane %v4102, 0
      %v4118 = vperm.slane %v4103, 0
      %v4119 = vperm.slane %v4104, 0
      %v4120 = vperm.slane %v4105, 0
      %v4121 = vperm.slane %v3491, 0
      %v4122 = vperm.slane %v4106, 0
      %v4123 = vperm.slane %v4107, 0
      %v4124 = vperm.slane %v4108, 0
      %v4125 = vperm.slane %v4109, 0
      %v4126 = vperm.slane %v4110, 0
      %v4127 = vperm.slane %v4111, 0
      %v4128 = vperm.slane %v4112, 0
      %4129 = vrot.lane.b32.xlu0 %v4113, 125
      %v4130 = vpop.permute.xlu0 %4129
      %4131 = vrot.lane.b32.xlu0 %v4114, 125
      %v4132 = vpop.permute.xlu0 %4131
      %4133 = vrot.lane.b32.xlu0 %v4115, 125
      %v4134 = vpop.permute.xlu0 %4133
      %4135 = vrot.lane.b32.xlu0 %v4116, 125
      %v4136 = vpop.permute.xlu0 %4135
      %4137 = vrot.lane.b32.xlu0 %v4117, 125
      %v4138 = vpop.permute.xlu0 %4137
      %4139 = vrot.lane.b32.xlu0 %v4118, 125
      %v4140 = vpop.permute.xlu0 %4139
      %4141 = vrot.lane.b32.xlu0 %v4119, 125
      %v4142 = vpop.permute.xlu0 %4141
      %4143 = vrot.lane.b32.xlu0 %v4120, 125
      %v4144 = vpop.permute.xlu0 %4143
      %4145 = vrot.lane.b32.xlu0 %v4121, 125
      %v4146 = vpop.permute.xlu0 %4145
      %4147 = vrot.lane.b32.xlu0 %v4122, 125
      %v4148 = vpop.permute.xlu0 %4147
      %4149 = vrot.lane.b32.xlu0 %v4123, 125
      %v4150 = vpop.permute.xlu0 %4149
      %4151 = vrot.lane.b32.xlu0 %v4124, 125
      %v4152 = vpop.permute.xlu0 %4151
      %4153 = vrot.lane.b32.xlu0 %v4125, 125
      %v4154 = vpop.permute.xlu0 %4153
      %4155 = vrot.lane.b32.xlu0 %v4126, 125
      %v4156 = vpop.permute.xlu0 %4155
      %4157 = vrot.lane.b32.xlu0 %v4127, 125
      %v4158 = vpop.permute.xlu0 %4157
      %4159 = vrot.lane.b32.xlu0 %v4128, 125
      %v4160 = vpop.permute.xlu0 %4159
      %4177 = vst.msk [vmem:[%s216 + $0x7] sm:$0x1] %vm3529, %v4130
      %4178 = vst.msk [vmem:[%s216 + $0x2f] sm:$0x1] %vm3529, %v4132
      %4179 = vst.msk [vmem:[%s216 + $0x57] sm:$0x1] %vm3529, %v4134
      %4180 = vst.msk [vmem:[%s216 + $0x7f] sm:$0x1] %vm3529, %v4136
      %4181 = vst.msk [vmem:[%s216 + $0xa7] sm:$0x1] %vm3529, %v4138
      %4182 = vst.msk [vmem:[%s216 + $0xcf] sm:$0x1] %vm3529, %v4140
      %4183 = vst.msk [vmem:[%s216 + $0xf7] sm:$0x1] %vm3529, %v4142
      %4184 = vst.msk [vmem:[%s216 + $0x11f] sm:$0x1] %vm3529, %v4144
      %4185 = vst.msk [vmem:[%s216 + $0x147] sm:$0x1] %vm3529, %v4146
      %4186 = vst.msk [vmem:[%s216 + $0x16f] sm:$0x1] %vm3529, %v4148
      %4187 = vst.msk [vmem:[%s216 + $0x197] sm:$0x1] %vm3529, %v4150
      %4188 = vst.msk [vmem:[%s216 + $0x1bf] sm:$0x1] %vm3529, %v4152
      %4189 = vst.msk [vmem:[%s216 + $0x1e7] sm:$0x1] %vm3529, %v4154
      %4190 = vst.msk [vmem:[%s216 + $0x20f] sm:$0x1] %vm3529, %v4156
      %4191 = vst.msk [vmem:[%s216 + $0x237] sm:$0x1] %vm3529, %v4158
      %4192 = vst.msk [vmem:[%s216 + $0x25f] sm:$0x1] %vm3529, %v4160
      %4193 = vrot.lane.b32.xlu0 %v4113, 88
      %v4194 = vpop.permute.xlu0 %4193
      %4195 = vrot.lane.b32.xlu0 %v4114, 88
      %v4196 = vpop.permute.xlu0 %4195
      %4197 = vrot.lane.b32.xlu0 %v4115, 88
      %v4198 = vpop.permute.xlu0 %4197
      %4199 = vrot.lane.b32.xlu0 %v4116, 88
      %v4200 = vpop.permute.xlu0 %4199
      %4201 = vrot.lane.b32.xlu0 %v4117, 88
      %v4202 = vpop.permute.xlu0 %4201
      %4203 = vrot.lane.b32.xlu0 %v4118, 88
      %v4204 = vpop.permute.xlu0 %4203
      %4205 = vrot.lane.b32.xlu0 %v4119, 88
      %v4206 = vpop.permute.xlu0 %4205
      %4207 = vrot.lane.b32.xlu0 %v4120, 88
      %v4208 = vpop.permute.xlu0 %4207
      %4209 = vrot.lane.b32.xlu0 %v4121, 88
      %v4210 = vpop.permute.xlu0 %4209
      %4211 = vrot.lane.b32.xlu0 %v4122, 88
      %v4212 = vpop.permute.xlu0 %4211
      %4213 = vrot.lane.b32.xlu0 %v4123, 88
      %v4214 = vpop.permute.xlu0 %4213
      %4215 = vrot.lane.b32.xlu0 %v4124, 88
      %v4216 = vpop.permute.xlu0 %4215
      %4217 = vrot.lane.b32.xlu0 %v4125, 88
      %v4218 = vpop.permute.xlu0 %4217
      %4219 = vrot.lane.b32.xlu0 %v4126, 88
      %v4220 = vpop.permute.xlu0 %4219
      %4221 = vrot.lane.b32.xlu0 %v4127, 88
      %v4222 = vpop.permute.xlu0 %4221
      %4223 = vrot.lane.b32.xlu0 %v4128, 88
      %v4224 = vpop.permute.xlu0 %4223
      %4241 = vst.msk [vmem:[%s216 + $0x8] sm:$0x1] %vm3529, %v4194
      %4242 = vst.msk [vmem:[%s216 + $0x30] sm:$0x1] %vm3529, %v4196
      %4243 = vst.msk [vmem:[%s216 + $0x58] sm:$0x1] %vm3529, %v4198
      %4244 = vst.msk [vmem:[%s216 + $0x80] sm:$0x1] %vm3529, %v4200
      %4245 = vst.msk [vmem:[%s216 + $0xa8] sm:$0x1] %vm3529, %v4202
      %4246 = vst.msk [vmem:[%s216 + $0xd0] sm:$0x1] %vm3529, %v4204
      %4247 = vst.msk [vmem:[%s216 + $0xf8] sm:$0x1] %vm3529, %v4206
      %4248 = vst.msk [vmem:[%s216 + $0x120] sm:$0x1] %vm3529, %v4208
      %4249 = vst.msk [vmem:[%s216 + $0x148] sm:$0x1] %vm3529, %v4210
      %4250 = vst.msk [vmem:[%s216 + $0x170] sm:$0x1] %vm3529, %v4212
      %4251 = vst.msk [vmem:[%s216 + $0x198] sm:$0x1] %vm3529, %v4214
      %4252 = vst.msk [vmem:[%s216 + $0x1c0] sm:$0x1] %vm3529, %v4216
      %4253 = vst.msk [vmem:[%s216 + $0x1e8] sm:$0x1] %vm3529, %v4218
      %4254 = vst.msk [vmem:[%s216 + $0x210] sm:$0x1] %vm3529, %v4220
      %4255 = vst.msk [vmem:[%s216 + $0x238] sm:$0x1] %vm3529, %v4222
      %4256 = vst.msk [vmem:[%s216 + $0x260] sm:$0x1] %vm3529, %v4224
      %4257 = vrot.lane.b32.xlu0 %v4113, 51
      %v4258 = vpop.permute.xlu0 %4257
      %4259 = vrot.lane.b32.xlu0 %v4114, 51
      %v4260 = vpop.permute.xlu0 %4259
      %4261 = vrot.lane.b32.xlu0 %v4115, 51
      %v4262 = vpop.permute.xlu0 %4261
      %4263 = vrot.lane.b32.xlu0 %v4116, 51
      %v4264 = vpop.permute.xlu0 %4263
      %4265 = vrot.lane.b32.xlu0 %v4117, 51
      %v4266 = vpop.permute.xlu0 %4265
      %4267 = vrot.lane.b32.xlu0 %v4118, 51
      %v4268 = vpop.permute.xlu0 %4267
      %4269 = vrot.lane.b32.xlu0 %v4119, 51
      %v4270 = vpop.permute.xlu0 %4269
      %4271 = vrot.lane.b32.xlu0 %v4120, 51
      %v4272 = vpop.permute.xlu0 %4271
      %4273 = vrot.lane.b32.xlu0 %v4121, 51
      %v4274 = vpop.permute.xlu0 %4273
      %4275 = vrot.lane.b32.xlu0 %v4122, 51
      %v4276 = vpop.permute.xlu0 %4275
      %4277 = vrot.lane.b32.xlu0 %v4123, 51
      %v4278 = vpop.permute.xlu0 %4277
      %4279 = vrot.lane.b32.xlu0 %v4124, 51
      %v4280 = vpop.permute.xlu0 %4279
      %4281 = vrot.lane.b32.xlu0 %v4125, 51
      %v4282 = vpop.permute.xlu0 %4281
      %4283 = vrot.lane.b32.xlu0 %v4126, 51
      %v4284 = vpop.permute.xlu0 %4283
      %4285 = vrot.lane.b32.xlu0 %v4127, 51
      %v4286 = vpop.permute.xlu0 %4285
      %4287 = vrot.lane.b32.xlu0 %v4128, 51
      %v4288 = vpop.permute.xlu0 %4287
      %4305 = vst.msk [vmem:[%s216 + $0x9] sm:$0x1] %vm3529, %v4258
      %4306 = vst.msk [vmem:[%s216 + $0x31] sm:$0x1] %vm3529, %v4260
      %4307 = vst.msk [vmem:[%s216 + $0x59] sm:$0x1] %vm3529, %v4262
      %4308 = vst.msk [vmem:[%s216 + $0x81] sm:$0x1] %vm3529, %v4264
      %4309 = vst.msk [vmem:[%s216 + $0xa9] sm:$0x1] %vm3529, %v4266
      %4310 = vst.msk [vmem:[%s216 + $0xd1] sm:$0x1] %vm3529, %v4268
      %4311 = vst.msk [vmem:[%s216 + $0xf9] sm:$0x1] %vm3529, %v4270
      %4312 = vst.msk [vmem:[%s216 + $0x121] sm:$0x1] %vm3529, %v4272
      %4313 = vst.msk [vmem:[%s216 + $0x149] sm:$0x1] %vm3529, %v4274
      %4314 = vst.msk [vmem:[%s216 + $0x171] sm:$0x1] %vm3529, %v4276
      %4315 = vst.msk [vmem:[%s216 + $0x199] sm:$0x1] %vm3529, %v4278
      %4316 = vst.msk [vmem:[%s216 + $0x1c1] sm:$0x1] %vm3529, %v4280
      %4317 = vst.msk [vmem:[%s216 + $0x1e9] sm:$0x1] %vm3529, %v4282
      %4318 = vst.msk [vmem:[%s216 + $0x211] sm:$0x1] %vm3529, %v4284
      %4319 = vst.msk [vmem:[%s216 + $0x239] sm:$0x1] %vm3529, %v4286
      %4320 = vst.msk [vmem:[%s216 + $0x261] sm:$0x1] %vm3529, %v4288
      %v4323 = vrot.slane %v3482, 7
      %v4324 = vrot.slane %v3492, 7
      %v4325 = vsel %vm3694, %v3481, %v4323
      %v4326 = vsel %vm3696, %v3481, %v4323
      %v4327 = vrot.slane %v4326, 1
      %v4328 = vsel %vm3699, %v3481, %v4323
      %v4329 = vrot.slane %v4328, 2
      %v4330 = vsel %vm3702, %v3481, %v4323
      %v4331 = vrot.slane %v4330, 3
      %v4332 = vsel %vm3705, %v3481, %v4323
      %v4333 = vrot.slane %v4332, 4
      %v4334 = vsel %vm3708, %v3481, %v4323
      %v4335 = vrot.slane %v4334, 5
      %v4336 = vsel %vm3711, %v3481, %v4323
      %v4337 = vrot.slane %v4336, 6
      %v4338 = vsel %vm3714, %v4323, %v3481
      %v4339 = vrot.slane %v4338, 7
      %v4340 = vsel %vm3694, %v3491, %v4324
      %v4341 = vsel %vm3696, %v3491, %v4324
      %v4342 = vrot.slane %v4341, 1
      %v4343 = vsel %vm3699, %v3491, %v4324
      %v4344 = vrot.slane %v4343, 2
      %v4345 = vsel %vm3702, %v3491, %v4324
      %v4346 = vrot.slane %v4345, 3
      %v4347 = vsel %vm3705, %v3491, %v4324
      %v4348 = vrot.slane %v4347, 4
      %v4349 = vsel %vm3708, %v3491, %v4324
      %v4350 = vrot.slane %v4349, 5
      %v4351 = vsel %vm3711, %v3491, %v4324
      %v4352 = vrot.slane %v4351, 6
      %v4353 = vsel %vm3714, %v4324, %v3491
      %v4354 = vrot.slane %v4353, 7
      %v4355 = vperm.slane %v4325, 0
      %v4356 = vperm.slane %v4325, 1
      %v4357 = vperm.slane %v4327, 0
      %v4358 = vperm.slane %v4327, 1
      %v4359 = vperm.slane %v4329, 0
      %v4360 = vperm.slane %v4329, 1
      %v4361 = vperm.slane %v4331, 0
      %v4362 = vperm.slane %v4331, 1
      %v4363 = vperm.slane %v4333, 0
      %v4364 = vperm.slane %v4333, 1
      %v4365 = vperm.slane %v4335, 0
      %v4366 = vperm.slane %v4335, 1
      %v4367 = vperm.slane %v4337, 0
      %v4368 = vperm.slane %v4337, 1
      %v4369 = vperm.slane %v4339, 0
      %v4370 = vperm.slane %v4339, 1
      %v4371 = vperm.slane %v4340, 0
      %v4372 = vperm.slane %v4340, 1
      %v4373 = vperm.slane %v4342, 0
      %v4374 = vperm.slane %v4342, 1
      %v4375 = vperm.slane %v4344, 0
      %v4376 = vperm.slane %v4344, 1
      %v4377 = vperm.slane %v4346, 0
      %v4378 = vperm.slane %v4346, 1
      %v4379 = vperm.slane %v4348, 0
      %v4380 = vperm.slane %v4348, 1
      %v4381 = vperm.slane %v4350, 0
      %v4382 = vperm.slane %v4350, 1
      %v4383 = vperm.slane %v4352, 0
      %v4384 = vperm.slane %v4352, 1
      %v4385 = vperm.slane %v4354, 0
      %v4386 = vperm.slane %v4354, 1
      %4387 = vrot.lane.b32.xlu0 %v4355, 14
      %v4388 = vpop.permute.xlu0 %4387
      %4389 = vrot.lane.b32.xlu0 %v4356, 14
      %v4390 = vpop.permute.xlu0 %4389
      %4391 = vrot.lane.b32.xlu0 %v4357, 14
      %v4392 = vpop.permute.xlu0 %4391
      %4393 = vrot.lane.b32.xlu0 %v4358, 14
      %v4394 = vpop.permute.xlu0 %4393
      %4395 = vrot.lane.b32.xlu0 %v4359, 14
      %v4396 = vpop.permute.xlu0 %4395
      %4397 = vrot.lane.b32.xlu0 %v4360, 14
      %v4398 = vpop.permute.xlu0 %4397
      %4399 = vrot.lane.b32.xlu0 %v4361, 14
      %v4400 = vpop.permute.xlu0 %4399
      %4401 = vrot.lane.b32.xlu0 %v4362, 14
      %v4402 = vpop.permute.xlu0 %4401
      %4403 = vrot.lane.b32.xlu0 %v4363, 14
      %v4404 = vpop.permute.xlu0 %4403
      %4405 = vrot.lane.b32.xlu0 %v4364, 14
      %v4406 = vpop.permute.xlu0 %4405
      %4407 = vrot.lane.b32.xlu0 %v4365, 14
      %v4408 = vpop.permute.xlu0 %4407
      %4409 = vrot.lane.b32.xlu0 %v4366, 14
      %v4410 = vpop.permute.xlu0 %4409
      %4411 = vrot.lane.b32.xlu0 %v4367, 14
      %v4412 = vpop.permute.xlu0 %4411
      %4413 = vrot.lane.b32.xlu0 %v4368, 14
      %v4414 = vpop.permute.xlu0 %4413
      %4415 = vrot.lane.b32.xlu0 %v4369, 14
      %v4416 = vpop.permute.xlu0 %4415
      %4417 = vrot.lane.b32.xlu0 %v4370, 14
      %v4418 = vpop.permute.xlu0 %4417
      %4419 = vrot.lane.b32.xlu0 %v4371, 14
      %v4420 = vpop.permute.xlu0 %4419
      %4421 = vrot.lane.b32.xlu0 %v4372, 14
      %v4422 = vpop.permute.xlu0 %4421
      %4423 = vrot.lane.b32.xlu0 %v4373, 14
      %v4424 = vpop.permute.xlu0 %4423
      %4425 = vrot.lane.b32.xlu0 %v4374, 14
      %v4426 = vpop.permute.xlu0 %4425
      %4427 = vrot.lane.b32.xlu0 %v4375, 14
      %v4428 = vpop.permute.xlu0 %4427
      %4429 = vrot.lane.b32.xlu0 %v4376, 14
      %v4430 = vpop.permute.xlu0 %4429
      %4431 = vrot.lane.b32.xlu0 %v4377, 14
      %v4432 = vpop.permute.xlu0 %4431
      %4433 = vrot.lane.b32.xlu0 %v4378, 14
      %v4434 = vpop.permute.xlu0 %4433
      %4435 = vrot.lane.b32.xlu0 %v4379, 14
      %v4436 = vpop.permute.xlu0 %4435
      %4437 = vrot.lane.b32.xlu0 %v4380, 14
      %v4438 = vpop.permute.xlu0 %4437
      %4439 = vrot.lane.b32.xlu0 %v4381, 14
      %v4440 = vpop.permute.xlu0 %4439
      %4441 = vrot.lane.b32.xlu0 %v4382, 14
      %v4442 = vpop.permute.xlu0 %4441
      %4443 = vrot.lane.b32.xlu0 %v4383, 14
      %v4444 = vpop.permute.xlu0 %4443
      %4445 = vrot.lane.b32.xlu0 %v4384, 14
      %v4446 = vpop.permute.xlu0 %4445
      %4447 = vrot.lane.b32.xlu0 %v4385, 14
      %v4448 = vpop.permute.xlu0 %4447
      %4449 = vrot.lane.b32.xlu0 %v4386, 14
      %v4450 = vpop.permute.xlu0 %4449
      %vm4451 = vcmask 113664
      %v4452 = vsel %vm4451, %v4388, %v4390
      %v4453 = vsel %vm4451, %v4392, %v4394
      %v4454 = vsel %vm4451, %v4396, %v4398
      %v4455 = vsel %vm4451, %v4400, %v4402
      %v4456 = vsel %vm4451, %v4404, %v4406
      %v4457 = vsel %vm4451, %v4408, %v4410
      %v4458 = vsel %vm4451, %v4412, %v4414
      %v4459 = vsel %vm4451, %v4416, %v4418
      %v4460 = vsel %vm4451, %v4420, %v4422
      %v4461 = vsel %vm4451, %v4424, %v4426
      %v4462 = vsel %vm4451, %v4428, %v4430
      %v4463 = vsel %vm4451, %v4432, %v4434
      %v4464 = vsel %vm4451, %v4436, %v4438
      %v4465 = vsel %vm4451, %v4440, %v4442
      %v4466 = vsel %vm4451, %v4444, %v4446
      %v4467 = vsel %vm4451, %v4448, %v4450
      %4484 = vst.msk [vmem:[%s216 + $0xa] sm:$0x1] %vm3529, %v4452
      %4485 = vst.msk [vmem:[%s216 + $0x32] sm:$0x1] %vm3529, %v4453
      %4486 = vst.msk [vmem:[%s216 + $0x5a] sm:$0x1] %vm3529, %v4454
      %4487 = vst.msk [vmem:[%s216 + $0x82] sm:$0x1] %vm3529, %v4455
      %4488 = vst.msk [vmem:[%s216 + $0xaa] sm:$0x1] %vm3529, %v4456
      %4489 = vst.msk [vmem:[%s216 + $0xd2] sm:$0x1] %vm3529, %v4457
      %4490 = vst.msk [vmem:[%s216 + $0xfa] sm:$0x1] %vm3529, %v4458
      %4491 = vst.msk [vmem:[%s216 + $0x122] sm:$0x1] %vm3529, %v4459
      %4492 = vst.msk [vmem:[%s216 + $0x14a] sm:$0x1] %vm3529, %v4460
      %4493 = vst.msk [vmem:[%s216 + $0x172] sm:$0x1] %vm3529, %v4461
      %4494 = vst.msk [vmem:[%s216 + $0x19a] sm:$0x1] %vm3529, %v4462
      %4495 = vst.msk [vmem:[%s216 + $0x1c2] sm:$0x1] %vm3529, %v4463
      %4496 = vst.msk [vmem:[%s216 + $0x1ea] sm:$0x1] %vm3529, %v4464
      %4497 = vst.msk [vmem:[%s216 + $0x212] sm:$0x1] %vm3529, %v4465
      %4498 = vst.msk [vmem:[%s216 + $0x23a] sm:$0x1] %vm3529, %v4466
      %4499 = vst.msk [vmem:[%s216 + $0x262] sm:$0x1] %vm3529, %v4467
      %v4500 = vrot.slane %v3482, 1
      %v4501 = vrot.slane %v3482, 2
      %v4502 = vrot.slane %v3482, 3
      %v4503 = vrot.slane %v3482, 4
      %v4504 = vrot.slane %v3482, 5
      %v4505 = vrot.slane %v3482, 6
      %v4506 = vrot.slane %v3492, 1
      %v4507 = vrot.slane %v3492, 2
      %v4508 = vrot.slane %v3492, 3
      %v4509 = vrot.slane %v3492, 4
      %v4510 = vrot.slane %v3492, 5
      %v4511 = vrot.slane %v3492, 6
      %v4512 = vperm.slane %v3482, 0
      %v4513 = vperm.slane %v4500, 0
      %v4514 = vperm.slane %v4501, 0
      %v4515 = vperm.slane %v4502, 0
      %v4516 = vperm.slane %v4503, 0
      %v4517 = vperm.slane %v4504, 0
      %v4518 = vperm.slane %v4505, 0
      %v4519 = vperm.slane %v4323, 0
      %v4520 = vperm.slane %v3492, 0
      %v4521 = vperm.slane %v4506, 0
      %v4522 = vperm.slane %v4507, 0
      %v4523 = vperm.slane %v4508, 0
      %v4524 = vperm.slane %v4509, 0
      %v4525 = vperm.slane %v4510, 0
      %v4526 = vperm.slane %v4511, 0
      %v4527 = vperm.slane %v4324, 0
      %4528 = vrot.lane.b32.xlu0 %v4512, 105
      %v4529 = vpop.permute.xlu0 %4528
      %4530 = vrot.lane.b32.xlu0 %v4513, 105
      %v4531 = vpop.permute.xlu0 %4530
      %4532 = vrot.lane.b32.xlu0 %v4514, 105
      %v4533 = vpop.permute.xlu0 %4532
      %4534 = vrot.lane.b32.xlu0 %v4515, 105
      %v4535 = vpop.permute.xlu0 %4534
      %4536 = vrot.lane.b32.xlu0 %v4516, 105
      %v4537 = vpop.permute.xlu0 %4536
      %4538 = vrot.lane.b32.xlu0 %v4517, 105
      %v4539 = vpop.permute.xlu0 %4538
      %4540 = vrot.lane.b32.xlu0 %v4518, 105
      %v4541 = vpop.permute.xlu0 %4540
      %4542 = vrot.lane.b32.xlu0 %v4519, 105
      %v4543 = vpop.permute.xlu0 %4542
      %4544 = vrot.lane.b32.xlu0 %v4520, 105
      %v4545 = vpop.permute.xlu0 %4544
      %4546 = vrot.lane.b32.xlu0 %v4521, 105
      %v4547 = vpop.permute.xlu0 %4546
      %4548 = vrot.lane.b32.xlu0 %v4522, 105
      %v4549 = vpop.permute.xlu0 %4548
      %4550 = vrot.lane.b32.xlu0 %v4523, 105
      %v4551 = vpop.permute.xlu0 %4550
      %4552 = vrot.lane.b32.xlu0 %v4524, 105
      %v4553 = vpop.permute.xlu0 %4552
      %4554 = vrot.lane.b32.xlu0 %v4525, 105
      %v4555 = vpop.permute.xlu0 %4554
      %4556 = vrot.lane.b32.xlu0 %v4526, 105
      %v4557 = vpop.permute.xlu0 %4556
      %4558 = vrot.lane.b32.xlu0 %v4527, 105
      %v4559 = vpop.permute.xlu0 %4558
      %4576 = vst.msk [vmem:[%s216 + $0xb] sm:$0x1] %vm3529, %v4529
      %4577 = vst.msk [vmem:[%s216 + $0x33] sm:$0x1] %vm3529, %v4531
      %4578 = vst.msk [vmem:[%s216 + $0x5b] sm:$0x1] %vm3529, %v4533
      %4579 = vst.msk [vmem:[%s216 + $0x83] sm:$0x1] %vm3529, %v4535
      %4580 = vst.msk [vmem:[%s216 + $0xab] sm:$0x1] %vm3529, %v4537
      %4581 = vst.msk [vmem:[%s216 + $0xd3] sm:$0x1] %vm3529, %v4539
      %4582 = vst.msk [vmem:[%s216 + $0xfb] sm:$0x1] %vm3529, %v4541
      %4583 = vst.msk [vmem:[%s216 + $0x123] sm:$0x1] %vm3529, %v4543
      %4584 = vst.msk [vmem:[%s216 + $0x14b] sm:$0x1] %vm3529, %v4545
      %4585 = vst.msk [vmem:[%s216 + $0x173] sm:$0x1] %vm3529, %v4547
      %4586 = vst.msk [vmem:[%s216 + $0x19b] sm:$0x1] %vm3529, %v4549
      %4587 = vst.msk [vmem:[%s216 + $0x1c3] sm:$0x1] %vm3529, %v4551
      %4588 = vst.msk [vmem:[%s216 + $0x1eb] sm:$0x1] %vm3529, %v4553
      %4589 = vst.msk [vmem:[%s216 + $0x213] sm:$0x1] %vm3529, %v4555
      %4590 = vst.msk [vmem:[%s216 + $0x23b] sm:$0x1] %vm3529, %v4557
      %4591 = vst.msk [vmem:[%s216 + $0x263] sm:$0x1] %vm3529, %v4559
      %4592 = vrot.lane.b32.xlu0 %v4512, 68
      %v4593 = vpop.permute.xlu0 %4592
      %4594 = vrot.lane.b32.xlu0 %v4513, 68
      %v4595 = vpop.permute.xlu0 %4594
      %4596 = vrot.lane.b32.xlu0 %v4514, 68
      %v4597 = vpop.permute.xlu0 %4596
      %4598 = vrot.lane.b32.xlu0 %v4515, 68
      %v4599 = vpop.permute.xlu0 %4598
      %4600 = vrot.lane.b32.xlu0 %v4516, 68
      %v4601 = vpop.permute.xlu0 %4600
      %4602 = vrot.lane.b32.xlu0 %v4517, 68
      %v4603 = vpop.permute.xlu0 %4602
      %4604 = vrot.lane.b32.xlu0 %v4518, 68
      %v4605 = vpop.permute.xlu0 %4604
      %4606 = vrot.lane.b32.xlu0 %v4519, 68
      %v4607 = vpop.permute.xlu0 %4606
      %4608 = vrot.lane.b32.xlu0 %v4520, 68
      %v4609 = vpop.permute.xlu0 %4608
      %4610 = vrot.lane.b32.xlu0 %v4521, 68
      %v4611 = vpop.permute.xlu0 %4610
      %4612 = vrot.lane.b32.xlu0 %v4522, 68
      %v4613 = vpop.permute.xlu0 %4612
      %4614 = vrot.lane.b32.xlu0 %v4523, 68
      %v4615 = vpop.permute.xlu0 %4614
      %4616 = vrot.lane.b32.xlu0 %v4524, 68
      %v4617 = vpop.permute.xlu0 %4616
      %4618 = vrot.lane.b32.xlu0 %v4525, 68
      %v4619 = vpop.permute.xlu0 %4618
      %4620 = vrot.lane.b32.xlu0 %v4526, 68
      %v4621 = vpop.permute.xlu0 %4620
      %4622 = vrot.lane.b32.xlu0 %v4527, 68
      %v4623 = vpop.permute.xlu0 %4622
      %4640 = vst.msk [vmem:[%s216 + $0xc] sm:$0x1] %vm3529, %v4593
      %4641 = vst.msk [vmem:[%s216 + $0x34] sm:$0x1] %vm3529, %v4595
      %4642 = vst.msk [vmem:[%s216 + $0x5c] sm:$0x1] %vm3529, %v4597
      %4643 = vst.msk [vmem:[%s216 + $0x84] sm:$0x1] %vm3529, %v4599
      %4644 = vst.msk [vmem:[%s216 + $0xac] sm:$0x1] %vm3529, %v4601
      %4645 = vst.msk [vmem:[%s216 + $0xd4] sm:$0x1] %vm3529, %v4603
      %4646 = vst.msk [vmem:[%s216 + $0xfc] sm:$0x1] %vm3529, %v4605
      %4647 = vst.msk [vmem:[%s216 + $0x124] sm:$0x1] %vm3529, %v4607
      %4648 = vst.msk [vmem:[%s216 + $0x14c] sm:$0x1] %vm3529, %v4609
      %4649 = vst.msk [vmem:[%s216 + $0x174] sm:$0x1] %vm3529, %v4611
      %4650 = vst.msk [vmem:[%s216 + $0x19c] sm:$0x1] %vm3529, %v4613
      %4651 = vst.msk [vmem:[%s216 + $0x1c4] sm:$0x1] %vm3529, %v4615
      %4652 = vst.msk [vmem:[%s216 + $0x1ec] sm:$0x1] %vm3529, %v4617
      %4653 = vst.msk [vmem:[%s216 + $0x214] sm:$0x1] %vm3529, %v4619
      %4654 = vst.msk [vmem:[%s216 + $0x23c] sm:$0x1] %vm3529, %v4621
      %4655 = vst.msk [vmem:[%s216 + $0x264] sm:$0x1] %vm3529, %v4623
      %v4658 = vrot.slane %v3483, 7
      %v4659 = vrot.slane %v3493, 7
      %v4660 = vsel %vm3694, %v3482, %v4658
      %v4661 = vsel %vm3696, %v3482, %v4658
      %v4662 = vrot.slane %v4661, 1
      %v4663 = vsel %vm3699, %v3482, %v4658
      %v4664 = vrot.slane %v4663, 2
      %v4665 = vsel %vm3702, %v3482, %v4658
      %v4666 = vrot.slane %v4665, 3
      %v4667 = vsel %vm3705, %v3482, %v4658
      %v4668 = vrot.slane %v4667, 4
      %v4669 = vsel %vm3708, %v3482, %v4658
      %v4670 = vrot.slane %v4669, 5
      %v4671 = vsel %vm3711, %v3482, %v4658
      %v4672 = vrot.slane %v4671, 6
      %v4673 = vsel %vm3714, %v4658, %v3482
      %v4674 = vrot.slane %v4673, 7
      %v4675 = vsel %vm3694, %v3492, %v4659
      %v4676 = vsel %vm3696, %v3492, %v4659
      %v4677 = vrot.slane %v4676, 1
      %v4678 = vsel %vm3699, %v3492, %v4659
      %v4679 = vrot.slane %v4678, 2
      %v4680 = vsel %vm3702, %v3492, %v4659
      %v4681 = vrot.slane %v4680, 3
      %v4682 = vsel %vm3705, %v3492, %v4659
      %v4683 = vrot.slane %v4682, 4
      %v4684 = vsel %vm3708, %v3492, %v4659
      %v4685 = vrot.slane %v4684, 5
      %v4686 = vsel %vm3711, %v3492, %v4659
      %v4687 = vrot.slane %v4686, 6
      %v4688 = vsel %vm3714, %v4659, %v3492
      %v4689 = vrot.slane %v4688, 7
      %v4690 = vperm.slane %v4660, 0
      %v4691 = vperm.slane %v4660, 1
      %v4692 = vperm.slane %v4662, 0
      %v4693 = vperm.slane %v4662, 1
      %v4694 = vperm.slane %v4664, 0
      %v4695 = vperm.slane %v4664, 1
      %v4696 = vperm.slane %v4666, 0
      %v4697 = vperm.slane %v4666, 1
      %v4698 = vperm.slane %v4668, 0
      %v4699 = vperm.slane %v4668, 1
      %v4700 = vperm.slane %v4670, 0
      %v4701 = vperm.slane %v4670, 1
      %v4702 = vperm.slane %v4672, 0
      %v4703 = vperm.slane %v4672, 1
      %v4704 = vperm.slane %v4674, 0
      %v4705 = vperm.slane %v4674, 1
      %v4706 = vperm.slane %v4675, 0
      %v4707 = vperm.slane %v4675, 1
      %v4708 = vperm.slane %v4677, 0
      %v4709 = vperm.slane %v4677, 1
      %v4710 = vperm.slane %v4679, 0
      %v4711 = vperm.slane %v4679, 1
      %v4712 = vperm.slane %v4681, 0
      %v4713 = vperm.slane %v4681, 1
      %v4714 = vperm.slane %v4683, 0
      %v4715 = vperm.slane %v4683, 1
      %v4716 = vperm.slane %v4685, 0
      %v4717 = vperm.slane %v4685, 1
      %v4718 = vperm.slane %v4687, 0
      %v4719 = vperm.slane %v4687, 1
      %v4720 = vperm.slane %v4689, 0
      %v4721 = vperm.slane %v4689, 1
      %4722 = vrot.lane.b32.xlu0 %v4690, 31
      %v4723 = vpop.permute.xlu0 %4722
      %4724 = vrot.lane.b32.xlu0 %v4691, 31
      %v4725 = vpop.permute.xlu0 %4724
      %4726 = vrot.lane.b32.xlu0 %v4692, 31
      %v4727 = vpop.permute.xlu0 %4726
      %4728 = vrot.lane.b32.xlu0 %v4693, 31
      %v4729 = vpop.permute.xlu0 %4728
      %4730 = vrot.lane.b32.xlu0 %v4694, 31
      %v4731 = vpop.permute.xlu0 %4730
      %4732 = vrot.lane.b32.xlu0 %v4695, 31
      %v4733 = vpop.permute.xlu0 %4732
      %4734 = vrot.lane.b32.xlu0 %v4696, 31
      %v4735 = vpop.permute.xlu0 %4734
      %4736 = vrot.lane.b32.xlu0 %v4697, 31
      %v4737 = vpop.permute.xlu0 %4736
      %4738 = vrot.lane.b32.xlu0 %v4698, 31
      %v4739 = vpop.permute.xlu0 %4738
      %4740 = vrot.lane.b32.xlu0 %v4699, 31
      %v4741 = vpop.permute.xlu0 %4740
      %4742 = vrot.lane.b32.xlu0 %v4700, 31
      %v4743 = vpop.permute.xlu0 %4742
      %4744 = vrot.lane.b32.xlu0 %v4701, 31
      %v4745 = vpop.permute.xlu0 %4744
      %4746 = vrot.lane.b32.xlu0 %v4702, 31
      %v4747 = vpop.permute.xlu0 %4746
      %4748 = vrot.lane.b32.xlu0 %v4703, 31
      %v4749 = vpop.permute.xlu0 %4748
      %4750 = vrot.lane.b32.xlu0 %v4704, 31
      %v4751 = vpop.permute.xlu0 %4750
      %4752 = vrot.lane.b32.xlu0 %v4705, 31
      %v4753 = vpop.permute.xlu0 %4752
      %4754 = vrot.lane.b32.xlu0 %v4706, 31
      %v4755 = vpop.permute.xlu0 %4754
      %4756 = vrot.lane.b32.xlu0 %v4707, 31
      %v4757 = vpop.permute.xlu0 %4756
      %4758 = vrot.lane.b32.xlu0 %v4708, 31
      %v4759 = vpop.permute.xlu0 %4758
      %4760 = vrot.lane.b32.xlu0 %v4709, 31
      %v4761 = vpop.permute.xlu0 %4760
      %4762 = vrot.lane.b32.xlu0 %v4710, 31
      %v4763 = vpop.permute.xlu0 %4762
      %4764 = vrot.lane.b32.xlu0 %v4711, 31
      %v4765 = vpop.permute.xlu0 %4764
      %4766 = vrot.lane.b32.xlu0 %v4712, 31
      %v4767 = vpop.permute.xlu0 %4766
      %4768 = vrot.lane.b32.xlu0 %v4713, 31
      %v4769 = vpop.permute.xlu0 %4768
      %4770 = vrot.lane.b32.xlu0 %v4714, 31
      %v4771 = vpop.permute.xlu0 %4770
      %4772 = vrot.lane.b32.xlu0 %v4715, 31
      %v4773 = vpop.permute.xlu0 %4772
      %4774 = vrot.lane.b32.xlu0 %v4716, 31
      %v4775 = vpop.permute.xlu0 %4774
      %4776 = vrot.lane.b32.xlu0 %v4717, 31
      %v4777 = vpop.permute.xlu0 %4776
      %4778 = vrot.lane.b32.xlu0 %v4718, 31
      %v4779 = vpop.permute.xlu0 %4778
      %4780 = vrot.lane.b32.xlu0 %v4719, 31
      %v4781 = vpop.permute.xlu0 %4780
      %4782 = vrot.lane.b32.xlu0 %v4720, 31
      %v4783 = vpop.permute.xlu0 %4782
      %4784 = vrot.lane.b32.xlu0 %v4721, 31
      %v4785 = vpop.permute.xlu0 %4784
      %vm4786 = vcmask 252928
      %v4787 = vsel %vm4786, %v4723, %v4725
      %v4788 = vsel %vm4786, %v4727, %v4729
      %v4789 = vsel %vm4786, %v4731, %v4733
      %v4790 = vsel %vm4786, %v4735, %v4737
      %v4791 = vsel %vm4786, %v4739, %v4741
      %v4792 = vsel %vm4786, %v4743, %v4745
      %v4793 = vsel %vm4786, %v4747, %v4749
      %v4794 = vsel %vm4786, %v4751, %v4753
      %v4795 = vsel %vm4786, %v4755, %v4757
      %v4796 = vsel %vm4786, %v4759, %v4761
      %v4797 = vsel %vm4786, %v4763, %v4765
      %v4798 = vsel %vm4786, %v4767, %v4769
      %v4799 = vsel %vm4786, %v4771, %v4773
      %v4800 = vsel %vm4786, %v4775, %v4777
      %v4801 = vsel %vm4786, %v4779, %v4781
      %v4802 = vsel %vm4786, %v4783, %v4785
      %4819 = vst.msk [vmem:[%s216 + $0xd] sm:$0x1] %vm3529, %v4787
      %4820 = vst.msk [vmem:[%s216 + $0x35] sm:$0x1] %vm3529, %v4788
      %4821 = vst.msk [vmem:[%s216 + $0x5d] sm:$0x1] %vm3529, %v4789
      %4822 = vst.msk [vmem:[%s216 + $0x85] sm:$0x1] %vm3529, %v4790
      %4823 = vst.msk [vmem:[%s216 + $0xad] sm:$0x1] %vm3529, %v4791
      %4824 = vst.msk [vmem:[%s216 + $0xd5] sm:$0x1] %vm3529, %v4792
      %4825 = vst.msk [vmem:[%s216 + $0xfd] sm:$0x1] %vm3529, %v4793
      %4826 = vst.msk [vmem:[%s216 + $0x125] sm:$0x1] %vm3529, %v4794
      %4827 = vst.msk [vmem:[%s216 + $0x14d] sm:$0x1] %vm3529, %v4795
      %4828 = vst.msk [vmem:[%s216 + $0x175] sm:$0x1] %vm3529, %v4796
      %4829 = vst.msk [vmem:[%s216 + $0x19d] sm:$0x1] %vm3529, %v4797
      %4830 = vst.msk [vmem:[%s216 + $0x1c5] sm:$0x1] %vm3529, %v4798
      %4831 = vst.msk [vmem:[%s216 + $0x1ed] sm:$0x1] %vm3529, %v4799
      %4832 = vst.msk [vmem:[%s216 + $0x215] sm:$0x1] %vm3529, %v4800
      %4833 = vst.msk [vmem:[%s216 + $0x23d] sm:$0x1] %vm3529, %v4801
      %4834 = vst.msk [vmem:[%s216 + $0x265] sm:$0x1] %vm3529, %v4802
      %v4835 = vrot.slane %v3483, 1
      %v4836 = vrot.slane %v3483, 2
      %v4837 = vrot.slane %v3483, 3
      %v4838 = vrot.slane %v3483, 4
      %v4839 = vrot.slane %v3483, 5
      %v4840 = vrot.slane %v3483, 6
      %v4841 = vrot.slane %v3493, 1
      %v4842 = vrot.slane %v3493, 2
      %v4843 = vrot.slane %v3493, 3
      %v4844 = vrot.slane %v3493, 4
      %v4845 = vrot.slane %v3493, 5
      %v4846 = vrot.slane %v3493, 6
      %v4847 = vperm.slane %v3483, 0
      %v4848 = vperm.slane %v4835, 0
      %v4849 = vperm.slane %v4836, 0
      %v4850 = vperm.slane %v4837, 0
      %v4851 = vperm.slane %v4838, 0
      %v4852 = vperm.slane %v4839, 0
      %v4853 = vperm.slane %v4840, 0
      %v4854 = vperm.slane %v4658, 0
      %v4855 = vperm.slane %v3493, 0
      %v4856 = vperm.slane %v4841, 0
      %v4857 = vperm.slane %v4842, 0
      %v4858 = vperm.slane %v4843, 0
      %v4859 = vperm.slane %v4844, 0
      %v4860 = vperm.slane %v4845, 0
      %v4861 = vperm.slane %v4846, 0
      %v4862 = vperm.slane %v4659, 0
      %4863 = vrot.lane.b32.xlu0 %v4847, 122
      %v4864 = vpop.permute.xlu0 %4863
      %4865 = vrot.lane.b32.xlu0 %v4848, 122
      %v4866 = vpop.permute.xlu0 %4865
      %4867 = vrot.lane.b32.xlu0 %v4849, 122
      %v4868 = vpop.permute.xlu0 %4867
      %4869 = vrot.lane.b32.xlu0 %v4850, 122
      %v4870 = vpop.permute.xlu0 %4869
      %4871 = vrot.lane.b32.xlu0 %v4851, 122
      %v4872 = vpop.permute.xlu0 %4871
      %4873 = vrot.lane.b32.xlu0 %v4852, 122
      %v4874 = vpop.permute.xlu0 %4873
      %4875 = vrot.lane.b32.xlu0 %v4853, 122
      %v4876 = vpop.permute.xlu0 %4875
      %4877 = vrot.lane.b32.xlu0 %v4854, 122
      %v4878 = vpop.permute.xlu0 %4877
      %4879 = vrot.lane.b32.xlu0 %v4855, 122
      %v4880 = vpop.permute.xlu0 %4879
      %4881 = vrot.lane.b32.xlu0 %v4856, 122
      %v4882 = vpop.permute.xlu0 %4881
      %4883 = vrot.lane.b32.xlu0 %v4857, 122
      %v4884 = vpop.permute.xlu0 %4883
      %4885 = vrot.lane.b32.xlu0 %v4858, 122
      %v4886 = vpop.permute.xlu0 %4885
      %4887 = vrot.lane.b32.xlu0 %v4859, 122
      %v4888 = vpop.permute.xlu0 %4887
      %4889 = vrot.lane.b32.xlu0 %v4860, 122
      %v4890 = vpop.permute.xlu0 %4889
      %4891 = vrot.lane.b32.xlu0 %v4861, 122
      %v4892 = vpop.permute.xlu0 %4891
      %4893 = vrot.lane.b32.xlu0 %v4862, 122
      %v4894 = vpop.permute.xlu0 %4893
      %4911 = vst.msk [vmem:[%s216 + $0xe] sm:$0x1] %vm3529, %v4864
      %4912 = vst.msk [vmem:[%s216 + $0x36] sm:$0x1] %vm3529, %v4866
      %4913 = vst.msk [vmem:[%s216 + $0x5e] sm:$0x1] %vm3529, %v4868
      %4914 = vst.msk [vmem:[%s216 + $0x86] sm:$0x1] %vm3529, %v4870
      %4915 = vst.msk [vmem:[%s216 + $0xae] sm:$0x1] %vm3529, %v4872
      %4916 = vst.msk [vmem:[%s216 + $0xd6] sm:$0x1] %vm3529, %v4874
      %4917 = vst.msk [vmem:[%s216 + $0xfe] sm:$0x1] %vm3529, %v4876
      %4918 = vst.msk [vmem:[%s216 + $0x126] sm:$0x1] %vm3529, %v4878
      %4919 = vst.msk [vmem:[%s216 + $0x14e] sm:$0x1] %vm3529, %v4880
      %4920 = vst.msk [vmem:[%s216 + $0x176] sm:$0x1] %vm3529, %v4882
      %4921 = vst.msk [vmem:[%s216 + $0x19e] sm:$0x1] %vm3529, %v4884
      %4922 = vst.msk [vmem:[%s216 + $0x1c6] sm:$0x1] %vm3529, %v4886
      %4923 = vst.msk [vmem:[%s216 + $0x1ee] sm:$0x1] %vm3529, %v4888
      %4924 = vst.msk [vmem:[%s216 + $0x216] sm:$0x1] %vm3529, %v4890
      %4925 = vst.msk [vmem:[%s216 + $0x23e] sm:$0x1] %vm3529, %v4892
      %4926 = vst.msk [vmem:[%s216 + $0x266] sm:$0x1] %vm3529, %v4894
      %4927 = vrot.lane.b32.xlu0 %v4847, 85
      %v4928 = vpop.permute.xlu0 %4927
      %4929 = vrot.lane.b32.xlu0 %v4848, 85
      %v4930 = vpop.permute.xlu0 %4929
      %4931 = vrot.lane.b32.xlu0 %v4849, 85
      %v4932 = vpop.permute.xlu0 %4931
      %4933 = vrot.lane.b32.xlu0 %v4850, 85
      %v4934 = vpop.permute.xlu0 %4933
      %4935 = vrot.lane.b32.xlu0 %v4851, 85
      %v4936 = vpop.permute.xlu0 %4935
      %4937 = vrot.lane.b32.xlu0 %v4852, 85
      %v4938 = vpop.permute.xlu0 %4937
      %4939 = vrot.lane.b32.xlu0 %v4853, 85
      %v4940 = vpop.permute.xlu0 %4939
      %4941 = vrot.lane.b32.xlu0 %v4854, 85
      %v4942 = vpop.permute.xlu0 %4941
      %4943 = vrot.lane.b32.xlu0 %v4855, 85
      %v4944 = vpop.permute.xlu0 %4943
      %4945 = vrot.lane.b32.xlu0 %v4856, 85
      %v4946 = vpop.permute.xlu0 %4945
      %4947 = vrot.lane.b32.xlu0 %v4857, 85
      %v4948 = vpop.permute.xlu0 %4947
      %4949 = vrot.lane.b32.xlu0 %v4858, 85
      %v4950 = vpop.permute.xlu0 %4949
      %4951 = vrot.lane.b32.xlu0 %v4859, 85
      %v4952 = vpop.permute.xlu0 %4951
      %4953 = vrot.lane.b32.xlu0 %v4860, 85
      %v4954 = vpop.permute.xlu0 %4953
      %4955 = vrot.lane.b32.xlu0 %v4861, 85
      %v4956 = vpop.permute.xlu0 %4955
      %4957 = vrot.lane.b32.xlu0 %v4862, 85
      %v4958 = vpop.permute.xlu0 %4957
      %4975 = vst.msk [vmem:[%s216 + $0xf] sm:$0x1] %vm3529, %v4928
      %4976 = vst.msk [vmem:[%s216 + $0x37] sm:$0x1] %vm3529, %v4930
      %4977 = vst.msk [vmem:[%s216 + $0x5f] sm:$0x1] %vm3529, %v4932
      %4978 = vst.msk [vmem:[%s216 + $0x87] sm:$0x1] %vm3529, %v4934
      %4979 = vst.msk [vmem:[%s216 + $0xaf] sm:$0x1] %vm3529, %v4936
      %4980 = vst.msk [vmem:[%s216 + $0xd7] sm:$0x1] %vm3529, %v4938
      %4981 = vst.msk [vmem:[%s216 + $0xff] sm:$0x1] %vm3529, %v4940
      %4982 = vst.msk [vmem:[%s216 + $0x127] sm:$0x1] %vm3529, %v4942
      %4983 = vst.msk [vmem:[%s216 + $0x14f] sm:$0x1] %vm3529, %v4944
      %4984 = vst.msk [vmem:[%s216 + $0x177] sm:$0x1] %vm3529, %v4946
      %4985 = vst.msk [vmem:[%s216 + $0x19f] sm:$0x1] %vm3529, %v4948
      %4986 = vst.msk [vmem:[%s216 + $0x1c7] sm:$0x1] %vm3529, %v4950
      %4987 = vst.msk [vmem:[%s216 + $0x1ef] sm:$0x1] %vm3529, %v4952
      %4988 = vst.msk [vmem:[%s216 + $0x217] sm:$0x1] %vm3529, %v4954
      %4989 = vst.msk [vmem:[%s216 + $0x23f] sm:$0x1] %vm3529, %v4956
      %4990 = vst.msk [vmem:[%s216 + $0x267] sm:$0x1] %vm3529, %v4958
      %4991 = vrot.lane.b32.xlu0 %v4847, 48
      %v4992 = vpop.permute.xlu0 %4991
      %4993 = vrot.lane.b32.xlu0 %v4848, 48
      %v4994 = vpop.permute.xlu0 %4993
      %4995 = vrot.lane.b32.xlu0 %v4849, 48
      %v4996 = vpop.permute.xlu0 %4995
      %4997 = vrot.lane.b32.xlu0 %v4850, 48
      %v4998 = vpop.permute.xlu0 %4997
      %4999 = vrot.lane.b32.xlu0 %v4851, 48
      %v5000 = vpop.permute.xlu0 %4999
      %5001 = vrot.lane.b32.xlu0 %v4852, 48
      %v5002 = vpop.permute.xlu0 %5001
      %5003 = vrot.lane.b32.xlu0 %v4853, 48
      %v5004 = vpop.permute.xlu0 %5003
      %5005 = vrot.lane.b32.xlu0 %v4854, 48
      %v5006 = vpop.permute.xlu0 %5005
      %5007 = vrot.lane.b32.xlu0 %v4855, 48
      %v5008 = vpop.permute.xlu0 %5007
      %5009 = vrot.lane.b32.xlu0 %v4856, 48
      %v5010 = vpop.permute.xlu0 %5009
      %5011 = vrot.lane.b32.xlu0 %v4857, 48
      %v5012 = vpop.permute.xlu0 %5011
      %5013 = vrot.lane.b32.xlu0 %v4858, 48
      %v5014 = vpop.permute.xlu0 %5013
      %5015 = vrot.lane.b32.xlu0 %v4859, 48
      %v5016 = vpop.permute.xlu0 %5015
      %5017 = vrot.lane.b32.xlu0 %v4860, 48
      %v5018 = vpop.permute.xlu0 %5017
      %5019 = vrot.lane.b32.xlu0 %v4861, 48
      %v5020 = vpop.permute.xlu0 %5019
      %5021 = vrot.lane.b32.xlu0 %v4862, 48
      %v5022 = vpop.permute.xlu0 %5021
      %5039 = vst.msk [vmem:[%s216 + $0x10] sm:$0x1] %vm3529, %v4992
      %5040 = vst.msk [vmem:[%s216 + $0x38] sm:$0x1] %vm3529, %v4994
      %5041 = vst.msk [vmem:[%s216 + $0x60] sm:$0x1] %vm3529, %v4996
      %5042 = vst.msk [vmem:[%s216 + $0x88] sm:$0x1] %vm3529, %v4998
      %5043 = vst.msk [vmem:[%s216 + $0xb0] sm:$0x1] %vm3529, %v5000
      %5044 = vst.msk [vmem:[%s216 + $0xd8] sm:$0x1] %vm3529, %v5002
      %5045 = vst.msk [vmem:[%s216 + $0x100] sm:$0x1] %vm3529, %v5004
      %5046 = vst.msk [vmem:[%s216 + $0x128] sm:$0x1] %vm3529, %v5006
      %5047 = vst.msk [vmem:[%s216 + $0x150] sm:$0x1] %vm3529, %v5008
      %5048 = vst.msk [vmem:[%s216 + $0x178] sm:$0x1] %vm3529, %v5010
      %5049 = vst.msk [vmem:[%s216 + $0x1a0] sm:$0x1] %vm3529, %v5012
      %5050 = vst.msk [vmem:[%s216 + $0x1c8] sm:$0x1] %vm3529, %v5014
      %5051 = vst.msk [vmem:[%s216 + $0x1f0] sm:$0x1] %vm3529, %v5016
      %5052 = vst.msk [vmem:[%s216 + $0x218] sm:$0x1] %vm3529, %v5018
      %5053 = vst.msk [vmem:[%s216 + $0x240] sm:$0x1] %vm3529, %v5020
      %5054 = vst.msk [vmem:[%s216 + $0x268] sm:$0x1] %vm3529, %v5022
      %v5057 = vrot.slane %v3484, 7
      %v5058 = vrot.slane %v3494, 7
      %v5059 = vsel %vm3694, %v3483, %v5057
      %v5060 = vsel %vm3696, %v3483, %v5057
      %v5061 = vrot.slane %v5060, 1
      %v5062 = vsel %vm3699, %v3483, %v5057
      %v5063 = vrot.slane %v5062, 2
      %v5064 = vsel %vm3702, %v3483, %v5057
      %v5065 = vrot.slane %v5064, 3
      %v5066 = vsel %vm3705, %v3483, %v5057
      %v5067 = vrot.slane %v5066, 4
      %v5068 = vsel %vm3708, %v3483, %v5057
      %v5069 = vrot.slane %v5068, 5
      %v5070 = vsel %vm3711, %v3483, %v5057
      %v5071 = vrot.slane %v5070, 6
      %v5072 = vsel %vm3714, %v5057, %v3483
      %v5073 = vrot.slane %v5072, 7
      %v5074 = vsel %vm3694, %v3493, %v5058
      %v5075 = vsel %vm3696, %v3493, %v5058
      %v5076 = vrot.slane %v5075, 1
      %v5077 = vsel %vm3699, %v3493, %v5058
      %v5078 = vrot.slane %v5077, 2
      %v5079 = vsel %vm3702, %v3493, %v5058
      %v5080 = vrot.slane %v5079, 3
      %v5081 = vsel %vm3705, %v3493, %v5058
      %v5082 = vrot.slane %v5081, 4
      %v5083 = vsel %vm3708, %v3493, %v5058
      %v5084 = vrot.slane %v5083, 5
      %v5085 = vsel %vm3711, %v3493, %v5058
      %v5086 = vrot.slane %v5085, 6
      %v5087 = vsel %vm3714, %v5058, %v3493
      %v5088 = vrot.slane %v5087, 7
      %v5089 = vperm.slane %v5059, 0
      %v5090 = vperm.slane %v5059, 1
      %v5091 = vperm.slane %v5061, 0
      %v5092 = vperm.slane %v5061, 1
      %v5093 = vperm.slane %v5063, 0
      %v5094 = vperm.slane %v5063, 1
      %v5095 = vperm.slane %v5065, 0
      %v5096 = vperm.slane %v5065, 1
      %v5097 = vperm.slane %v5067, 0
      %v5098 = vperm.slane %v5067, 1
      %v5099 = vperm.slane %v5069, 0
      %v5100 = vperm.slane %v5069, 1
      %v5101 = vperm.slane %v5071, 0
      %v5102 = vperm.slane %v5071, 1
      %v5103 = vperm.slane %v5073, 0
      %v5104 = vperm.slane %v5073, 1
      %v5105 = vperm.slane %v5074, 0
      %v5106 = vperm.slane %v5074, 1
      %v5107 = vperm.slane %v5076, 0
      %v5108 = vperm.slane %v5076, 1
      %v5109 = vperm.slane %v5078, 0
      %v5110 = vperm.slane %v5078, 1
      %v5111 = vperm.slane %v5080, 0
      %v5112 = vperm.slane %v5080, 1
      %v5113 = vperm.slane %v5082, 0
      %v5114 = vperm.slane %v5082, 1
      %v5115 = vperm.slane %v5084, 0
      %v5116 = vperm.slane %v5084, 1
      %v5117 = vperm.slane %v5086, 0
      %v5118 = vperm.slane %v5086, 1
      %v5119 = vperm.slane %v5088, 0
      %v5120 = vperm.slane %v5088, 1
      %5121 = vrot.lane.b32.xlu0 %v5089, 11
      %v5122 = vpop.permute.xlu0 %5121
      %5123 = vrot.lane.b32.xlu0 %v5090, 11
      %v5124 = vpop.permute.xlu0 %5123
      %5125 = vrot.lane.b32.xlu0 %v5091, 11
      %v5126 = vpop.permute.xlu0 %5125
      %5127 = vrot.lane.b32.xlu0 %v5092, 11
      %v5128 = vpop.permute.xlu0 %5127
      %5129 = vrot.lane.b32.xlu0 %v5093, 11
      %v5130 = vpop.permute.xlu0 %5129
      %5131 = vrot.lane.b32.xlu0 %v5094, 11
      %v5132 = vpop.permute.xlu0 %5131
      %5133 = vrot.lane.b32.xlu0 %v5095, 11
      %v5134 = vpop.permute.xlu0 %5133
      %5135 = vrot.lane.b32.xlu0 %v5096, 11
      %v5136 = vpop.permute.xlu0 %5135
      %5137 = vrot.lane.b32.xlu0 %v5097, 11
      %v5138 = vpop.permute.xlu0 %5137
      %5139 = vrot.lane.b32.xlu0 %v5098, 11
      %v5140 = vpop.permute.xlu0 %5139
      %5141 = vrot.lane.b32.xlu0 %v5099, 11
      %v5142 = vpop.permute.xlu0 %5141
      %5143 = vrot.lane.b32.xlu0 %v5100, 11
      %v5144 = vpop.permute.xlu0 %5143
      %5145 = vrot.lane.b32.xlu0 %v5101, 11
      %v5146 = vpop.permute.xlu0 %5145
      %5147 = vrot.lane.b32.xlu0 %v5102, 11
      %v5148 = vpop.permute.xlu0 %5147
      %5149 = vrot.lane.b32.xlu0 %v5103, 11
      %v5150 = vpop.permute.xlu0 %5149
      %5151 = vrot.lane.b32.xlu0 %v5104, 11
      %v5152 = vpop.permute.xlu0 %5151
      %5153 = vrot.lane.b32.xlu0 %v5105, 11
      %v5154 = vpop.permute.xlu0 %5153
      %5155 = vrot.lane.b32.xlu0 %v5106, 11
      %v5156 = vpop.permute.xlu0 %5155
      %5157 = vrot.lane.b32.xlu0 %v5107, 11
      %v5158 = vpop.permute.xlu0 %5157
      %5159 = vrot.lane.b32.xlu0 %v5108, 11
      %v5160 = vpop.permute.xlu0 %5159
      %5161 = vrot.lane.b32.xlu0 %v5109, 11
      %v5162 = vpop.permute.xlu0 %5161
      %5163 = vrot.lane.b32.xlu0 %v5110, 11
      %v5164 = vpop.permute.xlu0 %5163
      %5165 = vrot.lane.b32.xlu0 %v5111, 11
      %v5166 = vpop.permute.xlu0 %5165
      %5167 = vrot.lane.b32.xlu0 %v5112, 11
      %v5168 = vpop.permute.xlu0 %5167
      %5169 = vrot.lane.b32.xlu0 %v5113, 11
      %v5170 = vpop.permute.xlu0 %5169
      %5171 = vrot.lane.b32.xlu0 %v5114, 11
      %v5172 = vpop.permute.xlu0 %5171
      %5173 = vrot.lane.b32.xlu0 %v5115, 11
      %v5174 = vpop.permute.xlu0 %5173
      %5175 = vrot.lane.b32.xlu0 %v5116, 11
      %v5176 = vpop.permute.xlu0 %5175
      %5177 = vrot.lane.b32.xlu0 %v5117, 11
      %v5178 = vpop.permute.xlu0 %5177
      %5179 = vrot.lane.b32.xlu0 %v5118, 11
      %v5180 = vpop.permute.xlu0 %5179
      %5181 = vrot.lane.b32.xlu0 %v5119, 11
      %v5182 = vpop.permute.xlu0 %5181
      %5183 = vrot.lane.b32.xlu0 %v5120, 11
      %v5184 = vpop.permute.xlu0 %5183
      %vm5185 = vcmask 89088
      %v5186 = vsel %vm5185, %v5122, %v5124
      %v5187 = vsel %vm5185, %v5126, %v5128
      %v5188 = vsel %vm5185, %v5130, %v5132
      %v5189 = vsel %vm5185, %v5134, %v5136
      %v5190 = vsel %vm5185, %v5138, %v5140
      %v5191 = vsel %vm5185, %v5142, %v5144
      %v5192 = vsel %vm5185, %v5146, %v5148
      %v5193 = vsel %vm5185, %v5150, %v5152
      %v5194 = vsel %vm5185, %v5154, %v5156
      %v5195 = vsel %vm5185, %v5158, %v5160
      %v5196 = vsel %vm5185, %v5162, %v5164
      %v5197 = vsel %vm5185, %v5166, %v5168
      %v5198 = vsel %vm5185, %v5170, %v5172
      %v5199 = vsel %vm5185, %v5174, %v5176
      %v5200 = vsel %vm5185, %v5178, %v5180
      %v5201 = vsel %vm5185, %v5182, %v5184
      %5218 = vst.msk [vmem:[%s216 + $0x11] sm:$0x1] %vm3529, %v5186
      %5219 = vst.msk [vmem:[%s216 + $0x39] sm:$0x1] %vm3529, %v5187
      %5220 = vst.msk [vmem:[%s216 + $0x61] sm:$0x1] %vm3529, %v5188
      %5221 = vst.msk [vmem:[%s216 + $0x89] sm:$0x1] %vm3529, %v5189
      %5222 = vst.msk [vmem:[%s216 + $0xb1] sm:$0x1] %vm3529, %v5190
      %5223 = vst.msk [vmem:[%s216 + $0xd9] sm:$0x1] %vm3529, %v5191
      %5224 = vst.msk [vmem:[%s216 + $0x101] sm:$0x1] %vm3529, %v5192
      %5225 = vst.msk [vmem:[%s216 + $0x129] sm:$0x1] %vm3529, %v5193
      %5226 = vst.msk [vmem:[%s216 + $0x151] sm:$0x1] %vm3529, %v5194
      %5227 = vst.msk [vmem:[%s216 + $0x179] sm:$0x1] %vm3529, %v5195
      %5228 = vst.msk [vmem:[%s216 + $0x1a1] sm:$0x1] %vm3529, %v5196
      %5229 = vst.msk [vmem:[%s216 + $0x1c9] sm:$0x1] %vm3529, %v5197
      %5230 = vst.msk [vmem:[%s216 + $0x1f1] sm:$0x1] %vm3529, %v5198
      %5231 = vst.msk [vmem:[%s216 + $0x219] sm:$0x1] %vm3529, %v5199
      %5232 = vst.msk [vmem:[%s216 + $0x241] sm:$0x1] %vm3529, %v5200
      %5233 = vst.msk [vmem:[%s216 + $0x269] sm:$0x1] %vm3529, %v5201
      %v5234 = vrot.slane %v3484, 1
      %v5235 = vrot.slane %v3484, 2
      %v5236 = vrot.slane %v3484, 3
      %v5237 = vrot.slane %v3484, 4
      %v5238 = vrot.slane %v3484, 5
      %v5239 = vrot.slane %v3484, 6
      %v5240 = vrot.slane %v3494, 1
      %v5241 = vrot.slane %v3494, 2
      %v5242 = vrot.slane %v3494, 3
      %v5243 = vrot.slane %v3494, 4
      %v5244 = vrot.slane %v3494, 5
      %v5245 = vrot.slane %v3494, 6
      %v5246 = vperm.slane %v3484, 0
      %v5247 = vperm.slane %v5234, 0
      %v5248 = vperm.slane %v5235, 0
      %v5249 = vperm.slane %v5236, 0
      %v5250 = vperm.slane %v5237, 0
      %v5251 = vperm.slane %v5238, 0
      %v5252 = vperm.slane %v5239, 0
      %v5253 = vperm.slane %v5057, 0
      %v5254 = vperm.slane %v3494, 0
      %v5255 = vperm.slane %v5240, 0
      %v5256 = vperm.slane %v5241, 0
      %v5257 = vperm.slane %v5242, 0
      %v5258 = vperm.slane %v5243, 0
      %v5259 = vperm.slane %v5244, 0
      %v5260 = vperm.slane %v5245, 0
      %v5261 = vperm.slane %v5058, 0
      %5262 = vrot.lane.b32.xlu0 %v5246, 102
      %v5263 = vpop.permute.xlu0 %5262
      %5264 = vrot.lane.b32.xlu0 %v5247, 102
      %v5265 = vpop.permute.xlu0 %5264
      %5266 = vrot.lane.b32.xlu0 %v5248, 102
      %v5267 = vpop.permute.xlu0 %5266
      %5268 = vrot.lane.b32.xlu0 %v5249, 102
      %v5269 = vpop.permute.xlu0 %5268
      %5270 = vrot.lane.b32.xlu0 %v5250, 102
      %v5271 = vpop.permute.xlu0 %5270
      %5272 = vrot.lane.b32.xlu0 %v5251, 102
      %v5273 = vpop.permute.xlu0 %5272
      %5274 = vrot.lane.b32.xlu0 %v5252, 102
      %v5275 = vpop.permute.xlu0 %5274
      %5276 = vrot.lane.b32.xlu0 %v5253, 102
      %v5277 = vpop.permute.xlu0 %5276
      %5278 = vrot.lane.b32.xlu0 %v5254, 102
      %v5279 = vpop.permute.xlu0 %5278
      %5280 = vrot.lane.b32.xlu0 %v5255, 102
      %v5281 = vpop.permute.xlu0 %5280
      %5282 = vrot.lane.b32.xlu0 %v5256, 102
      %v5283 = vpop.permute.xlu0 %5282
      %5284 = vrot.lane.b32.xlu0 %v5257, 102
      %v5285 = vpop.permute.xlu0 %5284
      %5286 = vrot.lane.b32.xlu0 %v5258, 102
      %v5287 = vpop.permute.xlu0 %5286
      %5288 = vrot.lane.b32.xlu0 %v5259, 102
      %v5289 = vpop.permute.xlu0 %5288
      %5290 = vrot.lane.b32.xlu0 %v5260, 102
      %v5291 = vpop.permute.xlu0 %5290
      %5292 = vrot.lane.b32.xlu0 %v5261, 102
      %v5293 = vpop.permute.xlu0 %5292
      %5310 = vst.msk [vmem:[%s216 + $0x12] sm:$0x1] %vm3529, %v5263
      %5311 = vst.msk [vmem:[%s216 + $0x3a] sm:$0x1] %vm3529, %v5265
      %5312 = vst.msk [vmem:[%s216 + $0x62] sm:$0x1] %vm3529, %v5267
      %5313 = vst.msk [vmem:[%s216 + $0x8a] sm:$0x1] %vm3529, %v5269
      %5314 = vst.msk [vmem:[%s216 + $0xb2] sm:$0x1] %vm3529, %v5271
      %5315 = vst.msk [vmem:[%s216 + $0xda] sm:$0x1] %vm3529, %v5273
      %5316 = vst.msk [vmem:[%s216 + $0x102] sm:$0x1] %vm3529, %v5275
      %5317 = vst.msk [vmem:[%s216 + $0x12a] sm:$0x1] %vm3529, %v5277
      %5318 = vst.msk [vmem:[%s216 + $0x152] sm:$0x1] %vm3529, %v5279
      %5319 = vst.msk [vmem:[%s216 + $0x17a] sm:$0x1] %vm3529, %v5281
      %5320 = vst.msk [vmem:[%s216 + $0x1a2] sm:$0x1] %vm3529, %v5283
      %5321 = vst.msk [vmem:[%s216 + $0x1ca] sm:$0x1] %vm3529, %v5285
      %5322 = vst.msk [vmem:[%s216 + $0x1f2] sm:$0x1] %vm3529, %v5287
      %5323 = vst.msk [vmem:[%s216 + $0x21a] sm:$0x1] %vm3529, %v5289
      %5324 = vst.msk [vmem:[%s216 + $0x242] sm:$0x1] %vm3529, %v5291
      %5325 = vst.msk [vmem:[%s216 + $0x26a] sm:$0x1] %vm3529, %v5293
      %5326 = vrot.lane.b32.xlu0 %v5246, 65
      %v5327 = vpop.permute.xlu0 %5326
      %5328 = vrot.lane.b32.xlu0 %v5247, 65
      %v5329 = vpop.permute.xlu0 %5328
      %5330 = vrot.lane.b32.xlu0 %v5248, 65
      %v5331 = vpop.permute.xlu0 %5330
      %5332 = vrot.lane.b32.xlu0 %v5249, 65
      %v5333 = vpop.permute.xlu0 %5332
      %5334 = vrot.lane.b32.xlu0 %v5250, 65
      %v5335 = vpop.permute.xlu0 %5334
      %5336 = vrot.lane.b32.xlu0 %v5251, 65
      %v5337 = vpop.permute.xlu0 %5336
      %5338 = vrot.lane.b32.xlu0 %v5252, 65
      %v5339 = vpop.permute.xlu0 %5338
      %5340 = vrot.lane.b32.xlu0 %v5253, 65
      %v5341 = vpop.permute.xlu0 %5340
      %5342 = vrot.lane.b32.xlu0 %v5254, 65
      %v5343 = vpop.permute.xlu0 %5342
      %5344 = vrot.lane.b32.xlu0 %v5255, 65
      %v5345 = vpop.permute.xlu0 %5344
      %5346 = vrot.lane.b32.xlu0 %v5256, 65
      %v5347 = vpop.permute.xlu0 %5346
      %5348 = vrot.lane.b32.xlu0 %v5257, 65
      %v5349 = vpop.permute.xlu0 %5348
      %5350 = vrot.lane.b32.xlu0 %v5258, 65
      %v5351 = vpop.permute.xlu0 %5350
      %5352 = vrot.lane.b32.xlu0 %v5259, 65
      %v5353 = vpop.permute.xlu0 %5352
      %5354 = vrot.lane.b32.xlu0 %v5260, 65
      %v5355 = vpop.permute.xlu0 %5354
      %5356 = vrot.lane.b32.xlu0 %v5261, 65
      %v5357 = vpop.permute.xlu0 %5356
      %5374 = vst.msk [vmem:[%s216 + $0x13] sm:$0x1] %vm3529, %v5327
      %5375 = vst.msk [vmem:[%s216 + $0x3b] sm:$0x1] %vm3529, %v5329
      %5376 = vst.msk [vmem:[%s216 + $0x63] sm:$0x1] %vm3529, %v5331
      %5377 = vst.msk [vmem:[%s216 + $0x8b] sm:$0x1] %vm3529, %v5333
      %5378 = vst.msk [vmem:[%s216 + $0xb3] sm:$0x1] %vm3529, %v5335
      %5379 = vst.msk [vmem:[%s216 + $0xdb] sm:$0x1] %vm3529, %v5337
      %5380 = vst.msk [vmem:[%s216 + $0x103] sm:$0x1] %vm3529, %v5339
      %5381 = vst.msk [vmem:[%s216 + $0x12b] sm:$0x1] %vm3529, %v5341
      %5382 = vst.msk [vmem:[%s216 + $0x153] sm:$0x1] %vm3529, %v5343
      %5383 = vst.msk [vmem:[%s216 + $0x17b] sm:$0x1] %vm3529, %v5345
      %5384 = vst.msk [vmem:[%s216 + $0x1a3] sm:$0x1] %vm3529, %v5347
      %5385 = vst.msk [vmem:[%s216 + $0x1cb] sm:$0x1] %vm3529, %v5349
      %5386 = vst.msk [vmem:[%s216 + $0x1f3] sm:$0x1] %vm3529, %v5351
      %5387 = vst.msk [vmem:[%s216 + $0x21b] sm:$0x1] %vm3529, %v5353
      %5388 = vst.msk [vmem:[%s216 + $0x243] sm:$0x1] %vm3529, %v5355
      %5389 = vst.msk [vmem:[%s216 + $0x26b] sm:$0x1] %vm3529, %v5357
      %v5392 = vrot.slane %v3485, 7
      %v5393 = vrot.slane %v3495, 7
      %v5394 = vsel %vm3694, %v3484, %v5392
      %v5395 = vsel %vm3696, %v3484, %v5392
      %v5396 = vrot.slane %v5395, 1
      %v5397 = vsel %vm3699, %v3484, %v5392
      %v5398 = vrot.slane %v5397, 2
      %v5399 = vsel %vm3702, %v3484, %v5392
      %v5400 = vrot.slane %v5399, 3
      %v5401 = vsel %vm3705, %v3484, %v5392
      %v5402 = vrot.slane %v5401, 4
      %v5403 = vsel %vm3708, %v3484, %v5392
      %v5404 = vrot.slane %v5403, 5
      %v5405 = vsel %vm3711, %v3484, %v5392
      %v5406 = vrot.slane %v5405, 6
      %v5407 = vsel %vm3714, %v5392, %v3484
      %v5408 = vrot.slane %v5407, 7
      %v5409 = vsel %vm3694, %v3494, %v5393
      %v5410 = vsel %vm3696, %v3494, %v5393
      %v5411 = vrot.slane %v5410, 1
      %v5412 = vsel %vm3699, %v3494, %v5393
      %v5413 = vrot.slane %v5412, 2
      %v5414 = vsel %vm3702, %v3494, %v5393
      %v5415 = vrot.slane %v5414, 3
      %v5416 = vsel %vm3705, %v3494, %v5393
      %v5417 = vrot.slane %v5416, 4
      %v5418 = vsel %vm3708, %v3494, %v5393
      %v5419 = vrot.slane %v5418, 5
      %v5420 = vsel %vm3711, %v3494, %v5393
      %v5421 = vrot.slane %v5420, 6
      %v5422 = vsel %vm3714, %v5393, %v3494
      %v5423 = vrot.slane %v5422, 7
      %v5424 = vperm.slane %v5394, 0
      %v5425 = vperm.slane %v5394, 1
      %v5426 = vperm.slane %v5396, 0
      %v5427 = vperm.slane %v5396, 1
      %v5428 = vperm.slane %v5398, 0
      %v5429 = vperm.slane %v5398, 1
      %v5430 = vperm.slane %v5400, 0
      %v5431 = vperm.slane %v5400, 1
      %v5432 = vperm.slane %v5402, 0
      %v5433 = vperm.slane %v5402, 1
      %v5434 = vperm.slane %v5404, 0
      %v5435 = vperm.slane %v5404, 1
      %v5436 = vperm.slane %v5406, 0
      %v5437 = vperm.slane %v5406, 1
      %v5438 = vperm.slane %v5408, 0
      %v5439 = vperm.slane %v5408, 1
      %v5440 = vperm.slane %v5409, 0
      %v5441 = vperm.slane %v5409, 1
      %v5442 = vperm.slane %v5411, 0
      %v5443 = vperm.slane %v5411, 1
      %v5444 = vperm.slane %v5413, 0
      %v5445 = vperm.slane %v5413, 1
      %v5446 = vperm.slane %v5415, 0
      %v5447 = vperm.slane %v5415, 1
      %v5448 = vperm.slane %v5417, 0
      %v5449 = vperm.slane %v5417, 1
      %v5450 = vperm.slane %v5419, 0
      %v5451 = vperm.slane %v5419, 1
      %v5452 = vperm.slane %v5421, 0
      %v5453 = vperm.slane %v5421, 1
      %v5454 = vperm.slane %v5423, 0
      %v5455 = vperm.slane %v5423, 1
      %5456 = vrot.lane.b32.xlu0 %v5424, 28
      %v5457 = vpop.permute.xlu0 %5456
      %5458 = vrot.lane.b32.xlu0 %v5425, 28
      %v5459 = vpop.permute.xlu0 %5458
      %5460 = vrot.lane.b32.xlu0 %v5426, 28
      %v5461 = vpop.permute.xlu0 %5460
      %5462 = vrot.lane.b32.xlu0 %v5427, 28
      %v5463 = vpop.permute.xlu0 %5462
      %5464 = vrot.lane.b32.xlu0 %v5428, 28
      %v5465 = vpop.permute.xlu0 %5464
      %5466 = vrot.lane.b32.xlu0 %v5429, 28
      %v5467 = vpop.permute.xlu0 %5466
      %5468 = vrot.lane.b32.xlu0 %v5430, 28
      %v5469 = vpop.permute.xlu0 %5468
      %5470 = vrot.lane.b32.xlu0 %v5431, 28
      %v5471 = vpop.permute.xlu0 %5470
      %5472 = vrot.lane.b32.xlu0 %v5432, 28
      %v5473 = vpop.permute.xlu0 %5472
      %5474 = vrot.lane.b32.xlu0 %v5433, 28
      %v5475 = vpop.permute.xlu0 %5474
      %5476 = vrot.lane.b32.xlu0 %v5434, 28
      %v5477 = vpop.permute.xlu0 %5476
      %5478 = vrot.lane.b32.xlu0 %v5435, 28
      %v5479 = vpop.permute.xlu0 %5478
      %5480 = vrot.lane.b32.xlu0 %v5436, 28
      %v5481 = vpop.permute.xlu0 %5480
      %5482 = vrot.lane.b32.xlu0 %v5437, 28
      %v5483 = vpop.permute.xlu0 %5482
      %5484 = vrot.lane.b32.xlu0 %v5438, 28
      %v5485 = vpop.permute.xlu0 %5484
      %5486 = vrot.lane.b32.xlu0 %v5439, 28
      %v5487 = vpop.permute.xlu0 %5486
      %5488 = vrot.lane.b32.xlu0 %v5440, 28
      %v5489 = vpop.permute.xlu0 %5488
      %5490 = vrot.lane.b32.xlu0 %v5441, 28
      %v5491 = vpop.permute.xlu0 %5490
      %5492 = vrot.lane.b32.xlu0 %v5442, 28
      %v5493 = vpop.permute.xlu0 %5492
      %5494 = vrot.lane.b32.xlu0 %v5443, 28
      %v5495 = vpop.permute.xlu0 %5494
      %5496 = vrot.lane.b32.xlu0 %v5444, 28
      %v5497 = vpop.permute.xlu0 %5496
      %5498 = vrot.lane.b32.xlu0 %v5445, 28
      %v5499 = vpop.permute.xlu0 %5498
      %5500 = vrot.lane.b32.xlu0 %v5446, 28
      %v5501 = vpop.permute.xlu0 %5500
      %5502 = vrot.lane.b32.xlu0 %v5447, 28
      %v5503 = vpop.permute.xlu0 %5502
      %5504 = vrot.lane.b32.xlu0 %v5448, 28
      %v5505 = vpop.permute.xlu0 %5504
      %5506 = vrot.lane.b32.xlu0 %v5449, 28
      %v5507 = vpop.permute.xlu0 %5506
      %5508 = vrot.lane.b32.xlu0 %v5450, 28
      %v5509 = vpop.permute.xlu0 %5508
      %5510 = vrot.lane.b32.xlu0 %v5451, 28
      %v5511 = vpop.permute.xlu0 %5510
      %5512 = vrot.lane.b32.xlu0 %v5452, 28
      %v5513 = vpop.permute.xlu0 %5512
      %5514 = vrot.lane.b32.xlu0 %v5453, 28
      %v5515 = vpop.permute.xlu0 %5514
      %5516 = vrot.lane.b32.xlu0 %v5454, 28
      %v5517 = vpop.permute.xlu0 %5516
      %5518 = vrot.lane.b32.xlu0 %v5455, 28
      %v5519 = vpop.permute.xlu0 %5518
      %vm5520 = vcmask 228352
      %v5521 = vsel %vm5520, %v5457, %v5459
      %v5522 = vsel %vm5520, %v5461, %v5463
      %v5523 = vsel %vm5520, %v5465, %v5467
      %v5524 = vsel %vm5520, %v5469, %v5471
      %v5525 = vsel %vm5520, %v5473, %v5475
      %v5526 = vsel %vm5520, %v5477, %v5479
      %v5527 = vsel %vm5520, %v5481, %v5483
      %v5528 = vsel %vm5520, %v5485, %v5487
      %v5529 = vsel %vm5520, %v5489, %v5491
      %v5530 = vsel %vm5520, %v5493, %v5495
      %v5531 = vsel %vm5520, %v5497, %v5499
      %v5532 = vsel %vm5520, %v5501, %v5503
      %v5533 = vsel %vm5520, %v5505, %v5507
      %v5534 = vsel %vm5520, %v5509, %v5511
      %v5535 = vsel %vm5520, %v5513, %v5515
      %v5536 = vsel %vm5520, %v5517, %v5519
      %5553 = vst.msk [vmem:[%s216 + $0x14] sm:$0x1] %vm3529, %v5521
      %5554 = vst.msk [vmem:[%s216 + $0x3c] sm:$0x1] %vm3529, %v5522
      %5555 = vst.msk [vmem:[%s216 + $0x64] sm:$0x1] %vm3529, %v5523
      %5556 = vst.msk [vmem:[%s216 + $0x8c] sm:$0x1] %vm3529, %v5524
      %5557 = vst.msk [vmem:[%s216 + $0xb4] sm:$0x1] %vm3529, %v5525
      %5558 = vst.msk [vmem:[%s216 + $0xdc] sm:$0x1] %vm3529, %v5526
      %5559 = vst.msk [vmem:[%s216 + $0x104] sm:$0x1] %vm3529, %v5527
      %5560 = vst.msk [vmem:[%s216 + $0x12c] sm:$0x1] %vm3529, %v5528
      %5561 = vst.msk [vmem:[%s216 + $0x154] sm:$0x1] %vm3529, %v5529
      %5562 = vst.msk [vmem:[%s216 + $0x17c] sm:$0x1] %vm3529, %v5530
      %5563 = vst.msk [vmem:[%s216 + $0x1a4] sm:$0x1] %vm3529, %v5531
      %5564 = vst.msk [vmem:[%s216 + $0x1cc] sm:$0x1] %vm3529, %v5532
      %5565 = vst.msk [vmem:[%s216 + $0x1f4] sm:$0x1] %vm3529, %v5533
      %5566 = vst.msk [vmem:[%s216 + $0x21c] sm:$0x1] %vm3529, %v5534
      %5567 = vst.msk [vmem:[%s216 + $0x244] sm:$0x1] %vm3529, %v5535
      %5568 = vst.msk [vmem:[%s216 + $0x26c] sm:$0x1] %vm3529, %v5536
      %v5569 = vrot.slane %v3485, 1
      %v5570 = vrot.slane %v3485, 2
      %v5571 = vrot.slane %v3485, 3
      %v5572 = vrot.slane %v3485, 4
      %v5573 = vrot.slane %v3485, 5
      %v5574 = vrot.slane %v3485, 6
      %v5575 = vrot.slane %v3495, 1
      %v5576 = vrot.slane %v3495, 2
      %v5577 = vrot.slane %v3495, 3
      %v5578 = vrot.slane %v3495, 4
      %v5579 = vrot.slane %v3495, 5
      %v5580 = vrot.slane %v3495, 6
      %v5581 = vperm.slane %v3485, 0
      %v5582 = vperm.slane %v5569, 0
      %v5583 = vperm.slane %v5570, 0
      %v5584 = vperm.slane %v5571, 0
      %v5585 = vperm.slane %v5572, 0
      %v5586 = vperm.slane %v5573, 0
      %v5587 = vperm.slane %v5574, 0
      %v5588 = vperm.slane %v5392, 0
      %v5589 = vperm.slane %v3495, 0
      %v5590 = vperm.slane %v5575, 0
      %v5591 = vperm.slane %v5576, 0
      %v5592 = vperm.slane %v5577, 0
      %v5593 = vperm.slane %v5578, 0
      %v5594 = vperm.slane %v5579, 0
      %v5595 = vperm.slane %v5580, 0
      %v5596 = vperm.slane %v5393, 0
      %5597 = vrot.lane.b32.xlu0 %v5581, 119
      %v5598 = vpop.permute.xlu0 %5597
      %5599 = vrot.lane.b32.xlu0 %v5582, 119
      %v5600 = vpop.permute.xlu0 %5599
      %5601 = vrot.lane.b32.xlu0 %v5583, 119
      %v5602 = vpop.permute.xlu0 %5601
      %5603 = vrot.lane.b32.xlu0 %v5584, 119
      %v5604 = vpop.permute.xlu0 %5603
      %5605 = vrot.lane.b32.xlu0 %v5585, 119
      %v5606 = vpop.permute.xlu0 %5605
      %5607 = vrot.lane.b32.xlu0 %v5586, 119
      %v5608 = vpop.permute.xlu0 %5607
      %5609 = vrot.lane.b32.xlu0 %v5587, 119
      %v5610 = vpop.permute.xlu0 %5609
      %5611 = vrot.lane.b32.xlu0 %v5588, 119
      %v5612 = vpop.permute.xlu0 %5611
      %5613 = vrot.lane.b32.xlu0 %v5589, 119
      %v5614 = vpop.permute.xlu0 %5613
      %5615 = vrot.lane.b32.xlu0 %v5590, 119
      %v5616 = vpop.permute.xlu0 %5615
      %5617 = vrot.lane.b32.xlu0 %v5591, 119
      %v5618 = vpop.permute.xlu0 %5617
      %5619 = vrot.lane.b32.xlu0 %v5592, 119
      %v5620 = vpop.permute.xlu0 %5619
      %5621 = vrot.lane.b32.xlu0 %v5593, 119
      %v5622 = vpop.permute.xlu0 %5621
      %5623 = vrot.lane.b32.xlu0 %v5594, 119
      %v5624 = vpop.permute.xlu0 %5623
      %5625 = vrot.lane.b32.xlu0 %v5595, 119
      %v5626 = vpop.permute.xlu0 %5625
      %5627 = vrot.lane.b32.xlu0 %v5596, 119
      %v5628 = vpop.permute.xlu0 %5627
      %5645 = vst.msk [vmem:[%s216 + $0x15] sm:$0x1] %vm3529, %v5598
      %5646 = vst.msk [vmem:[%s216 + $0x3d] sm:$0x1] %vm3529, %v5600
      %5647 = vst.msk [vmem:[%s216 + $0x65] sm:$0x1] %vm3529, %v5602
      %5648 = vst.msk [vmem:[%s216 + $0x8d] sm:$0x1] %vm3529, %v5604
      %5649 = vst.msk [vmem:[%s216 + $0xb5] sm:$0x1] %vm3529, %v5606
      %5650 = vst.msk [vmem:[%s216 + $0xdd] sm:$0x1] %vm3529, %v5608
      %5651 = vst.msk [vmem:[%s216 + $0x105] sm:$0x1] %vm3529, %v5610
      %5652 = vst.msk [vmem:[%s216 + $0x12d] sm:$0x1] %vm3529, %v5612
      %5653 = vst.msk [vmem:[%s216 + $0x155] sm:$0x1] %vm3529, %v5614
      %5654 = vst.msk [vmem:[%s216 + $0x17d] sm:$0x1] %vm3529, %v5616
      %5655 = vst.msk [vmem:[%s216 + $0x1a5] sm:$0x1] %vm3529, %v5618
      %5656 = vst.msk [vmem:[%s216 + $0x1cd] sm:$0x1] %vm3529, %v5620
      %5657 = vst.msk [vmem:[%s216 + $0x1f5] sm:$0x1] %vm3529, %v5622
      %5658 = vst.msk [vmem:[%s216 + $0x21d] sm:$0x1] %vm3529, %v5624
      %5659 = vst.msk [vmem:[%s216 + $0x245] sm:$0x1] %vm3529, %v5626
      %5660 = vst.msk [vmem:[%s216 + $0x26d] sm:$0x1] %vm3529, %v5628
      %5661 = vrot.lane.b32.xlu0 %v5581, 82
      %v5662 = vpop.permute.xlu0 %5661
      %5663 = vrot.lane.b32.xlu0 %v5582, 82
      %v5664 = vpop.permute.xlu0 %5663
      %5665 = vrot.lane.b32.xlu0 %v5583, 82
      %v5666 = vpop.permute.xlu0 %5665
      %5667 = vrot.lane.b32.xlu0 %v5584, 82
      %v5668 = vpop.permute.xlu0 %5667
      %5669 = vrot.lane.b32.xlu0 %v5585, 82
      %v5670 = vpop.permute.xlu0 %5669
      %5671 = vrot.lane.b32.xlu0 %v5586, 82
      %v5672 = vpop.permute.xlu0 %5671
      %5673 = vrot.lane.b32.xlu0 %v5587, 82
      %v5674 = vpop.permute.xlu0 %5673
      %5675 = vrot.lane.b32.xlu0 %v5588, 82
      %v5676 = vpop.permute.xlu0 %5675
      %5677 = vrot.lane.b32.xlu0 %v5589, 82
      %v5678 = vpop.permute.xlu0 %5677
      %5679 = vrot.lane.b32.xlu0 %v5590, 82
      %v5680 = vpop.permute.xlu0 %5679
      %5681 = vrot.lane.b32.xlu0 %v5591, 82
      %v5682 = vpop.permute.xlu0 %5681
      %5683 = vrot.lane.b32.xlu0 %v5592, 82
      %v5684 = vpop.permute.xlu0 %5683
      %5685 = vrot.lane.b32.xlu0 %v5593, 82
      %v5686 = vpop.permute.xlu0 %5685
      %5687 = vrot.lane.b32.xlu0 %v5594, 82
      %v5688 = vpop.permute.xlu0 %5687
      %5689 = vrot.lane.b32.xlu0 %v5595, 82
      %v5690 = vpop.permute.xlu0 %5689
      %5691 = vrot.lane.b32.xlu0 %v5596, 82
      %v5692 = vpop.permute.xlu0 %5691
      %5709 = vst.msk [vmem:[%s216 + $0x16] sm:$0x1] %vm3529, %v5662
      %5710 = vst.msk [vmem:[%s216 + $0x3e] sm:$0x1] %vm3529, %v5664
      %5711 = vst.msk [vmem:[%s216 + $0x66] sm:$0x1] %vm3529, %v5666
      %5712 = vst.msk [vmem:[%s216 + $0x8e] sm:$0x1] %vm3529, %v5668
      %5713 = vst.msk [vmem:[%s216 + $0xb6] sm:$0x1] %vm3529, %v5670
      %5714 = vst.msk [vmem:[%s216 + $0xde] sm:$0x1] %vm3529, %v5672
      %5715 = vst.msk [vmem:[%s216 + $0x106] sm:$0x1] %vm3529, %v5674
      %5716 = vst.msk [vmem:[%s216 + $0x12e] sm:$0x1] %vm3529, %v5676
      %5717 = vst.msk [vmem:[%s216 + $0x156] sm:$0x1] %vm3529, %v5678
      %5718 = vst.msk [vmem:[%s216 + $0x17e] sm:$0x1] %vm3529, %v5680
      %5719 = vst.msk [vmem:[%s216 + $0x1a6] sm:$0x1] %vm3529, %v5682
      %5720 = vst.msk [vmem:[%s216 + $0x1ce] sm:$0x1] %vm3529, %v5684
      %5721 = vst.msk [vmem:[%s216 + $0x1f6] sm:$0x1] %vm3529, %v5686
      %5722 = vst.msk [vmem:[%s216 + $0x21e] sm:$0x1] %vm3529, %v5688
      %5723 = vst.msk [vmem:[%s216 + $0x246] sm:$0x1] %vm3529, %v5690
      %5724 = vst.msk [vmem:[%s216 + $0x26e] sm:$0x1] %vm3529, %v5692
      %5725 = vrot.lane.b32.xlu0 %v5581, 45
      %v5726 = vpop.permute.xlu0 %5725
      %5727 = vrot.lane.b32.xlu0 %v5582, 45
      %v5728 = vpop.permute.xlu0 %5727
      %5729 = vrot.lane.b32.xlu0 %v5583, 45
      %v5730 = vpop.permute.xlu0 %5729
      %5731 = vrot.lane.b32.xlu0 %v5584, 45
      %v5732 = vpop.permute.xlu0 %5731
      %5733 = vrot.lane.b32.xlu0 %v5585, 45
      %v5734 = vpop.permute.xlu0 %5733
      %5735 = vrot.lane.b32.xlu0 %v5586, 45
      %v5736 = vpop.permute.xlu0 %5735
      %5737 = vrot.lane.b32.xlu0 %v5587, 45
      %v5738 = vpop.permute.xlu0 %5737
      %5739 = vrot.lane.b32.xlu0 %v5588, 45
      %v5740 = vpop.permute.xlu0 %5739
      %5741 = vrot.lane.b32.xlu0 %v5589, 45
      %v5742 = vpop.permute.xlu0 %5741
      %5743 = vrot.lane.b32.xlu0 %v5590, 45
      %v5744 = vpop.permute.xlu0 %5743
      %5745 = vrot.lane.b32.xlu0 %v5591, 45
      %v5746 = vpop.permute.xlu0 %5745
      %5747 = vrot.lane.b32.xlu0 %v5592, 45
      %v5748 = vpop.permute.xlu0 %5747
      %5749 = vrot.lane.b32.xlu0 %v5593, 45
      %v5750 = vpop.permute.xlu0 %5749
      %5751 = vrot.lane.b32.xlu0 %v5594, 45
      %v5752 = vpop.permute.xlu0 %5751
      %5753 = vrot.lane.b32.xlu0 %v5595, 45
      %v5754 = vpop.permute.xlu0 %5753
      %5755 = vrot.lane.b32.xlu0 %v5596, 45
      %v5756 = vpop.permute.xlu0 %5755
      %5773 = vst.msk [vmem:[%s216 + $0x17] sm:$0x1] %vm3529, %v5726
      %5774 = vst.msk [vmem:[%s216 + $0x3f] sm:$0x1] %vm3529, %v5728
      %5775 = vst.msk [vmem:[%s216 + $0x67] sm:$0x1] %vm3529, %v5730
      %5776 = vst.msk [vmem:[%s216 + $0x8f] sm:$0x1] %vm3529, %v5732
      %5777 = vst.msk [vmem:[%s216 + $0xb7] sm:$0x1] %vm3529, %v5734
      %5778 = vst.msk [vmem:[%s216 + $0xdf] sm:$0x1] %vm3529, %v5736
      %5779 = vst.msk [vmem:[%s216 + $0x107] sm:$0x1] %vm3529, %v5738
      %5780 = vst.msk [vmem:[%s216 + $0x12f] sm:$0x1] %vm3529, %v5740
      %5781 = vst.msk [vmem:[%s216 + $0x157] sm:$0x1] %vm3529, %v5742
      %5782 = vst.msk [vmem:[%s216 + $0x17f] sm:$0x1] %vm3529, %v5744
      %5783 = vst.msk [vmem:[%s216 + $0x1a7] sm:$0x1] %vm3529, %v5746
      %5784 = vst.msk [vmem:[%s216 + $0x1cf] sm:$0x1] %vm3529, %v5748
      %5785 = vst.msk [vmem:[%s216 + $0x1f7] sm:$0x1] %vm3529, %v5750
      %5786 = vst.msk [vmem:[%s216 + $0x21f] sm:$0x1] %vm3529, %v5752
      %5787 = vst.msk [vmem:[%s216 + $0x247] sm:$0x1] %vm3529, %v5754
      %5788 = vst.msk [vmem:[%s216 + $0x26f] sm:$0x1] %vm3529, %v5756
      %v5791 = vrot.slane %v3486, 7
      %v5792 = vrot.slane %v3496, 7
      %v5793 = vsel %vm3694, %v3485, %v5791
      %v5794 = vsel %vm3696, %v3485, %v5791
      %v5795 = vrot.slane %v5794, 1
      %v5796 = vsel %vm3699, %v3485, %v5791
      %v5797 = vrot.slane %v5796, 2
      %v5798 = vsel %vm3702, %v3485, %v5791
      %v5799 = vrot.slane %v5798, 3
      %v5800 = vsel %vm3705, %v3485, %v5791
      %v5801 = vrot.slane %v5800, 4
      %v5802 = vsel %vm3708, %v3485, %v5791
      %v5803 = vrot.slane %v5802, 5
      %v5804 = vsel %vm3711, %v3485, %v5791
      %v5805 = vrot.slane %v5804, 6
      %v5806 = vsel %vm3714, %v5791, %v3485
      %v5807 = vrot.slane %v5806, 7
      %v5808 = vsel %vm3694, %v3495, %v5792
      %v5809 = vsel %vm3696, %v3495, %v5792
      %v5810 = vrot.slane %v5809, 1
      %v5811 = vsel %vm3699, %v3495, %v5792
      %v5812 = vrot.slane %v5811, 2
      %v5813 = vsel %vm3702, %v3495, %v5792
      %v5814 = vrot.slane %v5813, 3
      %v5815 = vsel %vm3705, %v3495, %v5792
      %v5816 = vrot.slane %v5815, 4
      %v5817 = vsel %vm3708, %v3495, %v5792
      %v5818 = vrot.slane %v5817, 5
      %v5819 = vsel %vm3711, %v3495, %v5792
      %v5820 = vrot.slane %v5819, 6
      %v5821 = vsel %vm3714, %v5792, %v3495
      %v5822 = vrot.slane %v5821, 7
      %v5823 = vperm.slane %v5793, 0
      %v5824 = vperm.slane %v5793, 1
      %v5825 = vperm.slane %v5795, 0
      %v5826 = vperm.slane %v5795, 1
      %v5827 = vperm.slane %v5797, 0
      %v5828 = vperm.slane %v5797, 1
      %v5829 = vperm.slane %v5799, 0
      %v5830 = vperm.slane %v5799, 1
      %v5831 = vperm.slane %v5801, 0
      %v5832 = vperm.slane %v5801, 1
      %v5833 = vperm.slane %v5803, 0
      %v5834 = vperm.slane %v5803, 1
      %v5835 = vperm.slane %v5805, 0
      %v5836 = vperm.slane %v5805, 1
      %v5837 = vperm.slane %v5807, 0
      %v5838 = vperm.slane %v5807, 1
      %v5839 = vperm.slane %v5808, 0
      %v5840 = vperm.slane %v5808, 1
      %v5841 = vperm.slane %v5810, 0
      %v5842 = vperm.slane %v5810, 1
      %v5843 = vperm.slane %v5812, 0
      %v5844 = vperm.slane %v5812, 1
      %v5845 = vperm.slane %v5814, 0
      %v5846 = vperm.slane %v5814, 1
      %v5847 = vperm.slane %v5816, 0
      %v5848 = vperm.slane %v5816, 1
      %v5849 = vperm.slane %v5818, 0
      %v5850 = vperm.slane %v5818, 1
      %v5851 = vperm.slane %v5820, 0
      %v5852 = vperm.slane %v5820, 1
      %v5853 = vperm.slane %v5822, 0
      %v5854 = vperm.slane %v5822, 1
      %5855 = vrot.lane.b32.xlu0 %v5823, 8
      %v5856 = vpop.permute.xlu0 %5855
      %5857 = vrot.lane.b32.xlu0 %v5824, 8
      %v5858 = vpop.permute.xlu0 %5857
      %5859 = vrot.lane.b32.xlu0 %v5825, 8
      %v5860 = vpop.permute.xlu0 %5859
      %5861 = vrot.lane.b32.xlu0 %v5826, 8
      %v5862 = vpop.permute.xlu0 %5861
      %5863 = vrot.lane.b32.xlu0 %v5827, 8
      %v5864 = vpop.permute.xlu0 %5863
      %5865 = vrot.lane.b32.xlu0 %v5828, 8
      %v5866 = vpop.permute.xlu0 %5865
      %5867 = vrot.lane.b32.xlu0 %v5829, 8
      %v5868 = vpop.permute.xlu0 %5867
      %5869 = vrot.lane.b32.xlu0 %v5830, 8
      %v5870 = vpop.permute.xlu0 %5869
      %5871 = vrot.lane.b32.xlu0 %v5831, 8
      %v5872 = vpop.permute.xlu0 %5871
      %5873 = vrot.lane.b32.xlu0 %v5832, 8
      %v5874 = vpop.permute.xlu0 %5873
      %5875 = vrot.lane.b32.xlu0 %v5833, 8
      %v5876 = vpop.permute.xlu0 %5875
      %5877 = vrot.lane.b32.xlu0 %v5834, 8
      %v5878 = vpop.permute.xlu0 %5877
      %5879 = vrot.lane.b32.xlu0 %v5835, 8
      %v5880 = vpop.permute.xlu0 %5879
      %5881 = vrot.lane.b32.xlu0 %v5836, 8
      %v5882 = vpop.permute.xlu0 %5881
      %5883 = vrot.lane.b32.xlu0 %v5837, 8
      %v5884 = vpop.permute.xlu0 %5883
      %5885 = vrot.lane.b32.xlu0 %v5838, 8
      %v5886 = vpop.permute.xlu0 %5885
      %5887 = vrot.lane.b32.xlu0 %v5839, 8
      %v5888 = vpop.permute.xlu0 %5887
      %5889 = vrot.lane.b32.xlu0 %v5840, 8
      %v5890 = vpop.permute.xlu0 %5889
      %5891 = vrot.lane.b32.xlu0 %v5841, 8
      %v5892 = vpop.permute.xlu0 %5891
      %5893 = vrot.lane.b32.xlu0 %v5842, 8
      %v5894 = vpop.permute.xlu0 %5893
      %5895 = vrot.lane.b32.xlu0 %v5843, 8
      %v5896 = vpop.permute.xlu0 %5895
      %5897 = vrot.lane.b32.xlu0 %v5844, 8
      %v5898 = vpop.permute.xlu0 %5897
      %5899 = vrot.lane.b32.xlu0 %v5845, 8
      %v5900 = vpop.permute.xlu0 %5899
      %5901 = vrot.lane.b32.xlu0 %v5846, 8
      %v5902 = vpop.permute.xlu0 %5901
      %5903 = vrot.lane.b32.xlu0 %v5847, 8
      %v5904 = vpop.permute.xlu0 %5903
      %5905 = vrot.lane.b32.xlu0 %v5848, 8
      %v5906 = vpop.permute.xlu0 %5905
      %5907 = vrot.lane.b32.xlu0 %v5849, 8
      %v5908 = vpop.permute.xlu0 %5907
      %5909 = vrot.lane.b32.xlu0 %v5850, 8
      %v5910 = vpop.permute.xlu0 %5909
      %5911 = vrot.lane.b32.xlu0 %v5851, 8
      %v5912 = vpop.permute.xlu0 %5911
      %5913 = vrot.lane.b32.xlu0 %v5852, 8
      %v5914 = vpop.permute.xlu0 %5913
      %5915 = vrot.lane.b32.xlu0 %v5853, 8
      %v5916 = vpop.permute.xlu0 %5915
      %5917 = vrot.lane.b32.xlu0 %v5854, 8
      %v5918 = vpop.permute.xlu0 %5917
      %vm5919 = vcmask 64512
      %v5920 = vsel %vm5919, %v5856, %v5858
      %v5921 = vsel %vm5919, %v5860, %v5862
      %v5922 = vsel %vm5919, %v5864, %v5866
      %v5923 = vsel %vm5919, %v5868, %v5870
      %v5924 = vsel %vm5919, %v5872, %v5874
      %v5925 = vsel %vm5919, %v5876, %v5878
      %v5926 = vsel %vm5919, %v5880, %v5882
      %v5927 = vsel %vm5919, %v5884, %v5886
      %v5928 = vsel %vm5919, %v5888, %v5890
      %v5929 = vsel %vm5919, %v5892, %v5894
      %v5930 = vsel %vm5919, %v5896, %v5898
      %v5931 = vsel %vm5919, %v5900, %v5902
      %v5932 = vsel %vm5919, %v5904, %v5906
      %v5933 = vsel %vm5919, %v5908, %v5910
      %v5934 = vsel %vm5919, %v5912, %v5914
      %v5935 = vsel %vm5919, %v5916, %v5918
      %5952 = vst.msk [vmem:[%s216 + $0x18] sm:$0x1] %vm3529, %v5920
      %5953 = vst.msk [vmem:[%s216 + $0x40] sm:$0x1] %vm3529, %v5921
      %5954 = vst.msk [vmem:[%s216 + $0x68] sm:$0x1] %vm3529, %v5922
      %5955 = vst.msk [vmem:[%s216 + $0x90] sm:$0x1] %vm3529, %v5923
      %5956 = vst.msk [vmem:[%s216 + $0xb8] sm:$0x1] %vm3529, %v5924
      %5957 = vst.msk [vmem:[%s216 + $0xe0] sm:$0x1] %vm3529, %v5925
      %5958 = vst.msk [vmem:[%s216 + $0x108] sm:$0x1] %vm3529, %v5926
      %5959 = vst.msk [vmem:[%s216 + $0x130] sm:$0x1] %vm3529, %v5927
      %5960 = vst.msk [vmem:[%s216 + $0x158] sm:$0x1] %vm3529, %v5928
      %5961 = vst.msk [vmem:[%s216 + $0x180] sm:$0x1] %vm3529, %v5929
      %5962 = vst.msk [vmem:[%s216 + $0x1a8] sm:$0x1] %vm3529, %v5930
      %5963 = vst.msk [vmem:[%s216 + $0x1d0] sm:$0x1] %vm3529, %v5931
      %5964 = vst.msk [vmem:[%s216 + $0x1f8] sm:$0x1] %vm3529, %v5932
      %5965 = vst.msk [vmem:[%s216 + $0x220] sm:$0x1] %vm3529, %v5933
      %5966 = vst.msk [vmem:[%s216 + $0x248] sm:$0x1] %vm3529, %v5934
      %5967 = vst.msk [vmem:[%s216 + $0x270] sm:$0x1] %vm3529, %v5935
      %v5968 = vrot.slane %v3486, 1
      %v5969 = vrot.slane %v3486, 2
      %v5970 = vrot.slane %v3486, 3
      %v5971 = vrot.slane %v3486, 4
      %v5972 = vrot.slane %v3486, 5
      %v5973 = vrot.slane %v3486, 6
      %v5974 = vrot.slane %v3496, 1
      %v5975 = vrot.slane %v3496, 2
      %v5976 = vrot.slane %v3496, 3
      %v5977 = vrot.slane %v3496, 4
      %v5978 = vrot.slane %v3496, 5
      %v5979 = vrot.slane %v3496, 6
      %v5980 = vperm.slane %v3486, 0
      %v5981 = vperm.slane %v5968, 0
      %v5982 = vperm.slane %v5969, 0
      %v5983 = vperm.slane %v5970, 0
      %v5984 = vperm.slane %v5971, 0
      %v5985 = vperm.slane %v5972, 0
      %v5986 = vperm.slane %v5973, 0
      %v5987 = vperm.slane %v5791, 0
      %v5988 = vperm.slane %v3496, 0
      %v5989 = vperm.slane %v5974, 0
      %v5990 = vperm.slane %v5975, 0
      %v5991 = vperm.slane %v5976, 0
      %v5992 = vperm.slane %v5977, 0
      %v5993 = vperm.slane %v5978, 0
      %v5994 = vperm.slane %v5979, 0
      %v5995 = vperm.slane %v5792, 0
      %5996 = vrot.lane.b32.xlu0 %v5980, 99
      %v5997 = vpop.permute.xlu0 %5996
      %5998 = vrot.lane.b32.xlu0 %v5981, 99
      %v5999 = vpop.permute.xlu0 %5998
      %6000 = vrot.lane.b32.xlu0 %v5982, 99
      %v6001 = vpop.permute.xlu0 %6000
      %6002 = vrot.lane.b32.xlu0 %v5983, 99
      %v6003 = vpop.permute.xlu0 %6002
      %6004 = vrot.lane.b32.xlu0 %v5984, 99
      %v6005 = vpop.permute.xlu0 %6004
      %6006 = vrot.lane.b32.xlu0 %v5985, 99
      %v6007 = vpop.permute.xlu0 %6006
      %6008 = vrot.lane.b32.xlu0 %v5986, 99
      %v6009 = vpop.permute.xlu0 %6008
      %6010 = vrot.lane.b32.xlu0 %v5987, 99
      %v6011 = vpop.permute.xlu0 %6010
      %6012 = vrot.lane.b32.xlu0 %v5988, 99
      %v6013 = vpop.permute.xlu0 %6012
      %6014 = vrot.lane.b32.xlu0 %v5989, 99
      %v6015 = vpop.permute.xlu0 %6014
      %6016 = vrot.lane.b32.xlu0 %v5990, 99
      %v6017 = vpop.permute.xlu0 %6016
      %6018 = vrot.lane.b32.xlu0 %v5991, 99
      %v6019 = vpop.permute.xlu0 %6018
      %6020 = vrot.lane.b32.xlu0 %v5992, 99
      %v6021 = vpop.permute.xlu0 %6020
      %6022 = vrot.lane.b32.xlu0 %v5993, 99
      %v6023 = vpop.permute.xlu0 %6022
      %6024 = vrot.lane.b32.xlu0 %v5994, 99
      %v6025 = vpop.permute.xlu0 %6024
      %6026 = vrot.lane.b32.xlu0 %v5995, 99
      %v6027 = vpop.permute.xlu0 %6026
      %6044 = vst.msk [vmem:[%s216 + $0x19] sm:$0x1] %vm3529, %v5997
      %6045 = vst.msk [vmem:[%s216 + $0x41] sm:$0x1] %vm3529, %v5999
      %6046 = vst.msk [vmem:[%s216 + $0x69] sm:$0x1] %vm3529, %v6001
      %6047 = vst.msk [vmem:[%s216 + $0x91] sm:$0x1] %vm3529, %v6003
      %6048 = vst.msk [vmem:[%s216 + $0xb9] sm:$0x1] %vm3529, %v6005
      %6049 = vst.msk [vmem:[%s216 + $0xe1] sm:$0x1] %vm3529, %v6007
      %6050 = vst.msk [vmem:[%s216 + $0x109] sm:$0x1] %vm3529, %v6009
      %6051 = vst.msk [vmem:[%s216 + $0x131] sm:$0x1] %vm3529, %v6011
      %6052 = vst.msk [vmem:[%s216 + $0x159] sm:$0x1] %vm3529, %v6013
      %6053 = vst.msk [vmem:[%s216 + $0x181] sm:$0x1] %vm3529, %v6015
      %6054 = vst.msk [vmem:[%s216 + $0x1a9] sm:$0x1] %vm3529, %v6017
      %6055 = vst.msk [vmem:[%s216 + $0x1d1] sm:$0x1] %vm3529, %v6019
      %6056 = vst.msk [vmem:[%s216 + $0x1f9] sm:$0x1] %vm3529, %v6021
      %6057 = vst.msk [vmem:[%s216 + $0x221] sm:$0x1] %vm3529, %v6023
      %6058 = vst.msk [vmem:[%s216 + $0x249] sm:$0x1] %vm3529, %v6025
      %6059 = vst.msk [vmem:[%s216 + $0x271] sm:$0x1] %vm3529, %v6027
      %6060 = vrot.lane.b32.xlu0 %v5980, 62
      %v6061 = vpop.permute.xlu0 %6060
      %6062 = vrot.lane.b32.xlu0 %v5981, 62
      %v6063 = vpop.permute.xlu0 %6062
      %6064 = vrot.lane.b32.xlu0 %v5982, 62
      %v6065 = vpop.permute.xlu0 %6064
      %6066 = vrot.lane.b32.xlu0 %v5983, 62
      %v6067 = vpop.permute.xlu0 %6066
      %6068 = vrot.lane.b32.xlu0 %v5984, 62
      %v6069 = vpop.permute.xlu0 %6068
      %6070 = vrot.lane.b32.xlu0 %v5985, 62
      %v6071 = vpop.permute.xlu0 %6070
      %6072 = vrot.lane.b32.xlu0 %v5986, 62
      %v6073 = vpop.permute.xlu0 %6072
      %6074 = vrot.lane.b32.xlu0 %v5987, 62
      %v6075 = vpop.permute.xlu0 %6074
      %6076 = vrot.lane.b32.xlu0 %v5988, 62
      %v6077 = vpop.permute.xlu0 %6076
      %6078 = vrot.lane.b32.xlu0 %v5989, 62
      %v6079 = vpop.permute.xlu0 %6078
      %6080 = vrot.lane.b32.xlu0 %v5990, 62
      %v6081 = vpop.permute.xlu0 %6080
      %6082 = vrot.lane.b32.xlu0 %v5991, 62
      %v6083 = vpop.permute.xlu0 %6082
      %6084 = vrot.lane.b32.xlu0 %v5992, 62
      %v6085 = vpop.permute.xlu0 %6084
      %6086 = vrot.lane.b32.xlu0 %v5993, 62
      %v6087 = vpop.permute.xlu0 %6086
      %6088 = vrot.lane.b32.xlu0 %v5994, 62
      %v6089 = vpop.permute.xlu0 %6088
      %6090 = vrot.lane.b32.xlu0 %v5995, 62
      %v6091 = vpop.permute.xlu0 %6090
      %6108 = vst.msk [vmem:[%s216 + $0x1a] sm:$0x1] %vm3529, %v6061
      %6109 = vst.msk [vmem:[%s216 + $0x42] sm:$0x1] %vm3529, %v6063
      %6110 = vst.msk [vmem:[%s216 + $0x6a] sm:$0x1] %vm3529, %v6065
      %6111 = vst.msk [vmem:[%s216 + $0x92] sm:$0x1] %vm3529, %v6067
      %6112 = vst.msk [vmem:[%s216 + $0xba] sm:$0x1] %vm3529, %v6069
      %6113 = vst.msk [vmem:[%s216 + $0xe2] sm:$0x1] %vm3529, %v6071
      %6114 = vst.msk [vmem:[%s216 + $0x10a] sm:$0x1] %vm3529, %v6073
      %6115 = vst.msk [vmem:[%s216 + $0x132] sm:$0x1] %vm3529, %v6075
      %6116 = vst.msk [vmem:[%s216 + $0x15a] sm:$0x1] %vm3529, %v6077
      %6117 = vst.msk [vmem:[%s216 + $0x182] sm:$0x1] %vm3529, %v6079
      %6118 = vst.msk [vmem:[%s216 + $0x1aa] sm:$0x1] %vm3529, %v6081
      %6119 = vst.msk [vmem:[%s216 + $0x1d2] sm:$0x1] %vm3529, %v6083
      %6120 = vst.msk [vmem:[%s216 + $0x1fa] sm:$0x1] %vm3529, %v6085
      %6121 = vst.msk [vmem:[%s216 + $0x222] sm:$0x1] %vm3529, %v6087
      %6122 = vst.msk [vmem:[%s216 + $0x24a] sm:$0x1] %vm3529, %v6089
      %6123 = vst.msk [vmem:[%s216 + $0x272] sm:$0x1] %vm3529, %v6091
      %v6126 = vrot.slane %v3487, 7
      %v6127 = vrot.slane %v3497, 7
      %v6128 = vsel %vm3694, %v3486, %v6126
      %v6129 = vsel %vm3696, %v3486, %v6126
      %v6130 = vrot.slane %v6129, 1
      %v6131 = vsel %vm3699, %v3486, %v6126
      %v6132 = vrot.slane %v6131, 2
      %v6133 = vsel %vm3702, %v3486, %v6126
      %v6134 = vrot.slane %v6133, 3
      %v6135 = vsel %vm3705, %v3486, %v6126
      %v6136 = vrot.slane %v6135, 4
      %v6137 = vsel %vm3708, %v3486, %v6126
      %v6138 = vrot.slane %v6137, 5
      %v6139 = vsel %vm3711, %v3486, %v6126
      %v6140 = vrot.slane %v6139, 6
      %v6141 = vsel %vm3714, %v6126, %v3486
      %v6142 = vrot.slane %v6141, 7
      %v6143 = vsel %vm3694, %v3496, %v6127
      %v6144 = vsel %vm3696, %v3496, %v6127
      %v6145 = vrot.slane %v6144, 1
      %v6146 = vsel %vm3699, %v3496, %v6127
      %v6147 = vrot.slane %v6146, 2
      %v6148 = vsel %vm3702, %v3496, %v6127
      %v6149 = vrot.slane %v6148, 3
      %v6150 = vsel %vm3705, %v3496, %v6127
      %v6151 = vrot.slane %v6150, 4
      %v6152 = vsel %vm3708, %v3496, %v6127
      %v6153 = vrot.slane %v6152, 5
      %v6154 = vsel %vm3711, %v3496, %v6127
      %v6155 = vrot.slane %v6154, 6
      %v6156 = vsel %vm3714, %v6127, %v3496
      %v6157 = vrot.slane %v6156, 7
      %v6158 = vperm.slane %v6128, 0
      %v6159 = vperm.slane %v6128, 1
      %v6160 = vperm.slane %v6130, 0
      %v6161 = vperm.slane %v6130, 1
      %v6162 = vperm.slane %v6132, 0
      %v6163 = vperm.slane %v6132, 1
      %v6164 = vperm.slane %v6134, 0
      %v6165 = vperm.slane %v6134, 1
      %v6166 = vperm.slane %v6136, 0
      %v6167 = vperm.slane %v6136, 1
      %v6168 = vperm.slane %v6138, 0
      %v6169 = vperm.slane %v6138, 1
      %v6170 = vperm.slane %v6140, 0
      %v6171 = vperm.slane %v6140, 1
      %v6172 = vperm.slane %v6142, 0
      %v6173 = vperm.slane %v6142, 1
      %v6174 = vperm.slane %v6143, 0
      %v6175 = vperm.slane %v6143, 1
      %v6176 = vperm.slane %v6145, 0
      %v6177 = vperm.slane %v6145, 1
      %v6178 = vperm.slane %v6147, 0
      %v6179 = vperm.slane %v6147, 1
      %v6180 = vperm.slane %v6149, 0
      %v6181 = vperm.slane %v6149, 1
      %v6182 = vperm.slane %v6151, 0
      %v6183 = vperm.slane %v6151, 1
      %v6184 = vperm.slane %v6153, 0
      %v6185 = vperm.slane %v6153, 1
      %v6186 = vperm.slane %v6155, 0
      %v6187 = vperm.slane %v6155, 1
      %v6188 = vperm.slane %v6157, 0
      %v6189 = vperm.slane %v6157, 1
      %6190 = vrot.lane.b32.xlu0 %v6158, 25
      %v6191 = vpop.permute.xlu0 %6190
      %6192 = vrot.lane.b32.xlu0 %v6159, 25
      %v6193 = vpop.permute.xlu0 %6192
      %6194 = vrot.lane.b32.xlu0 %v6160, 25
      %v6195 = vpop.permute.xlu0 %6194
      %6196 = vrot.lane.b32.xlu0 %v6161, 25
      %v6197 = vpop.permute.xlu0 %6196
      %6198 = vrot.lane.b32.xlu0 %v6162, 25
      %v6199 = vpop.permute.xlu0 %6198
      %6200 = vrot.lane.b32.xlu0 %v6163, 25
      %v6201 = vpop.permute.xlu0 %6200
      %6202 = vrot.lane.b32.xlu0 %v6164, 25
      %v6203 = vpop.permute.xlu0 %6202
      %6204 = vrot.lane.b32.xlu0 %v6165, 25
      %v6205 = vpop.permute.xlu0 %6204
      %6206 = vrot.lane.b32.xlu0 %v6166, 25
      %v6207 = vpop.permute.xlu0 %6206
      %6208 = vrot.lane.b32.xlu0 %v6167, 25
      %v6209 = vpop.permute.xlu0 %6208
      %6210 = vrot.lane.b32.xlu0 %v6168, 25
      %v6211 = vpop.permute.xlu0 %6210
      %6212 = vrot.lane.b32.xlu0 %v6169, 25
      %v6213 = vpop.permute.xlu0 %6212
      %6214 = vrot.lane.b32.xlu0 %v6170, 25
      %v6215 = vpop.permute.xlu0 %6214
      %6216 = vrot.lane.b32.xlu0 %v6171, 25
      %v6217 = vpop.permute.xlu0 %6216
      %6218 = vrot.lane.b32.xlu0 %v6172, 25
      %v6219 = vpop.permute.xlu0 %6218
      %6220 = vrot.lane.b32.xlu0 %v6173, 25
      %v6221 = vpop.permute.xlu0 %6220
      %6222 = vrot.lane.b32.xlu0 %v6174, 25
      %v6223 = vpop.permute.xlu0 %6222
      %6224 = vrot.lane.b32.xlu0 %v6175, 25
      %v6225 = vpop.permute.xlu0 %6224
      %6226 = vrot.lane.b32.xlu0 %v6176, 25
      %v6227 = vpop.permute.xlu0 %6226
      %6228 = vrot.lane.b32.xlu0 %v6177, 25
      %v6229 = vpop.permute.xlu0 %6228
      %6230 = vrot.lane.b32.xlu0 %v6178, 25
      %v6231 = vpop.permute.xlu0 %6230
      %6232 = vrot.lane.b32.xlu0 %v6179, 25
      %v6233 = vpop.permute.xlu0 %6232
      %6234 = vrot.lane.b32.xlu0 %v6180, 25
      %v6235 = vpop.permute.xlu0 %6234
      %6236 = vrot.lane.b32.xlu0 %v6181, 25
      %v6237 = vpop.permute.xlu0 %6236
      %6238 = vrot.lane.b32.xlu0 %v6182, 25
      %v6239 = vpop.permute.xlu0 %6238
      %6240 = vrot.lane.b32.xlu0 %v6183, 25
      %v6241 = vpop.permute.xlu0 %6240
      %6242 = vrot.lane.b32.xlu0 %v6184, 25
      %v6243 = vpop.permute.xlu0 %6242
      %6244 = vrot.lane.b32.xlu0 %v6185, 25
      %v6245 = vpop.permute.xlu0 %6244
      %6246 = vrot.lane.b32.xlu0 %v6186, 25
      %v6247 = vpop.permute.xlu0 %6246
      %6248 = vrot.lane.b32.xlu0 %v6187, 25
      %v6249 = vpop.permute.xlu0 %6248
      %6250 = vrot.lane.b32.xlu0 %v6188, 25
      %v6251 = vpop.permute.xlu0 %6250
      %6252 = vrot.lane.b32.xlu0 %v6189, 25
      %v6253 = vpop.permute.xlu0 %6252
      %vm6254 = vcmask 203776
      %v6255 = vsel %vm6254, %v6191, %v6193
      %v6256 = vsel %vm6254, %v6195, %v6197
      %v6257 = vsel %vm6254, %v6199, %v6201
      %v6258 = vsel %vm6254, %v6203, %v6205
      %v6259 = vsel %vm6254, %v6207, %v6209
      %v6260 = vsel %vm6254, %v6211, %v6213
      %v6261 = vsel %vm6254, %v6215, %v6217
      %v6262 = vsel %vm6254, %v6219, %v6221
      %v6263 = vsel %vm6254, %v6223, %v6225
      %v6264 = vsel %vm6254, %v6227, %v6229
      %v6265 = vsel %vm6254, %v6231, %v6233
      %v6266 = vsel %vm6254, %v6235, %v6237
      %v6267 = vsel %vm6254, %v6239, %v6241
      %v6268 = vsel %vm6254, %v6243, %v6245
      %v6269 = vsel %vm6254, %v6247, %v6249
      %v6270 = vsel %vm6254, %v6251, %v6253
      %6287 = vst.msk [vmem:[%s216 + $0x1b] sm:$0x1] %vm3529, %v6255
      %6288 = vst.msk [vmem:[%s216 + $0x43] sm:$0x1] %vm3529, %v6256
      %6289 = vst.msk [vmem:[%s216 + $0x6b] sm:$0x1] %vm3529, %v6257
      %6290 = vst.msk [vmem:[%s216 + $0x93] sm:$0x1] %vm3529, %v6258
      %6291 = vst.msk [vmem:[%s216 + $0xbb] sm:$0x1] %vm3529, %v6259
      %6292 = vst.msk [vmem:[%s216 + $0xe3] sm:$0x1] %vm3529, %v6260
      %6293 = vst.msk [vmem:[%s216 + $0x10b] sm:$0x1] %vm3529, %v6261
      %6294 = vst.msk [vmem:[%s216 + $0x133] sm:$0x1] %vm3529, %v6262
      %6295 = vst.msk [vmem:[%s216 + $0x15b] sm:$0x1] %vm3529, %v6263
      %6296 = vst.msk [vmem:[%s216 + $0x183] sm:$0x1] %vm3529, %v6264
      %6297 = vst.msk [vmem:[%s216 + $0x1ab] sm:$0x1] %vm3529, %v6265
      %6298 = vst.msk [vmem:[%s216 + $0x1d3] sm:$0x1] %vm3529, %v6266
      %6299 = vst.msk [vmem:[%s216 + $0x1fb] sm:$0x1] %vm3529, %v6267
      %6300 = vst.msk [vmem:[%s216 + $0x223] sm:$0x1] %vm3529, %v6268
      %6301 = vst.msk [vmem:[%s216 + $0x24b] sm:$0x1] %vm3529, %v6269
      %6302 = vst.msk [vmem:[%s216 + $0x273] sm:$0x1] %vm3529, %v6270
      %v6303 = vrot.slane %v3487, 1
      %v6304 = vrot.slane %v3487, 2
      %v6305 = vrot.slane %v3487, 3
      %v6306 = vrot.slane %v3487, 4
      %v6307 = vrot.slane %v3487, 5
      %v6308 = vrot.slane %v3487, 6
      %v6309 = vrot.slane %v3497, 1
      %v6310 = vrot.slane %v3497, 2
      %v6311 = vrot.slane %v3497, 3
      %v6312 = vrot.slane %v3497, 4
      %v6313 = vrot.slane %v3497, 5
      %v6314 = vrot.slane %v3497, 6
      %v6315 = vperm.slane %v3487, 0
      %v6316 = vperm.slane %v6303, 0
      %v6317 = vperm.slane %v6304, 0
      %v6318 = vperm.slane %v6305, 0
      %v6319 = vperm.slane %v6306, 0
      %v6320 = vperm.slane %v6307, 0
      %v6321 = vperm.slane %v6308, 0
      %v6322 = vperm.slane %v6126, 0
      %v6323 = vperm.slane %v3497, 0
      %v6324 = vperm.slane %v6309, 0
      %v6325 = vperm.slane %v6310, 0
      %v6326 = vperm.slane %v6311, 0
      %v6327 = vperm.slane %v6312, 0
      %v6328 = vperm.slane %v6313, 0
      %v6329 = vperm.slane %v6314, 0
      %v6330 = vperm.slane %v6127, 0
      %6331 = vrot.lane.b32.xlu0 %v6315, 116
      %v6332 = vpop.permute.xlu0 %6331
      %6333 = vrot.lane.b32.xlu0 %v6316, 116
      %v6334 = vpop.permute.xlu0 %6333
      %6335 = vrot.lane.b32.xlu0 %v6317, 116
      %v6336 = vpop.permute.xlu0 %6335
      %6337 = vrot.lane.b32.xlu0 %v6318, 116
      %v6338 = vpop.permute.xlu0 %6337
      %6339 = vrot.lane.b32.xlu0 %v6319, 116
      %v6340 = vpop.permute.xlu0 %6339
      %6341 = vrot.lane.b32.xlu0 %v6320, 116
      %v6342 = vpop.permute.xlu0 %6341
      %6343 = vrot.lane.b32.xlu0 %v6321, 116
      %v6344 = vpop.permute.xlu0 %6343
      %6345 = vrot.lane.b32.xlu0 %v6322, 116
      %v6346 = vpop.permute.xlu0 %6345
      %6347 = vrot.lane.b32.xlu0 %v6323, 116
      %v6348 = vpop.permute.xlu0 %6347
      %6349 = vrot.lane.b32.xlu0 %v6324, 116
      %v6350 = vpop.permute.xlu0 %6349
      %6351 = vrot.lane.b32.xlu0 %v6325, 116
      %v6352 = vpop.permute.xlu0 %6351
      %6353 = vrot.lane.b32.xlu0 %v6326, 116
      %v6354 = vpop.permute.xlu0 %6353
      %6355 = vrot.lane.b32.xlu0 %v6327, 116
      %v6356 = vpop.permute.xlu0 %6355
      %6357 = vrot.lane.b32.xlu0 %v6328, 116
      %v6358 = vpop.permute.xlu0 %6357
      %6359 = vrot.lane.b32.xlu0 %v6329, 116
      %v6360 = vpop.permute.xlu0 %6359
      %6361 = vrot.lane.b32.xlu0 %v6330, 116
      %v6362 = vpop.permute.xlu0 %6361
      %6379 = vst.msk [vmem:[%s216 + $0x1c] sm:$0x1] %vm3529, %v6332
      %6380 = vst.msk [vmem:[%s216 + $0x44] sm:$0x1] %vm3529, %v6334
      %6381 = vst.msk [vmem:[%s216 + $0x6c] sm:$0x1] %vm3529, %v6336
      %6382 = vst.msk [vmem:[%s216 + $0x94] sm:$0x1] %vm3529, %v6338
      %6383 = vst.msk [vmem:[%s216 + $0xbc] sm:$0x1] %vm3529, %v6340
      %6384 = vst.msk [vmem:[%s216 + $0xe4] sm:$0x1] %vm3529, %v6342
      %6385 = vst.msk [vmem:[%s216 + $0x10c] sm:$0x1] %vm3529, %v6344
      %6386 = vst.msk [vmem:[%s216 + $0x134] sm:$0x1] %vm3529, %v6346
      %6387 = vst.msk [vmem:[%s216 + $0x15c] sm:$0x1] %vm3529, %v6348
      %6388 = vst.msk [vmem:[%s216 + $0x184] sm:$0x1] %vm3529, %v6350
      %6389 = vst.msk [vmem:[%s216 + $0x1ac] sm:$0x1] %vm3529, %v6352
      %6390 = vst.msk [vmem:[%s216 + $0x1d4] sm:$0x1] %vm3529, %v6354
      %6391 = vst.msk [vmem:[%s216 + $0x1fc] sm:$0x1] %vm3529, %v6356
      %6392 = vst.msk [vmem:[%s216 + $0x224] sm:$0x1] %vm3529, %v6358
      %6393 = vst.msk [vmem:[%s216 + $0x24c] sm:$0x1] %vm3529, %v6360
      %6394 = vst.msk [vmem:[%s216 + $0x274] sm:$0x1] %vm3529, %v6362
      %6395 = vrot.lane.b32.xlu0 %v6315, 79
      %v6396 = vpop.permute.xlu0 %6395
      %6397 = vrot.lane.b32.xlu0 %v6316, 79
      %v6398 = vpop.permute.xlu0 %6397
      %6399 = vrot.lane.b32.xlu0 %v6317, 79
      %v6400 = vpop.permute.xlu0 %6399
      %6401 = vrot.lane.b32.xlu0 %v6318, 79
      %v6402 = vpop.permute.xlu0 %6401
      %6403 = vrot.lane.b32.xlu0 %v6319, 79
      %v6404 = vpop.permute.xlu0 %6403
      %6405 = vrot.lane.b32.xlu0 %v6320, 79
      %v6406 = vpop.permute.xlu0 %6405
      %6407 = vrot.lane.b32.xlu0 %v6321, 79
      %v6408 = vpop.permute.xlu0 %6407
      %6409 = vrot.lane.b32.xlu0 %v6322, 79
      %v6410 = vpop.permute.xlu0 %6409
      %6411 = vrot.lane.b32.xlu0 %v6323, 79
      %v6412 = vpop.permute.xlu0 %6411
      %6413 = vrot.lane.b32.xlu0 %v6324, 79
      %v6414 = vpop.permute.xlu0 %6413
      %6415 = vrot.lane.b32.xlu0 %v6325, 79
      %v6416 = vpop.permute.xlu0 %6415
      %6417 = vrot.lane.b32.xlu0 %v6326, 79
      %v6418 = vpop.permute.xlu0 %6417
      %6419 = vrot.lane.b32.xlu0 %v6327, 79
      %v6420 = vpop.permute.xlu0 %6419
      %6421 = vrot.lane.b32.xlu0 %v6328, 79
      %v6422 = vpop.permute.xlu0 %6421
      %6423 = vrot.lane.b32.xlu0 %v6329, 79
      %v6424 = vpop.permute.xlu0 %6423
      %6425 = vrot.lane.b32.xlu0 %v6330, 79
      %v6426 = vpop.permute.xlu0 %6425
      %6443 = vst.msk [vmem:[%s216 + $0x1d] sm:$0x1] %vm3529, %v6396
      %6444 = vst.msk [vmem:[%s216 + $0x45] sm:$0x1] %vm3529, %v6398
      %6445 = vst.msk [vmem:[%s216 + $0x6d] sm:$0x1] %vm3529, %v6400
      %6446 = vst.msk [vmem:[%s216 + $0x95] sm:$0x1] %vm3529, %v6402
      %6447 = vst.msk [vmem:[%s216 + $0xbd] sm:$0x1] %vm3529, %v6404
      %6448 = vst.msk [vmem:[%s216 + $0xe5] sm:$0x1] %vm3529, %v6406
      %6449 = vst.msk [vmem:[%s216 + $0x10d] sm:$0x1] %vm3529, %v6408
      %6450 = vst.msk [vmem:[%s216 + $0x135] sm:$0x1] %vm3529, %v6410
      %6451 = vst.msk [vmem:[%s216 + $0x15d] sm:$0x1] %vm3529, %v6412
      %6452 = vst.msk [vmem:[%s216 + $0x185] sm:$0x1] %vm3529, %v6414
      %6453 = vst.msk [vmem:[%s216 + $0x1ad] sm:$0x1] %vm3529, %v6416
      %6454 = vst.msk [vmem:[%s216 + $0x1d5] sm:$0x1] %vm3529, %v6418
      %6455 = vst.msk [vmem:[%s216 + $0x1fd] sm:$0x1] %vm3529, %v6420
      %6456 = vst.msk [vmem:[%s216 + $0x225] sm:$0x1] %vm3529, %v6422
      %6457 = vst.msk [vmem:[%s216 + $0x24d] sm:$0x1] %vm3529, %v6424
      %6458 = vst.msk [vmem:[%s216 + $0x275] sm:$0x1] %vm3529, %v6426
      %6459 = vrot.lane.b32.xlu0 %v6315, 42
      %v6460 = vpop.permute.xlu0 %6459
      %6461 = vrot.lane.b32.xlu0 %v6316, 42
      %v6462 = vpop.permute.xlu0 %6461
      %6463 = vrot.lane.b32.xlu0 %v6317, 42
      %v6464 = vpop.permute.xlu0 %6463
      %6465 = vrot.lane.b32.xlu0 %v6318, 42
      %v6466 = vpop.permute.xlu0 %6465
      %6467 = vrot.lane.b32.xlu0 %v6319, 42
      %v6468 = vpop.permute.xlu0 %6467
      %6469 = vrot.lane.b32.xlu0 %v6320, 42
      %v6470 = vpop.permute.xlu0 %6469
      %6471 = vrot.lane.b32.xlu0 %v6321, 42
      %v6472 = vpop.permute.xlu0 %6471
      %6473 = vrot.lane.b32.xlu0 %v6322, 42
      %v6474 = vpop.permute.xlu0 %6473
      %6475 = vrot.lane.b32.xlu0 %v6323, 42
      %v6476 = vpop.permute.xlu0 %6475
      %6477 = vrot.lane.b32.xlu0 %v6324, 42
      %v6478 = vpop.permute.xlu0 %6477
      %6479 = vrot.lane.b32.xlu0 %v6325, 42
      %v6480 = vpop.permute.xlu0 %6479
      %6481 = vrot.lane.b32.xlu0 %v6326, 42
      %v6482 = vpop.permute.xlu0 %6481
      %6483 = vrot.lane.b32.xlu0 %v6327, 42
      %v6484 = vpop.permute.xlu0 %6483
      %6485 = vrot.lane.b32.xlu0 %v6328, 42
      %v6486 = vpop.permute.xlu0 %6485
      %6487 = vrot.lane.b32.xlu0 %v6329, 42
      %v6488 = vpop.permute.xlu0 %6487
      %6489 = vrot.lane.b32.xlu0 %v6330, 42
      %v6490 = vpop.permute.xlu0 %6489
      %6507 = vst.msk [vmem:[%s216 + $0x1e] sm:$0x1] %vm3529, %v6460
      %6508 = vst.msk [vmem:[%s216 + $0x46] sm:$0x1] %vm3529, %v6462
      %6509 = vst.msk [vmem:[%s216 + $0x6e] sm:$0x1] %vm3529, %v6464
      %6510 = vst.msk [vmem:[%s216 + $0x96] sm:$0x1] %vm3529, %v6466
      %6511 = vst.msk [vmem:[%s216 + $0xbe] sm:$0x1] %vm3529, %v6468
      %6512 = vst.msk [vmem:[%s216 + $0xe6] sm:$0x1] %vm3529, %v6470
      %6513 = vst.msk [vmem:[%s216 + $0x10e] sm:$0x1] %vm3529, %v6472
      %6514 = vst.msk [vmem:[%s216 + $0x136] sm:$0x1] %vm3529, %v6474
      %6515 = vst.msk [vmem:[%s216 + $0x15e] sm:$0x1] %vm3529, %v6476
      %6516 = vst.msk [vmem:[%s216 + $0x186] sm:$0x1] %vm3529, %v6478
      %6517 = vst.msk [vmem:[%s216 + $0x1ae] sm:$0x1] %vm3529, %v6480
      %6518 = vst.msk [vmem:[%s216 + $0x1d6] sm:$0x1] %vm3529, %v6482
      %6519 = vst.msk [vmem:[%s216 + $0x1fe] sm:$0x1] %vm3529, %v6484
      %6520 = vst.msk [vmem:[%s216 + $0x226] sm:$0x1] %vm3529, %v6486
      %6521 = vst.msk [vmem:[%s216 + $0x24e] sm:$0x1] %vm3529, %v6488
      %6522 = vst.msk [vmem:[%s216 + $0x276] sm:$0x1] %vm3529, %v6490
      %v6525 = vrot.slane %v3488, 7
      %v6526 = vrot.slane %v3498, 7
      %v6527 = vsel %vm3694, %v3487, %v6525
      %v6528 = vsel %vm3696, %v3487, %v6525
      %v6529 = vrot.slane %v6528, 1
      %v6530 = vsel %vm3699, %v3487, %v6525
      %v6531 = vrot.slane %v6530, 2
      %v6532 = vsel %vm3702, %v3487, %v6525
      %v6533 = vrot.slane %v6532, 3
      %v6534 = vsel %vm3705, %v3487, %v6525
      %v6535 = vrot.slane %v6534, 4
      %v6536 = vsel %vm3708, %v3487, %v6525
      %v6537 = vrot.slane %v6536, 5
      %v6538 = vsel %vm3711, %v3487, %v6525
      %v6539 = vrot.slane %v6538, 6
      %v6540 = vsel %vm3714, %v6525, %v3487
      %v6541 = vrot.slane %v6540, 7
      %v6542 = vsel %vm3694, %v3497, %v6526
      %v6543 = vsel %vm3696, %v3497, %v6526
      %v6544 = vrot.slane %v6543, 1
      %v6545 = vsel %vm3699, %v3497, %v6526
      %v6546 = vrot.slane %v6545, 2
      %v6547 = vsel %vm3702, %v3497, %v6526
      %v6548 = vrot.slane %v6547, 3
      %v6549 = vsel %vm3705, %v3497, %v6526
      %v6550 = vrot.slane %v6549, 4
      %v6551 = vsel %vm3708, %v3497, %v6526
      %v6552 = vrot.slane %v6551, 5
      %v6553 = vsel %vm3711, %v3497, %v6526
      %v6554 = vrot.slane %v6553, 6
      %v6555 = vsel %vm3714, %v6526, %v3497
      %v6556 = vrot.slane %v6555, 7
      %v6557 = vperm.slane %v6527, 0
      %v6558 = vperm.slane %v6527, 1
      %v6559 = vperm.slane %v6529, 0
      %v6560 = vperm.slane %v6529, 1
      %v6561 = vperm.slane %v6531, 0
      %v6562 = vperm.slane %v6531, 1
      %v6563 = vperm.slane %v6533, 0
      %v6564 = vperm.slane %v6533, 1
      %v6565 = vperm.slane %v6535, 0
      %v6566 = vperm.slane %v6535, 1
      %v6567 = vperm.slane %v6537, 0
      %v6568 = vperm.slane %v6537, 1
      %v6569 = vperm.slane %v6539, 0
      %v6570 = vperm.slane %v6539, 1
      %v6571 = vperm.slane %v6541, 0
      %v6572 = vperm.slane %v6541, 1
      %v6573 = vperm.slane %v6542, 0
      %v6574 = vperm.slane %v6542, 1
      %v6575 = vperm.slane %v6544, 0
      %v6576 = vperm.slane %v6544, 1
      %v6577 = vperm.slane %v6546, 0
      %v6578 = vperm.slane %v6546, 1
      %v6579 = vperm.slane %v6548, 0
      %v6580 = vperm.slane %v6548, 1
      %v6581 = vperm.slane %v6550, 0
      %v6582 = vperm.slane %v6550, 1
      %v6583 = vperm.slane %v6552, 0
      %v6584 = vperm.slane %v6552, 1
      %v6585 = vperm.slane %v6554, 0
      %v6586 = vperm.slane %v6554, 1
      %v6587 = vperm.slane %v6556, 0
      %v6588 = vperm.slane %v6556, 1
      %6589 = vrot.lane.b32.xlu0 %v6557, 5
      %v6590 = vpop.permute.xlu0 %6589
      %6591 = vrot.lane.b32.xlu0 %v6558, 5
      %v6592 = vpop.permute.xlu0 %6591
      %6593 = vrot.lane.b32.xlu0 %v6559, 5
      %v6594 = vpop.permute.xlu0 %6593
      %6595 = vrot.lane.b32.xlu0 %v6560, 5
      %v6596 = vpop.permute.xlu0 %6595
      %6597 = vrot.lane.b32.xlu0 %v6561, 5
      %v6598 = vpop.permute.xlu0 %6597
      %6599 = vrot.lane.b32.xlu0 %v6562, 5
      %v6600 = vpop.permute.xlu0 %6599
      %6601 = vrot.lane.b32.xlu0 %v6563, 5
      %v6602 = vpop.permute.xlu0 %6601
      %6603 = vrot.lane.b32.xlu0 %v6564, 5
      %v6604 = vpop.permute.xlu0 %6603
      %6605 = vrot.lane.b32.xlu0 %v6565, 5
      %v6606 = vpop.permute.xlu0 %6605
      %6607 = vrot.lane.b32.xlu0 %v6566, 5
      %v6608 = vpop.permute.xlu0 %6607
      %6609 = vrot.lane.b32.xlu0 %v6567, 5
      %v6610 = vpop.permute.xlu0 %6609
      %6611 = vrot.lane.b32.xlu0 %v6568, 5
      %v6612 = vpop.permute.xlu0 %6611
      %6613 = vrot.lane.b32.xlu0 %v6569, 5
      %v6614 = vpop.permute.xlu0 %6613
      %6615 = vrot.lane.b32.xlu0 %v6570, 5
      %v6616 = vpop.permute.xlu0 %6615
      %6617 = vrot.lane.b32.xlu0 %v6571, 5
      %v6618 = vpop.permute.xlu0 %6617
      %6619 = vrot.lane.b32.xlu0 %v6572, 5
      %v6620 = vpop.permute.xlu0 %6619
      %6621 = vrot.lane.b32.xlu0 %v6573, 5
      %v6622 = vpop.permute.xlu0 %6621
      %6623 = vrot.lane.b32.xlu0 %v6574, 5
      %v6624 = vpop.permute.xlu0 %6623
      %6625 = vrot.lane.b32.xlu0 %v6575, 5
      %v6626 = vpop.permute.xlu0 %6625
      %6627 = vrot.lane.b32.xlu0 %v6576, 5
      %v6628 = vpop.permute.xlu0 %6627
      %6629 = vrot.lane.b32.xlu0 %v6577, 5
      %v6630 = vpop.permute.xlu0 %6629
      %6631 = vrot.lane.b32.xlu0 %v6578, 5
      %v6632 = vpop.permute.xlu0 %6631
      %6633 = vrot.lane.b32.xlu0 %v6579, 5
      %v6634 = vpop.permute.xlu0 %6633
      %6635 = vrot.lane.b32.xlu0 %v6580, 5
      %v6636 = vpop.permute.xlu0 %6635
      %6637 = vrot.lane.b32.xlu0 %v6581, 5
      %v6638 = vpop.permute.xlu0 %6637
      %6639 = vrot.lane.b32.xlu0 %v6582, 5
      %v6640 = vpop.permute.xlu0 %6639
      %6641 = vrot.lane.b32.xlu0 %v6583, 5
      %v6642 = vpop.permute.xlu0 %6641
      %6643 = vrot.lane.b32.xlu0 %v6584, 5
      %v6644 = vpop.permute.xlu0 %6643
      %6645 = vrot.lane.b32.xlu0 %v6585, 5
      %v6646 = vpop.permute.xlu0 %6645
      %6647 = vrot.lane.b32.xlu0 %v6586, 5
      %v6648 = vpop.permute.xlu0 %6647
      %6649 = vrot.lane.b32.xlu0 %v6587, 5
      %v6650 = vpop.permute.xlu0 %6649
      %6651 = vrot.lane.b32.xlu0 %v6588, 5
      %v6652 = vpop.permute.xlu0 %6651
      %vm6653 = vcmask 39936
      %v6654 = vsel %vm6653, %v6590, %v6592
      %v6655 = vsel %vm6653, %v6594, %v6596
      %v6656 = vsel %vm6653, %v6598, %v6600
      %v6657 = vsel %vm6653, %v6602, %v6604
      %v6658 = vsel %vm6653, %v6606, %v6608
      %v6659 = vsel %vm6653, %v6610, %v6612
      %v6660 = vsel %vm6653, %v6614, %v6616
      %v6661 = vsel %vm6653, %v6618, %v6620
      %v6662 = vsel %vm6653, %v6622, %v6624
      %v6663 = vsel %vm6653, %v6626, %v6628
      %v6664 = vsel %vm6653, %v6630, %v6632
      %v6665 = vsel %vm6653, %v6634, %v6636
      %v6666 = vsel %vm6653, %v6638, %v6640
      %v6667 = vsel %vm6653, %v6642, %v6644
      %v6668 = vsel %vm6653, %v6646, %v6648
      %v6669 = vsel %vm6653, %v6650, %v6652
      %6686 = vst.msk [vmem:[%s216 + $0x1f] sm:$0x1] %vm3529, %v6654
      %6687 = vst.msk [vmem:[%s216 + $0x47] sm:$0x1] %vm3529, %v6655
      %6688 = vst.msk [vmem:[%s216 + $0x6f] sm:$0x1] %vm3529, %v6656
      %6689 = vst.msk [vmem:[%s216 + $0x97] sm:$0x1] %vm3529, %v6657
      %6690 = vst.msk [vmem:[%s216 + $0xbf] sm:$0x1] %vm3529, %v6658
      %6691 = vst.msk [vmem:[%s216 + $0xe7] sm:$0x1] %vm3529, %v6659
      %6692 = vst.msk [vmem:[%s216 + $0x10f] sm:$0x1] %vm3529, %v6660
      %6693 = vst.msk [vmem:[%s216 + $0x137] sm:$0x1] %vm3529, %v6661
      %6694 = vst.msk [vmem:[%s216 + $0x15f] sm:$0x1] %vm3529, %v6662
      %6695 = vst.msk [vmem:[%s216 + $0x187] sm:$0x1] %vm3529, %v6663
      %6696 = vst.msk [vmem:[%s216 + $0x1af] sm:$0x1] %vm3529, %v6664
      %6697 = vst.msk [vmem:[%s216 + $0x1d7] sm:$0x1] %vm3529, %v6665
      %6698 = vst.msk [vmem:[%s216 + $0x1ff] sm:$0x1] %vm3529, %v6666
      %6699 = vst.msk [vmem:[%s216 + $0x227] sm:$0x1] %vm3529, %v6667
      %6700 = vst.msk [vmem:[%s216 + $0x24f] sm:$0x1] %vm3529, %v6668
      %6701 = vst.msk [vmem:[%s216 + $0x277] sm:$0x1] %vm3529, %v6669
      %v6702 = vrot.slane %v3488, 1
      %v6703 = vrot.slane %v3488, 2
      %v6704 = vrot.slane %v3488, 3
      %v6705 = vrot.slane %v3488, 4
      %v6706 = vrot.slane %v3488, 5
      %v6707 = vrot.slane %v3488, 6
      %v6708 = vrot.slane %v3498, 1
      %v6709 = vrot.slane %v3498, 2
      %v6710 = vrot.slane %v3498, 3
      %v6711 = vrot.slane %v3498, 4
      %v6712 = vrot.slane %v3498, 5
      %v6713 = vrot.slane %v3498, 6
      %v6714 = vperm.slane %v3488, 0
      %v6715 = vperm.slane %v6702, 0
      %v6716 = vperm.slane %v6703, 0
      %v6717 = vperm.slane %v6704, 0
      %v6718 = vperm.slane %v6705, 0
      %v6719 = vperm.slane %v6706, 0
      %v6720 = vperm.slane %v6707, 0
      %v6721 = vperm.slane %v6525, 0
      %v6722 = vperm.slane %v3498, 0
      %v6723 = vperm.slane %v6708, 0
      %v6724 = vperm.slane %v6709, 0
      %v6725 = vperm.slane %v6710, 0
      %v6726 = vperm.slane %v6711, 0
      %v6727 = vperm.slane %v6712, 0
      %v6728 = vperm.slane %v6713, 0
      %v6729 = vperm.slane %v6526, 0
      %6730 = vrot.lane.b32.xlu0 %v6714, 96
      %v6731 = vpop.permute.xlu0 %6730
      %6732 = vrot.lane.b32.xlu0 %v6715, 96
      %v6733 = vpop.permute.xlu0 %6732
      %6734 = vrot.lane.b32.xlu0 %v6716, 96
      %v6735 = vpop.permute.xlu0 %6734
      %6736 = vrot.lane.b32.xlu0 %v6717, 96
      %v6737 = vpop.permute.xlu0 %6736
      %6738 = vrot.lane.b32.xlu0 %v6718, 96
      %v6739 = vpop.permute.xlu0 %6738
      %6740 = vrot.lane.b32.xlu0 %v6719, 96
      %v6741 = vpop.permute.xlu0 %6740
      %6742 = vrot.lane.b32.xlu0 %v6720, 96
      %v6743 = vpop.permute.xlu0 %6742
      %6744 = vrot.lane.b32.xlu0 %v6721, 96
      %v6745 = vpop.permute.xlu0 %6744
      %6746 = vrot.lane.b32.xlu0 %v6722, 96
      %v6747 = vpop.permute.xlu0 %6746
      %6748 = vrot.lane.b32.xlu0 %v6723, 96
      %v6749 = vpop.permute.xlu0 %6748
      %6750 = vrot.lane.b32.xlu0 %v6724, 96
      %v6751 = vpop.permute.xlu0 %6750
      %6752 = vrot.lane.b32.xlu0 %v6725, 96
      %v6753 = vpop.permute.xlu0 %6752
      %6754 = vrot.lane.b32.xlu0 %v6726, 96
      %v6755 = vpop.permute.xlu0 %6754
      %6756 = vrot.lane.b32.xlu0 %v6727, 96
      %v6757 = vpop.permute.xlu0 %6756
      %6758 = vrot.lane.b32.xlu0 %v6728, 96
      %v6759 = vpop.permute.xlu0 %6758
      %6760 = vrot.lane.b32.xlu0 %v6729, 96
      %v6761 = vpop.permute.xlu0 %6760
      %6778 = vst.msk [vmem:[%s216 + $0x20] sm:$0x1] %vm3529, %v6731
      %6779 = vst.msk [vmem:[%s216 + $0x48] sm:$0x1] %vm3529, %v6733
      %6780 = vst.msk [vmem:[%s216 + $0x70] sm:$0x1] %vm3529, %v6735
      %6781 = vst.msk [vmem:[%s216 + $0x98] sm:$0x1] %vm3529, %v6737
      %6782 = vst.msk [vmem:[%s216 + $0xc0] sm:$0x1] %vm3529, %v6739
      %6783 = vst.msk [vmem:[%s216 + $0xe8] sm:$0x1] %vm3529, %v6741
      %6784 = vst.msk [vmem:[%s216 + $0x110] sm:$0x1] %vm3529, %v6743
      %6785 = vst.msk [vmem:[%s216 + $0x138] sm:$0x1] %vm3529, %v6745
      %6786 = vst.msk [vmem:[%s216 + $0x160] sm:$0x1] %vm3529, %v6747
      %6787 = vst.msk [vmem:[%s216 + $0x188] sm:$0x1] %vm3529, %v6749
      %6788 = vst.msk [vmem:[%s216 + $0x1b0] sm:$0x1] %vm3529, %v6751
      %6789 = vst.msk [vmem:[%s216 + $0x1d8] sm:$0x1] %vm3529, %v6753
      %6790 = vst.msk [vmem:[%s216 + $0x200] sm:$0x1] %vm3529, %v6755
      %6791 = vst.msk [vmem:[%s216 + $0x228] sm:$0x1] %vm3529, %v6757
      %6792 = vst.msk [vmem:[%s216 + $0x250] sm:$0x1] %vm3529, %v6759
      %6793 = vst.msk [vmem:[%s216 + $0x278] sm:$0x1] %vm3529, %v6761
      %s6794 = smul.u32 16, %s19
      %p6795 = scmp.lt.s32.totalorder %s18, 1
      %s6796 = scalar_select %p6795, %s18, 1
      %p6797 = scmp.lt.s32.totalorder %s6794, 31
      %s6798 = scalar_select %p6797, %s6794, 31
      %s6799 = smul.addr %s6798, 5
      %s6800 = smul.addr %s6796, 160
      %s6801 = sadd.s32 %s6799, %s6800
      %s6802 = smul.addr %s6801, 8
      %s6803 = scalar_lea.vmem %s3, %s6802
      // Predicated region
      $region37: #{model_forward.1} parent=31 // pred_check
        %p6804 = pneg %p119
      $region38: #{model_forward.1} parent=31 // pred_check_branch
        %6806 = sbr.rel (%p6804) target = $region40
      $region39: #{model_forward.1} parent=31 // pred_region
        %s6807 = smul.u32 16, %s19
      $region40: #{model_forward.1} parent=31 // pred_fallthru
        _
    $region32: #{model_forward.1} parent=5 // pred_fallthru
      _
    %p6808 = scmp.le.s32.totalorder 2, %s9
    // Predicated region
    $region41: #{model_forward.1} parent=5 // pred_check
      %p6809 = pneg %p6808
    $region42: #{model_forward.1} parent=5 // pred_check_branch
      %6811 = sbr.rel (%p6809) target = $region44
    $region43: #{model_forward.1} parent=5 // pred_region
      %s6812 = ssub.s32 %s9, 2
      // Predicated region
      $region45: #{model_forward.1} parent=43 // pred_check
        %p6813 = pneg %p125
      $region46: #{model_forward.1} parent=43 // pred_check_branch
        %6815 = sbr.rel (%p6813) target = $region48
      $region47: #{model_forward.1} parent=43 // pred_region
        %s6816 = smul.u32 16, %s21
        %p6817 = scmp.lt.s32.totalorder %s20, 1
        %s6818 = scalar_select %p6817, %s20, 1
        %p6819 = scmp.lt.s32.totalorder %s6816, 31
        %s6820 = scalar_select %p6819, %s6816, 31
        %s6821 = smul.addr %s6820, 5
        %s6822 = smul.addr %s6818, 160
        %s6823 = sadd.s32 %s6821, %s6822
        %s6824 = smul.addr %s6823, 8
        %s6825 = scalar_lea.vmem %s3, %s6824
      $region48: #{model_forward.1} parent=43 // pred_fallthru
        _
    $region44: #{model_forward.1} parent=5 // pred_fallthru
      _
  $region6: #{model_forward.1} parent=0 // loop_footer
    %s13 = sadd.s32 1, %s9
  $region7: #{model_forward.1} parent=0 // loop_footer_branch
    %8 = sbr.rel target = $region3
  $region8: #{model_forward.1} parent=0 // loop_exit
    _

</llo_original>
